<compile_context>
chip_gen: v7x
topology: tpu7x:2x2x1
jax: 0.10.0
libtpu: 0.0.40
codegen_flags: <defaults>
</compile_context>

<pallas_src>
import functools

import numpy as np
import jax
import jax.numpy as jnp
from jax.experimental import pallas as pl
from jax.experimental.pallas import tpu as pltpu

LEAKY_SLOPE = 0.2
IN_EPS = 1e-5
KSIZE = 4
TAPS = KSIZE * KSIZE
PAD = 1


def _leaky_relu(x):
    return jnp.where(x >= 0, x, LEAKY_SLOPE * x)


# ------------------------------- fused kernel --------------------------------
def _critic_kernel(*refs, num_blocks):
    """Entire Critic forward for one sample (grid iterates over the batch).

    refs layout (all VMEM):
      [0] patches0 [HW0, 16*Cin0]  bf16   layer-0 host im2col patches
      [1] w0       [16*Cin0, C0]   bf16
      [2] b0       [1, C0]         f32
      then per Block (conv + InstanceNorm + LeakyReLU):
          S_l      [16*HWout, HWin]   bf16  stacked 0/1 reflect+stride gathers
          W_l      [16*Cin, Cout]     bf16  im2col-flattened conv weights
      then final conv (Cout == 1, no norm / act):
          S_f      [16*HWf, HWinf]    bf16
          W_f      [16*HWf, Cinf]     f32   per-tap weight rows (repeated HWf x)
          b_f      [1, 1]             f32
      [-1] out     [1, HWf]           f32   lane-dense PatchGAN map
    """
    out_ref = refs[-1]
    p0_ref, w0_ref, b0_ref = refs[0], refs[1], refs[2]

    # ---- layer 0: conv (patches @ W) + bias + LeakyReLU (no norm) ----
    a = jnp.dot(p0_ref[...], w0_ref[...], preferred_element_type=jnp.float32)
    a = _leaky_relu(a + b0_ref[...])                      # [HW0, C0] f32

    # ---- Block layers: conv + InstanceNorm2d(affine=False) + LeakyReLU ----
    pos = 3
    for _ in range(num_blocks):
        s_ref, w_ref = refs[pos], refs[pos + 1]
        pos += 2
        hw_out = s_ref.shape[0] // TAPS
        a_b = a.astype(jnp.bfloat16)
        # (1) single gather GEMM: all 16 reflect-pad + stride-2 taps at once.
        g = jnp.dot(s_ref[...], a_b, preferred_element_type=jnp.float32)
        g = g.astype(jnp.bfloat16)      # exact: rows are copies of bf16 values
        # (2) repack tap-major row blocks into im2col layout [HWout, 16*Cin]
        #     via a lane-axis concat of static slices (no relayout reshape).
        patches = jnp.concatenate(
            [g[t * hw_out:(t + 1) * hw_out, :] for t in range(TAPS)], axis=1)
        # (3) single weight GEMM.
        acc = jnp.dot(patches, w_ref[...], preferred_element_type=jnp.float32)
        # Conv bias intentionally omitted: InstanceNorm mean subtraction cancels it.
        mean = jnp.mean(acc, axis=0, keepdims=True)                 # over spatial
        var = jnp.mean(jnp.square(acc - mean), axis=0, keepdims=True)
        a = _leaky_relu((acc - mean) * jax.lax.rsqrt(var + IN_EPS))

    # ---- final conv (Cout == 1): one gather GEMM + VPU weighted reduction ----
    sf_ref, wf_ref, bf_ref = refs[pos], refs[pos + 1], refs[pos + 2]
    hw_f = sf_ref.shape[0] // TAPS
    gf = jnp.dot(sf_ref[...], a.astype(jnp.bfloat16),
                 preferred_element_type=jnp.float32)                # [16*HWf, Cin]
    rows = jnp.sum(gf * wf_ref[...], axis=1, keepdims=True)         # [16*HWf, 1]
    y = rows[0:hw_f, :]
    for t in range(1, TAPS):                                        # sum over taps
        y = y + rows[t * hw_f:(t + 1) * hw_f, :]
    y = y + bf_ref[...]
    # Lane-dense output (HWf rides the lane axis); hw_f == 1 at 32x32 input, so
    # this reshape is a no-op.
    out_ref[...] = y.reshape(1, hw_f).astype(out_ref.dtype)


# ------------------------------ host-side glue --------------------------------
def _reflect_pad_nhwc(x, pad=PAD):
    return jnp.pad(x, ((0, 0), (pad, pad), (pad, pad), (0, 0)), mode="reflect")


def _im2col(xp, ksize, stride):
    # xp: [N, Hp, Wp, C] (already padded); patch column ordering is (kh, kw, cin).
    n, hp, wp, c = xp.shape
    hout = (hp - ksize) // stride + 1
    wout = (wp - ksize) // stride + 1
    taps = []
    for kh in range(ksize):
        for kw in range(ksize):
            taps.append(xp[:,
                           kh:kh + stride * (hout - 1) + 1:stride,
                           kw:kw + stride * (wout - 1) + 1:stride, :])
    patches = jnp.stack(taps, axis=3).reshape(n, hout * wout, ksize * ksize * c)
    return patches, hout, wout


def _conv_out_hw(h, w, stride, ksize=KSIZE, pad=PAD):
    return (h + 2 * pad - ksize) // stride + 1, (w + 2 * pad - ksize) // stride + 1


def _build_gather(h, w, stride, ksize=KSIZE, pad=PAD):
    """S[t*HWout + p, q] = 1 iff output position p reads source q for tap t
    (reflect padding of 1 folded in).  Tap-major row stacking."""
    hout, wout = _conv_out_hw(h, w, stride, ksize, pad)

    def refl(i, n):
        if i < pad:
            return pad - i
        if i >= n + pad:
            return 2 * n + pad - 2 - i
        return i - pad

    s = np.zeros((ksize * ksize * hout * wout, h * w), np.float32)
    for kh in range(ksize):
        for kw in range(ksize):
            t = kh * ksize + kw
            for oh in range(hout):
                ih = refl(stride * oh + kh, h)
                for ow in range(wout):
                    iw = refl(stride * ow + kw, w)
                    s[t * hout * wout + oh * wout + ow, ih * w + iw] = 1.0
    return s, hout, wout


# ------------------------------ Critic model ----------------------------------
def init_critic_params(key, in_channels=3, features=(64, 128, 256, 512)):
    layer_defs = [dict(cin=in_channels, cout=features[0], stride=2,
                       norm=False, act=True)]
    cin = features[0]
    for feature in features[1:]:
        # Upstream bug reproduced: stride is always 2 for every Block.
        layer_defs.append(dict(cin=cin, cout=feature, stride=2,
                               norm=True, act=True))
        cin = feature
    layer_defs.append(dict(cin=cin, cout=1, stride=1, norm=False, act=False))

    params = []
    for ld in layer_defs:
        key, wk, bk = jax.random.split(key, 3)
        fan_in = ld["cin"] * KSIZE * KSIZE
        wgt = jax.random.normal(wk, (KSIZE, KSIZE, ld["cin"], ld["cout"]),
                                jnp.float32) / jnp.sqrt(jnp.float32(fan_in))
        bias = jax.random.normal(bk, (ld["cout"],), jnp.float32) * 0.01
        params.append((wgt, bias))
    return layer_defs, params


def make_critic_forward(layer_defs, params, image_hw):
    """Precompute all kernel constants and return a jitted forward(x_nchw)."""
    h_in, w_in = image_hw
    num_blocks = len(layer_defs) - 2

    # ----- layer 0 operands (host im2col feeds the fused kernel) -----
    ld0 = layer_defs[0]
    w0, b0 = params[0]
    c0 = ld0["cout"]
    k0 = TAPS * ld0["cin"]                       # 48: block == full array, no pad
    w0_mat = w0.reshape(k0, c0).astype(jnp.bfloat16)
    b0_mat = b0.reshape(1, c0).astype(jnp.float32)
    h_cur, w_cur = _conv_out_hw(h_in, w_in, ld0["stride"])
    hw0 = h_cur * w_cur

    flops = 2 * hw0 * k0 * c0
    const_ops = [w0_mat, b0_mat]

    # ----- Block layers: stacked gather matrix + im2col-flattened weights -----
    for ld, (wgt, _bias) in zip(layer_defs[1:1 + num_blocks],
                                params[1:1 + num_blocks]):
        hw_in = h_cur * w_cur
        s_np, h_cur, w_cur = _build_gather(h_cur, w_cur, ld["stride"])
        hw_out = h_cur * w_cur
        s_arr = jnp.asarray(s_np).astype(jnp.bfloat16)      # 0/1 -> exact in bf16
        w_arr = wgt.reshape(TAPS * ld["cin"], ld["cout"]).astype(jnp.bfloat16)
        const_ops += [s_arr, w_arr]
        flops += 2 * (TAPS * hw_out) * hw_in * ld["cin"]        # gather GEMM
        flops += 2 * hw_out * (TAPS * ld["cin"]) * ld["cout"]   # weight GEMM

    # ----- final conv (Cout == 1, stride 1, no norm / act) -----
    ldf = layer_defs[-1]
    wf, bf = params[-1]
    hw_in = h_cur * w_cur
    s_np, h_out, w_out = _build_gather(h_cur, w_cur, ldf["stride"])
    hw_f = h_out * w_out
    sf_arr = jnp.asarray(s_np).astype(jnp.bfloat16)
    wf_rep = jnp.repeat(wf.reshape(TAPS, ldf["cin"]), hw_f, axis=0)  # [16*HWf, Cin]
    wf_rep = wf_rep.astype(jnp.float32)
    bf_arr = bf.reshape(1, 1).astype(jnp.float32)
    const_ops += [sf_arr, wf_rep, bf_arr]
    flops += 2 * (TAPS * hw_f) * hw_in * ldf["cin"] + 2 * TAPS * hw_f * ldf["cin"]

    # Constants never change across the grid: single-buffer them (no re-DMA and
    # no double-buffer VMEM cost -- the headroom matters on v7x's 64 MiB/TC).
    const_specs = [
        pl.BlockSpec(op.shape, (lambda i, _nd=op.ndim: (0,) * _nd),
                     pipeline_mode=pl.Buffered(1))
        for op in const_ops
    ]
    const_bytes = sum(int(np.prod(op.shape)) * op.dtype.itemsize
                      for op in const_ops)
    transc = sum(ld["cout"] for ld in layer_defs[1:1 + num_blocks])

    kernel = functools.partial(_critic_kernel, num_blocks=num_blocks)

    def forward(x_nchw):
        n = x_nchw.shape[0]
        # bf16 before pad / im2col: the patches are the only per-sample HBM stream.
        x = jnp.transpose(x_nchw, (0, 2, 3, 1)).astype(jnp.bfloat16)   # NHWC
        patches, _, _ = _im2col(_reflect_pad_nhwc(x), KSIZE, ld0["stride"])

        cost = pl.CostEstimate(
            flops=flops * n,
            transcendentals=transc * n,
            bytes_accessed=const_bytes + patches.size * 2 + n * hw_f * 4)

        out = pl.pallas_call(
            kernel,
            out_shape=jax.ShapeDtypeStruct((n, 1, hw_f), jnp.float32),
            grid=(n,),
            in_specs=[pl.BlockSpec((pl.Squeezed(), hw0, k0),
                                   lambda i: (i, 0, 0))] + const_specs,
            out_specs=pl.BlockSpec((pl.Squeezed(), 1, hw_f),
                                   lambda i: (i, 0, 0)),
            compiler_params=pltpu.CompilerParams(
                dimension_semantics=("parallel",),   # v7x: one sample per TC
                vmem_limit_bytes=40 * 1024 * 1024,   # ~8 MiB used; ample headroom
            ),
            cost_estimate=cost,
        )(patches, *const_ops)

        # (N, 1, HWf) -> (N, 1, H_out, W_out)  (PatchGAN map, NCHW like PyTorch)
        return out.reshape(n, 1, h_out, w_out)

    return jax.jit(forward)


# ---------------------------------- main ---------------------------------------
if __name__ == "__main__":
    key = jax.random.PRNGKey(0)
    kx, kp = jax.random.split(key)

    # Input: [N=2, C=3, H=32, W=32] (NCHW, as the PyTorch module expects).
    # 32 is the smallest spatial size for which the final k=4,s=1,p=1 conv is valid.
    x = jax.random.normal(kx, (2, 3, 32, 32), jnp.float32)

    layer_defs, params = init_critic_params(kp, in_channels=3,
                                            features=(64, 128, 256, 512))
    forward = make_critic_forward(layer_defs, params, image_hw=(32, 32))

    out = jax.block_until_ready(forward(x))

    # 32 -> 16 -> 8 -> 4 -> 2 -> (k4,s1,p1) 1  => PatchGAN map of shape 1x1
    assert out.shape == (2, 1, 1, 1), out.shape
    assert bool(jnp.all(jnp.isfinite(out)))
    print("KERNEL_OK")
</pallas_src>

<mosaic_0001>
module attributes {stable_mosaic.version = 11 : i64} {
  func.func @_critic_kernel(%arg0: i32, %arg1: memref<1x256x48xbf16, #tpu.memory_space<vmem>>, %arg2: memref<48x64xbf16, #tpu.memory_space<vmem>>, %arg3: memref<1x64xf32, #tpu.memory_space<vmem>>, %arg4: memref<1024x256xbf16, #tpu.memory_space<vmem>>, %arg5: memref<1024x128xbf16, #tpu.memory_space<vmem>>, %arg6: memref<256x64xbf16, #tpu.memory_space<vmem>>, %arg7: memref<2048x256xbf16, #tpu.memory_space<vmem>>, %arg8: memref<64x16xbf16, #tpu.memory_space<vmem>>, %arg9: memref<4096x512xbf16, #tpu.memory_space<vmem>>, %arg10: memref<16x4xbf16, #tpu.memory_space<vmem>>, %arg11: memref<16x512xf32, #tpu.memory_space<vmem>>, %arg12: memref<1x1xf32, #tpu.memory_space<vmem>>, %arg13: memref<1x1x1xf32, #tpu.memory_space<vmem>>) attributes {dimension_semantics = [#tpu.dimension_semantics<parallel>], iteration_bounds = array<i64: 2>, scalar_prefetch = 0 : i64, scratch_operands = 0 : i64, tpu.core_type = #tpu.core_type<tc>, window_params = [{transform_indices = @transform_0, window_bounds = array<i64: 1, 256, 48>}, {pipeline_mode = #tpu.pipeline_mode<synchronous>, transform_indices = @transform_1, window_bounds = array<i64: 48, 64>}, {pipeline_mode = #tpu.pipeline_mode<synchronous>, transform_indices = @transform_2, window_bounds = array<i64: 1, 64>}, {pipeline_mode = #tpu.pipeline_mode<synchronous>, transform_indices = @transform_3, window_bounds = array<i64: 1024, 256>}, {pipeline_mode = #tpu.pipeline_mode<synchronous>, transform_indices = @transform_4, window_bounds = array<i64: 1024, 128>}, {pipeline_mode = #tpu.pipeline_mode<synchronous>, transform_indices = @transform_5, window_bounds = array<i64: 256, 64>}, {pipeline_mode = #tpu.pipeline_mode<synchronous>, transform_indices = @transform_6, window_bounds = array<i64: 2048, 256>}, {pipeline_mode = #tpu.pipeline_mode<synchronous>, transform_indices = @transform_7, window_bounds = array<i64: 64, 16>}, {pipeline_mode = #tpu.pipeline_mode<synchronous>, transform_indices = @transform_8, window_bounds = array<i64: 4096, 512>}, {pipeline_mode = #tpu.pipeline_mode<synchronous>, transform_indices = @transform_9, window_bounds = array<i64: 16, 4>}, {pipeline_mode = #tpu.pipeline_mode<synchronous>, transform_indices = @transform_10, window_bounds = array<i64: 16, 512>}, {pipeline_mode = #tpu.pipeline_mode<synchronous>, transform_indices = @transform_11, window_bounds = array<i64: 1, 1>}, {transform_indices = @transform_12, window_bounds = array<i64: 1, 1, 1>}]} {
    %c0 = arith.constant 0 : index
    %c0_0 = arith.constant 0 : index
    %c0_1 = arith.constant 0 : index
    %0 = vector.load %arg1[%c0, %c0_0, %c0_1] : memref<1x256x48xbf16, #tpu.memory_space<vmem>>, vector<1x256x48xbf16>
    %1 = vector.shape_cast %0 : vector<1x256x48xbf16> to vector<256x48xbf16>
    %c0_2 = arith.constant 0 : index
    %c0_3 = arith.constant 0 : index
    %2 = vector.load %arg2[%c0_2, %c0_3] : memref<48x64xbf16, #tpu.memory_space<vmem>>, vector<48x64xbf16>
    %cst = arith.constant dense<0.000000e+00> : vector<256x64xf32>
    %3 = tpu.matmul %1, %2, %cst {dimension_numbers = #tpu.dot_dimension_numbers<[1], [0], [0], [1], [0, 0, 1, 1], [], []>} : vector<256x48xbf16>, vector<48x64xbf16>, vector<256x64xf32> -> vector<256x64xf32>
    %c0_4 = arith.constant 0 : index
    %c0_5 = arith.constant 0 : index
    %4 = vector.load %arg3[%c0_4, %c0_5] : memref<1x64xf32, #tpu.memory_space<vmem>>, vector<1x64xf32>
    %5 = vector.broadcast %4 : vector<1x64xf32> to vector<256x64xf32>
    %6 = arith.addf %3, %5 : vector<256x64xf32>
    %cst_6 = arith.constant 0.000000e+00 : f32
    %7 = vector.broadcast %cst_6 : f32 to vector<256x64xf32>
    %8 = arith.cmpf oge, %6, %7 : vector<256x64xf32>
    %cst_7 = arith.constant 2.000000e-01 : f32
    %9 = vector.broadcast %cst_7 : f32 to vector<256x64xf32>
    %10 = arith.mulf %9, %6 : vector<256x64xf32>
    %11 = arith.select %8, %6, %10 : vector<256x64xi1>, vector<256x64xf32>
    %12 = arith.truncf %11 : vector<256x64xf32> to vector<256x64xbf16>
    %c0_8 = arith.constant 0 : index
    %c0_9 = arith.constant 0 : index
    %13 = vector.load %arg4[%c0_8, %c0_9] : memref<1024x256xbf16, #tpu.memory_space<vmem>>, vector<1024x256xbf16>
    %cst_10 = arith.constant dense<0.000000e+00> : vector<1024x64xf32>
    %14 = tpu.matmul %13, %12, %cst_10 {dimension_numbers = #tpu.dot_dimension_numbers<[1], [0], [0], [1], [0, 0, 1, 1], [], []>} : vector<1024x256xbf16>, vector<256x64xbf16>, vector<1024x64xf32> -> vector<1024x64xf32>
    %15 = arith.truncf %14 : vector<1024x64xf32> to vector<1024x64xbf16>
    %16 = vector.extract_strided_slice %15 {offsets = [0, 0], sizes = [64, 64], strides = [1, 1]} : vector<1024x64xbf16> to vector<64x64xbf16>
    %17 = vector.extract_strided_slice %15 {offsets = [64, 0], sizes = [64, 64], strides = [1, 1]} : vector<1024x64xbf16> to vector<64x64xbf16>
    %18 = vector.extract_strided_slice %15 {offsets = [128, 0], sizes = [64, 64], strides = [1, 1]} : vector<1024x64xbf16> to vector<64x64xbf16>
    %19 = vector.extract_strided_slice %15 {offsets = [192, 0], sizes = [64, 64], strides = [1, 1]} : vector<1024x64xbf16> to vector<64x64xbf16>
    %20 = vector.extract_strided_slice %15 {offsets = [256, 0], sizes = [64, 64], strides = [1, 1]} : vector<1024x64xbf16> to vector<64x64xbf16>
    %21 = vector.extract_strided_slice %15 {offsets = [320, 0], sizes = [64, 64], strides = [1, 1]} : vector<1024x64xbf16> to vector<64x64xbf16>
    %22 = vector.extract_strided_slice %15 {offsets = [384, 0], sizes = [64, 64], strides = [1, 1]} : vector<1024x64xbf16> to vector<64x64xbf16>
    %23 = vector.extract_strided_slice %15 {offsets = [448, 0], sizes = [64, 64], strides = [1, 1]} : vector<1024x64xbf16> to vector<64x64xbf16>
    %24 = vector.extract_strided_slice %15 {offsets = [512, 0], sizes = [64, 64], strides = [1, 1]} : vector<1024x64xbf16> to vector<64x64xbf16>
    %25 = vector.extract_strided_slice %15 {offsets = [576, 0], sizes = [64, 64], strides = [1, 1]} : vector<1024x64xbf16> to vector<64x64xbf16>
    %26 = vector.extract_strided_slice %15 {offsets = [640, 0], sizes = [64, 64], strides = [1, 1]} : vector<1024x64xbf16> to vector<64x64xbf16>
    %27 = vector.extract_strided_slice %15 {offsets = [704, 0], sizes = [64, 64], strides = [1, 1]} : vector<1024x64xbf16> to vector<64x64xbf16>
    %28 = vector.extract_strided_slice %15 {offsets = [768, 0], sizes = [64, 64], strides = [1, 1]} : vector<1024x64xbf16> to vector<64x64xbf16>
    %29 = vector.extract_strided_slice %15 {offsets = [832, 0], sizes = [64, 64], strides = [1, 1]} : vector<1024x64xbf16> to vector<64x64xbf16>
    %30 = vector.extract_strided_slice %15 {offsets = [896, 0], sizes = [64, 64], strides = [1, 1]} : vector<1024x64xbf16> to vector<64x64xbf16>
    %31 = vector.extract_strided_slice %15 {offsets = [960, 0], sizes = [64, 64], strides = [1, 1]} : vector<1024x64xbf16> to vector<64x64xbf16>
    %32 = tpu.concatenate %16, %17, %18, %19, %20, %21, %22, %23, %24, %25, %26, %27, %28, %29, %30, %31 in 1 : vector<64x64xbf16>, vector<64x64xbf16>, vector<64x64xbf16>, vector<64x64xbf16>, vector<64x64xbf16>, vector<64x64xbf16>, vector<64x64xbf16>, vector<64x64xbf16>, vector<64x64xbf16>, vector<64x64xbf16>, vector<64x64xbf16>, vector<64x64xbf16>, vector<64x64xbf16>, vector<64x64xbf16>, vector<64x64xbf16>, vector<64x64xbf16> -> vector<64x1024xbf16>
    %c0_11 = arith.constant 0 : index
    %c0_12 = arith.constant 0 : index
    %33 = vector.load %arg5[%c0_11, %c0_12] : memref<1024x128xbf16, #tpu.memory_space<vmem>>, vector<1024x128xbf16>
    %cst_13 = arith.constant dense<0.000000e+00> : vector<64x128xf32>
    %34 = tpu.matmul %32, %33, %cst_13 {dimension_numbers = #tpu.dot_dimension_numbers<[1], [0], [0], [1], [0, 0, 1, 1], [], []>} : vector<64x1024xbf16>, vector<1024x128xbf16>, vector<64x128xf32> -> vector<64x128xf32>
    %cst_14 = arith.constant dense<0.000000e+00> : vector<128xf32>
    %35 = vector.multi_reduction <add>, %34, %cst_14 [0] : vector<64x128xf32> to vector<128xf32>
    %36 = vector.shape_cast %35 : vector<128xf32> to vector<1x128xf32>
    %cst_15 = arith.constant 6.400000e+01 : f32
    %37 = vector.broadcast %cst_15 : f32 to vector<1x128xf32>
    %38 = arith.divf %36, %37 : vector<1x128xf32>
    %39 = vector.broadcast %38 : vector<1x128xf32> to vector<64x128xf32>
    %40 = arith.subf %34, %39 : vector<64x128xf32>
    %41 = arith.mulf %40, %40 : vector<64x128xf32>
    %cst_16 = arith.constant dense<0.000000e+00> : vector<128xf32>
    %42 = vector.multi_reduction <add>, %41, %cst_16 [0] : vector<64x128xf32> to vector<128xf32>
    %43 = vector.shape_cast %42 : vector<128xf32> to vector<1x128xf32>
    %cst_17 = arith.constant 6.400000e+01 : f32
    %44 = vector.broadcast %cst_17 : f32 to vector<1x128xf32>
    %45 = arith.divf %43, %44 : vector<1x128xf32>
    %46 = vector.broadcast %38 : vector<1x128xf32> to vector<64x128xf32>
    %47 = arith.subf %34, %46 : vector<64x128xf32>
    %cst_18 = arith.constant 9.99999974E-6 : f32
    %48 = vector.broadcast %cst_18 : f32 to vector<1x128xf32>
    %49 = arith.addf %45, %48 : vector<1x128xf32>
    %50 = math.rsqrt %49 : vector<1x128xf32>
    %51 = vector.broadcast %50 : vector<1x128xf32> to vector<64x128xf32>
    %52 = arith.mulf %47, %51 : vector<64x128xf32>
    %cst_19 = arith.constant 0.000000e+00 : f32
    %53 = vector.broadcast %cst_19 : f32 to vector<64x128xf32>
    %54 = arith.cmpf oge, %52, %53 : vector<64x128xf32>
    %cst_20 = arith.constant 2.000000e-01 : f32
    %55 = vector.broadcast %cst_20 : f32 to vector<64x128xf32>
    %56 = arith.mulf %55, %52 : vector<64x128xf32>
    %57 = arith.select %54, %52, %56 : vector<64x128xi1>, vector<64x128xf32>
    %58 = arith.truncf %57 : vector<64x128xf32> to vector<64x128xbf16>
    %c0_21 = arith.constant 0 : index
    %c0_22 = arith.constant 0 : index
    %59 = vector.load %arg6[%c0_21, %c0_22] : memref<256x64xbf16, #tpu.memory_space<vmem>>, vector<256x64xbf16>
    %cst_23 = arith.constant dense<0.000000e+00> : vector<256x128xf32>
    %60 = tpu.matmul %59, %58, %cst_23 {dimension_numbers = #tpu.dot_dimension_numbers<[1], [0], [0], [1], [0, 0, 1, 1], [], []>} : vector<256x64xbf16>, vector<64x128xbf16>, vector<256x128xf32> -> vector<256x128xf32>
    %61 = arith.truncf %60 : vector<256x128xf32> to vector<256x128xbf16>
    %62 = vector.extract_strided_slice %61 {offsets = [0, 0], sizes = [16, 128], strides = [1, 1]} : vector<256x128xbf16> to vector<16x128xbf16>
    %63 = vector.extract_strided_slice %61 {offsets = [16, 0], sizes = [16, 128], strides = [1, 1]} : vector<256x128xbf16> to vector<16x128xbf16>
    %64 = vector.extract_strided_slice %61 {offsets = [32, 0], sizes = [16, 128], strides = [1, 1]} : vector<256x128xbf16> to vector<16x128xbf16>
    %65 = vector.extract_strided_slice %61 {offsets = [48, 0], sizes = [16, 128], strides = [1, 1]} : vector<256x128xbf16> to vector<16x128xbf16>
    %66 = vector.extract_strided_slice %61 {offsets = [64, 0], sizes = [16, 128], strides = [1, 1]} : vector<256x128xbf16> to vector<16x128xbf16>
    %67 = vector.extract_strided_slice %61 {offsets = [80, 0], sizes = [16, 128], strides = [1, 1]} : vector<256x128xbf16> to vector<16x128xbf16>
    %68 = vector.extract_strided_slice %61 {offsets = [96, 0], sizes = [16, 128], strides = [1, 1]} : vector<256x128xbf16> to vector<16x128xbf16>
    %69 = vector.extract_strided_slice %61 {offsets = [112, 0], sizes = [16, 128], strides = [1, 1]} : vector<256x128xbf16> to vector<16x128xbf16>
    %70 = vector.extract_strided_slice %61 {offsets = [128, 0], sizes = [16, 128], strides = [1, 1]} : vector<256x128xbf16> to vector<16x128xbf16>
    %71 = vector.extract_strided_slice %61 {offsets = [144, 0], sizes = [16, 128], strides = [1, 1]} : vector<256x128xbf16> to vector<16x128xbf16>
    %72 = vector.extract_strided_slice %61 {offsets = [160, 0], sizes = [16, 128], strides = [1, 1]} : vector<256x128xbf16> to vector<16x128xbf16>
    %73 = vector.extract_strided_slice %61 {offsets = [176, 0], sizes = [16, 128], strides = [1, 1]} : vector<256x128xbf16> to vector<16x128xbf16>
    %74 = vector.extract_strided_slice %61 {offsets = [192, 0], sizes = [16, 128], strides = [1, 1]} : vector<256x128xbf16> to vector<16x128xbf16>
    %75 = vector.extract_strided_slice %61 {offsets = [208, 0], sizes = [16, 128], strides = [1, 1]} : vector<256x128xbf16> to vector<16x128xbf16>
    %76 = vector.extract_strided_slice %61 {offsets = [224, 0], sizes = [16, 128], strides = [1, 1]} : vector<256x128xbf16> to vector<16x128xbf16>
    %77 = vector.extract_strided_slice %61 {offsets = [240, 0], sizes = [16, 128], strides = [1, 1]} : vector<256x128xbf16> to vector<16x128xbf16>
    %78 = tpu.concatenate %62, %63, %64, %65, %66, %67, %68, %69, %70, %71, %72, %73, %74, %75, %76, %77 in 1 : vector<16x128xbf16>, vector<16x128xbf16>, vector<16x128xbf16>, vector<16x128xbf16>, vector<16x128xbf16>, vector<16x128xbf16>, vector<16x128xbf16>, vector<16x128xbf16>, vector<16x128xbf16>, vector<16x128xbf16>, vector<16x128xbf16>, vector<16x128xbf16>, vector<16x128xbf16>, vector<16x128xbf16>, vector<16x128xbf16>, vector<16x128xbf16> -> vector<16x2048xbf16>
    %c0_24 = arith.constant 0 : index
    %c0_25 = arith.constant 0 : index
    %79 = vector.load %arg7[%c0_24, %c0_25] : memref<2048x256xbf16, #tpu.memory_space<vmem>>, vector<2048x256xbf16>
    %cst_26 = arith.constant dense<0.000000e+00> : vector<16x256xf32>
    %80 = tpu.matmul %78, %79, %cst_26 {dimension_numbers = #tpu.dot_dimension_numbers<[1], [0], [0], [1], [0, 0, 1, 1], [], []>} : vector<16x2048xbf16>, vector<2048x256xbf16>, vector<16x256xf32> -> vector<16x256xf32>
    %cst_27 = arith.constant dense<0.000000e+00> : vector<256xf32>
    %81 = vector.multi_reduction <add>, %80, %cst_27 [0] : vector<16x256xf32> to vector<256xf32>
    %82 = vector.shape_cast %81 : vector<256xf32> to vector<1x256xf32>
    %cst_28 = arith.constant 1.600000e+01 : f32
    %83 = vector.broadcast %cst_28 : f32 to vector<1x256xf32>
    %84 = arith.divf %82, %83 : vector<1x256xf32>
    %85 = vector.broadcast %84 : vector<1x256xf32> to vector<16x256xf32>
    %86 = arith.subf %80, %85 : vector<16x256xf32>
    %87 = arith.mulf %86, %86 : vector<16x256xf32>
    %cst_29 = arith.constant dense<0.000000e+00> : vector<256xf32>
    %88 = vector.multi_reduction <add>, %87, %cst_29 [0] : vector<16x256xf32> to vector<256xf32>
    %89 = vector.shape_cast %88 : vector<256xf32> to vector<1x256xf32>
    %cst_30 = arith.constant 1.600000e+01 : f32
    %90 = vector.broadcast %cst_30 : f32 to vector<1x256xf32>
    %91 = arith.divf %89, %90 : vector<1x256xf32>
    %92 = vector.broadcast %84 : vector<1x256xf32> to vector<16x256xf32>
    %93 = arith.subf %80, %92 : vector<16x256xf32>
    %cst_31 = arith.constant 9.99999974E-6 : f32
    %94 = vector.broadcast %cst_31 : f32 to vector<1x256xf32>
    %95 = arith.addf %91, %94 : vector<1x256xf32>
    %96 = math.rsqrt %95 : vector<1x256xf32>
    %97 = vector.broadcast %96 : vector<1x256xf32> to vector<16x256xf32>
    %98 = arith.mulf %93, %97 : vector<16x256xf32>
    %cst_32 = arith.constant 0.000000e+00 : f32
    %99 = vector.broadcast %cst_32 : f32 to vector<16x256xf32>
    %100 = arith.cmpf oge, %98, %99 : vector<16x256xf32>
    %cst_33 = arith.constant 2.000000e-01 : f32
    %101 = vector.broadcast %cst_33 : f32 to vector<16x256xf32>
    %102 = arith.mulf %101, %98 : vector<16x256xf32>
    %103 = arith.select %100, %98, %102 : vector<16x256xi1>, vector<16x256xf32>
    %104 = arith.truncf %103 : vector<16x256xf32> to vector<16x256xbf16>
    %c0_34 = arith.constant 0 : index
    %c0_35 = arith.constant 0 : index
    %105 = vector.load %arg8[%c0_34, %c0_35] : memref<64x16xbf16, #tpu.memory_space<vmem>>, vector<64x16xbf16>
    %cst_36 = arith.constant dense<0.000000e+00> : vector<64x256xf32>
    %106 = tpu.matmul %105, %104, %cst_36 {dimension_numbers = #tpu.dot_dimension_numbers<[1], [0], [0], [1], [0, 0, 1, 1], [], []>} : vector<64x16xbf16>, vector<16x256xbf16>, vector<64x256xf32> -> vector<64x256xf32>
    %107 = arith.truncf %106 : vector<64x256xf32> to vector<64x256xbf16>
    %108 = vector.extract_strided_slice %107 {offsets = [0, 0], sizes = [4, 256], strides = [1, 1]} : vector<64x256xbf16> to vector<4x256xbf16>
    %109 = vector.extract_strided_slice %107 {offsets = [4, 0], sizes = [4, 256], strides = [1, 1]} : vector<64x256xbf16> to vector<4x256xbf16>
    %110 = vector.extract_strided_slice %107 {offsets = [8, 0], sizes = [4, 256], strides = [1, 1]} : vector<64x256xbf16> to vector<4x256xbf16>
    %111 = vector.extract_strided_slice %107 {offsets = [12, 0], sizes = [4, 256], strides = [1, 1]} : vector<64x256xbf16> to vector<4x256xbf16>
    %112 = vector.extract_strided_slice %107 {offsets = [16, 0], sizes = [4, 256], strides = [1, 1]} : vector<64x256xbf16> to vector<4x256xbf16>
    %113 = vector.extract_strided_slice %107 {offsets = [20, 0], sizes = [4, 256], strides = [1, 1]} : vector<64x256xbf16> to vector<4x256xbf16>
    %114 = vector.extract_strided_slice %107 {offsets = [24, 0], sizes = [4, 256], strides = [1, 1]} : vector<64x256xbf16> to vector<4x256xbf16>
    %115 = vector.extract_strided_slice %107 {offsets = [28, 0], sizes = [4, 256], strides = [1, 1]} : vector<64x256xbf16> to vector<4x256xbf16>
    %116 = vector.extract_strided_slice %107 {offsets = [32, 0], sizes = [4, 256], strides = [1, 1]} : vector<64x256xbf16> to vector<4x256xbf16>
    %117 = vector.extract_strided_slice %107 {offsets = [36, 0], sizes = [4, 256], strides = [1, 1]} : vector<64x256xbf16> to vector<4x256xbf16>
    %118 = vector.extract_strided_slice %107 {offsets = [40, 0], sizes = [4, 256], strides = [1, 1]} : vector<64x256xbf16> to vector<4x256xbf16>
    %119 = vector.extract_strided_slice %107 {offsets = [44, 0], sizes = [4, 256], strides = [1, 1]} : vector<64x256xbf16> to vector<4x256xbf16>
    %120 = vector.extract_strided_slice %107 {offsets = [48, 0], sizes = [4, 256], strides = [1, 1]} : vector<64x256xbf16> to vector<4x256xbf16>
    %121 = vector.extract_strided_slice %107 {offsets = [52, 0], sizes = [4, 256], strides = [1, 1]} : vector<64x256xbf16> to vector<4x256xbf16>
    %122 = vector.extract_strided_slice %107 {offsets = [56, 0], sizes = [4, 256], strides = [1, 1]} : vector<64x256xbf16> to vector<4x256xbf16>
    %123 = vector.extract_strided_slice %107 {offsets = [60, 0], sizes = [4, 256], strides = [1, 1]} : vector<64x256xbf16> to vector<4x256xbf16>
    %124 = tpu.concatenate %108, %109, %110, %111, %112, %113, %114, %115, %116, %117, %118, %119, %120, %121, %122, %123 in 1 : vector<4x256xbf16>, vector<4x256xbf16>, vector<4x256xbf16>, vector<4x256xbf16>, vector<4x256xbf16>, vector<4x256xbf16>, vector<4x256xbf16>, vector<4x256xbf16>, vector<4x256xbf16>, vector<4x256xbf16>, vector<4x256xbf16>, vector<4x256xbf16>, vector<4x256xbf16>, vector<4x256xbf16>, vector<4x256xbf16>, vector<4x256xbf16> -> vector<4x4096xbf16>
    %c0_37 = arith.constant 0 : index
    %c0_38 = arith.constant 0 : index
    %125 = vector.load %arg9[%c0_37, %c0_38] : memref<4096x512xbf16, #tpu.memory_space<vmem>>, vector<4096x512xbf16>
    %cst_39 = arith.constant dense<0.000000e+00> : vector<4x512xf32>
    %126 = tpu.matmul %124, %125, %cst_39 {dimension_numbers = #tpu.dot_dimension_numbers<[1], [0], [0], [1], [0, 0, 1, 1], [], []>} : vector<4x4096xbf16>, vector<4096x512xbf16>, vector<4x512xf32> -> vector<4x512xf32>
    %cst_40 = arith.constant dense<0.000000e+00> : vector<512xf32>
    %127 = vector.multi_reduction <add>, %126, %cst_40 [0] : vector<4x512xf32> to vector<512xf32>
    %128 = vector.shape_cast %127 : vector<512xf32> to vector<1x512xf32>
    %cst_41 = arith.constant 4.000000e+00 : f32
    %129 = vector.broadcast %cst_41 : f32 to vector<1x512xf32>
    %130 = arith.divf %128, %129 : vector<1x512xf32>
    %131 = vector.broadcast %130 : vector<1x512xf32> to vector<4x512xf32>
    %132 = arith.subf %126, %131 : vector<4x512xf32>
    %133 = arith.mulf %132, %132 : vector<4x512xf32>
    %cst_42 = arith.constant dense<0.000000e+00> : vector<512xf32>
    %134 = vector.multi_reduction <add>, %133, %cst_42 [0] : vector<4x512xf32> to vector<512xf32>
    %135 = vector.shape_cast %134 : vector<512xf32> to vector<1x512xf32>
    %cst_43 = arith.constant 4.000000e+00 : f32
    %136 = vector.broadcast %cst_43 : f32 to vector<1x512xf32>
    %137 = arith.divf %135, %136 : vector<1x512xf32>
    %138 = vector.broadcast %130 : vector<1x512xf32> to vector<4x512xf32>
    %139 = arith.subf %126, %138 : vector<4x512xf32>
    %cst_44 = arith.constant 9.99999974E-6 : f32
    %140 = vector.broadcast %cst_44 : f32 to vector<1x512xf32>
    %141 = arith.addf %137, %140 : vector<1x512xf32>
    %142 = math.rsqrt %141 : vector<1x512xf32>
    %143 = vector.broadcast %142 : vector<1x512xf32> to vector<4x512xf32>
    %144 = arith.mulf %139, %143 : vector<4x512xf32>
    %cst_45 = arith.constant 0.000000e+00 : f32
    %145 = vector.broadcast %cst_45 : f32 to vector<4x512xf32>
    %146 = arith.cmpf oge, %144, %145 : vector<4x512xf32>
    %cst_46 = arith.constant 2.000000e-01 : f32
    %147 = vector.broadcast %cst_46 : f32 to vector<4x512xf32>
    %148 = arith.mulf %147, %144 : vector<4x512xf32>
    %149 = arith.select %146, %144, %148 : vector<4x512xi1>, vector<4x512xf32>
    %c0_47 = arith.constant 0 : index
    %c0_48 = arith.constant 0 : index
    %150 = vector.load %arg10[%c0_47, %c0_48] : memref<16x4xbf16, #tpu.memory_space<vmem>>, vector<16x4xbf16>
    %151 = arith.truncf %149 : vector<4x512xf32> to vector<4x512xbf16>
    %cst_49 = arith.constant dense<0.000000e+00> : vector<16x512xf32>
    %152 = tpu.matmul %150, %151, %cst_49 {dimension_numbers = #tpu.dot_dimension_numbers<[1], [0], [0], [1], [0, 0, 1, 1], [], []>} : vector<16x4xbf16>, vector<4x512xbf16>, vector<16x512xf32> -> vector<16x512xf32>
    %c0_50 = arith.constant 0 : index
    %c0_51 = arith.constant 0 : index
    %153 = vector.load %arg11[%c0_50, %c0_51] : memref<16x512xf32, #tpu.memory_space<vmem>>, vector<16x512xf32>
    %154 = arith.mulf %152, %153 : vector<16x512xf32>
    %cst_52 = arith.constant dense<0.000000e+00> : vector<16xf32>
    %155 = vector.multi_reduction <add>, %154, %cst_52 [1] : vector<16x512xf32> to vector<16xf32>
    %156 = vector.shape_cast %155 : vector<16xf32> to vector<16x1xf32>
    %157 = vector.extract_strided_slice %156 {offsets = [0, 0], sizes = [1, 1], strides = [1, 1]} : vector<16x1xf32> to vector<1x1xf32>
    %158 = vector.extract_strided_slice %156 {offsets = [1, 0], sizes = [1, 1], strides = [1, 1]} : vector<16x1xf32> to vector<1x1xf32>
    %159 = arith.addf %157, %158 : vector<1x1xf32>
    %160 = vector.extract_strided_slice %156 {offsets = [2, 0], sizes = [1, 1], strides = [1, 1]} : vector<16x1xf32> to vector<1x1xf32>
    %161 = arith.addf %159, %160 : vector<1x1xf32>
    %162 = vector.extract_strided_slice %156 {offsets = [3, 0], sizes = [1, 1], strides = [1, 1]} : vector<16x1xf32> to vector<1x1xf32>
    %163 = arith.addf %161, %162 : vector<1x1xf32>
    %164 = vector.extract_strided_slice %156 {offsets = [4, 0], sizes = [1, 1], strides = [1, 1]} : vector<16x1xf32> to vector<1x1xf32>
    %165 = arith.addf %163, %164 : vector<1x1xf32>
    %166 = vector.extract_strided_slice %156 {offsets = [5, 0], sizes = [1, 1], strides = [1, 1]} : vector<16x1xf32> to vector<1x1xf32>
    %167 = arith.addf %165, %166 : vector<1x1xf32>
    %168 = vector.extract_strided_slice %156 {offsets = [6, 0], sizes = [1, 1], strides = [1, 1]} : vector<16x1xf32> to vector<1x1xf32>
    %169 = arith.addf %167, %168 : vector<1x1xf32>
    %170 = vector.extract_strided_slice %156 {offsets = [7, 0], sizes = [1, 1], strides = [1, 1]} : vector<16x1xf32> to vector<1x1xf32>
    %171 = arith.addf %169, %170 : vector<1x1xf32>
    %172 = vector.extract_strided_slice %156 {offsets = [8, 0], sizes = [1, 1], strides = [1, 1]} : vector<16x1xf32> to vector<1x1xf32>
    %173 = arith.addf %171, %172 : vector<1x1xf32>
    %174 = vector.extract_strided_slice %156 {offsets = [9, 0], sizes = [1, 1], strides = [1, 1]} : vector<16x1xf32> to vector<1x1xf32>
    %175 = arith.addf %173, %174 : vector<1x1xf32>
    %176 = vector.extract_strided_slice %156 {offsets = [10, 0], sizes = [1, 1], strides = [1, 1]} : vector<16x1xf32> to vector<1x1xf32>
    %177 = arith.addf %175, %176 : vector<1x1xf32>
    %178 = vector.extract_strided_slice %156 {offsets = [11, 0], sizes = [1, 1], strides = [1, 1]} : vector<16x1xf32> to vector<1x1xf32>
    %179 = arith.addf %177, %178 : vector<1x1xf32>
    %180 = vector.extract_strided_slice %156 {offsets = [12, 0], sizes = [1, 1], strides = [1, 1]} : vector<16x1xf32> to vector<1x1xf32>
    %181 = arith.addf %179, %180 : vector<1x1xf32>
    %182 = vector.extract_strided_slice %156 {offsets = [13, 0], sizes = [1, 1], strides = [1, 1]} : vector<16x1xf32> to vector<1x1xf32>
    %183 = arith.addf %181, %182 : vector<1x1xf32>
    %184 = vector.extract_strided_slice %156 {offsets = [14, 0], sizes = [1, 1], strides = [1, 1]} : vector<16x1xf32> to vector<1x1xf32>
    %185 = arith.addf %183, %184 : vector<1x1xf32>
    %186 = vector.extract_strided_slice %156 {offsets = [15, 0], sizes = [1, 1], strides = [1, 1]} : vector<16x1xf32> to vector<1x1xf32>
    %187 = arith.addf %185, %186 : vector<1x1xf32>
    %c0_53 = arith.constant 0 : index
    %c0_54 = arith.constant 0 : index
    %188 = vector.load %arg12[%c0_53, %c0_54] : memref<1x1xf32, #tpu.memory_space<vmem>>, vector<1x1xf32>
    %189 = arith.addf %187, %188 : vector<1x1xf32>
    %c0_55 = arith.constant 0 : index
    %c0_56 = arith.constant 0 : index
    %c0_57 = arith.constant 0 : index
    %190 = vector.load %arg13[%c0_55, %c0_56, %c0_57] : memref<1x1x1xf32, #tpu.memory_space<vmem>>, vector<1x1x1xf32>
    %191 = vector.shape_cast %190 : vector<1x1x1xf32> to vector<1x1xf32>
    %192 = vector.shape_cast %189 : vector<1x1xf32> to vector<1x1x1xf32>
    tpu.vector_store %arg13[%c0_55, %c0_56, %c0_57], %192 {strides = array<i32>} : memref<1x1x1xf32, #tpu.memory_space<vmem>>, vector<1x1x1xf32>,
    return
  }
  func.func @transform_0(%arg0: i32) -> (i32, i32, i32) {
    %c0_i32 = arith.constant 0 : i32
    %c0_i32_0 = arith.constant 0 : i32
    %c0_i32_1 = arith.constant 0 : i32
    return %arg0, %c0_i32, %c0_i32_0 : i32, i32, i32
  }
  func.func @transform_1(%arg0: i32) -> (i32, i32) {
    %c0_i32 = arith.constant 0 : i32
    %c0_i32_0 = arith.constant 0 : i32
    %c0_i32_1 = arith.constant 0 : i32
    return %c0_i32, %c0_i32_0 : i32, i32
  }
  func.func @transform_2(%arg0: i32) -> (i32, i32) {
    %c0_i32 = arith.constant 0 : i32
    %c0_i32_0 = arith.constant 0 : i32
    %c0_i32_1 = arith.constant 0 : i32
    return %c0_i32, %c0_i32_0 : i32, i32
  }
  func.func @transform_3(%arg0: i32) -> (i32, i32) {
    %c0_i32 = arith.constant 0 : i32
    %c0_i32_0 = arith.constant 0 : i32
    %c0_i32_1 = arith.constant 0 : i32
    return %c0_i32, %c0_i32_0 : i32, i32
  }
  func.func @transform_4(%arg0: i32) -> (i32, i32) {
    %c0_i32 = arith.constant 0 : i32
    %c0_i32_0 = arith.constant 0 : i32
    %c0_i32_1 = arith.constant 0 : i32
    return %c0_i32, %c0_i32_0 : i32, i32
  }
  func.func @transform_5(%arg0: i32) -> (i32, i32) {
    %c0_i32 = arith.constant 0 : i32
    %c0_i32_0 = arith.constant 0 : i32
    %c0_i32_1 = arith.constant 0 : i32
    return %c0_i32, %c0_i32_0 : i32, i32
  }
  func.func @transform_6(%arg0: i32) -> (i32, i32) {
    %c0_i32 = arith.constant 0 : i32
    %c0_i32_0 = arith.constant 0 : i32
    %c0_i32_1 = arith.constant 0 : i32
    return %c0_i32, %c0_i32_0 : i32, i32
  }
  func.func @transform_7(%arg0: i32) -> (i32, i32) {
    %c0_i32 = arith.constant 0 : i32
    %c0_i32_0 = arith.constant 0 : i32
    %c0_i32_1 = arith.constant 0 : i32
    return %c0_i32, %c0_i32_0 : i32, i32
  }
  func.func @transform_8(%arg0: i32) -> (i32, i32) {
    %c0_i32 = arith.constant 0 : i32
    %c0_i32_0 = arith.constant 0 : i32
    %c0_i32_1 = arith.constant 0 : i32
    return %c0_i32, %c0_i32_0 : i32, i32
  }
  func.func @transform_9(%arg0: i32) -> (i32, i32) {
    %c0_i32 = arith.constant 0 : i32
    %c0_i32_0 = arith.constant 0 : i32
    %c0_i32_1 = arith.constant 0 : i32
    return %c0_i32, %c0_i32_0 : i32, i32
  }
  func.func @transform_10(%arg0: i32) -> (i32, i32) {
    %c0_i32 = arith.constant 0 : i32
    %c0_i32_0 = arith.constant 0 : i32
    %c0_i32_1 = arith.constant 0 : i32
    return %c0_i32, %c0_i32_0 : i32, i32
  }
  func.func @transform_11(%arg0: i32) -> (i32, i32) {
    %c0_i32 = arith.constant 0 : i32
    %c0_i32_0 = arith.constant 0 : i32
    %c0_i32_1 = arith.constant 0 : i32
    return %c0_i32, %c0_i32_0 : i32, i32
  }
  func.func @transform_12(%arg0: i32) -> (i32, i32, i32) {
    %c0_i32 = arith.constant 0 : i32
    %c0_i32_0 = arith.constant 0 : i32
    %c0_i32_1 = arith.constant 0 : i32
    return %arg0, %c0_i32, %c0_i32_0 : i32, i32, i32
  }
}

</mosaic_0001>

<llo_original>
// kernel: forward.1
$region0: #{forward.1}
  #allocation0 [shape = 'u32[]', space=smem, size = 0x4, offset = 0x4, fixed_abs, tag = 'smem constant byte address 0x4 - core index']
  #allocation1 [shape = 'u32[144,128]{1,0:T(1,128)}', space=vmem, size = 0x12000, scoped, tag = 'internal scratch']
  #allocation2 [shape = 'f32[1,1]{1,0:T(1,128)S(1)}', space=vmem, size = 0x200, scoped, tag = 'scoped memory for forward.1']
  %s0 = inlined_call_operand.vmem [shape: bf16[2,256,48], index: 0, kind: input, shape index: {}]
  %s1 = inlined_call_operand.vmem [shape: bf16[48,64], index: 1, kind: input, shape index: {}]
  %s2 = inlined_call_operand.vmem [shape: f32[1,64], index: 2, kind: input, shape index: {}]
  %s3 = inlined_call_operand.vmem [shape: bf16[1024,256], index: 3, kind: input, shape index: {}]
  %s4 = inlined_call_operand.vmem [shape: bf16[1024,128], index: 4, kind: input, shape index: {}]
  %s5 = inlined_call_operand.vmem [shape: bf16[256,64], index: 5, kind: input, shape index: {}]
  %s6 = inlined_call_operand.vmem [shape: bf16[2048,256], index: 6, kind: input, shape index: {}]
  %s7 = inlined_call_operand.vmem [shape: bf16[64,16], index: 7, kind: input, shape index: {}]
  %s8 = inlined_call_operand.vmem [shape: bf16[4096,512], index: 8, kind: input, shape index: {}]
  %s9 = inlined_call_operand.vmem [shape: bf16[16,4], index: 9, kind: input, shape index: {}]
  %s10 = inlined_call_operand.vmem [shape: f32[16,512], index: 10, kind: input, shape index: {}]
  %s11 = inlined_call_operand.<no memory space> [shape: f32[1,1], index: 11, kind: input, shape index: {}]
  %s12 = inlined_call_operand.vmem [shape: f32[2,1,1], index: 12, kind: output, shape index: {}]
  %s13 = sld [smem:[#allocation0]]
  $region81: #{forward.1} parent=0
    _
  %s15 = ssub.s32 1, %s13
  %s16 = scalar_select 0, %s15, %s13
  %v17 = vstv %s11
  %18 = vst [vmem:[#allocation2] sm:$0x1] %v17
  loop: start=0, step=1, limit=4
  $region2: #{forward.1} parent=0 // loop_pre_header
    _
  $region3: #{forward.1} parent=0 // loop_header
    %s20 = sphi 0, %s24
    %p21 = scmp.ge.s32.totalorder %s20, 4
    %s30 = sphi 0, %s32
    %s33 = sphi 0, %s30
    %s34 = sphi 0, %s33
    %s50 = sphi 0, %s34
    %s54 = sphi 0, %s54
    %s56 = sphi 0, %s54
    %s57 = sphi 0, %s56
    %s71 = sphi 0, %s57
    %s75 = sphi 0, %s75
    %s77 = sphi 0, %s75
    %s78 = sphi 0, %s77
    %s92 = sphi 0, %s78
    %s96 = sphi 0, %s96
    %s98 = sphi 0, %s96
    %s99 = sphi 0, %s98
    %s113 = sphi 0, %s99
    %s117 = sphi 0, %s117
    %s119 = sphi 0, %s117
    %s120 = sphi 0, %s119
    %s134 = sphi 0, %s120
    %s138 = sphi 0, %s138
    %s140 = sphi 0, %s138
    %s141 = sphi 0, %s140
    %s155 = sphi 0, %s141
    %s159 = sphi 0, %s159
    %s161 = sphi 0, %s159
    %s162 = sphi 0, %s161
    %s176 = sphi 0, %s162
    %s180 = sphi 0, %s180
    %s182 = sphi 0, %s180
    %s183 = sphi 0, %s182
    %s197 = sphi 0, %s183
    %s201 = sphi 0, %s201
    %s203 = sphi 0, %s201
    %s204 = sphi 0, %s203
    %s218 = sphi 0, %s204
    %s222 = sphi 0, %s222
    %s224 = sphi 0, %s222
    %s225 = sphi 0, %s224
    %s239 = sphi 0, %s225
    %s243 = sphi 0, %s243
    %s245 = sphi 0, %s243
    %s246 = sphi 0, %s245
    %s260 = sphi 0, %s246
    %s264 = sphi 0, %s264
    %s266 = sphi 0, %s264
    %s267 = sphi 0, %s266
    %s281 = sphi 0, %s267
    %s287 = sphi 0, %s289
    %s290 = sphi 0, %s287
    %s291 = sphi 0, %s290
    %s307 = sphi 0, %s291
  $region4: #{forward.1} parent=0 // loop_header_branch
    %23 = sbr.rel (%p21) target = $region8
  $region5: #{forward.1} parent=0 // loop_body
    %s25 = ssub.s32 %s20, 1
    %s26 = ssub.s32 %s20, 2
    %s27 = sadd.s32 %s20, 1
    %s28 = ssub.s32 %s20, %s27
    %p29 = scmp.eq.s32.totalorder %s28, 0
    %s31 = sadd.s32 %s30, 1
    %s32 = scalar_select %p29, %s30, %s31
    %p35 = pneg %p29
    %p36 = scmp.eq.s32.totalorder %s20, 1
    %p37 = por %p35, %p36
    %p38 = scmp.ne.s32.totalorder %s30, %s33
    %p39 = scmp.eq.s32.totalorder %s20, 0
    %p40 = por %p38, %p39
    %p41 = scmp.ne.s32.totalorder %s30, %s33
    %p42 = scmp.eq.s32.totalorder %s25, 1
    %p43 = por %p41, %p42
    %p44 = scmp.ne.s32.totalorder %s33, %s34
    %p45 = scmp.eq.s32.totalorder %s25, 0
    %p46 = por %p44, %p45
    %p47 = scmp.ne.s32.totalorder %s33, %s34
    %p48 = scmp.eq.s32.totalorder %s26, 1
    %p49 = por %p47, %p48
    %p51 = scmp.ne.s32.totalorder %s34, %s50
    %p52 = scmp.eq.s32.totalorder %s26, 0
    %p53 = por %p51, %p52
    %s55 = sadd.s32 %s54, 1
    %p58 = scmp.eq.s32.totalorder %s20, 1
    %p59 = scmp.ne.s32.totalorder %s54, %s56
    %p60 = scmp.eq.s32.totalorder %s20, 0
    %p61 = por %p59, %p60
    %p62 = scmp.ne.s32.totalorder %s54, %s56
    %p63 = scmp.eq.s32.totalorder %s25, 1
    %p64 = por %p62, %p63
    %p65 = scmp.ne.s32.totalorder %s56, %s57
    %p66 = scmp.eq.s32.totalorder %s25, 0
    %p67 = por %p65, %p66
    %p68 = scmp.ne.s32.totalorder %s56, %s57
    %p69 = scmp.eq.s32.totalorder %s26, 1
    %p70 = por %p68, %p69
    %p72 = scmp.ne.s32.totalorder %s57, %s71
    %p73 = scmp.eq.s32.totalorder %s26, 0
    %p74 = por %p72, %p73
    %s76 = sadd.s32 %s75, 1
    %p79 = scmp.eq.s32.totalorder %s20, 1
    %p80 = scmp.ne.s32.totalorder %s75, %s77
    %p81 = scmp.eq.s32.totalorder %s20, 0
    %p82 = por %p80, %p81
    %p83 = scmp.ne.s32.totalorder %s75, %s77
    %p84 = scmp.eq.s32.totalorder %s25, 1
    %p85 = por %p83, %p84
    %p86 = scmp.ne.s32.totalorder %s77, %s78
    %p87 = scmp.eq.s32.totalorder %s25, 0
    %p88 = por %p86, %p87
    %p89 = scmp.ne.s32.totalorder %s77, %s78
    %p90 = scmp.eq.s32.totalorder %s26, 1
    %p91 = por %p89, %p90
    %p93 = scmp.ne.s32.totalorder %s78, %s92
    %p94 = scmp.eq.s32.totalorder %s26, 0
    %p95 = por %p93, %p94
    %s97 = sadd.s32 %s96, 1
    %p100 = scmp.eq.s32.totalorder %s20, 1
    %p101 = scmp.ne.s32.totalorder %s96, %s98
    %p102 = scmp.eq.s32.totalorder %s20, 0
    %p103 = por %p101, %p102
    %p104 = scmp.ne.s32.totalorder %s96, %s98
    %p105 = scmp.eq.s32.totalorder %s25, 1
    %p106 = por %p104, %p105
    %p107 = scmp.ne.s32.totalorder %s98, %s99
    %p108 = scmp.eq.s32.totalorder %s25, 0
    %p109 = por %p107, %p108
    %p110 = scmp.ne.s32.totalorder %s98, %s99
    %p111 = scmp.eq.s32.totalorder %s26, 1
    %p112 = por %p110, %p111
    %p114 = scmp.ne.s32.totalorder %s99, %s113
    %p115 = scmp.eq.s32.totalorder %s26, 0
    %p116 = por %p114, %p115
    %s118 = sadd.s32 %s117, 1
    %p121 = scmp.eq.s32.totalorder %s20, 1
    %p122 = scmp.ne.s32.totalorder %s117, %s119
    %p123 = scmp.eq.s32.totalorder %s20, 0
    %p124 = por %p122, %p123
    %p125 = scmp.ne.s32.totalorder %s117, %s119
    %p126 = scmp.eq.s32.totalorder %s25, 1
    %p127 = por %p125, %p126
    %p128 = scmp.ne.s32.totalorder %s119, %s120
    %p129 = scmp.eq.s32.totalorder %s25, 0
    %p130 = por %p128, %p129
    %p131 = scmp.ne.s32.totalorder %s119, %s120
    %p132 = scmp.eq.s32.totalorder %s26, 1
    %p133 = por %p131, %p132
    %p135 = scmp.ne.s32.totalorder %s120, %s134
    %p136 = scmp.eq.s32.totalorder %s26, 0
    %p137 = por %p135, %p136
    %s139 = sadd.s32 %s138, 1
    %p142 = scmp.eq.s32.totalorder %s20, 1
    %p143 = scmp.ne.s32.totalorder %s138, %s140
    %p144 = scmp.eq.s32.totalorder %s20, 0
    %p145 = por %p143, %p144
    %p146 = scmp.ne.s32.totalorder %s138, %s140
    %p147 = scmp.eq.s32.totalorder %s25, 1
    %p148 = por %p146, %p147
    %p149 = scmp.ne.s32.totalorder %s140, %s141
    %p150 = scmp.eq.s32.totalorder %s25, 0
    %p151 = por %p149, %p150
    %p152 = scmp.ne.s32.totalorder %s140, %s141
    %p153 = scmp.eq.s32.totalorder %s26, 1
    %p154 = por %p152, %p153
    %p156 = scmp.ne.s32.totalorder %s141, %s155
    %p157 = scmp.eq.s32.totalorder %s26, 0
    %p158 = por %p156, %p157
    %s160 = sadd.s32 %s159, 1
    %p163 = scmp.eq.s32.totalorder %s20, 1
    %p164 = scmp.ne.s32.totalorder %s159, %s161
    %p165 = scmp.eq.s32.totalorder %s20, 0
    %p166 = por %p164, %p165
    %p167 = scmp.ne.s32.totalorder %s159, %s161
    %p168 = scmp.eq.s32.totalorder %s25, 1
    %p169 = por %p167, %p168
    %p170 = scmp.ne.s32.totalorder %s161, %s162
    %p171 = scmp.eq.s32.totalorder %s25, 0
    %p172 = por %p170, %p171
    %p173 = scmp.ne.s32.totalorder %s161, %s162
    %p174 = scmp.eq.s32.totalorder %s26, 1
    %p175 = por %p173, %p174
    %p177 = scmp.ne.s32.totalorder %s162, %s176
    %p178 = scmp.eq.s32.totalorder %s26, 0
    %p179 = por %p177, %p178
    %s181 = sadd.s32 %s180, 1
    %p184 = scmp.eq.s32.totalorder %s20, 1
    %p185 = scmp.ne.s32.totalorder %s180, %s182
    %p186 = scmp.eq.s32.totalorder %s20, 0
    %p187 = por %p185, %p186
    %p188 = scmp.ne.s32.totalorder %s180, %s182
    %p189 = scmp.eq.s32.totalorder %s25, 1
    %p190 = por %p188, %p189
    %p191 = scmp.ne.s32.totalorder %s182, %s183
    %p192 = scmp.eq.s32.totalorder %s25, 0
    %p193 = por %p191, %p192
    %p194 = scmp.ne.s32.totalorder %s182, %s183
    %p195 = scmp.eq.s32.totalorder %s26, 1
    %p196 = por %p194, %p195
    %p198 = scmp.ne.s32.totalorder %s183, %s197
    %p199 = scmp.eq.s32.totalorder %s26, 0
    %p200 = por %p198, %p199
    %s202 = sadd.s32 %s201, 1
    %p205 = scmp.eq.s32.totalorder %s20, 1
    %p206 = scmp.ne.s32.totalorder %s201, %s203
    %p207 = scmp.eq.s32.totalorder %s20, 0
    %p208 = por %p206, %p207
    %p209 = scmp.ne.s32.totalorder %s201, %s203
    %p210 = scmp.eq.s32.totalorder %s25, 1
    %p211 = por %p209, %p210
    %p212 = scmp.ne.s32.totalorder %s203, %s204
    %p213 = scmp.eq.s32.totalorder %s25, 0
    %p214 = por %p212, %p213
    %p215 = scmp.ne.s32.totalorder %s203, %s204
    %p216 = scmp.eq.s32.totalorder %s26, 1
    %p217 = por %p215, %p216
    %p219 = scmp.ne.s32.totalorder %s204, %s218
    %p220 = scmp.eq.s32.totalorder %s26, 0
    %p221 = por %p219, %p220
    %s223 = sadd.s32 %s222, 1
    %p226 = scmp.eq.s32.totalorder %s20, 1
    %p227 = scmp.ne.s32.totalorder %s222, %s224
    %p228 = scmp.eq.s32.totalorder %s20, 0
    %p229 = por %p227, %p228
    %p230 = scmp.ne.s32.totalorder %s222, %s224
    %p231 = scmp.eq.s32.totalorder %s25, 1
    %p232 = por %p230, %p231
    %p233 = scmp.ne.s32.totalorder %s224, %s225
    %p234 = scmp.eq.s32.totalorder %s25, 0
    %p235 = por %p233, %p234
    %p236 = scmp.ne.s32.totalorder %s224, %s225
    %p237 = scmp.eq.s32.totalorder %s26, 1
    %p238 = por %p236, %p237
    %p240 = scmp.ne.s32.totalorder %s225, %s239
    %p241 = scmp.eq.s32.totalorder %s26, 0
    %p242 = por %p240, %p241
    %s244 = sadd.s32 %s243, 1
    %p247 = scmp.eq.s32.totalorder %s20, 1
    %p248 = scmp.ne.s32.totalorder %s243, %s245
    %p249 = scmp.eq.s32.totalorder %s20, 0
    %p250 = por %p248, %p249
    %p251 = scmp.ne.s32.totalorder %s243, %s245
    %p252 = scmp.eq.s32.totalorder %s25, 1
    %p253 = por %p251, %p252
    %p254 = scmp.ne.s32.totalorder %s245, %s246
    %p255 = scmp.eq.s32.totalorder %s25, 0
    %p256 = por %p254, %p255
    %p257 = scmp.ne.s32.totalorder %s245, %s246
    %p258 = scmp.eq.s32.totalorder %s26, 1
    %p259 = por %p257, %p258
    %p261 = scmp.ne.s32.totalorder %s246, %s260
    %p262 = scmp.eq.s32.totalorder %s26, 0
    %p263 = por %p261, %p262
    %s265 = sadd.s32 %s264, 1
    %p268 = scmp.eq.s32.totalorder %s20, 1
    %p269 = scmp.ne.s32.totalorder %s264, %s266
    %p270 = scmp.eq.s32.totalorder %s20, 0
    %p271 = por %p269, %p270
    %p272 = scmp.ne.s32.totalorder %s264, %s266
    %p273 = scmp.eq.s32.totalorder %s25, 1
    %p274 = por %p272, %p273
    %p275 = scmp.ne.s32.totalorder %s266, %s267
    %p276 = scmp.eq.s32.totalorder %s25, 0
    %p277 = por %p275, %p276
    %p278 = scmp.ne.s32.totalorder %s266, %s267
    %p279 = scmp.eq.s32.totalorder %s26, 1
    %p280 = por %p278, %p279
    %p282 = scmp.ne.s32.totalorder %s267, %s281
    %p283 = scmp.eq.s32.totalorder %s26, 0
    %p284 = por %p282, %p283
    %s285 = ssub.s32 %s20, %s27
    %p286 = scmp.eq.s32.totalorder %s285, 0
    %s288 = sadd.s32 %s287, 1
    %s289 = scalar_select %p286, %s287, %s288
    %p292 = pneg %p286
    %p293 = scmp.eq.s32.totalorder %s20, 1
    %p294 = por %p292, %p293
    %p295 = scmp.ne.s32.totalorder %s287, %s290
    %p296 = scmp.eq.s32.totalorder %s20, 0
    %p297 = por %p295, %p296
    %p298 = scmp.ne.s32.totalorder %s287, %s290
    %p299 = scmp.eq.s32.totalorder %s25, 1
    %p300 = por %p298, %p299
    %p301 = scmp.ne.s32.totalorder %s290, %s291
    %p302 = scmp.eq.s32.totalorder %s25, 0
    %p303 = por %p301, %p302
    %p304 = scmp.ne.s32.totalorder %s290, %s291
    %p305 = scmp.eq.s32.totalorder %s26, 1
    %p306 = por %p304, %p305
    %p308 = scmp.ne.s32.totalorder %s291, %s307
    %p309 = scmp.eq.s32.totalorder %s26, 0
    %p310 = por %p308, %p309
    %p311 = scmp.le.s32.totalorder 1, %s20
    %p312 = scmp.lt.s32.totalorder %s20, 3
    %p313 = pnand %p311, %p312
    %p314 = pneg %p313
    // Predicated region
    $region9: #{forward.1} parent=5 // pred_check
      _
    $region10: #{forward.1} parent=5 // pred_check_branch
      %316 = sbr.rel (%p313) target = $region12
    $region11: #{forward.1} parent=5 // pred_region
      %s317 = ssub.s32 %s20, 1
      // Predicated region
      $region13: #{forward.1} parent=11 // pred_check
        %p318 = pneg %p67
      $region14: #{forward.1} parent=11 // pred_check_branch
        %320 = sbr.rel (%p318) target = $region16
      $region15: #{forward.1} parent=11 // pred_region
        _
      $region16: #{forward.1} parent=11 // pred_fallthru
        _
      // Predicated region
      $region17: #{forward.1} parent=11 // pred_check
        %p321 = pneg %p88
      $region18: #{forward.1} parent=11 // pred_check_branch
        %323 = sbr.rel (%p321) target = $region20
      $region19: #{forward.1} parent=11 // pred_region
        _
      $region20: #{forward.1} parent=11 // pred_fallthru
        _
      // Predicated region
      $region21: #{forward.1} parent=11 // pred_check
        %p324 = pneg %p109
      $region22: #{forward.1} parent=11 // pred_check_branch
        %326 = sbr.rel (%p324) target = $region24
      $region23: #{forward.1} parent=11 // pred_region
        _
      $region24: #{forward.1} parent=11 // pred_fallthru
        _
      // Predicated region
      $region25: #{forward.1} parent=11 // pred_check
        %p327 = pneg %p130
      $region26: #{forward.1} parent=11 // pred_check_branch
        %329 = sbr.rel (%p327) target = $region28
      $region27: #{forward.1} parent=11 // pred_region
        _
      $region28: #{forward.1} parent=11 // pred_fallthru
        _
      // Predicated region
      $region29: #{forward.1} parent=11 // pred_check
        %p330 = pneg %p151
      $region30: #{forward.1} parent=11 // pred_check_branch
        %332 = sbr.rel (%p330) target = $region32
      $region31: #{forward.1} parent=11 // pred_region
        _
      $region32: #{forward.1} parent=11 // pred_fallthru
        _
      // Predicated region
      $region33: #{forward.1} parent=11 // pred_check
        %p333 = pneg %p172
      $region34: #{forward.1} parent=11 // pred_check_branch
        %335 = sbr.rel (%p333) target = $region36
      $region35: #{forward.1} parent=11 // pred_region
        _
      $region36: #{forward.1} parent=11 // pred_fallthru
        _
      // Predicated region
      $region37: #{forward.1} parent=11 // pred_check
        %p336 = pneg %p193
      $region38: #{forward.1} parent=11 // pred_check_branch
        %338 = sbr.rel (%p336) target = $region40
      $region39: #{forward.1} parent=11 // pred_region
        _
      $region40: #{forward.1} parent=11 // pred_fallthru
        _
      // Predicated region
      $region41: #{forward.1} parent=11 // pred_check
        %p339 = pneg %p214
      $region42: #{forward.1} parent=11 // pred_check_branch
        %341 = sbr.rel (%p339) target = $region44
      $region43: #{forward.1} parent=11 // pred_region
        _
      $region44: #{forward.1} parent=11 // pred_fallthru
        _
      // Predicated region
      $region45: #{forward.1} parent=11 // pred_check
        %p342 = pneg %p235
      $region46: #{forward.1} parent=11 // pred_check_branch
        %344 = sbr.rel (%p342) target = $region48
      $region47: #{forward.1} parent=11 // pred_region
        _
      $region48: #{forward.1} parent=11 // pred_fallthru
        _
      // Predicated region
      $region49: #{forward.1} parent=11 // pred_check
        %p345 = pneg %p256
      $region50: #{forward.1} parent=11 // pred_check_branch
        %347 = sbr.rel (%p345) target = $region52
      $region51: #{forward.1} parent=11 // pred_region
        _
      $region52: #{forward.1} parent=11 // pred_fallthru
        _
      // Predicated region
      $region53: #{forward.1} parent=11 // pred_check
        %p348 = pneg %p277
      $region54: #{forward.1} parent=11 // pred_check_branch
        %350 = sbr.rel (%p348) target = $region56
      $region55: #{forward.1} parent=11 // pred_region
        _
      $region56: #{forward.1} parent=11 // pred_fallthru
        _
    $region12: #{forward.1} parent=5 // pred_fallthru
      _
    %p351 = scmp.lt.s32.totalorder %s20, 2
    // Predicated region
    $region57: #{forward.1} parent=5 // pred_check
      %p352 = pneg %p351
    $region58: #{forward.1} parent=5 // pred_check_branch
      %354 = sbr.rel (%p352) target = $region60
    $region59: #{forward.1} parent=5 // pred_region
      // Predicated region
      $region61: #{forward.1} parent=59 // pred_check
        %p355 = pneg %p40
      $region62: #{forward.1} parent=59 // pred_check_branch
        %357 = sbr.rel (%p355) target = $region64
      $region63: #{forward.1} parent=59 // pred_region
        %p358 = scmp.lt.s32.totalorder %s20, 1
        %s359 = scalar_select %p358, %s20, 1
        %s360 = smul.addr %s359, 32
        %s361 = smul.addr %s360, 4
        %s362 = scalar_lea.vmem %s0, %s361
      $region64: #{forward.1} parent=59 // pred_fallthru
        _
    $region60: #{forward.1} parent=5 // pred_fallthru
      _
    %p363 = scmp.le.s32.totalorder 1, %s20
    %p364 = scmp.lt.s32.totalorder %s20, 3
    %p365 = pnand %p363, %p364
    %p366 = pneg %p365
    // Predicated region
    $region65: #{forward.1} parent=5 // pred_check
      _
    $region66: #{forward.1} parent=5 // pred_check_branch
      %368 = sbr.rel (%p365) target = $region68
    $region67: #{forward.1} parent=5 // pred_region
      %s369 = ssub.s32 %s20, 1
      %p370 = scmp.lt.s32.totalorder %s25, 1
      %s371 = scalar_select %p370, %s25, 1
      %s372 = smul.addr %s371, 32
      %s373 = smul.addr %s372, 4
      %s374 = scalar_lea.vmem %s0, %s373
      %p375 = pneg %p46
      %p376 = pneg %p43
      %p377 = pneg %p67
      %p378 = pneg %p64
      %p379 = pneg %p88
      %p380 = pneg %p85
      %p381 = pneg %p109
      %p382 = pneg %p106
      %p383 = pneg %p130
      %p384 = pneg %p127
      %p385 = pneg %p151
      %p386 = pneg %p148
      %p387 = pneg %p172
      %p388 = pneg %p169
      %p389 = pneg %p193
      %p390 = pneg %p190
      %p391 = pneg %p214
      %p392 = pneg %p211
      %p393 = pneg %p235
      %p394 = pneg %p232
      %p395 = pneg %p256
      %p396 = pneg %p253
      %p397 = pneg %p277
      %p398 = pneg %p274
      %p399 = pneg %p303
      %p400 = pneg %p300
      %p401 = scmp.lt.s32.totalorder %s25, 1
      %s402 = scalar_select %p401, %s25, 1
      %s403 = scalar_lea.vmem %s12, %s402
      %p404 = scmp.lt.s32.totalorder %s25, 1
      %s405 = scalar_select %p404, %s25, 1
      %s406 = smul.addr %s405, 32
      %s407 = smul.addr %s406, 4
      %s408 = scalar_lea.vmem %s0, %s407
      %p409 = scmp.lt.s32.totalorder %s25, 1
      %s410 = scalar_select %p409, %s25, 1
      %s411 = scalar_lea.vmem %s12, %s410
      %v413 = vld [vmem:[%s408] sm:$0xf]
      %v414 = vld [vmem:[%s408 + $0x4] sm:$0xf]
      %v415 = vld [vmem:[%s408 + $0x8] sm:$0xf]
      %v416 = vld [vmem:[%s408 + $0xc] sm:$0xf]
      %v417 = vld [vmem:[%s408 + $0x10] sm:$0xf]
      %v418 = vld [vmem:[%s408 + $0x14] sm:$0xf]
      %v419 = vld [vmem:[%s408 + $0x18] sm:$0xf]
      %v420 = vld [vmem:[%s408 + $0x1c] sm:$0xf]
      %v421 = vld [vmem:[%s408 + $0x20] sm:$0xf]
      %v422 = vld [vmem:[%s408 + $0x24] sm:$0xf]
      %v423 = vld [vmem:[%s408 + $0x28] sm:$0xf]
      %v424 = vld [vmem:[%s408 + $0x2c] sm:$0xf]
      %v425 = vld [vmem:[%s408 + $0x30] sm:$0xf]
      %v426 = vld [vmem:[%s408 + $0x34] sm:$0xf]
      %v427 = vld [vmem:[%s408 + $0x38] sm:$0xf]
      %v428 = vld [vmem:[%s408 + $0x3c] sm:$0xf]
      %v429 = vld [vmem:[%s408 + $0x40] sm:$0xf]
      %v430 = vld [vmem:[%s408 + $0x44] sm:$0xf]
      %v431 = vld [vmem:[%s408 + $0x48] sm:$0xf]
      %v432 = vld [vmem:[%s408 + $0x4c] sm:$0xf]
      %v433 = vld [vmem:[%s408 + $0x50] sm:$0xf]
      %v434 = vld [vmem:[%s408 + $0x54] sm:$0xf]
      %v435 = vld [vmem:[%s408 + $0x58] sm:$0xf]
      %v436 = vld [vmem:[%s408 + $0x5c] sm:$0xf]
      %v437 = vld [vmem:[%s408 + $0x60] sm:$0xf]
      %v438 = vld [vmem:[%s408 + $0x64] sm:$0xf]
      %v439 = vld [vmem:[%s408 + $0x68] sm:$0xf]
      %v440 = vld [vmem:[%s408 + $0x6c] sm:$0xf]
      %v441 = vld [vmem:[%s408 + $0x70] sm:$0xf]
      %v442 = vld [vmem:[%s408 + $0x74] sm:$0xf]
      %v443 = vld [vmem:[%s408 + $0x78] sm:$0xf]
      %v444 = vld [vmem:[%s408 + $0x7c] sm:$0xf]
      %v445 = vld [vmem:[%s1] sm:$0xf]
      %v446 = vld [vmem:[%s1 + $0x4] sm:$0xf]
      %v447 = vld [vmem:[%s1 + $0x8] sm:$0xf]
      %v448 = vld [vmem:[%s1 + $0xc] sm:$0xf]
      %v449 = vld [vmem:[%s1 + $0x10] sm:$0xf]
      %v450 = vld [vmem:[%s1 + $0x14] sm:$0xf]
      %v451 = vld [vmem:[%s2] sm:$0x1]
      %v453 = vlaneseq
      %v454 = vshrl.u32 %v453, 7
      %v455 = vsub.s32 0, %v454
      %v456 = vrot.slane %v451, %v455
      %v490 = vunpack.c.l.b16 %v413
      %v491 = vunpack.c.l.b16 %v414
      %v492 = vunpack.c.l.b16 %v415
      %v493 = vunpack.c.l.b16 %v416
      %v494 = vunpack.c.l.b16 %v417
      %v495 = vunpack.c.l.b16 %v418
      %v496 = vunpack.c.l.b16 %v419
      %v497 = vunpack.c.l.b16 %v420
      %v498 = vunpack.c.l.b16 %v421
      %v499 = vunpack.c.l.b16 %v422
      %v500 = vunpack.c.l.b16 %v423
      %v501 = vunpack.c.l.b16 %v424
      %v502 = vunpack.c.l.b16 %v425
      %v503 = vunpack.c.l.b16 %v426
      %v504 = vunpack.c.l.b16 %v427
      %v505 = vunpack.c.l.b16 %v428
      %v506 = vunpack.c.l.b16 %v429
      %v507 = vunpack.c.l.b16 %v430
      %v508 = vunpack.c.l.b16 %v431
      %v509 = vunpack.c.l.b16 %v432
      %v510 = vunpack.c.l.b16 %v433
      %v511 = vunpack.c.l.b16 %v434
      %v512 = vunpack.c.l.b16 %v435
      %v513 = vunpack.c.l.b16 %v436
      %v514 = vunpack.c.l.b16 %v437
      %v515 = vunpack.c.l.b16 %v438
      %v516 = vunpack.c.l.b16 %v439
      %v517 = vunpack.c.l.b16 %v440
      %v518 = vunpack.c.l.b16 %v441
      %v519 = vunpack.c.l.b16 %v442
      %v520 = vunpack.c.l.b16 %v443
      %v521 = vunpack.c.l.b16 %v444
      %v522 = vpack.c.b16 %v491, %v490
      %v523 = vpack.c.b16 %v493, %v492
      %v524 = vpack.c.b16 %v495, %v494
      %v525 = vpack.c.b16 %v497, %v496
      %v526 = vpack.c.b16 %v499, %v498
      %v527 = vpack.c.b16 %v501, %v500
      %v528 = vpack.c.b16 %v503, %v502
      %v529 = vpack.c.b16 %v505, %v504
      %v530 = vpack.c.b16 %v507, %v506
      %v531 = vpack.c.b16 %v509, %v508
      %v532 = vpack.c.b16 %v511, %v510
      %v533 = vpack.c.b16 %v513, %v512
      %v534 = vpack.c.b16 %v515, %v514
      %v535 = vpack.c.b16 %v517, %v516
      %v536 = vpack.c.b16 %v519, %v518
      %v537 = vpack.c.b16 %v521, %v520
      %v544 = vunpack.c.l.b16 %v445
      %v545 = vunpack.c.l.b16 %v446
      %v546 = vunpack.c.l.b16 %v447
      %v547 = vunpack.c.l.b16 %v448
      %v548 = vunpack.c.l.b16 %v449
      %v549 = vunpack.c.l.b16 %v450
      %v550 = vpack.c.b16 %v545, %v544
      %v551 = vpack.c.b16 %v547, %v546
      %v552 = vpack.c.b16 %v549, %v548
      %vm556 = vcmask 392192
      %v558 = vsel %vm556, %v522, 0
      %v561 = vsel %vm556, %v523, 0
      %v564 = vsel %vm556, %v524, 0
      %v567 = vsel %vm556, %v525, 0
      %v570 = vsel %vm556, %v526, 0
      %v573 = vsel %vm556, %v527, 0
      %v576 = vsel %vm556, %v528, 0
      %v579 = vsel %vm556, %v529, 0
      %v582 = vsel %vm556, %v530, 0
      %v585 = vsel %vm556, %v531, 0
      %v588 = vsel %vm556, %v532, 0
      %v591 = vsel %vm556, %v533, 0
      %v594 = vsel %vm556, %v534, 0
      %v597 = vsel %vm556, %v535, 0
      %v600 = vsel %vm556, %v536, 0
      %v603 = vsel %vm556, %v537, 0
      %605 = vmatprep.subr.bf16.mxu0 0
      %606 = vmatpush1.bf16.msra.mxu0 %v550
      %607 = vmatprep.subr.bf16.mxu0 0
      %608 = vmatpush1.bf16.msra.mxu0 %v551
      %609 = vmatprep.subr.bf16.mxu0 0
      %610 = vmatpush1.bf16.msra.mxu0 %v552
      %611 = vmatprep.subr.bf16.mxu0 0
      %612 = vmatpush1.bf16.msra.mxu0 0
      %613 = vmatprep.subr.bf16.mxu0 0
      %614 = vmatpush1.bf16.msra.mxu0 0
      %615 = vmatprep.subr.bf16.mxu0 0
      %616 = vmatpush1.bf16.msra.mxu0 0
      %617 = vmatprep.subr.bf16.mxu0 0
      %618 = vmatpush1.bf16.msra.mxu0 0
      %619 = vmatprep.subr.bf16.mxu0 0
      %620 = vmatpush1.bf16.msra.mxu0 0
      %621 = vmatprep.subr.bf16.mxu0 0
      %622 = vmatpush1.bf16.msra.mxu0 0
      %623 = vmatprep.subr.bf16.mxu0 0
      %624 = vmatpush1.bf16.msra.mxu0 0
      %625 = vmatprep.subr.bf16.mxu0 0
      %626 = vmatpush1.bf16.msra.mxu0 0
      %627 = vmatprep.subr.bf16.mxu0 0
      %628 = vmatpush1.bf16.msra.mxu0 0
      %629 = vmatprep.subr.bf16.mxu0 0
      %630 = vmatpush1.bf16.msra.mxu0 0
      %631 = vmatprep.subr.bf16.mxu0 0
      %632 = vmatpush1.bf16.msra.mxu0 0
      %633 = vmatprep.subr.bf16.mxu0 0
      %634 = vmatpush1.bf16.msra.mxu0 0
      %635 = vmatprep.subr.bf16.mxu0 0
      %636 = vmatpush1.bf16.msra.mxu0 0
      %637 = vmatprep.mubr.bf16.mxu0 0
      %638 = vmatmul.mubr.bf16.gmra.mrb[0].mxu0 %v558
      %v639 = vpop.f32.mrb[0].mxu0
      %v640 = vadd.f32 %v456, %v639
      %v641 = vpop.f32.mrb[0].mxu0
      %v642 = vpop.f32.mrb[0].mxu0
      %v643 = vadd.f32 %v456, %v642
      %v644 = vpop.f32.mrb[0].mxu0
      %645 = vmatprep.mubr.bf16.mxu0 0
      %646 = vmatmul.mubr.bf16.gmra.mrb[0].mxu0 %v561
      %v647 = vpop.f32.mrb[0].mxu0
      %v648 = vadd.f32 %v456, %v647
      %v649 = vpop.f32.mrb[0].mxu0
      %v650 = vpop.f32.mrb[0].mxu0
      %v651 = vadd.f32 %v456, %v650
      %v652 = vpop.f32.mrb[0].mxu0
      %653 = vmatprep.mubr.bf16.mxu0 0
      %654 = vmatmul.mubr.bf16.gmra.mrb[0].mxu0 %v564
      %v655 = vpop.f32.mrb[0].mxu0
      %v656 = vadd.f32 %v456, %v655
      %v657 = vpop.f32.mrb[0].mxu0
      %v658 = vpop.f32.mrb[0].mxu0
      %v659 = vadd.f32 %v456, %v658
      %v660 = vpop.f32.mrb[0].mxu0
      %661 = vmatprep.mubr.bf16.mxu0 0
      %662 = vmatmul.mubr.bf16.gmra.mrb[0].mxu0 %v567
      %v663 = vpop.f32.mrb[0].mxu0
      %v664 = vadd.f32 %v456, %v663
      %v665 = vpop.f32.mrb[0].mxu0
      %v666 = vpop.f32.mrb[0].mxu0
      %v667 = vadd.f32 %v456, %v666
      %v668 = vpop.f32.mrb[0].mxu0
      %669 = vmatprep.mubr.bf16.mxu0 0
      %670 = vmatmul.mubr.bf16.gmra.mrb[0].mxu0 %v570
      %v671 = vpop.f32.mrb[0].mxu0
      %v672 = vadd.f32 %v456, %v671
      %v673 = vpop.f32.mrb[0].mxu0
      %v674 = vpop.f32.mrb[0].mxu0
      %v675 = vadd.f32 %v456, %v674
      %v676 = vpop.f32.mrb[0].mxu0
      %677 = vmatprep.mubr.bf16.mxu0 0
      %678 = vmatmul.mubr.bf16.gmra.mrb[0].mxu0 %v573
      %v679 = vpop.f32.mrb[0].mxu0
      %v680 = vadd.f32 %v456, %v679
      %v681 = vpop.f32.mrb[0].mxu0
      %v682 = vpop.f32.mrb[0].mxu0
      %v683 = vadd.f32 %v456, %v682
      %v684 = vpop.f32.mrb[0].mxu0
      %685 = vmatprep.mubr.bf16.mxu0 0
      %686 = vmatmul.mubr.bf16.gmra.mrb[0].mxu0 %v576
      %v687 = vpop.f32.mrb[0].mxu0
      %v688 = vadd.f32 %v456, %v687
      %v689 = vpop.f32.mrb[0].mxu0
      %v690 = vpop.f32.mrb[0].mxu0
      %v691 = vadd.f32 %v456, %v690
      %v692 = vpop.f32.mrb[0].mxu0
      %693 = vmatprep.mubr.bf16.mxu0 0
      %694 = vmatmul.mubr.bf16.gmra.mrb[0].mxu0 %v579
      %v695 = vpop.f32.mrb[0].mxu0
      %v696 = vadd.f32 %v456, %v695
      %v697 = vpop.f32.mrb[0].mxu0
      %v698 = vpop.f32.mrb[0].mxu0
      %v699 = vadd.f32 %v456, %v698
      %v700 = vpop.f32.mrb[0].mxu0
      %701 = vmatprep.mubr.bf16.mxu0 0
      %702 = vmatmul.mubr.bf16.gmra.mrb[0].mxu0 %v582
      %v703 = vpop.f32.mrb[0].mxu0
      %v704 = vadd.f32 %v456, %v703
      %v705 = vpop.f32.mrb[0].mxu0
      %v706 = vpop.f32.mrb[0].mxu0
      %v707 = vadd.f32 %v456, %v706
      %v708 = vpop.f32.mrb[0].mxu0
      %709 = vmatprep.mubr.bf16.mxu0 0
      %710 = vmatmul.mubr.bf16.gmra.mrb[0].mxu0 %v585
      %v711 = vpop.f32.mrb[0].mxu0
      %v712 = vadd.f32 %v456, %v711
      %v713 = vpop.f32.mrb[0].mxu0
      %v714 = vpop.f32.mrb[0].mxu0
      %v715 = vadd.f32 %v456, %v714
      %v716 = vpop.f32.mrb[0].mxu0
      %717 = vmatprep.mubr.bf16.mxu0 0
      %718 = vmatmul.mubr.bf16.gmra.mrb[0].mxu0 %v588
      %v719 = vpop.f32.mrb[0].mxu0
      %v720 = vadd.f32 %v456, %v719
      %v721 = vpop.f32.mrb[0].mxu0
      %v722 = vpop.f32.mrb[0].mxu0
      %v723 = vadd.f32 %v456, %v722
      %v724 = vpop.f32.mrb[0].mxu0
      %725 = vmatprep.mubr.bf16.mxu0 0
      %726 = vmatmul.mubr.bf16.gmra.mrb[0].mxu0 %v591
      %v727 = vpop.f32.mrb[0].mxu0
      %v728 = vadd.f32 %v456, %v727
      %v729 = vpop.f32.mrb[0].mxu0
      %v730 = vpop.f32.mrb[0].mxu0
      %v731 = vadd.f32 %v456, %v730
      %v732 = vpop.f32.mrb[0].mxu0
      %733 = vmatprep.mubr.bf16.mxu0 0
      %734 = vmatmul.mubr.bf16.gmra.mrb[0].mxu0 %v594
      %v735 = vpop.f32.mrb[0].mxu0
      %v736 = vadd.f32 %v456, %v735
      %v737 = vpop.f32.mrb[0].mxu0
      %v738 = vpop.f32.mrb[0].mxu0
      %v739 = vadd.f32 %v456, %v738
      %v740 = vpop.f32.mrb[0].mxu0
      %741 = vmatprep.mubr.bf16.mxu0 0
      %742 = vmatmul.mubr.bf16.gmra.mrb[0].mxu0 %v597
      %v743 = vpop.f32.mrb[0].mxu0
      %v744 = vadd.f32 %v456, %v743
      %v745 = vpop.f32.mrb[0].mxu0
      %v746 = vpop.f32.mrb[0].mxu0
      %v747 = vadd.f32 %v456, %v746
      %v748 = vpop.f32.mrb[0].mxu0
      %749 = vmatprep.mubr.bf16.mxu0 0
      %750 = vmatmul.mubr.bf16.gmra.mrb[0].mxu0 %v600
      %v751 = vpop.f32.mrb[0].mxu0
      %v752 = vadd.f32 %v456, %v751
      %v753 = vpop.f32.mrb[0].mxu0
      %v754 = vpop.f32.mrb[0].mxu0
      %v755 = vadd.f32 %v456, %v754
      %v756 = vpop.f32.mrb[0].mxu0
      %757 = vmatprep.mubr.bf16.mxu0 0
      %758 = vmatmul.mubr.bf16.gmra.mrb[0].mxu0 %v603
      %v759 = vpop.f32.mrb[0].mxu0
      %v760 = vadd.f32 %v456, %v759
      %v761 = vpop.f32.mrb[0].mxu0
      %v762 = vpop.f32.mrb[0].mxu0
      %v763 = vadd.f32 %v456, %v762
      %v764 = vpop.f32.mrb[0].mxu0
      %765 = vdwg.mxu0
      %vm766 = vcmp.ge.f32.partialorder %v640, 0.0
      %vm767 = vcmp.ge.f32.partialorder %v643, 0.0
      %vm768 = vcmp.ge.f32.partialorder %v648, 0.0
      %vm769 = vcmp.ge.f32.partialorder %v651, 0.0
      %vm770 = vcmp.ge.f32.partialorder %v656, 0.0
      %vm771 = vcmp.ge.f32.partialorder %v659, 0.0
      %vm772 = vcmp.ge.f32.partialorder %v664, 0.0
      %vm773 = vcmp.ge.f32.partialorder %v667, 0.0
      %vm774 = vcmp.ge.f32.partialorder %v672, 0.0
      %vm775 = vcmp.ge.f32.partialorder %v675, 0.0
      %vm776 = vcmp.ge.f32.partialorder %v680, 0.0
      %vm777 = vcmp.ge.f32.partialorder %v683, 0.0
      %vm778 = vcmp.ge.f32.partialorder %v688, 0.0
      %vm779 = vcmp.ge.f32.partialorder %v691, 0.0
      %vm780 = vcmp.ge.f32.partialorder %v696, 0.0
      %vm781 = vcmp.ge.f32.partialorder %v699, 0.0
      %vm782 = vcmp.ge.f32.partialorder %v704, 0.0
      %vm783 = vcmp.ge.f32.partialorder %v707, 0.0
      %vm784 = vcmp.ge.f32.partialorder %v712, 0.0
      %vm785 = vcmp.ge.f32.partialorder %v715, 0.0
      %vm786 = vcmp.ge.f32.partialorder %v720, 0.0
      %vm787 = vcmp.ge.f32.partialorder %v723, 0.0
      %vm788 = vcmp.ge.f32.partialorder %v728, 0.0
      %vm789 = vcmp.ge.f32.partialorder %v731, 0.0
      %vm790 = vcmp.ge.f32.partialorder %v736, 0.0
      %vm791 = vcmp.ge.f32.partialorder %v739, 0.0
      %vm792 = vcmp.ge.f32.partialorder %v744, 0.0
      %vm793 = vcmp.ge.f32.partialorder %v747, 0.0
      %vm794 = vcmp.ge.f32.partialorder %v752, 0.0
      %vm795 = vcmp.ge.f32.partialorder %v755, 0.0
      %vm796 = vcmp.ge.f32.partialorder %v760, 0.0
      %vm797 = vcmp.ge.f32.partialorder %v763, 0.0
      %v798 = vmul.f32 %v640, 0.2
      %v799 = vmul.f32 %v643, 0.2
      %v800 = vmul.f32 %v648, 0.2
      %v801 = vmul.f32 %v651, 0.2
      %v802 = vmul.f32 %v656, 0.2
      %v803 = vmul.f32 %v659, 0.2
      %v804 = vmul.f32 %v664, 0.2
      %v805 = vmul.f32 %v667, 0.2
      %v806 = vmul.f32 %v672, 0.2
      %v807 = vmul.f32 %v675, 0.2
      %v808 = vmul.f32 %v680, 0.2
      %v809 = vmul.f32 %v683, 0.2
      %v810 = vmul.f32 %v688, 0.2
      %v811 = vmul.f32 %v691, 0.2
      %v812 = vmul.f32 %v696, 0.2
      %v813 = vmul.f32 %v699, 0.2
      %v814 = vmul.f32 %v704, 0.2
      %v815 = vmul.f32 %v707, 0.2
      %v816 = vmul.f32 %v712, 0.2
      %v817 = vmul.f32 %v715, 0.2
      %v818 = vmul.f32 %v720, 0.2
      %v819 = vmul.f32 %v723, 0.2
      %v820 = vmul.f32 %v728, 0.2
      %v821 = vmul.f32 %v731, 0.2
      %v822 = vmul.f32 %v736, 0.2
      %v823 = vmul.f32 %v739, 0.2
      %v824 = vmul.f32 %v744, 0.2
      %v825 = vmul.f32 %v747, 0.2
      %v826 = vmul.f32 %v752, 0.2
      %v827 = vmul.f32 %v755, 0.2
      %v828 = vmul.f32 %v760, 0.2
      %v829 = vmul.f32 %v763, 0.2
      %v830 = vsel %vm766, %v640, %v798
      %v831 = vsel %vm767, %v643, %v799
      %v832 = vsel %vm768, %v648, %v800
      %v833 = vsel %vm769, %v651, %v801
      %v834 = vsel %vm770, %v656, %v802
      %v835 = vsel %vm771, %v659, %v803
      %v836 = vsel %vm772, %v664, %v804
      %v837 = vsel %vm773, %v667, %v805
      %v838 = vsel %vm774, %v672, %v806
      %v839 = vsel %vm775, %v675, %v807
      %v840 = vsel %vm776, %v680, %v808
      %v841 = vsel %vm777, %v683, %v809
      %v842 = vsel %vm778, %v688, %v810
      %v843 = vsel %vm779, %v691, %v811
      %v844 = vsel %vm780, %v696, %v812
      %v845 = vsel %vm781, %v699, %v813
      %v846 = vsel %vm782, %v704, %v814
      %v847 = vsel %vm783, %v707, %v815
      %v848 = vsel %vm784, %v712, %v816
      %v849 = vsel %vm785, %v715, %v817
      %v850 = vsel %vm786, %v720, %v818
      %v851 = vsel %vm787, %v723, %v819
      %v852 = vsel %vm788, %v728, %v820
      %v853 = vsel %vm789, %v731, %v821
      %v854 = vsel %vm790, %v736, %v822
      %v855 = vsel %vm791, %v739, %v823
      %v856 = vsel %vm792, %v744, %v824
      %v857 = vsel %vm793, %v747, %v825
      %v858 = vsel %vm794, %v752, %v826
      %v859 = vsel %vm795, %v755, %v827
      %v860 = vsel %vm796, %v760, %v828
      %v861 = vsel %vm797, %v763, %v829
      %v862 = vpack.c.bf16 %v831, %v830
      %v863 = vpack.c.bf16 %v833, %v832
      %v864 = vpack.c.bf16 %v835, %v834
      %v865 = vpack.c.bf16 %v837, %v836
      %v866 = vpack.c.bf16 %v839, %v838
      %v867 = vpack.c.bf16 %v841, %v840
      %v868 = vpack.c.bf16 %v843, %v842
      %v869 = vpack.c.bf16 %v845, %v844
      %v870 = vpack.c.bf16 %v847, %v846
      %v871 = vpack.c.bf16 %v849, %v848
      %v872 = vpack.c.bf16 %v851, %v850
      %v873 = vpack.c.bf16 %v853, %v852
      %v874 = vpack.c.bf16 %v855, %v854
      %v875 = vpack.c.bf16 %v857, %v856
      %v876 = vpack.c.bf16 %v859, %v858
      %v877 = vpack.c.bf16 %v861, %v860
      %v878 = vld [vmem:[%s3] sm:$0xff]
      %v879 = vld [vmem:[%s3 + $0x8] sm:$0xff]
      %v880 = vld [vmem:[%s3 + $0x10] sm:$0xff]
      %v881 = vld [vmem:[%s3 + $0x18] sm:$0xff]
      %v882 = vld [vmem:[%s3 + $0x20] sm:$0xff]
      %v883 = vld [vmem:[%s3 + $0x28] sm:$0xff]
      %v884 = vld [vmem:[%s3 + $0x30] sm:$0xff]
      %v885 = vld [vmem:[%s3 + $0x38] sm:$0xff]
      %v886 = vld [vmem:[%s3 + $0x40] sm:$0xff]
      %v887 = vld [vmem:[%s3 + $0x48] sm:$0xff]
      %v888 = vld [vmem:[%s3 + $0x50] sm:$0xff]
      %v889 = vld [vmem:[%s3 + $0x58] sm:$0xff]
      %v890 = vld [vmem:[%s3 + $0x60] sm:$0xff]
      %v891 = vld [vmem:[%s3 + $0x68] sm:$0xff]
      %v892 = vld [vmem:[%s3 + $0x70] sm:$0xff]
      %v893 = vld [vmem:[%s3 + $0x78] sm:$0xff]
      %v894 = vld [vmem:[%s3 + $0x80] sm:$0xff]
      %v895 = vld [vmem:[%s3 + $0x88] sm:$0xff]
      %v896 = vld [vmem:[%s3 + $0x90] sm:$0xff]
      %v897 = vld [vmem:[%s3 + $0x98] sm:$0xff]
      %v898 = vld [vmem:[%s3 + $0xa0] sm:$0xff]
      %v899 = vld [vmem:[%s3 + $0xa8] sm:$0xff]
      %v900 = vld [vmem:[%s3 + $0xb0] sm:$0xff]
      %v901 = vld [vmem:[%s3 + $0xb8] sm:$0xff]
      %v902 = vld [vmem:[%s3 + $0xc0] sm:$0xff]
      %v903 = vld [vmem:[%s3 + $0xc8] sm:$0xff]
      %v904 = vld [vmem:[%s3 + $0xd0] sm:$0xff]
      %v905 = vld [vmem:[%s3 + $0xd8] sm:$0xff]
      %v906 = vld [vmem:[%s3 + $0xe0] sm:$0xff]
      %v907 = vld [vmem:[%s3 + $0xe8] sm:$0xff]
      %v908 = vld [vmem:[%s3 + $0xf0] sm:$0xff]
      %v909 = vld [vmem:[%s3 + $0xf8] sm:$0xff]
      %v910 = vld [vmem:[%s3 + $0x100] sm:$0xff]
      %v911 = vld [vmem:[%s3 + $0x108] sm:$0xff]
      %v912 = vld [vmem:[%s3 + $0x110] sm:$0xff]
      %v913 = vld [vmem:[%s3 + $0x118] sm:$0xff]
      %v914 = vld [vmem:[%s3 + $0x120] sm:$0xff]
      %v915 = vld [vmem:[%s3 + $0x128] sm:$0xff]
      %v916 = vld [vmem:[%s3 + $0x130] sm:$0xff]
      %v917 = vld [vmem:[%s3 + $0x138] sm:$0xff]
      %v918 = vld [vmem:[%s3 + $0x140] sm:$0xff]
      %v919 = vld [vmem:[%s3 + $0x148] sm:$0xff]
      %v920 = vld [vmem:[%s3 + $0x150] sm:$0xff]
      %v921 = vld [vmem:[%s3 + $0x158] sm:$0xff]
      %v922 = vld [vmem:[%s3 + $0x160] sm:$0xff]
      %v923 = vld [vmem:[%s3 + $0x168] sm:$0xff]
      %v924 = vld [vmem:[%s3 + $0x170] sm:$0xff]
      %v925 = vld [vmem:[%s3 + $0x178] sm:$0xff]
      %v926 = vld [vmem:[%s3 + $0x180] sm:$0xff]
      %v927 = vld [vmem:[%s3 + $0x188] sm:$0xff]
      %v928 = vld [vmem:[%s3 + $0x190] sm:$0xff]
      %v929 = vld [vmem:[%s3 + $0x198] sm:$0xff]
      %v930 = vld [vmem:[%s3 + $0x1a0] sm:$0xff]
      %v931 = vld [vmem:[%s3 + $0x1a8] sm:$0xff]
      %v932 = vld [vmem:[%s3 + $0x1b0] sm:$0xff]
      %v933 = vld [vmem:[%s3 + $0x1b8] sm:$0xff]
      %v934 = vld [vmem:[%s3 + $0x1c0] sm:$0xff]
      %v935 = vld [vmem:[%s3 + $0x1c8] sm:$0xff]
      %v936 = vld [vmem:[%s3 + $0x1d0] sm:$0xff]
      %v937 = vld [vmem:[%s3 + $0x1d8] sm:$0xff]
      %v938 = vld [vmem:[%s3 + $0x1e0] sm:$0xff]
      %v939 = vld [vmem:[%s3 + $0x1e8] sm:$0xff]
      %v940 = vld [vmem:[%s3 + $0x1f0] sm:$0xff]
      %v941 = vld [vmem:[%s3 + $0x1f8] sm:$0xff]
      %v942 = vld [vmem:[%s3 + $0x200] sm:$0xff]
      %v943 = vld [vmem:[%s3 + $0x208] sm:$0xff]
      %v944 = vld [vmem:[%s3 + $0x210] sm:$0xff]
      %v945 = vld [vmem:[%s3 + $0x218] sm:$0xff]
      %v946 = vld [vmem:[%s3 + $0x220] sm:$0xff]
      %v947 = vld [vmem:[%s3 + $0x228] sm:$0xff]
      %v948 = vld [vmem:[%s3 + $0x230] sm:$0xff]
      %v949 = vld [vmem:[%s3 + $0x238] sm:$0xff]
      %v950 = vld [vmem:[%s3 + $0x240] sm:$0xff]
      %v951 = vld [vmem:[%s3 + $0x248] sm:$0xff]
      %v952 = vld [vmem:[%s3 + $0x250] sm:$0xff]
      %v953 = vld [vmem:[%s3 + $0x258] sm:$0xff]
      %v954 = vld [vmem:[%s3 + $0x260] sm:$0xff]
      %v955 = vld [vmem:[%s3 + $0x268] sm:$0xff]
      %v956 = vld [vmem:[%s3 + $0x270] sm:$0xff]
      %v957 = vld [vmem:[%s3 + $0x278] sm:$0xff]
      %v958 = vld [vmem:[%s3 + $0x280] sm:$0xff]
      %v959 = vld [vmem:[%s3 + $0x288] sm:$0xff]
      %v960 = vld [vmem:[%s3 + $0x290] sm:$0xff]
      %v961 = vld [vmem:[%s3 + $0x298] sm:$0xff]
      %v962 = vld [vmem:[%s3 + $0x2a0] sm:$0xff]
      %v963 = vld [vmem:[%s3 + $0x2a8] sm:$0xff]
      %v964 = vld [vmem:[%s3 + $0x2b0] sm:$0xff]
      %v965 = vld [vmem:[%s3 + $0x2b8] sm:$0xff]
      %v966 = vld [vmem:[%s3 + $0x2c0] sm:$0xff]
      %v967 = vld [vmem:[%s3 + $0x2c8] sm:$0xff]
      %v968 = vld [vmem:[%s3 + $0x2d0] sm:$0xff]
      %v969 = vld [vmem:[%s3 + $0x2d8] sm:$0xff]
      %v970 = vld [vmem:[%s3 + $0x2e0] sm:$0xff]
      %v971 = vld [vmem:[%s3 + $0x2e8] sm:$0xff]
      %v972 = vld [vmem:[%s3 + $0x2f0] sm:$0xff]
      %v973 = vld [vmem:[%s3 + $0x2f8] sm:$0xff]
      %v974 = vld [vmem:[%s3 + $0x300] sm:$0xff]
      %v975 = vld [vmem:[%s3 + $0x308] sm:$0xff]
      %v976 = vld [vmem:[%s3 + $0x310] sm:$0xff]
      %v977 = vld [vmem:[%s3 + $0x318] sm:$0xff]
      %v978 = vld [vmem:[%s3 + $0x320] sm:$0xff]
      %v979 = vld [vmem:[%s3 + $0x328] sm:$0xff]
      %v980 = vld [vmem:[%s3 + $0x330] sm:$0xff]
      %v981 = vld [vmem:[%s3 + $0x338] sm:$0xff]
      %v982 = vld [vmem:[%s3 + $0x340] sm:$0xff]
      %v983 = vld [vmem:[%s3 + $0x348] sm:$0xff]
      %v984 = vld [vmem:[%s3 + $0x350] sm:$0xff]
      %v985 = vld [vmem:[%s3 + $0x358] sm:$0xff]
      %v986 = vld [vmem:[%s3 + $0x360] sm:$0xff]
      %v987 = vld [vmem:[%s3 + $0x368] sm:$0xff]
      %v988 = vld [vmem:[%s3 + $0x370] sm:$0xff]
      %v989 = vld [vmem:[%s3 + $0x378] sm:$0xff]
      %v990 = vld [vmem:[%s3 + $0x380] sm:$0xff]
      %v991 = vld [vmem:[%s3 + $0x388] sm:$0xff]
      %v992 = vld [vmem:[%s3 + $0x390] sm:$0xff]
      %v993 = vld [vmem:[%s3 + $0x398] sm:$0xff]
      %v994 = vld [vmem:[%s3 + $0x3a0] sm:$0xff]
      %v995 = vld [vmem:[%s3 + $0x3a8] sm:$0xff]
      %v996 = vld [vmem:[%s3 + $0x3b0] sm:$0xff]
      %v997 = vld [vmem:[%s3 + $0x3b8] sm:$0xff]
      %v998 = vld [vmem:[%s3 + $0x3c0] sm:$0xff]
      %v999 = vld [vmem:[%s3 + $0x3c8] sm:$0xff]
      %v1000 = vld [vmem:[%s3 + $0x3d0] sm:$0xff]
      %v1001 = vld [vmem:[%s3 + $0x3d8] sm:$0xff]
      %v1002 = vld [vmem:[%s3 + $0x3e0] sm:$0xff]
      %v1003 = vld [vmem:[%s3 + $0x3e8] sm:$0xff]
      %v1004 = vld [vmem:[%s3 + $0x3f0] sm:$0xff]
      %v1005 = vld [vmem:[%s3 + $0x3f8] sm:$0xff]
      %v1134 = vunpack.c.l.b16 %v878
      %v1135 = vunpack.c.h.b16 %v878
      %v1136 = vunpack.c.l.b16 %v879
      %v1137 = vunpack.c.h.b16 %v879
      %v1138 = vunpack.c.l.b16 %v880
      %v1139 = vunpack.c.h.b16 %v880
      %v1140 = vunpack.c.l.b16 %v881
      %v1141 = vunpack.c.h.b16 %v881
      %v1142 = vunpack.c.l.b16 %v882
      %v1143 = vunpack.c.h.b16 %v882
      %v1144 = vunpack.c.l.b16 %v883
      %v1145 = vunpack.c.h.b16 %v883
      %v1146 = vunpack.c.l.b16 %v884
      %v1147 = vunpack.c.h.b16 %v884
      %v1148 = vunpack.c.l.b16 %v885
      %v1149 = vunpack.c.h.b16 %v885
      %v1150 = vunpack.c.l.b16 %v886
      %v1151 = vunpack.c.h.b16 %v886
      %v1152 = vunpack.c.l.b16 %v887
      %v1153 = vunpack.c.h.b16 %v887
      %v1154 = vunpack.c.l.b16 %v888
      %v1155 = vunpack.c.h.b16 %v888
      %v1156 = vunpack.c.l.b16 %v889
      %v1157 = vunpack.c.h.b16 %v889
      %v1158 = vunpack.c.l.b16 %v890
      %v1159 = vunpack.c.h.b16 %v890
      %v1160 = vunpack.c.l.b16 %v891
      %v1161 = vunpack.c.h.b16 %v891
      %v1162 = vunpack.c.l.b16 %v892
      %v1163 = vunpack.c.h.b16 %v892
      %v1164 = vunpack.c.l.b16 %v893
      %v1165 = vunpack.c.h.b16 %v893
      %v1166 = vunpack.c.l.b16 %v894
      %v1167 = vunpack.c.h.b16 %v894
      %v1168 = vunpack.c.l.b16 %v895
      %v1169 = vunpack.c.h.b16 %v895
      %v1170 = vunpack.c.l.b16 %v896
      %v1171 = vunpack.c.h.b16 %v896
      %v1172 = vunpack.c.l.b16 %v897
      %v1173 = vunpack.c.h.b16 %v897
      %v1174 = vunpack.c.l.b16 %v898
      %v1175 = vunpack.c.h.b16 %v898
      %v1176 = vunpack.c.l.b16 %v899
      %v1177 = vunpack.c.h.b16 %v899
      %v1178 = vunpack.c.l.b16 %v900
      %v1179 = vunpack.c.h.b16 %v900
      %v1180 = vunpack.c.l.b16 %v901
      %v1181 = vunpack.c.h.b16 %v901
      %v1182 = vunpack.c.l.b16 %v902
      %v1183 = vunpack.c.h.b16 %v902
      %v1184 = vunpack.c.l.b16 %v903
      %v1185 = vunpack.c.h.b16 %v903
      %v1186 = vunpack.c.l.b16 %v904
      %v1187 = vunpack.c.h.b16 %v904
      %v1188 = vunpack.c.l.b16 %v905
      %v1189 = vunpack.c.h.b16 %v905
      %v1190 = vunpack.c.l.b16 %v906
      %v1191 = vunpack.c.h.b16 %v906
      %v1192 = vunpack.c.l.b16 %v907
      %v1193 = vunpack.c.h.b16 %v907
      %v1194 = vunpack.c.l.b16 %v908
      %v1195 = vunpack.c.h.b16 %v908
      %v1196 = vunpack.c.l.b16 %v909
      %v1197 = vunpack.c.h.b16 %v909
      %v1198 = vunpack.c.l.b16 %v910
      %v1199 = vunpack.c.h.b16 %v910
      %v1200 = vunpack.c.l.b16 %v911
      %v1201 = vunpack.c.h.b16 %v911
      %v1202 = vunpack.c.l.b16 %v912
      %v1203 = vunpack.c.h.b16 %v912
      %v1204 = vunpack.c.l.b16 %v913
      %v1205 = vunpack.c.h.b16 %v913
      %v1206 = vunpack.c.l.b16 %v914
      %v1207 = vunpack.c.h.b16 %v914
      %v1208 = vunpack.c.l.b16 %v915
      %v1209 = vunpack.c.h.b16 %v915
      %v1210 = vunpack.c.l.b16 %v916
      %v1211 = vunpack.c.h.b16 %v916
      %v1212 = vunpack.c.l.b16 %v917
      %v1213 = vunpack.c.h.b16 %v917
      %v1214 = vunpack.c.l.b16 %v918
      %v1215 = vunpack.c.h.b16 %v918
      %v1216 = vunpack.c.l.b16 %v919
      %v1217 = vunpack.c.h.b16 %v919
      %v1218 = vunpack.c.l.b16 %v920
      %v1219 = vunpack.c.h.b16 %v920
      %v1220 = vunpack.c.l.b16 %v921
      %v1221 = vunpack.c.h.b16 %v921
      %v1222 = vunpack.c.l.b16 %v922
      %v1223 = vunpack.c.h.b16 %v922
      %v1224 = vunpack.c.l.b16 %v923
      %v1225 = vunpack.c.h.b16 %v923
      %v1226 = vunpack.c.l.b16 %v924
      %v1227 = vunpack.c.h.b16 %v924
      %v1228 = vunpack.c.l.b16 %v925
      %v1229 = vunpack.c.h.b16 %v925
      %v1230 = vunpack.c.l.b16 %v926
      %v1231 = vunpack.c.h.b16 %v926
      %v1232 = vunpack.c.l.b16 %v927
      %v1233 = vunpack.c.h.b16 %v927
      %v1234 = vunpack.c.l.b16 %v928
      %v1235 = vunpack.c.h.b16 %v928
      %v1236 = vunpack.c.l.b16 %v929
      %v1237 = vunpack.c.h.b16 %v929
      %v1238 = vunpack.c.l.b16 %v930
      %v1239 = vunpack.c.h.b16 %v930
      %v1240 = vunpack.c.l.b16 %v931
      %v1241 = vunpack.c.h.b16 %v931
      %v1242 = vunpack.c.l.b16 %v932
      %v1243 = vunpack.c.h.b16 %v932
      %v1244 = vunpack.c.l.b16 %v933
      %v1245 = vunpack.c.h.b16 %v933
      %v1246 = vunpack.c.l.b16 %v934
      %v1247 = vunpack.c.h.b16 %v934
      %v1248 = vunpack.c.l.b16 %v935
      %v1249 = vunpack.c.h.b16 %v935
      %v1250 = vunpack.c.l.b16 %v936
      %v1251 = vunpack.c.h.b16 %v936
      %v1252 = vunpack.c.l.b16 %v937
      %v1253 = vunpack.c.h.b16 %v937
      %v1254 = vunpack.c.l.b16 %v938
      %v1255 = vunpack.c.h.b16 %v938
      %v1256 = vunpack.c.l.b16 %v939
      %v1257 = vunpack.c.h.b16 %v939
      %v1258 = vunpack.c.l.b16 %v940
      %v1259 = vunpack.c.h.b16 %v940
      %v1260 = vunpack.c.l.b16 %v941
      %v1261 = vunpack.c.h.b16 %v941
      %v1262 = vunpack.c.l.b16 %v942
      %v1263 = vunpack.c.h.b16 %v942
      %v1264 = vunpack.c.l.b16 %v943
      %v1265 = vunpack.c.h.b16 %v943
      %v1266 = vunpack.c.l.b16 %v944
      %v1267 = vunpack.c.h.b16 %v944
      %v1268 = vunpack.c.l.b16 %v945
      %v1269 = vunpack.c.h.b16 %v945
      %v1270 = vunpack.c.l.b16 %v946
      %v1271 = vunpack.c.h.b16 %v946
      %v1272 = vunpack.c.l.b16 %v947
      %v1273 = vunpack.c.h.b16 %v947
      %v1274 = vunpack.c.l.b16 %v948
      %v1275 = vunpack.c.h.b16 %v948
      %v1276 = vunpack.c.l.b16 %v949
      %v1277 = vunpack.c.h.b16 %v949
      %v1278 = vunpack.c.l.b16 %v950
      %v1279 = vunpack.c.h.b16 %v950
      %v1280 = vunpack.c.l.b16 %v951
      %v1281 = vunpack.c.h.b16 %v951
      %v1282 = vunpack.c.l.b16 %v952
      %v1283 = vunpack.c.h.b16 %v952
      %v1284 = vunpack.c.l.b16 %v953
      %v1285 = vunpack.c.h.b16 %v953
      %v1286 = vunpack.c.l.b16 %v954
      %v1287 = vunpack.c.h.b16 %v954
      %v1288 = vunpack.c.l.b16 %v955
      %v1289 = vunpack.c.h.b16 %v955
      %v1290 = vunpack.c.l.b16 %v956
      %v1291 = vunpack.c.h.b16 %v956
      %v1292 = vunpack.c.l.b16 %v957
      %v1293 = vunpack.c.h.b16 %v957
      %v1294 = vunpack.c.l.b16 %v958
      %v1295 = vunpack.c.h.b16 %v958
      %v1296 = vunpack.c.l.b16 %v959
      %v1297 = vunpack.c.h.b16 %v959
      %v1298 = vunpack.c.l.b16 %v960
      %v1299 = vunpack.c.h.b16 %v960
      %v1300 = vunpack.c.l.b16 %v961
      %v1301 = vunpack.c.h.b16 %v961
      %v1302 = vunpack.c.l.b16 %v962
      %v1303 = vunpack.c.h.b16 %v962
      %v1304 = vunpack.c.l.b16 %v963
      %v1305 = vunpack.c.h.b16 %v963
      %v1306 = vunpack.c.l.b16 %v964
      %v1307 = vunpack.c.h.b16 %v964
      %v1308 = vunpack.c.l.b16 %v965
      %v1309 = vunpack.c.h.b16 %v965
      %v1310 = vunpack.c.l.b16 %v966
      %v1311 = vunpack.c.h.b16 %v966
      %v1312 = vunpack.c.l.b16 %v967
      %v1313 = vunpack.c.h.b16 %v967
      %v1314 = vunpack.c.l.b16 %v968
      %v1315 = vunpack.c.h.b16 %v968
      %v1316 = vunpack.c.l.b16 %v969
      %v1317 = vunpack.c.h.b16 %v969
      %v1318 = vunpack.c.l.b16 %v970
      %v1319 = vunpack.c.h.b16 %v970
      %v1320 = vunpack.c.l.b16 %v971
      %v1321 = vunpack.c.h.b16 %v971
      %v1322 = vunpack.c.l.b16 %v972
      %v1323 = vunpack.c.h.b16 %v972
      %v1324 = vunpack.c.l.b16 %v973
      %v1325 = vunpack.c.h.b16 %v973
      %v1326 = vunpack.c.l.b16 %v974
      %v1327 = vunpack.c.h.b16 %v974
      %v1328 = vunpack.c.l.b16 %v975
      %v1329 = vunpack.c.h.b16 %v975
      %v1330 = vunpack.c.l.b16 %v976
      %v1331 = vunpack.c.h.b16 %v976
      %v1332 = vunpack.c.l.b16 %v977
      %v1333 = vunpack.c.h.b16 %v977
      %v1334 = vunpack.c.l.b16 %v978
      %v1335 = vunpack.c.h.b16 %v978
      %v1336 = vunpack.c.l.b16 %v979
      %v1337 = vunpack.c.h.b16 %v979
      %v1338 = vunpack.c.l.b16 %v980
      %v1339 = vunpack.c.h.b16 %v980
      %v1340 = vunpack.c.l.b16 %v981
      %v1341 = vunpack.c.h.b16 %v981
      %v1342 = vunpack.c.l.b16 %v982
      %v1343 = vunpack.c.h.b16 %v982
      %v1344 = vunpack.c.l.b16 %v983
      %v1345 = vunpack.c.h.b16 %v983
      %v1346 = vunpack.c.l.b16 %v984
      %v1347 = vunpack.c.h.b16 %v984
      %v1348 = vunpack.c.l.b16 %v985
      %v1349 = vunpack.c.h.b16 %v985
      %v1350 = vunpack.c.l.b16 %v986
      %v1351 = vunpack.c.h.b16 %v986
      %v1352 = vunpack.c.l.b16 %v987
      %v1353 = vunpack.c.h.b16 %v987
      %v1354 = vunpack.c.l.b16 %v988
      %v1355 = vunpack.c.h.b16 %v988
      %v1356 = vunpack.c.l.b16 %v989
      %v1357 = vunpack.c.h.b16 %v989
      %v1358 = vunpack.c.l.b16 %v990
      %v1359 = vunpack.c.h.b16 %v990
      %v1360 = vunpack.c.l.b16 %v991
      %v1361 = vunpack.c.h.b16 %v991
      %v1362 = vunpack.c.l.b16 %v992
      %v1363 = vunpack.c.h.b16 %v992
      %v1364 = vunpack.c.l.b16 %v993
      %v1365 = vunpack.c.h.b16 %v993
      %v1366 = vunpack.c.l.b16 %v994
      %v1367 = vunpack.c.h.b16 %v994
      %v1368 = vunpack.c.l.b16 %v995
      %v1369 = vunpack.c.h.b16 %v995
      %v1370 = vunpack.c.l.b16 %v996
      %v1371 = vunpack.c.h.b16 %v996
      %v1372 = vunpack.c.l.b16 %v997
      %v1373 = vunpack.c.h.b16 %v997
      %v1374 = vunpack.c.l.b16 %v998
      %v1375 = vunpack.c.h.b16 %v998
      %v1376 = vunpack.c.l.b16 %v999
      %v1377 = vunpack.c.h.b16 %v999
      %v1378 = vunpack.c.l.b16 %v1000
      %v1379 = vunpack.c.h.b16 %v1000
      %v1380 = vunpack.c.l.b16 %v1001
      %v1381 = vunpack.c.h.b16 %v1001
      %v1382 = vunpack.c.l.b16 %v1002
      %v1383 = vunpack.c.h.b16 %v1002
      %v1384 = vunpack.c.l.b16 %v1003
      %v1385 = vunpack.c.h.b16 %v1003
      %v1386 = vunpack.c.l.b16 %v1004
      %v1387 = vunpack.c.h.b16 %v1004
      %v1388 = vunpack.c.l.b16 %v1005
      %v1389 = vunpack.c.h.b16 %v1005
      %v1390 = vpack.c.b16 %v1136, %v1134
      %v1391 = vpack.c.b16 %v1137, %v1135
      %v1392 = vpack.c.b16 %v1140, %v1138
      %v1393 = vpack.c.b16 %v1141, %v1139
      %v1394 = vpack.c.b16 %v1144, %v1142
      %v1395 = vpack.c.b16 %v1145, %v1143
      %v1396 = vpack.c.b16 %v1148, %v1146
      %v1397 = vpack.c.b16 %v1149, %v1147
      %v1398 = vpack.c.b16 %v1152, %v1150
      %v1399 = vpack.c.b16 %v1153, %v1151
      %v1400 = vpack.c.b16 %v1156, %v1154
      %v1401 = vpack.c.b16 %v1157, %v1155
      %v1402 = vpack.c.b16 %v1160, %v1158
      %v1403 = vpack.c.b16 %v1161, %v1159
      %v1404 = vpack.c.b16 %v1164, %v1162
      %v1405 = vpack.c.b16 %v1165, %v1163
      %v1406 = vpack.c.b16 %v1168, %v1166
      %v1407 = vpack.c.b16 %v1169, %v1167
      %v1408 = vpack.c.b16 %v1172, %v1170
      %v1409 = vpack.c.b16 %v1173, %v1171
      %v1410 = vpack.c.b16 %v1176, %v1174
      %v1411 = vpack.c.b16 %v1177, %v1175
      %v1412 = vpack.c.b16 %v1180, %v1178
      %v1413 = vpack.c.b16 %v1181, %v1179
      %v1414 = vpack.c.b16 %v1184, %v1182
      %v1415 = vpack.c.b16 %v1185, %v1183
      %v1416 = vpack.c.b16 %v1188, %v1186
      %v1417 = vpack.c.b16 %v1189, %v1187
      %v1418 = vpack.c.b16 %v1192, %v1190
      %v1419 = vpack.c.b16 %v1193, %v1191
      %v1420 = vpack.c.b16 %v1196, %v1194
      %v1421 = vpack.c.b16 %v1197, %v1195
      %v1422 = vpack.c.b16 %v1200, %v1198
      %v1423 = vpack.c.b16 %v1201, %v1199
      %v1424 = vpack.c.b16 %v1204, %v1202
      %v1425 = vpack.c.b16 %v1205, %v1203
      %v1426 = vpack.c.b16 %v1208, %v1206
      %v1427 = vpack.c.b16 %v1209, %v1207
      %v1428 = vpack.c.b16 %v1212, %v1210
      %v1429 = vpack.c.b16 %v1213, %v1211
      %v1430 = vpack.c.b16 %v1216, %v1214
      %v1431 = vpack.c.b16 %v1217, %v1215
      %v1432 = vpack.c.b16 %v1220, %v1218
      %v1433 = vpack.c.b16 %v1221, %v1219
      %v1434 = vpack.c.b16 %v1224, %v1222
      %v1435 = vpack.c.b16 %v1225, %v1223
      %v1436 = vpack.c.b16 %v1228, %v1226
      %v1437 = vpack.c.b16 %v1229, %v1227
      %v1438 = vpack.c.b16 %v1232, %v1230
      %v1439 = vpack.c.b16 %v1233, %v1231
      %v1440 = vpack.c.b16 %v1236, %v1234
      %v1441 = vpack.c.b16 %v1237, %v1235
      %v1442 = vpack.c.b16 %v1240, %v1238
      %v1443 = vpack.c.b16 %v1241, %v1239
      %v1444 = vpack.c.b16 %v1244, %v1242
      %v1445 = vpack.c.b16 %v1245, %v1243
      %v1446 = vpack.c.b16 %v1248, %v1246
      %v1447 = vpack.c.b16 %v1249, %v1247
      %v1448 = vpack.c.b16 %v1252, %v1250
      %v1449 = vpack.c.b16 %v1253, %v1251
      %v1450 = vpack.c.b16 %v1256, %v1254
      %v1451 = vpack.c.b16 %v1257, %v1255
      %v1452 = vpack.c.b16 %v1260, %v1258
      %v1453 = vpack.c.b16 %v1261, %v1259
      %v1454 = vpack.c.b16 %v1264, %v1262
      %v1455 = vpack.c.b16 %v1265, %v1263
      %v1456 = vpack.c.b16 %v1268, %v1266
      %v1457 = vpack.c.b16 %v1269, %v1267
      %v1458 = vpack.c.b16 %v1272, %v1270
      %v1459 = vpack.c.b16 %v1273, %v1271
      %v1460 = vpack.c.b16 %v1276, %v1274
      %v1461 = vpack.c.b16 %v1277, %v1275
      %v1462 = vpack.c.b16 %v1280, %v1278
      %v1463 = vpack.c.b16 %v1281, %v1279
      %v1464 = vpack.c.b16 %v1284, %v1282
      %v1465 = vpack.c.b16 %v1285, %v1283
      %v1466 = vpack.c.b16 %v1288, %v1286
      %v1467 = vpack.c.b16 %v1289, %v1287
      %v1468 = vpack.c.b16 %v1292, %v1290
      %v1469 = vpack.c.b16 %v1293, %v1291
      %v1470 = vpack.c.b16 %v1296, %v1294
      %v1471 = vpack.c.b16 %v1297, %v1295
      %v1472 = vpack.c.b16 %v1300, %v1298
      %v1473 = vpack.c.b16 %v1301, %v1299
      %v1474 = vpack.c.b16 %v1304, %v1302
      %v1475 = vpack.c.b16 %v1305, %v1303
      %v1476 = vpack.c.b16 %v1308, %v1306
      %v1477 = vpack.c.b16 %v1309, %v1307
      %v1478 = vpack.c.b16 %v1312, %v1310
      %v1479 = vpack.c.b16 %v1313, %v1311
      %v1480 = vpack.c.b16 %v1316, %v1314
      %v1481 = vpack.c.b16 %v1317, %v1315
      %v1482 = vpack.c.b16 %v1320, %v1318
      %v1483 = vpack.c.b16 %v1321, %v1319
      %v1484 = vpack.c.b16 %v1324, %v1322
      %v1485 = vpack.c.b16 %v1325, %v1323
      %v1486 = vpack.c.b16 %v1328, %v1326
      %v1487 = vpack.c.b16 %v1329, %v1327
      %v1488 = vpack.c.b16 %v1332, %v1330
      %v1489 = vpack.c.b16 %v1333, %v1331
      %v1490 = vpack.c.b16 %v1336, %v1334
      %v1491 = vpack.c.b16 %v1337, %v1335
      %v1492 = vpack.c.b16 %v1340, %v1338
      %v1493 = vpack.c.b16 %v1341, %v1339
      %v1494 = vpack.c.b16 %v1344, %v1342
      %v1495 = vpack.c.b16 %v1345, %v1343
      %v1496 = vpack.c.b16 %v1348, %v1346
      %v1497 = vpack.c.b16 %v1349, %v1347
      %v1498 = vpack.c.b16 %v1352, %v1350
      %v1499 = vpack.c.b16 %v1353, %v1351
      %v1500 = vpack.c.b16 %v1356, %v1354
      %v1501 = vpack.c.b16 %v1357, %v1355
      %v1502 = vpack.c.b16 %v1360, %v1358
      %v1503 = vpack.c.b16 %v1361, %v1359
      %v1504 = vpack.c.b16 %v1364, %v1362
      %v1505 = vpack.c.b16 %v1365, %v1363
      %v1506 = vpack.c.b16 %v1368, %v1366
      %v1507 = vpack.c.b16 %v1369, %v1367
      %v1508 = vpack.c.b16 %v1372, %v1370
      %v1509 = vpack.c.b16 %v1373, %v1371
      %v1510 = vpack.c.b16 %v1376, %v1374
      %v1511 = vpack.c.b16 %v1377, %v1375
      %v1512 = vpack.c.b16 %v1380, %v1378
      %v1513 = vpack.c.b16 %v1381, %v1379
      %v1514 = vpack.c.b16 %v1384, %v1382
      %v1515 = vpack.c.b16 %v1385, %v1383
      %v1516 = vpack.c.b16 %v1388, %v1386
      %v1517 = vpack.c.b16 %v1389, %v1387
      %1646 = vmatprep.subr.bf16.mxu0 0
      %1647 = vmatpush1.bf16.msra.mxu0 %v862
      %1648 = vmatprep.subr.bf16.mxu0 0
      %1649 = vmatpush1.bf16.msra.mxu0 %v863
      %1650 = vmatprep.subr.bf16.mxu0 0
      %1651 = vmatpush1.bf16.msra.mxu0 %v864
      %1652 = vmatprep.subr.bf16.mxu0 0
      %1653 = vmatpush1.bf16.msra.mxu0 %v865
      %1654 = vmatprep.subr.bf16.mxu0 0
      %1655 = vmatpush1.bf16.msra.mxu0 %v866
      %1656 = vmatprep.subr.bf16.mxu0 0
      %1657 = vmatpush1.bf16.msra.mxu0 %v867
      %1658 = vmatprep.subr.bf16.mxu0 0
      %1659 = vmatpush1.bf16.msra.mxu0 %v868
      %1660 = vmatprep.subr.bf16.mxu0 0
      %1661 = vmatpush1.bf16.msra.mxu0 %v869
      %1662 = vmatprep.subr.bf16.mxu0 0
      %1663 = vmatpush1.bf16.msra.mxu0 %v870
      %1664 = vmatprep.subr.bf16.mxu0 0
      %1665 = vmatpush1.bf16.msra.mxu0 %v871
      %1666 = vmatprep.subr.bf16.mxu0 0
      %1667 = vmatpush1.bf16.msra.mxu0 %v872
      %1668 = vmatprep.subr.bf16.mxu0 0
      %1669 = vmatpush1.bf16.msra.mxu0 %v873
      %1670 = vmatprep.subr.bf16.mxu0 0
      %1671 = vmatpush1.bf16.msra.mxu0 %v874
      %1672 = vmatprep.subr.bf16.mxu0 0
      %1673 = vmatpush1.bf16.msra.mxu0 %v875
      %1674 = vmatprep.subr.bf16.mxu0 0
      %1675 = vmatpush1.bf16.msra.mxu0 %v876
      %1676 = vmatprep.subr.bf16.mxu0 0
      %1677 = vmatpush1.bf16.msra.mxu0 %v877
      %1678 = vmatprep.mubr.bf16.mxu0 %v1391
      %1679 = vmatmul.mubr.bf16.gmra.mrb[0].mxu0 %v1390
      %v1680 = vpop.f32.mrb[0].mxu0
      %v1681 = vadd.f32 0.0, %v1680
      %v1682 = vpop.f32.mrb[0].mxu0
      %v1683 = vpop.f32.mrb[0].mxu0
      %v1684 = vadd.f32 0.0, %v1683
      %v1685 = vpop.f32.mrb[0].mxu0
      %1686 = vmatprep.mubr.bf16.mxu0 %v1393
      %1687 = vmatmul.mubr.bf16.gmra.mrb[0].mxu0 %v1392
      %v1688 = vpop.f32.mrb[0].mxu0
      %v1689 = vadd.f32 0.0, %v1688
      %v1690 = vpop.f32.mrb[0].mxu0
      %v1691 = vpop.f32.mrb[0].mxu0
      %v1692 = vadd.f32 0.0, %v1691
      %v1693 = vpop.f32.mrb[0].mxu0
      %1694 = vmatprep.mubr.bf16.mxu0 %v1395
      %1695 = vmatmul.mubr.bf16.gmra.mrb[0].mxu0 %v1394
      %v1696 = vpop.f32.mrb[0].mxu0
      %v1697 = vadd.f32 0.0, %v1696
      %v1698 = vpop.f32.mrb[0].mxu0
      %v1699 = vpop.f32.mrb[0].mxu0
      %v1700 = vadd.f32 0.0, %v1699
      %v1701 = vpop.f32.mrb[0].mxu0
      %1702 = vmatprep.mubr.bf16.mxu0 %v1397
      %1703 = vmatmul.mubr.bf16.gmra.mrb[0].mxu0 %v1396
      %v1704 = vpop.f32.mrb[0].mxu0
      %v1705 = vadd.f32 0.0, %v1704
      %v1706 = vpop.f32.mrb[0].mxu0
      %v1707 = vpop.f32.mrb[0].mxu0
      %v1708 = vadd.f32 0.0, %v1707
      %v1709 = vpop.f32.mrb[0].mxu0
      %1710 = vmatprep.mubr.bf16.mxu0 %v1399
      %1711 = vmatmul.mubr.bf16.gmra.mrb[0].mxu0 %v1398
      %v1712 = vpop.f32.mrb[0].mxu0
      %v1713 = vadd.f32 0.0, %v1712
      %v1714 = vpop.f32.mrb[0].mxu0
      %v1715 = vpop.f32.mrb[0].mxu0
      %v1716 = vadd.f32 0.0, %v1715
      %v1717 = vpop.f32.mrb[0].mxu0
      %1718 = vmatprep.mubr.bf16.mxu0 %v1401
      %1719 = vmatmul.mubr.bf16.gmra.mrb[0].mxu0 %v1400
      %v1720 = vpop.f32.mrb[0].mxu0
      %v1721 = vadd.f32 0.0, %v1720
      %v1722 = vpop.f32.mrb[0].mxu0
      %v1723 = vpop.f32.mrb[0].mxu0
      %v1724 = vadd.f32 0.0, %v1723
      %v1725 = vpop.f32.mrb[0].mxu0
      %1726 = vmatprep.mubr.bf16.mxu0 %v1403
      %1727 = vmatmul.mubr.bf16.gmra.mrb[0].mxu0 %v1402
      %v1728 = vpop.f32.mrb[0].mxu0
      %v1729 = vadd.f32 0.0, %v1728
      %v1730 = vpop.f32.mrb[0].mxu0
      %v1731 = vpop.f32.mrb[0].mxu0
      %v1732 = vadd.f32 0.0, %v1731
      %v1733 = vpop.f32.mrb[0].mxu0
      %1734 = vmatprep.mubr.bf16.mxu0 %v1405
      %1735 = vmatmul.mubr.bf16.gmra.mrb[0].mxu0 %v1404
      %v1736 = vpop.f32.mrb[0].mxu0
      %v1737 = vadd.f32 0.0, %v1736
      %v1738 = vpop.f32.mrb[0].mxu0
      %v1739 = vpop.f32.mrb[0].mxu0
      %v1740 = vadd.f32 0.0, %v1739
      %v1741 = vpop.f32.mrb[0].mxu0
      %1742 = vmatprep.mubr.bf16.mxu0 %v1407
      %1743 = vmatmul.mubr.bf16.gmra.mrb[0].mxu0 %v1406
      %v1744 = vpop.f32.mrb[0].mxu0
      %v1745 = vadd.f32 0.0, %v1744
      %v1746 = vpop.f32.mrb[0].mxu0
      %v1747 = vpop.f32.mrb[0].mxu0
      %v1748 = vadd.f32 0.0, %v1747
      %v1749 = vpop.f32.mrb[0].mxu0
      %1750 = vmatprep.mubr.bf16.mxu0 %v1409
      %1751 = vmatmul.mubr.bf16.gmra.mrb[0].mxu0 %v1408
      %v1752 = vpop.f32.mrb[0].mxu0
      %v1753 = vadd.f32 0.0, %v1752
      %v1754 = vpop.f32.mrb[0].mxu0
      %v1755 = vpop.f32.mrb[0].mxu0
      %v1756 = vadd.f32 0.0, %v1755
      %v1757 = vpop.f32.mrb[0].mxu0
      %1758 = vmatprep.mubr.bf16.mxu0 %v1411
      %1759 = vmatmul.mubr.bf16.gmra.mrb[0].mxu0 %v1410
      %v1760 = vpop.f32.mrb[0].mxu0
      %v1761 = vadd.f32 0.0, %v1760
      %v1762 = vpop.f32.mrb[0].mxu0
      %v1763 = vpop.f32.mrb[0].mxu0
      %v1764 = vadd.f32 0.0, %v1763
      %v1765 = vpop.f32.mrb[0].mxu0
      %1766 = vmatprep.mubr.bf16.mxu0 %v1413
      %1767 = vmatmul.mubr.bf16.gmra.mrb[0].mxu0 %v1412
      %v1768 = vpop.f32.mrb[0].mxu0
      %v1769 = vadd.f32 0.0, %v1768
      %v1770 = vpop.f32.mrb[0].mxu0
      %v1771 = vpop.f32.mrb[0].mxu0
      %v1772 = vadd.f32 0.0, %v1771
      %v1773 = vpop.f32.mrb[0].mxu0
      %1774 = vmatprep.mubr.bf16.mxu0 %v1415
      %1775 = vmatmul.mubr.bf16.gmra.mrb[0].mxu0 %v1414
      %v1776 = vpop.f32.mrb[0].mxu0
      %v1777 = vadd.f32 0.0, %v1776
      %v1778 = vpop.f32.mrb[0].mxu0
      %v1779 = vpop.f32.mrb[0].mxu0
      %v1780 = vadd.f32 0.0, %v1779
      %v1781 = vpop.f32.mrb[0].mxu0
      %1782 = vmatprep.mubr.bf16.mxu0 %v1417
      %1783 = vmatmul.mubr.bf16.gmra.mrb[0].mxu0 %v1416
      %v1784 = vpop.f32.mrb[0].mxu0
      %v1785 = vadd.f32 0.0, %v1784
      %v1786 = vpop.f32.mrb[0].mxu0
      %v1787 = vpop.f32.mrb[0].mxu0
      %v1788 = vadd.f32 0.0, %v1787
      %v1789 = vpop.f32.mrb[0].mxu0
      %1790 = vmatprep.mubr.bf16.mxu0 %v1419
      %1791 = vmatmul.mubr.bf16.gmra.mrb[0].mxu0 %v1418
      %v1792 = vpop.f32.mrb[0].mxu0
      %v1793 = vadd.f32 0.0, %v1792
      %v1794 = vpop.f32.mrb[0].mxu0
      %v1795 = vpop.f32.mrb[0].mxu0
      %v1796 = vadd.f32 0.0, %v1795
      %v1797 = vpop.f32.mrb[0].mxu0
      %1798 = vmatprep.mubr.bf16.mxu0 %v1421
      %1799 = vmatmul.mubr.bf16.gmra.mrb[0].mxu0 %v1420
      %v1800 = vpop.f32.mrb[0].mxu0
      %v1801 = vadd.f32 0.0, %v1800
      %v1802 = vpop.f32.mrb[0].mxu0
      %v1803 = vpop.f32.mrb[0].mxu0
      %v1804 = vadd.f32 0.0, %v1803
      %v1805 = vpop.f32.mrb[0].mxu0
      %1806 = vmatprep.mubr.bf16.mxu0 %v1423
      %1807 = vmatmul.mubr.bf16.gmra.mrb[0].mxu0 %v1422
      %v1808 = vpop.f32.mrb[0].mxu0
      %v1809 = vadd.f32 0.0, %v1808
      %v1810 = vpop.f32.mrb[0].mxu0
      %v1811 = vpop.f32.mrb[0].mxu0
      %v1812 = vadd.f32 0.0, %v1811
      %v1813 = vpop.f32.mrb[0].mxu0
      %1814 = vmatprep.mubr.bf16.mxu0 %v1425
      %1815 = vmatmul.mubr.bf16.gmra.mrb[0].mxu0 %v1424
      %v1816 = vpop.f32.mrb[0].mxu0
      %v1817 = vadd.f32 0.0, %v1816
      %v1818 = vpop.f32.mrb[0].mxu0
      %v1819 = vpop.f32.mrb[0].mxu0
      %v1820 = vadd.f32 0.0, %v1819
      %v1821 = vpop.f32.mrb[0].mxu0
      %1822 = vmatprep.mubr.bf16.mxu0 %v1427
      %1823 = vmatmul.mubr.bf16.gmra.mrb[0].mxu0 %v1426
      %v1824 = vpop.f32.mrb[0].mxu0
      %v1825 = vadd.f32 0.0, %v1824
      %v1826 = vpop.f32.mrb[0].mxu0
      %v1827 = vpop.f32.mrb[0].mxu0
      %v1828 = vadd.f32 0.0, %v1827
      %v1829 = vpop.f32.mrb[0].mxu0
      %1830 = vmatprep.mubr.bf16.mxu0 %v1429
      %1831 = vmatmul.mubr.bf16.gmra.mrb[0].mxu0 %v1428
      %v1832 = vpop.f32.mrb[0].mxu0
      %v1833 = vadd.f32 0.0, %v1832
      %v1834 = vpop.f32.mrb[0].mxu0
      %v1835 = vpop.f32.mrb[0].mxu0
      %v1836 = vadd.f32 0.0, %v1835
      %v1837 = vpop.f32.mrb[0].mxu0
      %1838 = vmatprep.mubr.bf16.mxu0 %v1431
      %1839 = vmatmul.mubr.bf16.gmra.mrb[0].mxu0 %v1430
      %v1840 = vpop.f32.mrb[0].mxu0
      %v1841 = vadd.f32 0.0, %v1840
      %v1842 = vpop.f32.mrb[0].mxu0
      %v1843 = vpop.f32.mrb[0].mxu0
      %v1844 = vadd.f32 0.0, %v1843
      %v1845 = vpop.f32.mrb[0].mxu0
      %1846 = vmatprep.mubr.bf16.mxu0 %v1433
      %1847 = vmatmul.mubr.bf16.gmra.mrb[0].mxu0 %v1432
      %v1848 = vpop.f32.mrb[0].mxu0
      %v1849 = vadd.f32 0.0, %v1848
      %v1850 = vpop.f32.mrb[0].mxu0
      %v1851 = vpop.f32.mrb[0].mxu0
      %v1852 = vadd.f32 0.0, %v1851
      %v1853 = vpop.f32.mrb[0].mxu0
      %1854 = vmatprep.mubr.bf16.mxu0 %v1435
      %1855 = vmatmul.mubr.bf16.gmra.mrb[0].mxu0 %v1434
      %v1856 = vpop.f32.mrb[0].mxu0
      %v1857 = vadd.f32 0.0, %v1856
      %v1858 = vpop.f32.mrb[0].mxu0
      %v1859 = vpop.f32.mrb[0].mxu0
      %v1860 = vadd.f32 0.0, %v1859
      %v1861 = vpop.f32.mrb[0].mxu0
      %1862 = vmatprep.mubr.bf16.mxu0 %v1437
      %1863 = vmatmul.mubr.bf16.gmra.mrb[0].mxu0 %v1436
      %v1864 = vpop.f32.mrb[0].mxu0
      %v1865 = vadd.f32 0.0, %v1864
      %v1866 = vpop.f32.mrb[0].mxu0
      %v1867 = vpop.f32.mrb[0].mxu0
      %v1868 = vadd.f32 0.0, %v1867
      %v1869 = vpop.f32.mrb[0].mxu0
      %1870 = vmatprep.mubr.bf16.mxu0 %v1439
      %1871 = vmatmul.mubr.bf16.gmra.mrb[0].mxu0 %v1438
      %v1872 = vpop.f32.mrb[0].mxu0
      %v1873 = vadd.f32 0.0, %v1872
      %v1874 = vpop.f32.mrb[0].mxu0
      %v1875 = vpop.f32.mrb[0].mxu0
      %v1876 = vadd.f32 0.0, %v1875
      %v1877 = vpop.f32.mrb[0].mxu0
      %1878 = vmatprep.mubr.bf16.mxu0 %v1441
      %1879 = vmatmul.mubr.bf16.gmra.mrb[0].mxu0 %v1440
      %v1880 = vpop.f32.mrb[0].mxu0
      %v1881 = vadd.f32 0.0, %v1880
      %v1882 = vpop.f32.mrb[0].mxu0
      %v1883 = vpop.f32.mrb[0].mxu0
      %v1884 = vadd.f32 0.0, %v1883
      %v1885 = vpop.f32.mrb[0].mxu0
      %1886 = vmatprep.mubr.bf16.mxu0 %v1443
      %1887 = vmatmul.mubr.bf16.gmra.mrb[0].mxu0 %v1442
      %v1888 = vpop.f32.mrb[0].mxu0
      %v1889 = vadd.f32 0.0, %v1888
      %v1890 = vpop.f32.mrb[0].mxu0
      %v1891 = vpop.f32.mrb[0].mxu0
      %v1892 = vadd.f32 0.0, %v1891
      %v1893 = vpop.f32.mrb[0].mxu0
      %1894 = vmatprep.mubr.bf16.mxu0 %v1445
      %1895 = vmatmul.mubr.bf16.gmra.mrb[0].mxu0 %v1444
      %v1896 = vpop.f32.mrb[0].mxu0
      %v1897 = vadd.f32 0.0, %v1896
      %v1898 = vpop.f32.mrb[0].mxu0
      %v1899 = vpop.f32.mrb[0].mxu0
      %v1900 = vadd.f32 0.0, %v1899
      %v1901 = vpop.f32.mrb[0].mxu0
      %1902 = vmatprep.mubr.bf16.mxu0 %v1447
      %1903 = vmatmul.mubr.bf16.gmra.mrb[0].mxu0 %v1446
      %v1904 = vpop.f32.mrb[0].mxu0
      %v1905 = vadd.f32 0.0, %v1904
      %v1906 = vpop.f32.mrb[0].mxu0
      %v1907 = vpop.f32.mrb[0].mxu0
      %v1908 = vadd.f32 0.0, %v1907
      %v1909 = vpop.f32.mrb[0].mxu0
      %1910 = vmatprep.mubr.bf16.mxu0 %v1449
      %1911 = vmatmul.mubr.bf16.gmra.mrb[0].mxu0 %v1448
      %v1912 = vpop.f32.mrb[0].mxu0
      %v1913 = vadd.f32 0.0, %v1912
      %v1914 = vpop.f32.mrb[0].mxu0
      %v1915 = vpop.f32.mrb[0].mxu0
      %v1916 = vadd.f32 0.0, %v1915
      %v1917 = vpop.f32.mrb[0].mxu0
      %1918 = vmatprep.mubr.bf16.mxu0 %v1451
      %1919 = vmatmul.mubr.bf16.gmra.mrb[0].mxu0 %v1450
      %v1920 = vpop.f32.mrb[0].mxu0
      %v1921 = vadd.f32 0.0, %v1920
      %v1922 = vpop.f32.mrb[0].mxu0
      %v1923 = vpop.f32.mrb[0].mxu0
      %v1924 = vadd.f32 0.0, %v1923
      %v1925 = vpop.f32.mrb[0].mxu0
      %1926 = vmatprep.mubr.bf16.mxu0 %v1453
      %1927 = vmatmul.mubr.bf16.gmra.mrb[0].mxu0 %v1452
      %v1928 = vpop.f32.mrb[0].mxu0
      %v1929 = vadd.f32 0.0, %v1928
      %v1930 = vpop.f32.mrb[0].mxu0
      %v1931 = vpop.f32.mrb[0].mxu0
      %v1932 = vadd.f32 0.0, %v1931
      %v1933 = vpop.f32.mrb[0].mxu0
      %1934 = vmatprep.mubr.bf16.mxu0 %v1455
      %1935 = vmatmul.mubr.bf16.gmra.mrb[0].mxu0 %v1454
      %v1936 = vpop.f32.mrb[0].mxu0
      %v1937 = vadd.f32 0.0, %v1936
      %v1938 = vpop.f32.mrb[0].mxu0
      %v1939 = vpop.f32.mrb[0].mxu0
      %v1940 = vadd.f32 0.0, %v1939
      %v1941 = vpop.f32.mrb[0].mxu0
      %1942 = vmatprep.mubr.bf16.mxu0 %v1457
      %1943 = vmatmul.mubr.bf16.gmra.mrb[0].mxu0 %v1456
      %v1944 = vpop.f32.mrb[0].mxu0
      %v1945 = vadd.f32 0.0, %v1944
      %v1946 = vpop.f32.mrb[0].mxu0
      %v1947 = vpop.f32.mrb[0].mxu0
      %v1948 = vadd.f32 0.0, %v1947
      %v1949 = vpop.f32.mrb[0].mxu0
      %1950 = vmatprep.mubr.bf16.mxu0 %v1459
      %1951 = vmatmul.mubr.bf16.gmra.mrb[0].mxu0 %v1458
      %v1952 = vpop.f32.mrb[0].mxu0
      %v1953 = vadd.f32 0.0, %v1952
      %v1954 = vpop.f32.mrb[0].mxu0
      %v1955 = vpop.f32.mrb[0].mxu0
      %v1956 = vadd.f32 0.0, %v1955
      %v1957 = vpop.f32.mrb[0].mxu0
      %1958 = vmatprep.mubr.bf16.mxu0 %v1461
      %1959 = vmatmul.mubr.bf16.gmra.mrb[0].mxu0 %v1460
      %v1960 = vpop.f32.mrb[0].mxu0
      %v1961 = vadd.f32 0.0, %v1960
      %v1962 = vpop.f32.mrb[0].mxu0
      %v1963 = vpop.f32.mrb[0].mxu0
      %v1964 = vadd.f32 0.0, %v1963
      %v1965 = vpop.f32.mrb[0].mxu0
      %1966 = vmatprep.mubr.bf16.mxu0 %v1463
      %1967 = vmatmul.mubr.bf16.gmra.mrb[0].mxu0 %v1462
      %v1968 = vpop.f32.mrb[0].mxu0
      %v1969 = vadd.f32 0.0, %v1968
      %v1970 = vpop.f32.mrb[0].mxu0
      %v1971 = vpop.f32.mrb[0].mxu0
      %v1972 = vadd.f32 0.0, %v1971
      %v1973 = vpop.f32.mrb[0].mxu0
      %1974 = vmatprep.mubr.bf16.mxu0 %v1465
      %1975 = vmatmul.mubr.bf16.gmra.mrb[0].mxu0 %v1464
      %v1976 = vpop.f32.mrb[0].mxu0
      %v1977 = vadd.f32 0.0, %v1976
      %v1978 = vpop.f32.mrb[0].mxu0
      %v1979 = vpop.f32.mrb[0].mxu0
      %v1980 = vadd.f32 0.0, %v1979
      %v1981 = vpop.f32.mrb[0].mxu0
      %1982 = vmatprep.mubr.bf16.mxu0 %v1467
      %1983 = vmatmul.mubr.bf16.gmra.mrb[0].mxu0 %v1466
      %v1984 = vpop.f32.mrb[0].mxu0
      %v1985 = vadd.f32 0.0, %v1984
      %v1986 = vpop.f32.mrb[0].mxu0
      %v1987 = vpop.f32.mrb[0].mxu0
      %v1988 = vadd.f32 0.0, %v1987
      %v1989 = vpop.f32.mrb[0].mxu0
      %1990 = vmatprep.mubr.bf16.mxu0 %v1469
      %1991 = vmatmul.mubr.bf16.gmra.mrb[0].mxu0 %v1468
      %v1992 = vpop.f32.mrb[0].mxu0
      %v1993 = vadd.f32 0.0, %v1992
      %v1994 = vpop.f32.mrb[0].mxu0
      %v1995 = vpop.f32.mrb[0].mxu0
      %v1996 = vadd.f32 0.0, %v1995
      %v1997 = vpop.f32.mrb[0].mxu0
      %1998 = vmatprep.mubr.bf16.mxu0 %v1471
      %1999 = vmatmul.mubr.bf16.gmra.mrb[0].mxu0 %v1470
      %v2000 = vpop.f32.mrb[0].mxu0
      %v2001 = vadd.f32 0.0, %v2000
      %v2002 = vpop.f32.mrb[0].mxu0
      %v2003 = vpop.f32.mrb[0].mxu0
      %v2004 = vadd.f32 0.0, %v2003
      %v2005 = vpop.f32.mrb[0].mxu0
      %2006 = vmatprep.mubr.bf16.mxu0 %v1473
      %2007 = vmatmul.mubr.bf16.gmra.mrb[0].mxu0 %v1472
      %v2008 = vpop.f32.mrb[0].mxu0
      %v2009 = vadd.f32 0.0, %v2008
      %v2010 = vpop.f32.mrb[0].mxu0
      %v2011 = vpop.f32.mrb[0].mxu0
      %v2012 = vadd.f32 0.0, %v2011
      %v2013 = vpop.f32.mrb[0].mxu0
      %2014 = vmatprep.mubr.bf16.mxu0 %v1475
      %2015 = vmatmul.mubr.bf16.gmra.mrb[0].mxu0 %v1474
      %v2016 = vpop.f32.mrb[0].mxu0
      %v2017 = vadd.f32 0.0, %v2016
      %v2018 = vpop.f32.mrb[0].mxu0
      %v2019 = vpop.f32.mrb[0].mxu0
      %v2020 = vadd.f32 0.0, %v2019
      %v2021 = vpop.f32.mrb[0].mxu0
      %2022 = vmatprep.mubr.bf16.mxu0 %v1477
      %2023 = vmatmul.mubr.bf16.gmra.mrb[0].mxu0 %v1476
      %v2024 = vpop.f32.mrb[0].mxu0
      %v2025 = vadd.f32 0.0, %v2024
      %v2026 = vpop.f32.mrb[0].mxu0
      %v2027 = vpop.f32.mrb[0].mxu0
      %v2028 = vadd.f32 0.0, %v2027
      %v2029 = vpop.f32.mrb[0].mxu0
      %2030 = vmatprep.mubr.bf16.mxu0 %v1479
      %2031 = vmatmul.mubr.bf16.gmra.mrb[0].mxu0 %v1478
      %v2032 = vpop.f32.mrb[0].mxu0
      %v2033 = vadd.f32 0.0, %v2032
      %v2034 = vpop.f32.mrb[0].mxu0
      %v2035 = vpop.f32.mrb[0].mxu0
      %v2036 = vadd.f32 0.0, %v2035
      %v2037 = vpop.f32.mrb[0].mxu0
      %2038 = vmatprep.mubr.bf16.mxu0 %v1481
      %2039 = vmatmul.mubr.bf16.gmra.mrb[0].mxu0 %v1480
      %v2040 = vpop.f32.mrb[0].mxu0
      %v2041 = vadd.f32 0.0, %v2040
      %v2042 = vpop.f32.mrb[0].mxu0
      %v2043 = vpop.f32.mrb[0].mxu0
      %v2044 = vadd.f32 0.0, %v2043
      %v2045 = vpop.f32.mrb[0].mxu0
      %2046 = vmatprep.mubr.bf16.mxu0 %v1483
      %2047 = vmatmul.mubr.bf16.gmra.mrb[0].mxu0 %v1482
      %v2048 = vpop.f32.mrb[0].mxu0
      %v2049 = vadd.f32 0.0, %v2048
      %v2050 = vpop.f32.mrb[0].mxu0
      %v2051 = vpop.f32.mrb[0].mxu0
      %v2052 = vadd.f32 0.0, %v2051
      %v2053 = vpop.f32.mrb[0].mxu0
      %2054 = vmatprep.mubr.bf16.mxu0 %v1485
      %2055 = vmatmul.mubr.bf16.gmra.mrb[0].mxu0 %v1484
      %v2056 = vpop.f32.mrb[0].mxu0
      %v2057 = vadd.f32 0.0, %v2056
      %v2058 = vpop.f32.mrb[0].mxu0
      %v2059 = vpop.f32.mrb[0].mxu0
      %v2060 = vadd.f32 0.0, %v2059
      %v2061 = vpop.f32.mrb[0].mxu0
      %2062 = vmatprep.mubr.bf16.mxu0 %v1487
      %2063 = vmatmul.mubr.bf16.gmra.mrb[0].mxu0 %v1486
      %v2064 = vpop.f32.mrb[0].mxu0
      %v2065 = vadd.f32 0.0, %v2064
      %v2066 = vpop.f32.mrb[0].mxu0
      %v2067 = vpop.f32.mrb[0].mxu0
      %v2068 = vadd.f32 0.0, %v2067
      %v2069 = vpop.f32.mrb[0].mxu0
      %2070 = vmatprep.mubr.bf16.mxu0 %v1489
      %2071 = vmatmul.mubr.bf16.gmra.mrb[0].mxu0 %v1488
      %v2072 = vpop.f32.mrb[0].mxu0
      %v2073 = vadd.f32 0.0, %v2072
      %v2074 = vpop.f32.mrb[0].mxu0
      %v2075 = vpop.f32.mrb[0].mxu0
      %v2076 = vadd.f32 0.0, %v2075
      %v2077 = vpop.f32.mrb[0].mxu0
      %2078 = vmatprep.mubr.bf16.mxu0 %v1491
      %2079 = vmatmul.mubr.bf16.gmra.mrb[0].mxu0 %v1490
      %v2080 = vpop.f32.mrb[0].mxu0
      %v2081 = vadd.f32 0.0, %v2080
      %v2082 = vpop.f32.mrb[0].mxu0
      %v2083 = vpop.f32.mrb[0].mxu0
      %v2084 = vadd.f32 0.0, %v2083
      %v2085 = vpop.f32.mrb[0].mxu0
      %2086 = vmatprep.mubr.bf16.mxu0 %v1493
      %2087 = vmatmul.mubr.bf16.gmra.mrb[0].mxu0 %v1492
      %v2088 = vpop.f32.mrb[0].mxu0
      %v2089 = vadd.f32 0.0, %v2088
      %v2090 = vpop.f32.mrb[0].mxu0
      %v2091 = vpop.f32.mrb[0].mxu0
      %v2092 = vadd.f32 0.0, %v2091
      %v2093 = vpop.f32.mrb[0].mxu0
      %2094 = vmatprep.mubr.bf16.mxu0 %v1495
      %2095 = vmatmul.mubr.bf16.gmra.mrb[0].mxu0 %v1494
      %v2096 = vpop.f32.mrb[0].mxu0
      %v2097 = vadd.f32 0.0, %v2096
      %v2098 = vpop.f32.mrb[0].mxu0
      %v2099 = vpop.f32.mrb[0].mxu0
      %v2100 = vadd.f32 0.0, %v2099
      %v2101 = vpop.f32.mrb[0].mxu0
      %2102 = vmatprep.mubr.bf16.mxu0 %v1497
      %2103 = vmatmul.mubr.bf16.gmra.mrb[0].mxu0 %v1496
      %v2104 = vpop.f32.mrb[0].mxu0
      %v2105 = vadd.f32 0.0, %v2104
      %v2106 = vpop.f32.mrb[0].mxu0
      %v2107 = vpop.f32.mrb[0].mxu0
      %v2108 = vadd.f32 0.0, %v2107
      %v2109 = vpop.f32.mrb[0].mxu0
      %2110 = vmatprep.mubr.bf16.mxu0 %v1499
      %2111 = vmatmul.mubr.bf16.gmra.mrb[0].mxu0 %v1498
      %v2112 = vpop.f32.mrb[0].mxu0
      %v2113 = vadd.f32 0.0, %v2112
      %v2114 = vpop.f32.mrb[0].mxu0
      %v2115 = vpop.f32.mrb[0].mxu0
      %v2116 = vadd.f32 0.0, %v2115
      %v2117 = vpop.f32.mrb[0].mxu0
      %2118 = vmatprep.mubr.bf16.mxu0 %v1501
      %2119 = vmatmul.mubr.bf16.gmra.mrb[0].mxu0 %v1500
      %v2120 = vpop.f32.mrb[0].mxu0
      %v2121 = vadd.f32 0.0, %v2120
      %v2122 = vpop.f32.mrb[0].mxu0
      %v2123 = vpop.f32.mrb[0].mxu0
      %v2124 = vadd.f32 0.0, %v2123
      %v2125 = vpop.f32.mrb[0].mxu0
      %2126 = vmatprep.mubr.bf16.mxu0 %v1503
      %2127 = vmatmul.mubr.bf16.gmra.mrb[0].mxu0 %v1502
      %v2128 = vpop.f32.mrb[0].mxu0
      %v2129 = vadd.f32 0.0, %v2128
      %v2130 = vpop.f32.mrb[0].mxu0
      %v2131 = vpop.f32.mrb[0].mxu0
      %v2132 = vadd.f32 0.0, %v2131
      %v2133 = vpop.f32.mrb[0].mxu0
      %2134 = vmatprep.mubr.bf16.mxu0 %v1505
      %2135 = vmatmul.mubr.bf16.gmra.mrb[0].mxu0 %v1504
      %v2136 = vpop.f32.mrb[0].mxu0
      %v2137 = vadd.f32 0.0, %v2136
      %v2138 = vpop.f32.mrb[0].mxu0
      %v2139 = vpop.f32.mrb[0].mxu0
      %v2140 = vadd.f32 0.0, %v2139
      %v2141 = vpop.f32.mrb[0].mxu0
      %2142 = vmatprep.mubr.bf16.mxu0 %v1507
      %2143 = vmatmul.mubr.bf16.gmra.mrb[0].mxu0 %v1506
      %v2144 = vpop.f32.mrb[0].mxu0
      %v2145 = vadd.f32 0.0, %v2144
      %v2146 = vpop.f32.mrb[0].mxu0
      %v2147 = vpop.f32.mrb[0].mxu0
      %v2148 = vadd.f32 0.0, %v2147
      %v2149 = vpop.f32.mrb[0].mxu0
      %2150 = vmatprep.mubr.bf16.mxu0 %v1509
      %2151 = vmatmul.mubr.bf16.gmra.mrb[0].mxu0 %v1508
      %v2152 = vpop.f32.mrb[0].mxu0
      %v2153 = vadd.f32 0.0, %v2152
      %v2154 = vpop.f32.mrb[0].mxu0
      %v2155 = vpop.f32.mrb[0].mxu0
      %v2156 = vadd.f32 0.0, %v2155
      %v2157 = vpop.f32.mrb[0].mxu0
      %2158 = vmatprep.mubr.bf16.mxu0 %v1511
      %2159 = vmatmul.mubr.bf16.gmra.mrb[0].mxu0 %v1510
      %v2160 = vpop.f32.mrb[0].mxu0
      %v2161 = vadd.f32 0.0, %v2160
      %v2162 = vpop.f32.mrb[0].mxu0
      %v2163 = vpop.f32.mrb[0].mxu0
      %v2164 = vadd.f32 0.0, %v2163
      %v2165 = vpop.f32.mrb[0].mxu0
      %2166 = vmatprep.mubr.bf16.mxu0 %v1513
      %2167 = vmatmul.mubr.bf16.gmra.mrb[0].mxu0 %v1512
      %v2168 = vpop.f32.mrb[0].mxu0
      %v2169 = vadd.f32 0.0, %v2168
      %v2170 = vpop.f32.mrb[0].mxu0
      %v2171 = vpop.f32.mrb[0].mxu0
      %v2172 = vadd.f32 0.0, %v2171
      %v2173 = vpop.f32.mrb[0].mxu0
      %2174 = vmatprep.mubr.bf16.mxu0 %v1515
      %2175 = vmatmul.mubr.bf16.gmra.mrb[0].mxu0 %v1514
      %v2176 = vpop.f32.mrb[0].mxu0
      %v2177 = vadd.f32 0.0, %v2176
      %v2178 = vpop.f32.mrb[0].mxu0
      %v2179 = vpop.f32.mrb[0].mxu0
      %v2180 = vadd.f32 0.0, %v2179
      %v2181 = vpop.f32.mrb[0].mxu0
      %2182 = vmatprep.mubr.bf16.mxu0 %v1517
      %2183 = vmatmul.mubr.bf16.gmra.mrb[0].mxu0 %v1516
      %v2184 = vpop.f32.mrb[0].mxu0
      %v2185 = vadd.f32 0.0, %v2184
      %v2186 = vpop.f32.mrb[0].mxu0
      %v2187 = vpop.f32.mrb[0].mxu0
      %v2188 = vadd.f32 0.0, %v2187
      %v2189 = vpop.f32.mrb[0].mxu0
      %2190 = vdwg.mxu0
      %v2191 = vpack.c.bf16 %v1684, %v1681
      %v2192 = vpack.c.bf16 %v1692, %v1689
      %v2193 = vpack.c.bf16 %v1700, %v1697
      %v2194 = vpack.c.bf16 %v1708, %v1705
      %v2195 = vpack.c.bf16 %v1716, %v1713
      %v2196 = vpack.c.bf16 %v1724, %v1721
      %v2197 = vpack.c.bf16 %v1732, %v1729
      %v2198 = vpack.c.bf16 %v1740, %v1737
      %v2199 = vpack.c.bf16 %v1748, %v1745
      %v2200 = vpack.c.bf16 %v1756, %v1753
      %v2201 = vpack.c.bf16 %v1764, %v1761
      %v2202 = vpack.c.bf16 %v1772, %v1769
      %v2203 = vpack.c.bf16 %v1780, %v1777
      %v2204 = vpack.c.bf16 %v1788, %v1785
      %v2205 = vpack.c.bf16 %v1796, %v1793
      %v2206 = vpack.c.bf16 %v1804, %v1801
      %v2207 = vpack.c.bf16 %v1812, %v1809
      %v2208 = vpack.c.bf16 %v1820, %v1817
      %v2209 = vpack.c.bf16 %v1828, %v1825
      %v2210 = vpack.c.bf16 %v1836, %v1833
      %v2211 = vpack.c.bf16 %v1844, %v1841
      %v2212 = vpack.c.bf16 %v1852, %v1849
      %v2213 = vpack.c.bf16 %v1860, %v1857
      %v2214 = vpack.c.bf16 %v1868, %v1865
      %v2215 = vpack.c.bf16 %v1876, %v1873
      %v2216 = vpack.c.bf16 %v1884, %v1881
      %v2217 = vpack.c.bf16 %v1892, %v1889
      %v2218 = vpack.c.bf16 %v1900, %v1897
      %v2219 = vpack.c.bf16 %v1908, %v1905
      %v2220 = vpack.c.bf16 %v1916, %v1913
      %v2221 = vpack.c.bf16 %v1924, %v1921
      %v2222 = vpack.c.bf16 %v1932, %v1929
      %v2223 = vpack.c.bf16 %v1940, %v1937
      %v2224 = vpack.c.bf16 %v1948, %v1945
      %v2225 = vpack.c.bf16 %v1956, %v1953
      %v2226 = vpack.c.bf16 %v1964, %v1961
      %v2227 = vpack.c.bf16 %v1972, %v1969
      %v2228 = vpack.c.bf16 %v1980, %v1977
      %v2229 = vpack.c.bf16 %v1988, %v1985
      %v2230 = vpack.c.bf16 %v1996, %v1993
      %v2231 = vpack.c.bf16 %v2004, %v2001
      %v2232 = vpack.c.bf16 %v2012, %v2009
      %v2233 = vpack.c.bf16 %v2020, %v2017
      %v2234 = vpack.c.bf16 %v2028, %v2025
      %v2235 = vpack.c.bf16 %v2036, %v2033
      %v2236 = vpack.c.bf16 %v2044, %v2041
      %v2237 = vpack.c.bf16 %v2052, %v2049
      %v2238 = vpack.c.bf16 %v2060, %v2057
      %v2239 = vpack.c.bf16 %v2068, %v2065
      %v2240 = vpack.c.bf16 %v2076, %v2073
      %v2241 = vpack.c.bf16 %v2084, %v2081
      %v2242 = vpack.c.bf16 %v2092, %v2089
      %v2243 = vpack.c.bf16 %v2100, %v2097
      %v2244 = vpack.c.bf16 %v2108, %v2105
      %v2245 = vpack.c.bf16 %v2116, %v2113
      %v2246 = vpack.c.bf16 %v2124, %v2121
      %v2247 = vpack.c.bf16 %v2132, %v2129
      %v2248 = vpack.c.bf16 %v2140, %v2137
      %v2249 = vpack.c.bf16 %v2148, %v2145
      %v2250 = vpack.c.bf16 %v2156, %v2153
      %v2251 = vpack.c.bf16 %v2164, %v2161
      %v2252 = vpack.c.bf16 %v2172, %v2169
      %v2253 = vpack.c.bf16 %v2180, %v2177
      %v2254 = vpack.c.bf16 %v2188, %v2185
      %2259 = vrot.lane.b32.xlu0 %v2195, 64
      %v2260 = vpop.permute.xlu0 %2259
      %2261 = vrot.lane.b32.xlu0 %v2196, 64
      %v2262 = vpop.permute.xlu0 %2261
      %2263 = vrot.lane.b32.xlu0 %v2197, 64
      %v2264 = vpop.permute.xlu0 %2263
      %2265 = vrot.lane.b32.xlu0 %v2198, 64
      %v2266 = vpop.permute.xlu0 %2265
      %2271 = vrot.lane.b32.xlu0 %v2203, 64
      %v2272 = vpop.permute.xlu0 %2271
      %2273 = vrot.lane.b32.xlu0 %v2204, 64
      %v2274 = vpop.permute.xlu0 %2273
      %2275 = vrot.lane.b32.xlu0 %v2205, 64
      %v2276 = vpop.permute.xlu0 %2275
      %2277 = vrot.lane.b32.xlu0 %v2206, 64
      %v2278 = vpop.permute.xlu0 %2277
      %2283 = vrot.lane.b32.xlu0 %v2211, 64
      %v2284 = vpop.permute.xlu0 %2283
      %2285 = vrot.lane.b32.xlu0 %v2212, 64
      %v2286 = vpop.permute.xlu0 %2285
      %2287 = vrot.lane.b32.xlu0 %v2213, 64
      %v2288 = vpop.permute.xlu0 %2287
      %2289 = vrot.lane.b32.xlu0 %v2214, 64
      %v2290 = vpop.permute.xlu0 %2289
      %2295 = vrot.lane.b32.xlu0 %v2219, 64
      %v2296 = vpop.permute.xlu0 %2295
      %2297 = vrot.lane.b32.xlu0 %v2220, 64
      %v2298 = vpop.permute.xlu0 %2297
      %2299 = vrot.lane.b32.xlu0 %v2221, 64
      %v2300 = vpop.permute.xlu0 %2299
      %2301 = vrot.lane.b32.xlu0 %v2222, 64
      %v2302 = vpop.permute.xlu0 %2301
      %2307 = vrot.lane.b32.xlu0 %v2227, 64
      %v2308 = vpop.permute.xlu0 %2307
      %2309 = vrot.lane.b32.xlu0 %v2228, 64
      %v2310 = vpop.permute.xlu0 %2309
      %2311 = vrot.lane.b32.xlu0 %v2229, 64
      %v2312 = vpop.permute.xlu0 %2311
      %2313 = vrot.lane.b32.xlu0 %v2230, 64
      %v2314 = vpop.permute.xlu0 %2313
      %2319 = vrot.lane.b32.xlu0 %v2235, 64
      %v2320 = vpop.permute.xlu0 %2319
      %2321 = vrot.lane.b32.xlu0 %v2236, 64
      %v2322 = vpop.permute.xlu0 %2321
      %2323 = vrot.lane.b32.xlu0 %v2237, 64
      %v2324 = vpop.permute.xlu0 %2323
      %2325 = vrot.lane.b32.xlu0 %v2238, 64
      %v2326 = vpop.permute.xlu0 %2325
      %2331 = vrot.lane.b32.xlu0 %v2243, 64
      %v2332 = vpop.permute.xlu0 %2331
      %2333 = vrot.lane.b32.xlu0 %v2244, 64
      %v2334 = vpop.permute.xlu0 %2333
      %2335 = vrot.lane.b32.xlu0 %v2245, 64
      %v2336 = vpop.permute.xlu0 %2335
      %2337 = vrot.lane.b32.xlu0 %v2246, 64
      %v2338 = vpop.permute.xlu0 %2337
      %2343 = vrot.lane.b32.xlu0 %v2251, 64
      %v2344 = vpop.permute.xlu0 %2343
      %2345 = vrot.lane.b32.xlu0 %v2252, 64
      %v2346 = vpop.permute.xlu0 %2345
      %2347 = vrot.lane.b32.xlu0 %v2253, 64
      %v2348 = vpop.permute.xlu0 %2347
      %2349 = vrot.lane.b32.xlu0 %v2254, 64
      %v2350 = vpop.permute.xlu0 %2349
      %vm2351 = vcmask 523264
      %v2354 = vsel %vm2351, %v2191, %v2260
      %v2358 = vsel %vm2351, %v2192, %v2262
      %v2362 = vsel %vm2351, %v2193, %v2264
      %v2366 = vsel %vm2351, %v2194, %v2266
      %v2370 = vsel %vm2351, %v2199, %v2272
      %v2374 = vsel %vm2351, %v2200, %v2274
      %v2378 = vsel %vm2351, %v2201, %v2276
      %v2382 = vsel %vm2351, %v2202, %v2278
      %v2386 = vsel %vm2351, %v2207, %v2284
      %v2390 = vsel %vm2351, %v2208, %v2286
      %v2394 = vsel %vm2351, %v2209, %v2288
      %v2398 = vsel %vm2351, %v2210, %v2290
      %v2402 = vsel %vm2351, %v2215, %v2296
      %v2406 = vsel %vm2351, %v2216, %v2298
      %v2410 = vsel %vm2351, %v2217, %v2300
      %v2414 = vsel %vm2351, %v2218, %v2302
      %v2418 = vsel %vm2351, %v2223, %v2308
      %v2422 = vsel %vm2351, %v2224, %v2310
      %v2426 = vsel %vm2351, %v2225, %v2312
      %v2430 = vsel %vm2351, %v2226, %v2314
      %v2434 = vsel %vm2351, %v2231, %v2320
      %v2438 = vsel %vm2351, %v2232, %v2322
      %v2442 = vsel %vm2351, %v2233, %v2324
      %v2446 = vsel %vm2351, %v2234, %v2326
      %v2450 = vsel %vm2351, %v2239, %v2332
      %v2454 = vsel %vm2351, %v2240, %v2334
      %v2458 = vsel %vm2351, %v2241, %v2336
      %v2462 = vsel %vm2351, %v2242, %v2338
      %v2466 = vsel %vm2351, %v2247, %v2344
      %v2470 = vsel %vm2351, %v2248, %v2346
      %v2474 = vsel %vm2351, %v2249, %v2348
      %v2478 = vsel %vm2351, %v2250, %v2350
      %v2480 = vld [vmem:[%s4] sm:$0xf]
      %v2481 = vld [vmem:[%s4 + $0x4] sm:$0xf]
      %v2482 = vld [vmem:[%s4 + $0x8] sm:$0xf]
      %v2483 = vld [vmem:[%s4 + $0xc] sm:$0xf]
      %v2484 = vld [vmem:[%s4 + $0x10] sm:$0xf]
      %v2485 = vld [vmem:[%s4 + $0x14] sm:$0xf]
      %v2486 = vld [vmem:[%s4 + $0x18] sm:$0xf]
      %v2487 = vld [vmem:[%s4 + $0x1c] sm:$0xf]
      %v2488 = vld [vmem:[%s4 + $0x20] sm:$0xf]
      %v2489 = vld [vmem:[%s4 + $0x24] sm:$0xf]
      %v2490 = vld [vmem:[%s4 + $0x28] sm:$0xf]
      %v2491 = vld [vmem:[%s4 + $0x2c] sm:$0xf]
      %v2492 = vld [vmem:[%s4 + $0x30] sm:$0xf]
      %v2493 = vld [vmem:[%s4 + $0x34] sm:$0xf]
      %v2494 = vld [vmem:[%s4 + $0x38] sm:$0xf]
      %v2495 = vld [vmem:[%s4 + $0x3c] sm:$0xf]
      %v2496 = vld [vmem:[%s4 + $0x40] sm:$0xf]
      %v2497 = vld [vmem:[%s4 + $0x44] sm:$0xf]
      %v2498 = vld [vmem:[%s4 + $0x48] sm:$0xf]
      %v2499 = vld [vmem:[%s4 + $0x4c] sm:$0xf]
      %v2500 = vld [vmem:[%s4 + $0x50] sm:$0xf]
      %v2501 = vld [vmem:[%s4 + $0x54] sm:$0xf]
      %v2502 = vld [vmem:[%s4 + $0x58] sm:$0xf]
      %v2503 = vld [vmem:[%s4 + $0x5c] sm:$0xf]
      %v2504 = vld [vmem:[%s4 + $0x60] sm:$0xf]
      %v2505 = vld [vmem:[%s4 + $0x64] sm:$0xf]
      %v2506 = vld [vmem:[%s4 + $0x68] sm:$0xf]
      %v2507 = vld [vmem:[%s4 + $0x6c] sm:$0xf]
      %v2508 = vld [vmem:[%s4 + $0x70] sm:$0xf]
      %v2509 = vld [vmem:[%s4 + $0x74] sm:$0xf]
      %v2510 = vld [vmem:[%s4 + $0x78] sm:$0xf]
      %v2511 = vld [vmem:[%s4 + $0x7c] sm:$0xf]
      %v2512 = vld [vmem:[%s4 + $0x80] sm:$0xf]
      %v2513 = vld [vmem:[%s4 + $0x84] sm:$0xf]
      %v2514 = vld [vmem:[%s4 + $0x88] sm:$0xf]
      %v2515 = vld [vmem:[%s4 + $0x8c] sm:$0xf]
      %v2516 = vld [vmem:[%s4 + $0x90] sm:$0xf]
      %v2517 = vld [vmem:[%s4 + $0x94] sm:$0xf]
      %v2518 = vld [vmem:[%s4 + $0x98] sm:$0xf]
      %v2519 = vld [vmem:[%s4 + $0x9c] sm:$0xf]
      %v2520 = vld [vmem:[%s4 + $0xa0] sm:$0xf]
      %v2521 = vld [vmem:[%s4 + $0xa4] sm:$0xf]
      %v2522 = vld [vmem:[%s4 + $0xa8] sm:$0xf]
      %v2523 = vld [vmem:[%s4 + $0xac] sm:$0xf]
      %v2524 = vld [vmem:[%s4 + $0xb0] sm:$0xf]
      %v2525 = vld [vmem:[%s4 + $0xb4] sm:$0xf]
      %v2526 = vld [vmem:[%s4 + $0xb8] sm:$0xf]
      %v2527 = vld [vmem:[%s4 + $0xbc] sm:$0xf]
      %v2528 = vld [vmem:[%s4 + $0xc0] sm:$0xf]
      %v2529 = vld [vmem:[%s4 + $0xc4] sm:$0xf]
      %v2530 = vld [vmem:[%s4 + $0xc8] sm:$0xf]
      %v2531 = vld [vmem:[%s4 + $0xcc] sm:$0xf]
      %v2532 = vld [vmem:[%s4 + $0xd0] sm:$0xf]
      %v2533 = vld [vmem:[%s4 + $0xd4] sm:$0xf]
      %v2534 = vld [vmem:[%s4 + $0xd8] sm:$0xf]
      %v2535 = vld [vmem:[%s4 + $0xdc] sm:$0xf]
      %v2536 = vld [vmem:[%s4 + $0xe0] sm:$0xf]
      %v2537 = vld [vmem:[%s4 + $0xe4] sm:$0xf]
      %v2538 = vld [vmem:[%s4 + $0xe8] sm:$0xf]
      %v2539 = vld [vmem:[%s4 + $0xec] sm:$0xf]
      %v2540 = vld [vmem:[%s4 + $0xf0] sm:$0xf]
      %v2541 = vld [vmem:[%s4 + $0xf4] sm:$0xf]
      %v2542 = vld [vmem:[%s4 + $0xf8] sm:$0xf]
      %v2543 = vld [vmem:[%s4 + $0xfc] sm:$0xf]
      %v2544 = vld [vmem:[%s4 + $0x100] sm:$0xf]
      %v2545 = vld [vmem:[%s4 + $0x104] sm:$0xf]
      %v2546 = vld [vmem:[%s4 + $0x108] sm:$0xf]
      %v2547 = vld [vmem:[%s4 + $0x10c] sm:$0xf]
      %v2548 = vld [vmem:[%s4 + $0x110] sm:$0xf]
      %v2549 = vld [vmem:[%s4 + $0x114] sm:$0xf]
      %v2550 = vld [vmem:[%s4 + $0x118] sm:$0xf]
      %v2551 = vld [vmem:[%s4 + $0x11c] sm:$0xf]
      %v2552 = vld [vmem:[%s4 + $0x120] sm:$0xf]
      %v2553 = vld [vmem:[%s4 + $0x124] sm:$0xf]
      %v2554 = vld [vmem:[%s4 + $0x128] sm:$0xf]
      %v2555 = vld [vmem:[%s4 + $0x12c] sm:$0xf]
      %v2556 = vld [vmem:[%s4 + $0x130] sm:$0xf]
      %v2557 = vld [vmem:[%s4 + $0x134] sm:$0xf]
      %v2558 = vld [vmem:[%s4 + $0x138] sm:$0xf]
      %v2559 = vld [vmem:[%s4 + $0x13c] sm:$0xf]
      %v2560 = vld [vmem:[%s4 + $0x140] sm:$0xf]
      %v2561 = vld [vmem:[%s4 + $0x144] sm:$0xf]
      %v2562 = vld [vmem:[%s4 + $0x148] sm:$0xf]
      %v2563 = vld [vmem:[%s4 + $0x14c] sm:$0xf]
      %v2564 = vld [vmem:[%s4 + $0x150] sm:$0xf]
      %v2565 = vld [vmem:[%s4 + $0x154] sm:$0xf]
      %v2566 = vld [vmem:[%s4 + $0x158] sm:$0xf]
      %v2567 = vld [vmem:[%s4 + $0x15c] sm:$0xf]
      %v2568 = vld [vmem:[%s4 + $0x160] sm:$0xf]
      %v2569 = vld [vmem:[%s4 + $0x164] sm:$0xf]
      %v2570 = vld [vmem:[%s4 + $0x168] sm:$0xf]
      %v2571 = vld [vmem:[%s4 + $0x16c] sm:$0xf]
      %v2572 = vld [vmem:[%s4 + $0x170] sm:$0xf]
      %v2573 = vld [vmem:[%s4 + $0x174] sm:$0xf]
      %v2574 = vld [vmem:[%s4 + $0x178] sm:$0xf]
      %v2575 = vld [vmem:[%s4 + $0x17c] sm:$0xf]
      %v2576 = vld [vmem:[%s4 + $0x180] sm:$0xf]
      %v2577 = vld [vmem:[%s4 + $0x184] sm:$0xf]
      %v2578 = vld [vmem:[%s4 + $0x188] sm:$0xf]
      %v2579 = vld [vmem:[%s4 + $0x18c] sm:$0xf]
      %v2580 = vld [vmem:[%s4 + $0x190] sm:$0xf]
      %v2581 = vld [vmem:[%s4 + $0x194] sm:$0xf]
      %v2582 = vld [vmem:[%s4 + $0x198] sm:$0xf]
      %v2583 = vld [vmem:[%s4 + $0x19c] sm:$0xf]
      %v2584 = vld [vmem:[%s4 + $0x1a0] sm:$0xf]
      %v2585 = vld [vmem:[%s4 + $0x1a4] sm:$0xf]
      %v2586 = vld [vmem:[%s4 + $0x1a8] sm:$0xf]
      %v2587 = vld [vmem:[%s4 + $0x1ac] sm:$0xf]
      %v2588 = vld [vmem:[%s4 + $0x1b0] sm:$0xf]
      %v2589 = vld [vmem:[%s4 + $0x1b4] sm:$0xf]
      %v2590 = vld [vmem:[%s4 + $0x1b8] sm:$0xf]
      %v2591 = vld [vmem:[%s4 + $0x1bc] sm:$0xf]
      %v2592 = vld [vmem:[%s4 + $0x1c0] sm:$0xf]
      %v2593 = vld [vmem:[%s4 + $0x1c4] sm:$0xf]
      %v2594 = vld [vmem:[%s4 + $0x1c8] sm:$0xf]
      %v2595 = vld [vmem:[%s4 + $0x1cc] sm:$0xf]
      %v2596 = vld [vmem:[%s4 + $0x1d0] sm:$0xf]
      %v2597 = vld [vmem:[%s4 + $0x1d4] sm:$0xf]
      %v2598 = vld [vmem:[%s4 + $0x1d8] sm:$0xf]
      %v2599 = vld [vmem:[%s4 + $0x1dc] sm:$0xf]
      %v2600 = vld [vmem:[%s4 + $0x1e0] sm:$0xf]
      %v2601 = vld [vmem:[%s4 + $0x1e4] sm:$0xf]
      %v2602 = vld [vmem:[%s4 + $0x1e8] sm:$0xf]
      %v2603 = vld [vmem:[%s4 + $0x1ec] sm:$0xf]
      %v2604 = vld [vmem:[%s4 + $0x1f0] sm:$0xf]
      %v2605 = vld [vmem:[%s4 + $0x1f4] sm:$0xf]
      %v2606 = vld [vmem:[%s4 + $0x1f8] sm:$0xf]
      %v2607 = vld [vmem:[%s4 + $0x1fc] sm:$0xf]
      %v2736 = vunpack.c.l.b16 %v2480
      %v2737 = vunpack.c.l.b16 %v2481
      %v2738 = vunpack.c.l.b16 %v2482
      %v2739 = vunpack.c.l.b16 %v2483
      %v2740 = vunpack.c.l.b16 %v2484
      %v2741 = vunpack.c.l.b16 %v2485
      %v2742 = vunpack.c.l.b16 %v2486
      %v2743 = vunpack.c.l.b16 %v2487
      %v2744 = vunpack.c.l.b16 %v2488
      %v2745 = vunpack.c.l.b16 %v2489
      %v2746 = vunpack.c.l.b16 %v2490
      %v2747 = vunpack.c.l.b16 %v2491
      %v2748 = vunpack.c.l.b16 %v2492
      %v2749 = vunpack.c.l.b16 %v2493
      %v2750 = vunpack.c.l.b16 %v2494
      %v2751 = vunpack.c.l.b16 %v2495
      %v2752 = vunpack.c.l.b16 %v2496
      %v2753 = vunpack.c.l.b16 %v2497
      %v2754 = vunpack.c.l.b16 %v2498
      %v2755 = vunpack.c.l.b16 %v2499
      %v2756 = vunpack.c.l.b16 %v2500
      %v2757 = vunpack.c.l.b16 %v2501
      %v2758 = vunpack.c.l.b16 %v2502
      %v2759 = vunpack.c.l.b16 %v2503
      %v2760 = vunpack.c.l.b16 %v2504
      %v2761 = vunpack.c.l.b16 %v2505
      %v2762 = vunpack.c.l.b16 %v2506
      %v2763 = vunpack.c.l.b16 %v2507
      %v2764 = vunpack.c.l.b16 %v2508
      %v2765 = vunpack.c.l.b16 %v2509
      %v2766 = vunpack.c.l.b16 %v2510
      %v2767 = vunpack.c.l.b16 %v2511
      %v2768 = vunpack.c.l.b16 %v2512
      %v2769 = vunpack.c.l.b16 %v2513
      %v2770 = vunpack.c.l.b16 %v2514
      %v2771 = vunpack.c.l.b16 %v2515
      %v2772 = vunpack.c.l.b16 %v2516
      %v2773 = vunpack.c.l.b16 %v2517
      %v2774 = vunpack.c.l.b16 %v2518
      %v2775 = vunpack.c.l.b16 %v2519
      %v2776 = vunpack.c.l.b16 %v2520
      %v2777 = vunpack.c.l.b16 %v2521
      %v2778 = vunpack.c.l.b16 %v2522
      %v2779 = vunpack.c.l.b16 %v2523
      %v2780 = vunpack.c.l.b16 %v2524
      %v2781 = vunpack.c.l.b16 %v2525
      %v2782 = vunpack.c.l.b16 %v2526
      %v2783 = vunpack.c.l.b16 %v2527
      %v2784 = vunpack.c.l.b16 %v2528
      %v2785 = vunpack.c.l.b16 %v2529
      %v2786 = vunpack.c.l.b16 %v2530
      %v2787 = vunpack.c.l.b16 %v2531
      %v2788 = vunpack.c.l.b16 %v2532
      %v2789 = vunpack.c.l.b16 %v2533
      %v2790 = vunpack.c.l.b16 %v2534
      %v2791 = vunpack.c.l.b16 %v2535
      %v2792 = vunpack.c.l.b16 %v2536
      %v2793 = vunpack.c.l.b16 %v2537
      %v2794 = vunpack.c.l.b16 %v2538
      %v2795 = vunpack.c.l.b16 %v2539
      %v2796 = vunpack.c.l.b16 %v2540
      %v2797 = vunpack.c.l.b16 %v2541
      %v2798 = vunpack.c.l.b16 %v2542
      %v2799 = vunpack.c.l.b16 %v2543
      %v2800 = vunpack.c.l.b16 %v2544
      %v2801 = vunpack.c.l.b16 %v2545
      %v2802 = vunpack.c.l.b16 %v2546
      %v2803 = vunpack.c.l.b16 %v2547
      %v2804 = vunpack.c.l.b16 %v2548
      %v2805 = vunpack.c.l.b16 %v2549
      %v2806 = vunpack.c.l.b16 %v2550
      %v2807 = vunpack.c.l.b16 %v2551
      %v2808 = vunpack.c.l.b16 %v2552
      %v2809 = vunpack.c.l.b16 %v2553
      %v2810 = vunpack.c.l.b16 %v2554
      %v2811 = vunpack.c.l.b16 %v2555
      %v2812 = vunpack.c.l.b16 %v2556
      %v2813 = vunpack.c.l.b16 %v2557
      %v2814 = vunpack.c.l.b16 %v2558
      %v2815 = vunpack.c.l.b16 %v2559
      %v2816 = vunpack.c.l.b16 %v2560
      %v2817 = vunpack.c.l.b16 %v2561
      %v2818 = vunpack.c.l.b16 %v2562
      %v2819 = vunpack.c.l.b16 %v2563
      %v2820 = vunpack.c.l.b16 %v2564
      %v2821 = vunpack.c.l.b16 %v2565
      %v2822 = vunpack.c.l.b16 %v2566
      %v2823 = vunpack.c.l.b16 %v2567
      %v2824 = vunpack.c.l.b16 %v2568
      %v2825 = vunpack.c.l.b16 %v2569
      %v2826 = vunpack.c.l.b16 %v2570
      %v2827 = vunpack.c.l.b16 %v2571
      %v2828 = vunpack.c.l.b16 %v2572
      %v2829 = vunpack.c.l.b16 %v2573
      %v2830 = vunpack.c.l.b16 %v2574
      %v2831 = vunpack.c.l.b16 %v2575
      %v2832 = vunpack.c.l.b16 %v2576
      %v2833 = vunpack.c.l.b16 %v2577
      %v2834 = vunpack.c.l.b16 %v2578
      %v2835 = vunpack.c.l.b16 %v2579
      %v2836 = vunpack.c.l.b16 %v2580
      %v2837 = vunpack.c.l.b16 %v2581
      %v2838 = vunpack.c.l.b16 %v2582
      %v2839 = vunpack.c.l.b16 %v2583
      %v2840 = vunpack.c.l.b16 %v2584
      %v2841 = vunpack.c.l.b16 %v2585
      %v2842 = vunpack.c.l.b16 %v2586
      %v2843 = vunpack.c.l.b16 %v2587
      %v2844 = vunpack.c.l.b16 %v2588
      %v2845 = vunpack.c.l.b16 %v2589
      %v2846 = vunpack.c.l.b16 %v2590
      %v2847 = vunpack.c.l.b16 %v2591
      %v2848 = vunpack.c.l.b16 %v2592
      %v2849 = vunpack.c.l.b16 %v2593
      %v2850 = vunpack.c.l.b16 %v2594
      %v2851 = vunpack.c.l.b16 %v2595
      %v2852 = vunpack.c.l.b16 %v2596
      %v2853 = vunpack.c.l.b16 %v2597
      %v2854 = vunpack.c.l.b16 %v2598
      %v2855 = vunpack.c.l.b16 %v2599
      %v2856 = vunpack.c.l.b16 %v2600
      %v2857 = vunpack.c.l.b16 %v2601
      %v2858 = vunpack.c.l.b16 %v2602
      %v2859 = vunpack.c.l.b16 %v2603
      %v2860 = vunpack.c.l.b16 %v2604
      %v2861 = vunpack.c.l.b16 %v2605
      %v2862 = vunpack.c.l.b16 %v2606
      %v2863 = vunpack.c.l.b16 %v2607
      %v2864 = vpack.c.b16 %v2737, %v2736
      %v2865 = vpack.c.b16 %v2739, %v2738
      %v2866 = vpack.c.b16 %v2741, %v2740
      %v2867 = vpack.c.b16 %v2743, %v2742
      %v2868 = vpack.c.b16 %v2745, %v2744
      %v2869 = vpack.c.b16 %v2747, %v2746
      %v2870 = vpack.c.b16 %v2749, %v2748
      %v2871 = vpack.c.b16 %v2751, %v2750
      %v2872 = vpack.c.b16 %v2753, %v2752
      %v2873 = vpack.c.b16 %v2755, %v2754
      %v2874 = vpack.c.b16 %v2757, %v2756
      %v2875 = vpack.c.b16 %v2759, %v2758
      %v2876 = vpack.c.b16 %v2761, %v2760
      %v2877 = vpack.c.b16 %v2763, %v2762
      %v2878 = vpack.c.b16 %v2765, %v2764
      %v2879 = vpack.c.b16 %v2767, %v2766
      %v2880 = vpack.c.b16 %v2769, %v2768
      %v2881 = vpack.c.b16 %v2771, %v2770
      %v2882 = vpack.c.b16 %v2773, %v2772
      %v2883 = vpack.c.b16 %v2775, %v2774
      %v2884 = vpack.c.b16 %v2777, %v2776
      %v2885 = vpack.c.b16 %v2779, %v2778
      %v2886 = vpack.c.b16 %v2781, %v2780
      %v2887 = vpack.c.b16 %v2783, %v2782
      %v2888 = vpack.c.b16 %v2785, %v2784
      %v2889 = vpack.c.b16 %v2787, %v2786
      %v2890 = vpack.c.b16 %v2789, %v2788
      %v2891 = vpack.c.b16 %v2791, %v2790
      %v2892 = vpack.c.b16 %v2793, %v2792
      %v2893 = vpack.c.b16 %v2795, %v2794
      %v2894 = vpack.c.b16 %v2797, %v2796
      %v2895 = vpack.c.b16 %v2799, %v2798
      %v2896 = vpack.c.b16 %v2801, %v2800
      %v2897 = vpack.c.b16 %v2803, %v2802
      %v2898 = vpack.c.b16 %v2805, %v2804
      %v2899 = vpack.c.b16 %v2807, %v2806
      %v2900 = vpack.c.b16 %v2809, %v2808
      %v2901 = vpack.c.b16 %v2811, %v2810
      %v2902 = vpack.c.b16 %v2813, %v2812
      %v2903 = vpack.c.b16 %v2815, %v2814
      %v2904 = vpack.c.b16 %v2817, %v2816
      %v2905 = vpack.c.b16 %v2819, %v2818
      %v2906 = vpack.c.b16 %v2821, %v2820
      %v2907 = vpack.c.b16 %v2823, %v2822
      %v2908 = vpack.c.b16 %v2825, %v2824
      %v2909 = vpack.c.b16 %v2827, %v2826
      %v2910 = vpack.c.b16 %v2829, %v2828
      %v2911 = vpack.c.b16 %v2831, %v2830
      %v2912 = vpack.c.b16 %v2833, %v2832
      %v2913 = vpack.c.b16 %v2835, %v2834
      %v2914 = vpack.c.b16 %v2837, %v2836
      %v2915 = vpack.c.b16 %v2839, %v2838
      %v2916 = vpack.c.b16 %v2841, %v2840
      %v2917 = vpack.c.b16 %v2843, %v2842
      %v2918 = vpack.c.b16 %v2845, %v2844
      %v2919 = vpack.c.b16 %v2847, %v2846
      %v2920 = vpack.c.b16 %v2849, %v2848
      %v2921 = vpack.c.b16 %v2851, %v2850
      %v2922 = vpack.c.b16 %v2853, %v2852
      %v2923 = vpack.c.b16 %v2855, %v2854
      %v2924 = vpack.c.b16 %v2857, %v2856
      %v2925 = vpack.c.b16 %v2859, %v2858
      %v2926 = vpack.c.b16 %v2861, %v2860
      %v2927 = vpack.c.b16 %v2863, %v2862
      %2992 = vmatprep.subr.bf16.mxu0 0
      %2993 = vmatpush1.bf16.msra.mxu0 %v2864
      %2994 = vmatprep.subr.bf16.mxu0 0
      %2995 = vmatpush1.bf16.msra.mxu0 %v2865
      %2996 = vmatprep.subr.bf16.mxu0 0
      %2997 = vmatpush1.bf16.msra.mxu0 %v2866
      %2998 = vmatprep.subr.bf16.mxu0 0
      %2999 = vmatpush1.bf16.msra.mxu0 %v2867
      %3000 = vmatprep.subr.bf16.mxu0 0
      %3001 = vmatpush1.bf16.msra.mxu0 %v2868
      %3002 = vmatprep.subr.bf16.mxu0 0
      %3003 = vmatpush1.bf16.msra.mxu0 %v2869
      %3004 = vmatprep.subr.bf16.mxu0 0
      %3005 = vmatpush1.bf16.msra.mxu0 %v2870
      %3006 = vmatprep.subr.bf16.mxu0 0
      %3007 = vmatpush1.bf16.msra.mxu0 %v2871
      %3008 = vmatprep.subr.bf16.mxu0 0
      %3009 = vmatpush1.bf16.msra.mxu0 %v2872
      %3010 = vmatprep.subr.bf16.mxu0 0
      %3011 = vmatpush1.bf16.msra.mxu0 %v2873
      %3012 = vmatprep.subr.bf16.mxu0 0
      %3013 = vmatpush1.bf16.msra.mxu0 %v2874
      %3014 = vmatprep.subr.bf16.mxu0 0
      %3015 = vmatpush1.bf16.msra.mxu0 %v2875
      %3016 = vmatprep.subr.bf16.mxu0 0
      %3017 = vmatpush1.bf16.msra.mxu0 %v2876
      %3018 = vmatprep.subr.bf16.mxu0 0
      %3019 = vmatpush1.bf16.msra.mxu0 %v2877
      %3020 = vmatprep.subr.bf16.mxu0 0
      %3021 = vmatpush1.bf16.msra.mxu0 %v2878
      %3022 = vmatprep.subr.bf16.mxu0 0
      %3023 = vmatpush1.bf16.msra.mxu0 %v2879
      %3024 = vmatprep.mubr.bf16.mxu0 %v2370
      %3025 = vmatmul.mubr.bf16.gmra.mrb[0].mxu0 %v2354
      %v3026 = vpop.f32.mrb[0].mxu0
      %v3027 = vadd.f32 0.0, %v3026
      %v3028 = vpop.f32.mrb[0].mxu0
      %v3029 = vpop.f32.mrb[0].mxu0
      %v3030 = vadd.f32 0.0, %v3029
      %v3031 = vpop.f32.mrb[0].mxu0
      %3032 = vmatprep.mubr.bf16.mxu0 %v2374
      %3033 = vmatmul.mubr.bf16.gmra.mrb[0].mxu0 %v2358
      %v3034 = vpop.f32.mrb[0].mxu0
      %v3035 = vadd.f32 0.0, %v3034
      %v3036 = vpop.f32.mrb[0].mxu0
      %v3037 = vpop.f32.mrb[0].mxu0
      %v3038 = vadd.f32 0.0, %v3037
      %v3039 = vpop.f32.mrb[0].mxu0
      %3040 = vmatprep.mubr.bf16.mxu0 %v2378
      %3041 = vmatmul.mubr.bf16.gmra.mrb[0].mxu0 %v2362
      %v3042 = vpop.f32.mrb[0].mxu0
      %v3043 = vadd.f32 0.0, %v3042
      %v3044 = vpop.f32.mrb[0].mxu0
      %v3045 = vpop.f32.mrb[0].mxu0
      %v3046 = vadd.f32 0.0, %v3045
      %v3047 = vpop.f32.mrb[0].mxu0
      %3048 = vmatprep.mubr.bf16.mxu0 %v2382
      %3049 = vmatmul.mubr.bf16.gmra.mrb[0].mxu0 %v2366
      %v3050 = vpop.f32.mrb[0].mxu0
      %v3051 = vadd.f32 0.0, %v3050
      %v3052 = vpop.f32.mrb[0].mxu0
      %v3053 = vpop.f32.mrb[0].mxu0
      %v3054 = vadd.f32 0.0, %v3053
      %v3055 = vpop.f32.mrb[0].mxu0
      %3056 = vdwg.mxu0
      %3057 = vmatprep.subr.bf16.mxu0 0
      %3058 = vmatpush1.bf16.msra.mxu0 %v2880
      %3059 = vmatprep.subr.bf16.mxu0 0
      %3060 = vmatpush1.bf16.msra.mxu0 %v2881
      %3061 = vmatprep.subr.bf16.mxu0 0
      %3062 = vmatpush1.bf16.msra.mxu0 %v2882
      %3063 = vmatprep.subr.bf16.mxu0 0
      %3064 = vmatpush1.bf16.msra.mxu0 %v2883
      %3065 = vmatprep.subr.bf16.mxu0 0
      %3066 = vmatpush1.bf16.msra.mxu0 %v2884
      %3067 = vmatprep.subr.bf16.mxu0 0
      %3068 = vmatpush1.bf16.msra.mxu0 %v2885
      %3069 = vmatprep.subr.bf16.mxu0 0
      %3070 = vmatpush1.bf16.msra.mxu0 %v2886
      %3071 = vmatprep.subr.bf16.mxu0 0
      %3072 = vmatpush1.bf16.msra.mxu0 %v2887
      %3073 = vmatprep.subr.bf16.mxu0 0
      %3074 = vmatpush1.bf16.msra.mxu0 %v2888
      %3075 = vmatprep.subr.bf16.mxu0 0
      %3076 = vmatpush1.bf16.msra.mxu0 %v2889
      %3077 = vmatprep.subr.bf16.mxu0 0
      %3078 = vmatpush1.bf16.msra.mxu0 %v2890
      %3079 = vmatprep.subr.bf16.mxu0 0
      %3080 = vmatpush1.bf16.msra.mxu0 %v2891
      %3081 = vmatprep.subr.bf16.mxu0 0
      %3082 = vmatpush1.bf16.msra.mxu0 %v2892
      %3083 = vmatprep.subr.bf16.mxu0 0
      %3084 = vmatpush1.bf16.msra.mxu0 %v2893
      %3085 = vmatprep.subr.bf16.mxu0 0
      %3086 = vmatpush1.bf16.msra.mxu0 %v2894
      %3087 = vmatprep.subr.bf16.mxu0 0
      %3088 = vmatpush1.bf16.msra.mxu0 %v2895
      %3089 = vmatprep.mubr.bf16.mxu0 %v2402
      %3090 = vmatmul.mubr.bf16.gmra.mrb[0].mxu0 %v2386
      %v3091 = vpop.f32.mrb[0].mxu0
      %v3092 = vadd.f32 %v3027, %v3091
      %v3093 = vpop.f32.mrb[0].mxu0
      %v3094 = vpop.f32.mrb[0].mxu0
      %v3095 = vadd.f32 %v3030, %v3094
      %v3096 = vpop.f32.mrb[0].mxu0
      %3097 = vmatprep.mubr.bf16.mxu0 %v2406
      %3098 = vmatmul.mubr.bf16.gmra.mrb[0].mxu0 %v2390
      %v3099 = vpop.f32.mrb[0].mxu0
      %v3100 = vadd.f32 %v3035, %v3099
      %v3101 = vpop.f32.mrb[0].mxu0
      %v3102 = vpop.f32.mrb[0].mxu0
      %v3103 = vadd.f32 %v3038, %v3102
      %v3104 = vpop.f32.mrb[0].mxu0
      %3105 = vmatprep.mubr.bf16.mxu0 %v2410
      %3106 = vmatmul.mubr.bf16.gmra.mrb[0].mxu0 %v2394
      %v3107 = vpop.f32.mrb[0].mxu0
      %v3108 = vadd.f32 %v3043, %v3107
      %v3109 = vpop.f32.mrb[0].mxu0
      %v3110 = vpop.f32.mrb[0].mxu0
      %v3111 = vadd.f32 %v3046, %v3110
      %v3112 = vpop.f32.mrb[0].mxu0
      %3113 = vmatprep.mubr.bf16.mxu0 %v2414
      %3114 = vmatmul.mubr.bf16.gmra.mrb[0].mxu0 %v2398
      %v3115 = vpop.f32.mrb[0].mxu0
      %v3116 = vadd.f32 %v3051, %v3115
      %v3117 = vpop.f32.mrb[0].mxu0
      %v3118 = vpop.f32.mrb[0].mxu0
      %v3119 = vadd.f32 %v3054, %v3118
      %v3120 = vpop.f32.mrb[0].mxu0
      %3121 = vdwg.mxu0
      %3122 = vmatprep.subr.bf16.mxu0 0
      %3123 = vmatpush1.bf16.msra.mxu0 %v2896
      %3124 = vmatprep.subr.bf16.mxu0 0
      %3125 = vmatpush1.bf16.msra.mxu0 %v2897
      %3126 = vmatprep.subr.bf16.mxu0 0
      %3127 = vmatpush1.bf16.msra.mxu0 %v2898
      %3128 = vmatprep.subr.bf16.mxu0 0
      %3129 = vmatpush1.bf16.msra.mxu0 %v2899
      %3130 = vmatprep.subr.bf16.mxu0 0
      %3131 = vmatpush1.bf16.msra.mxu0 %v2900
      %3132 = vmatprep.subr.bf16.mxu0 0
      %3133 = vmatpush1.bf16.msra.mxu0 %v2901
      %3134 = vmatprep.subr.bf16.mxu0 0
      %3135 = vmatpush1.bf16.msra.mxu0 %v2902
      %3136 = vmatprep.subr.bf16.mxu0 0
      %3137 = vmatpush1.bf16.msra.mxu0 %v2903
      %3138 = vmatprep.subr.bf16.mxu0 0
      %3139 = vmatpush1.bf16.msra.mxu0 %v2904
      %3140 = vmatprep.subr.bf16.mxu0 0
      %3141 = vmatpush1.bf16.msra.mxu0 %v2905
      %3142 = vmatprep.subr.bf16.mxu0 0
      %3143 = vmatpush1.bf16.msra.mxu0 %v2906
      %3144 = vmatprep.subr.bf16.mxu0 0
      %3145 = vmatpush1.bf16.msra.mxu0 %v2907
      %3146 = vmatprep.subr.bf16.mxu0 0
      %3147 = vmatpush1.bf16.msra.mxu0 %v2908
      %3148 = vmatprep.subr.bf16.mxu0 0
      %3149 = vmatpush1.bf16.msra.mxu0 %v2909
      %3150 = vmatprep.subr.bf16.mxu0 0
      %3151 = vmatpush1.bf16.msra.mxu0 %v2910
      %3152 = vmatprep.subr.bf16.mxu0 0
      %3153 = vmatpush1.bf16.msra.mxu0 %v2911
      %3154 = vmatprep.mubr.bf16.mxu0 %v2434
      %3155 = vmatmul.mubr.bf16.gmra.mrb[0].mxu0 %v2418
      %v3156 = vpop.f32.mrb[0].mxu0
      %v3157 = vadd.f32 %v3092, %v3156
      %v3158 = vpop.f32.mrb[0].mxu0
      %v3159 = vpop.f32.mrb[0].mxu0
      %v3160 = vadd.f32 %v3095, %v3159
      %v3161 = vpop.f32.mrb[0].mxu0
      %3162 = vmatprep.mubr.bf16.mxu0 %v2438
      %3163 = vmatmul.mubr.bf16.gmra.mrb[0].mxu0 %v2422
      %v3164 = vpop.f32.mrb[0].mxu0
      %v3165 = vadd.f32 %v3100, %v3164
      %v3166 = vpop.f32.mrb[0].mxu0
      %v3167 = vpop.f32.mrb[0].mxu0
      %v3168 = vadd.f32 %v3103, %v3167
      %v3169 = vpop.f32.mrb[0].mxu0
      %3170 = vmatprep.mubr.bf16.mxu0 %v2442
      %3171 = vmatmul.mubr.bf16.gmra.mrb[0].mxu0 %v2426
      %v3172 = vpop.f32.mrb[0].mxu0
      %v3173 = vadd.f32 %v3108, %v3172
      %v3174 = vpop.f32.mrb[0].mxu0
      %v3175 = vpop.f32.mrb[0].mxu0
      %v3176 = vadd.f32 %v3111, %v3175
      %v3177 = vpop.f32.mrb[0].mxu0
      %3178 = vmatprep.mubr.bf16.mxu0 %v2446
      %3179 = vmatmul.mubr.bf16.gmra.mrb[0].mxu0 %v2430
      %v3180 = vpop.f32.mrb[0].mxu0
      %v3181 = vadd.f32 %v3116, %v3180
      %v3182 = vpop.f32.mrb[0].mxu0
      %v3183 = vpop.f32.mrb[0].mxu0
      %v3184 = vadd.f32 %v3119, %v3183
      %v3185 = vpop.f32.mrb[0].mxu0
      %3186 = vdwg.mxu0
      %3187 = vmatprep.subr.bf16.mxu0 0
      %3188 = vmatpush1.bf16.msra.mxu0 %v2912
      %3189 = vmatprep.subr.bf16.mxu0 0
      %3190 = vmatpush1.bf16.msra.mxu0 %v2913
      %3191 = vmatprep.subr.bf16.mxu0 0
      %3192 = vmatpush1.bf16.msra.mxu0 %v2914
      %3193 = vmatprep.subr.bf16.mxu0 0
      %3194 = vmatpush1.bf16.msra.mxu0 %v2915
      %3195 = vmatprep.subr.bf16.mxu0 0
      %3196 = vmatpush1.bf16.msra.mxu0 %v2916
      %3197 = vmatprep.subr.bf16.mxu0 0
      %3198 = vmatpush1.bf16.msra.mxu0 %v2917
      %3199 = vmatprep.subr.bf16.mxu0 0
      %3200 = vmatpush1.bf16.msra.mxu0 %v2918
      %3201 = vmatprep.subr.bf16.mxu0 0
      %3202 = vmatpush1.bf16.msra.mxu0 %v2919
      %3203 = vmatprep.subr.bf16.mxu0 0
      %3204 = vmatpush1.bf16.msra.mxu0 %v2920
      %3205 = vmatprep.subr.bf16.mxu0 0
      %3206 = vmatpush1.bf16.msra.mxu0 %v2921
      %3207 = vmatprep.subr.bf16.mxu0 0
      %3208 = vmatpush1.bf16.msra.mxu0 %v2922
      %3209 = vmatprep.subr.bf16.mxu0 0
      %3210 = vmatpush1.bf16.msra.mxu0 %v2923
      %3211 = vmatprep.subr.bf16.mxu0 0
      %3212 = vmatpush1.bf16.msra.mxu0 %v2924
      %3213 = vmatprep.subr.bf16.mxu0 0
      %3214 = vmatpush1.bf16.msra.mxu0 %v2925
      %3215 = vmatprep.subr.bf16.mxu0 0
      %3216 = vmatpush1.bf16.msra.mxu0 %v2926
      %3217 = vmatprep.subr.bf16.mxu0 0
      %3218 = vmatpush1.bf16.msra.mxu0 %v2927
      %3219 = vmatprep.mubr.bf16.mxu0 %v2466
      %3220 = vmatmul.mubr.bf16.gmra.mrb[0].mxu0 %v2450
      %v3221 = vpop.f32.mrb[0].mxu0
      %v3222 = vadd.f32 %v3157, %v3221
      %v3223 = vpop.f32.mrb[0].mxu0
      %v3224 = vpop.f32.mrb[0].mxu0
      %v3225 = vadd.f32 %v3160, %v3224
      %v3226 = vpop.f32.mrb[0].mxu0
      %3227 = vmatprep.mubr.bf16.mxu0 %v2470
      %3228 = vmatmul.mubr.bf16.gmra.mrb[0].mxu0 %v2454
      %v3229 = vpop.f32.mrb[0].mxu0
      %v3230 = vadd.f32 %v3165, %v3229
      %v3231 = vpop.f32.mrb[0].mxu0
      %v3232 = vpop.f32.mrb[0].mxu0
      %v3233 = vadd.f32 %v3168, %v3232
      %v3234 = vpop.f32.mrb[0].mxu0
      %3235 = vmatprep.mubr.bf16.mxu0 %v2474
      %3236 = vmatmul.mubr.bf16.gmra.mrb[0].mxu0 %v2458
      %v3237 = vpop.f32.mrb[0].mxu0
      %v3238 = vadd.f32 %v3173, %v3237
      %v3239 = vpop.f32.mrb[0].mxu0
      %v3240 = vpop.f32.mrb[0].mxu0
      %v3241 = vadd.f32 %v3176, %v3240
      %v3242 = vpop.f32.mrb[0].mxu0
      %3243 = vmatprep.mubr.bf16.mxu0 %v2478
      %3244 = vmatmul.mubr.bf16.gmra.mrb[0].mxu0 %v2462
      %v3245 = vpop.f32.mrb[0].mxu0
      %v3246 = vadd.f32 %v3181, %v3245
      %v3247 = vpop.f32.mrb[0].mxu0
      %v3248 = vpop.f32.mrb[0].mxu0
      %v3249 = vadd.f32 %v3184, %v3248
      %v3250 = vpop.f32.mrb[0].mxu0
      %3251 = vdwg.mxu0
      %v3252 = vadd.f32 %v3222, %v3225
      %v3253 = vadd.f32 %v3252, %v3230
      %v3254 = vadd.f32 %v3253, %v3233
      %v3255 = vadd.f32 %v3254, %v3238
      %v3256 = vadd.f32 %v3255, %v3241
      %v3257 = vadd.f32 %v3256, %v3246
      %v3258 = vadd.f32 %v3257, %v3249
      %v3259 = vrot.slane %v3258, 4
      %v3260 = vadd.f32 %v3258, %v3259
      %v3261 = vrot.slane %v3260, 2
      %v3262 = vadd.f32 %v3260, %v3261
      %v3263 = vrot.slane %v3262, 1
      %v3264 = vadd.f32 %v3262, %v3263
      %v3265 = vrcp.pop 64.0
      %v3266 = vmul.f32 %v3264, %v3265
      %v3267 = vsub.f32 %v3222, %v3266
      %v3268 = vsub.f32 %v3225, %v3266
      %v3269 = vsub.f32 %v3230, %v3266
      %v3270 = vsub.f32 %v3233, %v3266
      %v3271 = vsub.f32 %v3238, %v3266
      %v3272 = vsub.f32 %v3241, %v3266
      %v3273 = vsub.f32 %v3246, %v3266
      %v3274 = vsub.f32 %v3249, %v3266
      %v3275 = vmul.f32 %v3267, %v3267
      %v3276 = vmul.f32 %v3268, %v3268
      %v3277 = vmul.f32 %v3269, %v3269
      %v3278 = vmul.f32 %v3270, %v3270
      %v3279 = vmul.f32 %v3271, %v3271
      %v3280 = vmul.f32 %v3272, %v3272
      %v3281 = vmul.f32 %v3273, %v3273
      %v3282 = vmul.f32 %v3274, %v3274
      %v3283 = vadd.f32 %v3275, %v3276
      %v3284 = vadd.f32 %v3283, %v3277
      %v3285 = vadd.f32 %v3284, %v3278
      %v3286 = vadd.f32 %v3285, %v3279
      %v3287 = vadd.f32 %v3286, %v3280
      %v3288 = vadd.f32 %v3287, %v3281
      %v3289 = vadd.f32 %v3288, %v3282
      %v3290 = vrot.slane %v3289, 4
      %v3291 = vadd.f32 %v3289, %v3290
      %v3292 = vrot.slane %v3291, 2
      %v3293 = vadd.f32 %v3291, %v3292
      %v3294 = vrot.slane %v3293, 1
      %v3295 = vadd.f32 %v3293, %v3294
      %v3296 = vmul.f32 %v3295, %v3265
      %v3297 = vadd.f32 %v3296, 1e-05
      %v3298 = vrsqrt.pop %v3297
      %v3299 = vmul.f32 %v3267, %v3298
      %v3300 = vmul.f32 %v3268, %v3298
      %v3301 = vmul.f32 %v3269, %v3298
      %v3302 = vmul.f32 %v3270, %v3298
      %v3303 = vmul.f32 %v3271, %v3298
      %v3304 = vmul.f32 %v3272, %v3298
      %v3305 = vmul.f32 %v3273, %v3298
      %v3306 = vmul.f32 %v3274, %v3298
      %vm3307 = vcmp.ge.f32.partialorder %v3299, 0.0
      %vm3308 = vcmp.ge.f32.partialorder %v3300, 0.0
      %vm3309 = vcmp.ge.f32.partialorder %v3301, 0.0
      %vm3310 = vcmp.ge.f32.partialorder %v3302, 0.0
      %vm3311 = vcmp.ge.f32.partialorder %v3303, 0.0
      %vm3312 = vcmp.ge.f32.partialorder %v3304, 0.0
      %vm3313 = vcmp.ge.f32.partialorder %v3305, 0.0
      %vm3314 = vcmp.ge.f32.partialorder %v3306, 0.0
      %v3315 = vmul.f32 %v3299, 0.2
      %v3316 = vmul.f32 %v3300, 0.2
      %v3317 = vmul.f32 %v3301, 0.2
      %v3318 = vmul.f32 %v3302, 0.2
      %v3319 = vmul.f32 %v3303, 0.2
      %v3320 = vmul.f32 %v3304, 0.2
      %v3321 = vmul.f32 %v3305, 0.2
      %v3322 = vmul.f32 %v3306, 0.2
      %v3323 = vsel %vm3307, %v3299, %v3315
      %v3324 = vsel %vm3308, %v3300, %v3316
      %v3325 = vsel %vm3309, %v3301, %v3317
      %v3326 = vsel %vm3310, %v3302, %v3318
      %v3327 = vsel %vm3311, %v3303, %v3319
      %v3328 = vsel %vm3312, %v3304, %v3320
      %v3329 = vsel %vm3313, %v3305, %v3321
      %v3330 = vsel %vm3314, %v3306, %v3322
      %v3331 = vpack.c.bf16 %v3324, %v3323
      %v3332 = vpack.c.bf16 %v3326, %v3325
      %v3333 = vpack.c.bf16 %v3328, %v3327
      %v3334 = vpack.c.bf16 %v3330, %v3329
      %v3335 = vld [vmem:[%s5] sm:$0xf]
      %v3336 = vld [vmem:[%s5 + $0x4] sm:$0xf]
      %v3337 = vld [vmem:[%s5 + $0x8] sm:$0xf]
      %v3338 = vld [vmem:[%s5 + $0xc] sm:$0xf]
      %v3339 = vld [vmem:[%s5 + $0x10] sm:$0xf]
      %v3340 = vld [vmem:[%s5 + $0x14] sm:$0xf]
      %v3341 = vld [vmem:[%s5 + $0x18] sm:$0xf]
      %v3342 = vld [vmem:[%s5 + $0x1c] sm:$0xf]
      %v3343 = vld [vmem:[%s5 + $0x20] sm:$0xf]
      %v3344 = vld [vmem:[%s5 + $0x24] sm:$0xf]
      %v3345 = vld [vmem:[%s5 + $0x28] sm:$0xf]
      %v3346 = vld [vmem:[%s5 + $0x2c] sm:$0xf]
      %v3347 = vld [vmem:[%s5 + $0x30] sm:$0xf]
      %v3348 = vld [vmem:[%s5 + $0x34] sm:$0xf]
      %v3349 = vld [vmem:[%s5 + $0x38] sm:$0xf]
      %v3350 = vld [vmem:[%s5 + $0x3c] sm:$0xf]
      %v3351 = vld [vmem:[%s5 + $0x40] sm:$0xf]
      %v3352 = vld [vmem:[%s5 + $0x44] sm:$0xf]
      %v3353 = vld [vmem:[%s5 + $0x48] sm:$0xf]
      %v3354 = vld [vmem:[%s5 + $0x4c] sm:$0xf]
      %v3355 = vld [vmem:[%s5 + $0x50] sm:$0xf]
      %v3356 = vld [vmem:[%s5 + $0x54] sm:$0xf]
      %v3357 = vld [vmem:[%s5 + $0x58] sm:$0xf]
      %v3358 = vld [vmem:[%s5 + $0x5c] sm:$0xf]
      %v3359 = vld [vmem:[%s5 + $0x60] sm:$0xf]
      %v3360 = vld [vmem:[%s5 + $0x64] sm:$0xf]
      %v3361 = vld [vmem:[%s5 + $0x68] sm:$0xf]
      %v3362 = vld [vmem:[%s5 + $0x6c] sm:$0xf]
      %v3363 = vld [vmem:[%s5 + $0x70] sm:$0xf]
      %v3364 = vld [vmem:[%s5 + $0x74] sm:$0xf]
      %v3365 = vld [vmem:[%s5 + $0x78] sm:$0xf]
      %v3366 = vld [vmem:[%s5 + $0x7c] sm:$0xf]
      %v3399 = vunpack.c.l.b16 %v3335
      %v3400 = vunpack.c.l.b16 %v3336
      %v3401 = vunpack.c.l.b16 %v3337
      %v3402 = vunpack.c.l.b16 %v3338
      %v3403 = vunpack.c.l.b16 %v3339
      %v3404 = vunpack.c.l.b16 %v3340
      %v3405 = vunpack.c.l.b16 %v3341
      %v3406 = vunpack.c.l.b16 %v3342
      %v3407 = vunpack.c.l.b16 %v3343
      %v3408 = vunpack.c.l.b16 %v3344
      %v3409 = vunpack.c.l.b16 %v3345
      %v3410 = vunpack.c.l.b16 %v3346
      %v3411 = vunpack.c.l.b16 %v3347
      %v3412 = vunpack.c.l.b16 %v3348
      %v3413 = vunpack.c.l.b16 %v3349
      %v3414 = vunpack.c.l.b16 %v3350
      %v3415 = vunpack.c.l.b16 %v3351
      %v3416 = vunpack.c.l.b16 %v3352
      %v3417 = vunpack.c.l.b16 %v3353
      %v3418 = vunpack.c.l.b16 %v3354
      %v3419 = vunpack.c.l.b16 %v3355
      %v3420 = vunpack.c.l.b16 %v3356
      %v3421 = vunpack.c.l.b16 %v3357
      %v3422 = vunpack.c.l.b16 %v3358
      %v3423 = vunpack.c.l.b16 %v3359
      %v3424 = vunpack.c.l.b16 %v3360
      %v3425 = vunpack.c.l.b16 %v3361
      %v3426 = vunpack.c.l.b16 %v3362
      %v3427 = vunpack.c.l.b16 %v3363
      %v3428 = vunpack.c.l.b16 %v3364
      %v3429 = vunpack.c.l.b16 %v3365
      %v3430 = vunpack.c.l.b16 %v3366
      %v3431 = vpack.c.b16 %v3400, %v3399
      %v3432 = vpack.c.b16 %v3402, %v3401
      %v3433 = vpack.c.b16 %v3404, %v3403
      %v3434 = vpack.c.b16 %v3406, %v3405
      %v3435 = vpack.c.b16 %v3408, %v3407
      %v3436 = vpack.c.b16 %v3410, %v3409
      %v3437 = vpack.c.b16 %v3412, %v3411
      %v3438 = vpack.c.b16 %v3414, %v3413
      %v3439 = vpack.c.b16 %v3416, %v3415
      %v3440 = vpack.c.b16 %v3418, %v3417
      %v3441 = vpack.c.b16 %v3420, %v3419
      %v3442 = vpack.c.b16 %v3422, %v3421
      %v3443 = vpack.c.b16 %v3424, %v3423
      %v3444 = vpack.c.b16 %v3426, %v3425
      %v3445 = vpack.c.b16 %v3428, %v3427
      %v3446 = vpack.c.b16 %v3430, %v3429
      %v3448 = vsel %vm2351, %v3431, 0
      %v3451 = vsel %vm2351, %v3432, 0
      %v3454 = vsel %vm2351, %v3433, 0
      %v3457 = vsel %vm2351, %v3434, 0
      %v3460 = vsel %vm2351, %v3435, 0
      %v3463 = vsel %vm2351, %v3436, 0
      %v3466 = vsel %vm2351, %v3437, 0
      %v3469 = vsel %vm2351, %v3438, 0
      %v3472 = vsel %vm2351, %v3439, 0
      %v3475 = vsel %vm2351, %v3440, 0
      %v3478 = vsel %vm2351, %v3441, 0
      %v3481 = vsel %vm2351, %v3442, 0
      %v3484 = vsel %vm2351, %v3443, 0
      %v3487 = vsel %vm2351, %v3444, 0
      %v3490 = vsel %vm2351, %v3445, 0
      %v3493 = vsel %vm2351, %v3446, 0
      %3495 = vmatprep.subr.bf16.mxu0 0
      %3496 = vmatpush1.bf16.msra.mxu0 %v3331
      %3497 = vmatprep.subr.bf16.mxu0 0
      %3498 = vmatpush1.bf16.msra.mxu0 %v3332
      %3499 = vmatprep.subr.bf16.mxu0 0
      %3500 = vmatpush1.bf16.msra.mxu0 %v3333
      %3501 = vmatprep.subr.bf16.mxu0 0
      %3502 = vmatpush1.bf16.msra.mxu0 %v3334
      %3503 = vmatprep.subr.bf16.mxu0 0
      %3504 = vmatpush1.bf16.msra.mxu0 0
      %3505 = vmatprep.subr.bf16.mxu0 0
      %3506 = vmatpush1.bf16.msra.mxu0 0
      %3507 = vmatprep.subr.bf16.mxu0 0
      %3508 = vmatpush1.bf16.msra.mxu0 0
      %3509 = vmatprep.subr.bf16.mxu0 0
      %3510 = vmatpush1.bf16.msra.mxu0 0
      %3511 = vmatprep.subr.bf16.mxu0 0
      %3512 = vmatpush1.bf16.msra.mxu0 0
      %3513 = vmatprep.subr.bf16.mxu0 0
      %3514 = vmatpush1.bf16.msra.mxu0 0
      %3515 = vmatprep.subr.bf16.mxu0 0
      %3516 = vmatpush1.bf16.msra.mxu0 0
      %3517 = vmatprep.subr.bf16.mxu0 0
      %3518 = vmatpush1.bf16.msra.mxu0 0
      %3519 = vmatprep.subr.bf16.mxu0 0
      %3520 = vmatpush1.bf16.msra.mxu0 0
      %3521 = vmatprep.subr.bf16.mxu0 0
      %3522 = vmatpush1.bf16.msra.mxu0 0
      %3523 = vmatprep.subr.bf16.mxu0 0
      %3524 = vmatpush1.bf16.msra.mxu0 0
      %3525 = vmatprep.subr.bf16.mxu0 0
      %3526 = vmatpush1.bf16.msra.mxu0 0
      %3527 = vmatprep.mubr.bf16.mxu0 0
      %3528 = vmatmul.mubr.bf16.gmra.mrb[0].mxu0 %v3448
      %v3529 = vpop.f32.mrb[0].mxu0
      %v3530 = vadd.f32 0.0, %v3529
      %v3531 = vpop.f32.mrb[0].mxu0
      %v3532 = vpop.f32.mrb[0].mxu0
      %v3533 = vadd.f32 0.0, %v3532
      %v3534 = vpop.f32.mrb[0].mxu0
      %3535 = vmatprep.mubr.bf16.mxu0 0
      %3536 = vmatmul.mubr.bf16.gmra.mrb[0].mxu0 %v3451
      %v3537 = vpop.f32.mrb[0].mxu0
      %v3538 = vadd.f32 0.0, %v3537
      %v3539 = vpop.f32.mrb[0].mxu0
      %v3540 = vpop.f32.mrb[0].mxu0
      %v3541 = vadd.f32 0.0, %v3540
      %v3542 = vpop.f32.mrb[0].mxu0
      %3543 = vmatprep.mubr.bf16.mxu0 0
      %3544 = vmatmul.mubr.bf16.gmra.mrb[0].mxu0 %v3454
      %v3545 = vpop.f32.mrb[0].mxu0
      %v3546 = vadd.f32 0.0, %v3545
      %v3547 = vpop.f32.mrb[0].mxu0
      %v3548 = vpop.f32.mrb[0].mxu0
      %v3549 = vadd.f32 0.0, %v3548
      %v3550 = vpop.f32.mrb[0].mxu0
      %3551 = vmatprep.mubr.bf16.mxu0 0
      %3552 = vmatmul.mubr.bf16.gmra.mrb[0].mxu0 %v3457
      %v3553 = vpop.f32.mrb[0].mxu0
      %v3554 = vadd.f32 0.0, %v3553
      %v3555 = vpop.f32.mrb[0].mxu0
      %v3556 = vpop.f32.mrb[0].mxu0
      %v3557 = vadd.f32 0.0, %v3556
      %v3558 = vpop.f32.mrb[0].mxu0
      %3559 = vmatprep.mubr.bf16.mxu0 0
      %3560 = vmatmul.mubr.bf16.gmra.mrb[0].mxu0 %v3460
      %v3561 = vpop.f32.mrb[0].mxu0
      %v3562 = vadd.f32 0.0, %v3561
      %v3563 = vpop.f32.mrb[0].mxu0
      %v3564 = vpop.f32.mrb[0].mxu0
      %v3565 = vadd.f32 0.0, %v3564
      %v3566 = vpop.f32.mrb[0].mxu0
      %3567 = vmatprep.mubr.bf16.mxu0 0
      %3568 = vmatmul.mubr.bf16.gmra.mrb[0].mxu0 %v3463
      %v3569 = vpop.f32.mrb[0].mxu0
      %v3570 = vadd.f32 0.0, %v3569
      %v3571 = vpop.f32.mrb[0].mxu0
      %v3572 = vpop.f32.mrb[0].mxu0
      %v3573 = vadd.f32 0.0, %v3572
      %v3574 = vpop.f32.mrb[0].mxu0
      %3575 = vmatprep.mubr.bf16.mxu0 0
      %3576 = vmatmul.mubr.bf16.gmra.mrb[0].mxu0 %v3466
      %v3577 = vpop.f32.mrb[0].mxu0
      %v3578 = vadd.f32 0.0, %v3577
      %v3579 = vpop.f32.mrb[0].mxu0
      %v3580 = vpop.f32.mrb[0].mxu0
      %v3581 = vadd.f32 0.0, %v3580
      %v3582 = vpop.f32.mrb[0].mxu0
      %3583 = vmatprep.mubr.bf16.mxu0 0
      %3584 = vmatmul.mubr.bf16.gmra.mrb[0].mxu0 %v3469
      %v3585 = vpop.f32.mrb[0].mxu0
      %v3586 = vadd.f32 0.0, %v3585
      %v3587 = vpop.f32.mrb[0].mxu0
      %v3588 = vpop.f32.mrb[0].mxu0
      %v3589 = vadd.f32 0.0, %v3588
      %v3590 = vpop.f32.mrb[0].mxu0
      %3591 = vmatprep.mubr.bf16.mxu0 0
      %3592 = vmatmul.mubr.bf16.gmra.mrb[0].mxu0 %v3472
      %v3593 = vpop.f32.mrb[0].mxu0
      %v3594 = vadd.f32 0.0, %v3593
      %v3595 = vpop.f32.mrb[0].mxu0
      %v3596 = vpop.f32.mrb[0].mxu0
      %v3597 = vadd.f32 0.0, %v3596
      %v3598 = vpop.f32.mrb[0].mxu0
      %3599 = vmatprep.mubr.bf16.mxu0 0
      %3600 = vmatmul.mubr.bf16.gmra.mrb[0].mxu0 %v3475
      %v3601 = vpop.f32.mrb[0].mxu0
      %v3602 = vadd.f32 0.0, %v3601
      %v3603 = vpop.f32.mrb[0].mxu0
      %v3604 = vpop.f32.mrb[0].mxu0
      %v3605 = vadd.f32 0.0, %v3604
      %v3606 = vpop.f32.mrb[0].mxu0
      %3607 = vmatprep.mubr.bf16.mxu0 0
      %3608 = vmatmul.mubr.bf16.gmra.mrb[0].mxu0 %v3478
      %v3609 = vpop.f32.mrb[0].mxu0
      %v3610 = vadd.f32 0.0, %v3609
      %v3611 = vpop.f32.mrb[0].mxu0
      %v3612 = vpop.f32.mrb[0].mxu0
      %v3613 = vadd.f32 0.0, %v3612
      %v3614 = vpop.f32.mrb[0].mxu0
      %3615 = vmatprep.mubr.bf16.mxu0 0
      %3616 = vmatmul.mubr.bf16.gmra.mrb[0].mxu0 %v3481
      %v3617 = vpop.f32.mrb[0].mxu0
      %v3618 = vadd.f32 0.0, %v3617
      %v3619 = vpop.f32.mrb[0].mxu0
      %v3620 = vpop.f32.mrb[0].mxu0
      %v3621 = vadd.f32 0.0, %v3620
      %v3622 = vpop.f32.mrb[0].mxu0
      %3623 = vmatprep.mubr.bf16.mxu0 0
      %3624 = vmatmul.mubr.bf16.gmra.mrb[0].mxu0 %v3484
      %v3625 = vpop.f32.mrb[0].mxu0
      %v3626 = vadd.f32 0.0, %v3625
      %v3627 = vpop.f32.mrb[0].mxu0
      %v3628 = vpop.f32.mrb[0].mxu0
      %v3629 = vadd.f32 0.0, %v3628
      %v3630 = vpop.f32.mrb[0].mxu0
      %3631 = vmatprep.mubr.bf16.mxu0 0
      %3632 = vmatmul.mubr.bf16.gmra.mrb[0].mxu0 %v3487
      %v3633 = vpop.f32.mrb[0].mxu0
      %v3634 = vadd.f32 0.0, %v3633
      %v3635 = vpop.f32.mrb[0].mxu0
      %v3636 = vpop.f32.mrb[0].mxu0
      %v3637 = vadd.f32 0.0, %v3636
      %v3638 = vpop.f32.mrb[0].mxu0
      %3639 = vmatprep.mubr.bf16.mxu0 0
      %3640 = vmatmul.mubr.bf16.gmra.mrb[0].mxu0 %v3490
      %v3641 = vpop.f32.mrb[0].mxu0
      %v3642 = vadd.f32 0.0, %v3641
      %v3643 = vpop.f32.mrb[0].mxu0
      %v3644 = vpop.f32.mrb[0].mxu0
      %v3645 = vadd.f32 0.0, %v3644
      %v3646 = vpop.f32.mrb[0].mxu0
      %3647 = vmatprep.mubr.bf16.mxu0 0
      %3648 = vmatmul.mubr.bf16.gmra.mrb[0].mxu0 %v3493
      %v3649 = vpop.f32.mrb[0].mxu0
      %v3650 = vadd.f32 0.0, %v3649
      %v3651 = vpop.f32.mrb[0].mxu0
      %v3652 = vpop.f32.mrb[0].mxu0
      %v3653 = vadd.f32 0.0, %v3652
      %v3654 = vpop.f32.mrb[0].mxu0
      %3655 = vdwg.mxu0
      %v3656 = vpack.c.bf16 %v3533, %v3530
      %v3657 = vpack.c.bf16 %v3541, %v3538
      %v3658 = vpack.c.bf16 %v3549, %v3546
      %v3659 = vpack.c.bf16 %v3557, %v3554
      %v3660 = vpack.c.bf16 %v3565, %v3562
      %v3661 = vpack.c.bf16 %v3573, %v3570
      %v3662 = vpack.c.bf16 %v3581, %v3578
      %v3663 = vpack.c.bf16 %v3589, %v3586
      %v3664 = vpack.c.bf16 %v3597, %v3594
      %v3665 = vpack.c.bf16 %v3605, %v3602
      %v3666 = vpack.c.bf16 %v3613, %v3610
      %v3667 = vpack.c.bf16 %v3621, %v3618
      %v3668 = vpack.c.bf16 %v3629, %v3626
      %v3669 = vpack.c.bf16 %v3637, %v3634
      %v3670 = vpack.c.bf16 %v3645, %v3642
      %v3671 = vpack.c.bf16 %v3653, %v3650
      %v3672 = vld [vmem:[%s6] sm:$0xff]
      %v3673 = vld [vmem:[%s6 + $0x8] sm:$0xff]
      %v3674 = vld [vmem:[%s6 + $0x10] sm:$0xff]
      %v3675 = vld [vmem:[%s6 + $0x18] sm:$0xff]
      %v3676 = vld [vmem:[%s6 + $0x20] sm:$0xff]
      %v3677 = vld [vmem:[%s6 + $0x28] sm:$0xff]
      %v3678 = vld [vmem:[%s6 + $0x30] sm:$0xff]
      %v3679 = vld [vmem:[%s6 + $0x38] sm:$0xff]
      %v3680 = vld [vmem:[%s6 + $0x40] sm:$0xff]
      %v3681 = vld [vmem:[%s6 + $0x48] sm:$0xff]
      %v3682 = vld [vmem:[%s6 + $0x50] sm:$0xff]
      %v3683 = vld [vmem:[%s6 + $0x58] sm:$0xff]
      %v3684 = vld [vmem:[%s6 + $0x60] sm:$0xff]
      %v3685 = vld [vmem:[%s6 + $0x68] sm:$0xff]
      %v3686 = vld [vmem:[%s6 + $0x70] sm:$0xff]
      %v3687 = vld [vmem:[%s6 + $0x78] sm:$0xff]
      %v3688 = vld [vmem:[%s6 + $0x80] sm:$0xff]
      %v3689 = vld [vmem:[%s6 + $0x88] sm:$0xff]
      %v3690 = vld [vmem:[%s6 + $0x90] sm:$0xff]
      %v3691 = vld [vmem:[%s6 + $0x98] sm:$0xff]
      %v3692 = vld [vmem:[%s6 + $0xa0] sm:$0xff]
      %v3693 = vld [vmem:[%s6 + $0xa8] sm:$0xff]
      %v3694 = vld [vmem:[%s6 + $0xb0] sm:$0xff]
      %v3695 = vld [vmem:[%s6 + $0xb8] sm:$0xff]
      %v3696 = vld [vmem:[%s6 + $0xc0] sm:$0xff]
      %v3697 = vld [vmem:[%s6 + $0xc8] sm:$0xff]
      %v3698 = vld [vmem:[%s6 + $0xd0] sm:$0xff]
      %v3699 = vld [vmem:[%s6 + $0xd8] sm:$0xff]
      %v3700 = vld [vmem:[%s6 + $0xe0] sm:$0xff]
      %v3701 = vld [vmem:[%s6 + $0xe8] sm:$0xff]
      %v3702 = vld [vmem:[%s6 + $0xf0] sm:$0xff]
      %v3703 = vld [vmem:[%s6 + $0xf8] sm:$0xff]
      %v3704 = vld [vmem:[%s6 + $0x100] sm:$0xff]
      %v3705 = vld [vmem:[%s6 + $0x108] sm:$0xff]
      %v3706 = vld [vmem:[%s6 + $0x110] sm:$0xff]
      %v3707 = vld [vmem:[%s6 + $0x118] sm:$0xff]
      %v3708 = vld [vmem:[%s6 + $0x120] sm:$0xff]
      %v3709 = vld [vmem:[%s6 + $0x128] sm:$0xff]
      %v3710 = vld [vmem:[%s6 + $0x130] sm:$0xff]
      %v3711 = vld [vmem:[%s6 + $0x138] sm:$0xff]
      %v3712 = vld [vmem:[%s6 + $0x140] sm:$0xff]
      %v3713 = vld [vmem:[%s6 + $0x148] sm:$0xff]
      %v3714 = vld [vmem:[%s6 + $0x150] sm:$0xff]
      %v3715 = vld [vmem:[%s6 + $0x158] sm:$0xff]
      %v3716 = vld [vmem:[%s6 + $0x160] sm:$0xff]
      %v3717 = vld [vmem:[%s6 + $0x168] sm:$0xff]
      %v3718 = vld [vmem:[%s6 + $0x170] sm:$0xff]
      %v3719 = vld [vmem:[%s6 + $0x178] sm:$0xff]
      %v3720 = vld [vmem:[%s6 + $0x180] sm:$0xff]
      %v3721 = vld [vmem:[%s6 + $0x188] sm:$0xff]
      %v3722 = vld [vmem:[%s6 + $0x190] sm:$0xff]
      %v3723 = vld [vmem:[%s6 + $0x198] sm:$0xff]
      %v3724 = vld [vmem:[%s6 + $0x1a0] sm:$0xff]
      %v3725 = vld [vmem:[%s6 + $0x1a8] sm:$0xff]
      %v3726 = vld [vmem:[%s6 + $0x1b0] sm:$0xff]
      %v3727 = vld [vmem:[%s6 + $0x1b8] sm:$0xff]
      %v3728 = vld [vmem:[%s6 + $0x1c0] sm:$0xff]
      %v3729 = vld [vmem:[%s6 + $0x1c8] sm:$0xff]
      %v3730 = vld [vmem:[%s6 + $0x1d0] sm:$0xff]
      %v3731 = vld [vmem:[%s6 + $0x1d8] sm:$0xff]
      %v3732 = vld [vmem:[%s6 + $0x1e0] sm:$0xff]
      %v3733 = vld [vmem:[%s6 + $0x1e8] sm:$0xff]
      %v3734 = vld [vmem:[%s6 + $0x1f0] sm:$0xff]
      %v3735 = vld [vmem:[%s6 + $0x1f8] sm:$0xff]
      %v3736 = vld [vmem:[%s6 + $0x200] sm:$0xff]
      %v3737 = vld [vmem:[%s6 + $0x208] sm:$0xff]
      %v3738 = vld [vmem:[%s6 + $0x210] sm:$0xff]
      %v3739 = vld [vmem:[%s6 + $0x218] sm:$0xff]
      %v3740 = vld [vmem:[%s6 + $0x220] sm:$0xff]
      %v3741 = vld [vmem:[%s6 + $0x228] sm:$0xff]
      %v3742 = vld [vmem:[%s6 + $0x230] sm:$0xff]
      %v3743 = vld [vmem:[%s6 + $0x238] sm:$0xff]
      %v3744 = vld [vmem:[%s6 + $0x240] sm:$0xff]
      %v3745 = vld [vmem:[%s6 + $0x248] sm:$0xff]
      %v3746 = vld [vmem:[%s6 + $0x250] sm:$0xff]
      %v3747 = vld [vmem:[%s6 + $0x258] sm:$0xff]
      %v3748 = vld [vmem:[%s6 + $0x260] sm:$0xff]
      %v3749 = vld [vmem:[%s6 + $0x268] sm:$0xff]
      %v3750 = vld [vmem:[%s6 + $0x270] sm:$0xff]
      %v3751 = vld [vmem:[%s6 + $0x278] sm:$0xff]
      %v3752 = vld [vmem:[%s6 + $0x280] sm:$0xff]
      %v3753 = vld [vmem:[%s6 + $0x288] sm:$0xff]
      %v3754 = vld [vmem:[%s6 + $0x290] sm:$0xff]
      %v3755 = vld [vmem:[%s6 + $0x298] sm:$0xff]
      %v3756 = vld [vmem:[%s6 + $0x2a0] sm:$0xff]
      %v3757 = vld [vmem:[%s6 + $0x2a8] sm:$0xff]
      %v3758 = vld [vmem:[%s6 + $0x2b0] sm:$0xff]
      %v3759 = vld [vmem:[%s6 + $0x2b8] sm:$0xff]
      %v3760 = vld [vmem:[%s6 + $0x2c0] sm:$0xff]
      %v3761 = vld [vmem:[%s6 + $0x2c8] sm:$0xff]
      %v3762 = vld [vmem:[%s6 + $0x2d0] sm:$0xff]
      %v3763 = vld [vmem:[%s6 + $0x2d8] sm:$0xff]
      %v3764 = vld [vmem:[%s6 + $0x2e0] sm:$0xff]
      %v3765 = vld [vmem:[%s6 + $0x2e8] sm:$0xff]
      %v3766 = vld [vmem:[%s6 + $0x2f0] sm:$0xff]
      %v3767 = vld [vmem:[%s6 + $0x2f8] sm:$0xff]
      %v3768 = vld [vmem:[%s6 + $0x300] sm:$0xff]
      %v3769 = vld [vmem:[%s6 + $0x308] sm:$0xff]
      %v3770 = vld [vmem:[%s6 + $0x310] sm:$0xff]
      %v3771 = vld [vmem:[%s6 + $0x318] sm:$0xff]
      %v3772 = vld [vmem:[%s6 + $0x320] sm:$0xff]
      %v3773 = vld [vmem:[%s6 + $0x328] sm:$0xff]
      %v3774 = vld [vmem:[%s6 + $0x330] sm:$0xff]
      %v3775 = vld [vmem:[%s6 + $0x338] sm:$0xff]
      %v3776 = vld [vmem:[%s6 + $0x340] sm:$0xff]
      %v3777 = vld [vmem:[%s6 + $0x348] sm:$0xff]
      %v3778 = vld [vmem:[%s6 + $0x350] sm:$0xff]
      %v3779 = vld [vmem:[%s6 + $0x358] sm:$0xff]
      %v3780 = vld [vmem:[%s6 + $0x360] sm:$0xff]
      %v3781 = vld [vmem:[%s6 + $0x368] sm:$0xff]
      %v3782 = vld [vmem:[%s6 + $0x370] sm:$0xff]
      %v3783 = vld [vmem:[%s6 + $0x378] sm:$0xff]
      %v3784 = vld [vmem:[%s6 + $0x380] sm:$0xff]
      %v3785 = vld [vmem:[%s6 + $0x388] sm:$0xff]
      %v3786 = vld [vmem:[%s6 + $0x390] sm:$0xff]
      %v3787 = vld [vmem:[%s6 + $0x398] sm:$0xff]
      %v3788 = vld [vmem:[%s6 + $0x3a0] sm:$0xff]
      %v3789 = vld [vmem:[%s6 + $0x3a8] sm:$0xff]
      %v3790 = vld [vmem:[%s6 + $0x3b0] sm:$0xff]
      %v3791 = vld [vmem:[%s6 + $0x3b8] sm:$0xff]
      %v3792 = vld [vmem:[%s6 + $0x3c0] sm:$0xff]
      %v3793 = vld [vmem:[%s6 + $0x3c8] sm:$0xff]
      %v3794 = vld [vmem:[%s6 + $0x3d0] sm:$0xff]
      %v3795 = vld [vmem:[%s6 + $0x3d8] sm:$0xff]
      %v3796 = vld [vmem:[%s6 + $0x3e0] sm:$0xff]
      %v3797 = vld [vmem:[%s6 + $0x3e8] sm:$0xff]
      %v3798 = vld [vmem:[%s6 + $0x3f0] sm:$0xff]
      %v3799 = vld [vmem:[%s6 + $0x3f8] sm:$0xff]
      %v3800 = vld [vmem:[%s6 + $0x400] sm:$0xff]
      %v3801 = vld [vmem:[%s6 + $0x408] sm:$0xff]
      %v3802 = vld [vmem:[%s6 + $0x410] sm:$0xff]
      %v3803 = vld [vmem:[%s6 + $0x418] sm:$0xff]
      %v3804 = vld [vmem:[%s6 + $0x420] sm:$0xff]
      %v3805 = vld [vmem:[%s6 + $0x428] sm:$0xff]
      %v3806 = vld [vmem:[%s6 + $0x430] sm:$0xff]
      %v3807 = vld [vmem:[%s6 + $0x438] sm:$0xff]
      %v3808 = vld [vmem:[%s6 + $0x440] sm:$0xff]
      %v3809 = vld [vmem:[%s6 + $0x448] sm:$0xff]
      %v3810 = vld [vmem:[%s6 + $0x450] sm:$0xff]
      %v3811 = vld [vmem:[%s6 + $0x458] sm:$0xff]
      %v3812 = vld [vmem:[%s6 + $0x460] sm:$0xff]
      %v3813 = vld [vmem:[%s6 + $0x468] sm:$0xff]
      %v3814 = vld [vmem:[%s6 + $0x470] sm:$0xff]
      %v3815 = vld [vmem:[%s6 + $0x478] sm:$0xff]
      %v3816 = vld [vmem:[%s6 + $0x480] sm:$0xff]
      %v3817 = vld [vmem:[%s6 + $0x488] sm:$0xff]
      %v3818 = vld [vmem:[%s6 + $0x490] sm:$0xff]
      %v3819 = vld [vmem:[%s6 + $0x498] sm:$0xff]
      %v3820 = vld [vmem:[%s6 + $0x4a0] sm:$0xff]
      %v3821 = vld [vmem:[%s6 + $0x4a8] sm:$0xff]
      %v3822 = vld [vmem:[%s6 + $0x4b0] sm:$0xff]
      %v3823 = vld [vmem:[%s6 + $0x4b8] sm:$0xff]
      %v3824 = vld [vmem:[%s6 + $0x4c0] sm:$0xff]
      %v3825 = vld [vmem:[%s6 + $0x4c8] sm:$0xff]
      %v3826 = vld [vmem:[%s6 + $0x4d0] sm:$0xff]
      %v3827 = vld [vmem:[%s6 + $0x4d8] sm:$0xff]
      %v3828 = vld [vmem:[%s6 + $0x4e0] sm:$0xff]
      %v3829 = vld [vmem:[%s6 + $0x4e8] sm:$0xff]
      %v3830 = vld [vmem:[%s6 + $0x4f0] sm:$0xff]
      %v3831 = vld [vmem:[%s6 + $0x4f8] sm:$0xff]
      %v3832 = vld [vmem:[%s6 + $0x500] sm:$0xff]
      %v3833 = vld [vmem:[%s6 + $0x508] sm:$0xff]
      %v3834 = vld [vmem:[%s6 + $0x510] sm:$0xff]
      %v3835 = vld [vmem:[%s6 + $0x518] sm:$0xff]
      %v3836 = vld [vmem:[%s6 + $0x520] sm:$0xff]
      %v3837 = vld [vmem:[%s6 + $0x528] sm:$0xff]
      %v3838 = vld [vmem:[%s6 + $0x530] sm:$0xff]
      %v3839 = vld [vmem:[%s6 + $0x538] sm:$0xff]
      %v3840 = vld [vmem:[%s6 + $0x540] sm:$0xff]
      %v3841 = vld [vmem:[%s6 + $0x548] sm:$0xff]
      %v3842 = vld [vmem:[%s6 + $0x550] sm:$0xff]
      %v3843 = vld [vmem:[%s6 + $0x558] sm:$0xff]
      %v3844 = vld [vmem:[%s6 + $0x560] sm:$0xff]
      %v3845 = vld [vmem:[%s6 + $0x568] sm:$0xff]
      %v3846 = vld [vmem:[%s6 + $0x570] sm:$0xff]
      %v3847 = vld [vmem:[%s6 + $0x578] sm:$0xff]
      %v3848 = vld [vmem:[%s6 + $0x580] sm:$0xff]
      %v3849 = vld [vmem:[%s6 + $0x588] sm:$0xff]
      %v3850 = vld [vmem:[%s6 + $0x590] sm:$0xff]
      %v3851 = vld [vmem:[%s6 + $0x598] sm:$0xff]
      %v3852 = vld [vmem:[%s6 + $0x5a0] sm:$0xff]
      %v3853 = vld [vmem:[%s6 + $0x5a8] sm:$0xff]
      %v3854 = vld [vmem:[%s6 + $0x5b0] sm:$0xff]
      %v3855 = vld [vmem:[%s6 + $0x5b8] sm:$0xff]
      %v3856 = vld [vmem:[%s6 + $0x5c0] sm:$0xff]
      %v3857 = vld [vmem:[%s6 + $0x5c8] sm:$0xff]
      %v3858 = vld [vmem:[%s6 + $0x5d0] sm:$0xff]
      %v3859 = vld [vmem:[%s6 + $0x5d8] sm:$0xff]
      %v3860 = vld [vmem:[%s6 + $0x5e0] sm:$0xff]
      %v3861 = vld [vmem:[%s6 + $0x5e8] sm:$0xff]
      %v3862 = vld [vmem:[%s6 + $0x5f0] sm:$0xff]
      %v3863 = vld [vmem:[%s6 + $0x5f8] sm:$0xff]
      %v3864 = vld [vmem:[%s6 + $0x600] sm:$0xff]
      %v3865 = vld [vmem:[%s6 + $0x608] sm:$0xff]
      %v3866 = vld [vmem:[%s6 + $0x610] sm:$0xff]
      %v3867 = vld [vmem:[%s6 + $0x618] sm:$0xff]
      %v3868 = vld [vmem:[%s6 + $0x620] sm:$0xff]
      %v3869 = vld [vmem:[%s6 + $0x628] sm:$0xff]
      %v3870 = vld [vmem:[%s6 + $0x630] sm:$0xff]
      %v3871 = vld [vmem:[%s6 + $0x638] sm:$0xff]
      %v3872 = vld [vmem:[%s6 + $0x640] sm:$0xff]
      %v3873 = vld [vmem:[%s6 + $0x648] sm:$0xff]
      %v3874 = vld [vmem:[%s6 + $0x650] sm:$0xff]
      %v3875 = vld [vmem:[%s6 + $0x658] sm:$0xff]
      %v3876 = vld [vmem:[%s6 + $0x660] sm:$0xff]
      %v3877 = vld [vmem:[%s6 + $0x668] sm:$0xff]
      %v3878 = vld [vmem:[%s6 + $0x670] sm:$0xff]
      %v3879 = vld [vmem:[%s6 + $0x678] sm:$0xff]
      %v3880 = vld [vmem:[%s6 + $0x680] sm:$0xff]
      %v3881 = vld [vmem:[%s6 + $0x688] sm:$0xff]
      %v3882 = vld [vmem:[%s6 + $0x690] sm:$0xff]
      %v3883 = vld [vmem:[%s6 + $0x698] sm:$0xff]
      %v3884 = vld [vmem:[%s6 + $0x6a0] sm:$0xff]
      %v3885 = vld [vmem:[%s6 + $0x6a8] sm:$0xff]
      %v3886 = vld [vmem:[%s6 + $0x6b0] sm:$0xff]
      %v3887 = vld [vmem:[%s6 + $0x6b8] sm:$0xff]
      %v3888 = vld [vmem:[%s6 + $0x6c0] sm:$0xff]
      %v3889 = vld [vmem:[%s6 + $0x6c8] sm:$0xff]
      %v3890 = vld [vmem:[%s6 + $0x6d0] sm:$0xff]
      %v3891 = vld [vmem:[%s6 + $0x6d8] sm:$0xff]
      %v3892 = vld [vmem:[%s6 + $0x6e0] sm:$0xff]
      %v3893 = vld [vmem:[%s6 + $0x6e8] sm:$0xff]
      %v3894 = vld [vmem:[%s6 + $0x6f0] sm:$0xff]
      %v3895 = vld [vmem:[%s6 + $0x6f8] sm:$0xff]
      %v3896 = vld [vmem:[%s6 + $0x700] sm:$0xff]
      %v3897 = vld [vmem:[%s6 + $0x708] sm:$0xff]
      %v3898 = vld [vmem:[%s6 + $0x710] sm:$0xff]
      %v3899 = vld [vmem:[%s6 + $0x718] sm:$0xff]
      %v3900 = vld [vmem:[%s6 + $0x720] sm:$0xff]
      %v3901 = vld [vmem:[%s6 + $0x728] sm:$0xff]
      %v3902 = vld [vmem:[%s6 + $0x730] sm:$0xff]
      %v3903 = vld [vmem:[%s6 + $0x738] sm:$0xff]
      %v3904 = vld [vmem:[%s6 + $0x740] sm:$0xff]
      %v3905 = vld [vmem:[%s6 + $0x748] sm:$0xff]
      %v3906 = vld [vmem:[%s6 + $0x750] sm:$0xff]
      %v3907 = vld [vmem:[%s6 + $0x758] sm:$0xff]
      %v3908 = vld [vmem:[%s6 + $0x760] sm:$0xff]
      %v3909 = vld [vmem:[%s6 + $0x768] sm:$0xff]
      %v3910 = vld [vmem:[%s6 + $0x770] sm:$0xff]
      %v3911 = vld [vmem:[%s6 + $0x778] sm:$0xff]
      %v3912 = vld [vmem:[%s6 + $0x780] sm:$0xff]
      %v3913 = vld [vmem:[%s6 + $0x788] sm:$0xff]
      %v3914 = vld [vmem:[%s6 + $0x790] sm:$0xff]
      %v3915 = vld [vmem:[%s6 + $0x798] sm:$0xff]
      %v3916 = vld [vmem:[%s6 + $0x7a0] sm:$0xff]
      %v3917 = vld [vmem:[%s6 + $0x7a8] sm:$0xff]
      %v3918 = vld [vmem:[%s6 + $0x7b0] sm:$0xff]
      %v3919 = vld [vmem:[%s6 + $0x7b8] sm:$0xff]
      %v3920 = vld [vmem:[%s6 + $0x7c0] sm:$0xff]
      %v3921 = vld [vmem:[%s6 + $0x7c8] sm:$0xff]
      %v3922 = vld [vmem:[%s6 + $0x7d0] sm:$0xff]
      %v3923 = vld [vmem:[%s6 + $0x7d8] sm:$0xff]
      %v3924 = vld [vmem:[%s6 + $0x7e0] sm:$0xff]
      %v3925 = vld [vmem:[%s6 + $0x7e8] sm:$0xff]
      %v3926 = vld [vmem:[%s6 + $0x7f0] sm:$0xff]
      %v3927 = vld [vmem:[%s6 + $0x7f8] sm:$0xff]
      %v4184 = vunpack.c.l.b16 %v3672
      %v4185 = vunpack.c.h.b16 %v3672
      %v4186 = vunpack.c.l.b16 %v3673
      %v4187 = vunpack.c.h.b16 %v3673
      %v4188 = vunpack.c.l.b16 %v3674
      %v4189 = vunpack.c.h.b16 %v3674
      %v4190 = vunpack.c.l.b16 %v3675
      %v4191 = vunpack.c.h.b16 %v3675
      %v4192 = vunpack.c.l.b16 %v3676
      %v4193 = vunpack.c.h.b16 %v3676
      %v4194 = vunpack.c.l.b16 %v3677
      %v4195 = vunpack.c.h.b16 %v3677
      %v4196 = vunpack.c.l.b16 %v3678
      %v4197 = vunpack.c.h.b16 %v3678
      %v4198 = vunpack.c.l.b16 %v3679
      %v4199 = vunpack.c.h.b16 %v3679
      %v4200 = vunpack.c.l.b16 %v3680
      %v4201 = vunpack.c.h.b16 %v3680
      %v4202 = vunpack.c.l.b16 %v3681
      %v4203 = vunpack.c.h.b16 %v3681
      %v4204 = vunpack.c.l.b16 %v3682
      %v4205 = vunpack.c.h.b16 %v3682
      %v4206 = vunpack.c.l.b16 %v3683
      %v4207 = vunpack.c.h.b16 %v3683
      %v4208 = vunpack.c.l.b16 %v3684
      %v4209 = vunpack.c.h.b16 %v3684
      %v4210 = vunpack.c.l.b16 %v3685
      %v4211 = vunpack.c.h.b16 %v3685
      %v4212 = vunpack.c.l.b16 %v3686
      %v4213 = vunpack.c.h.b16 %v3686
      %v4214 = vunpack.c.l.b16 %v3687
      %v4215 = vunpack.c.h.b16 %v3687
      %v4216 = vunpack.c.l.b16 %v3688
      %v4217 = vunpack.c.h.b16 %v3688
      %v4218 = vunpack.c.l.b16 %v3689
      %v4219 = vunpack.c.h.b16 %v3689
      %v4220 = vunpack.c.l.b16 %v3690
      %v4221 = vunpack.c.h.b16 %v3690
      %v4222 = vunpack.c.l.b16 %v3691
      %v4223 = vunpack.c.h.b16 %v3691
      %v4224 = vunpack.c.l.b16 %v3692
      %v4225 = vunpack.c.h.b16 %v3692
      %v4226 = vunpack.c.l.b16 %v3693
      %v4227 = vunpack.c.h.b16 %v3693
      %v4228 = vunpack.c.l.b16 %v3694
      %v4229 = vunpack.c.h.b16 %v3694
      %v4230 = vunpack.c.l.b16 %v3695
      %v4231 = vunpack.c.h.b16 %v3695
      %v4232 = vunpack.c.l.b16 %v3696
      %v4233 = vunpack.c.h.b16 %v3696
      %v4234 = vunpack.c.l.b16 %v3697
      %v4235 = vunpack.c.h.b16 %v3697
      %v4236 = vunpack.c.l.b16 %v3698
      %v4237 = vunpack.c.h.b16 %v3698
      %v4238 = vunpack.c.l.b16 %v3699
      %v4239 = vunpack.c.h.b16 %v3699
      %v4240 = vunpack.c.l.b16 %v3700
      %v4241 = vunpack.c.h.b16 %v3700
      %v4242 = vunpack.c.l.b16 %v3701
      %v4243 = vunpack.c.h.b16 %v3701
      %v4244 = vunpack.c.l.b16 %v3702
      %v4245 = vunpack.c.h.b16 %v3702
      %v4246 = vunpack.c.l.b16 %v3703
      %v4247 = vunpack.c.h.b16 %v3703
      %v4248 = vunpack.c.l.b16 %v3704
      %v4249 = vunpack.c.h.b16 %v3704
      %v4250 = vunpack.c.l.b16 %v3705
      %v4251 = vunpack.c.h.b16 %v3705
      %v4252 = vunpack.c.l.b16 %v3706
      %v4253 = vunpack.c.h.b16 %v3706
      %v4254 = vunpack.c.l.b16 %v3707
      %v4255 = vunpack.c.h.b16 %v3707
      %v4256 = vunpack.c.l.b16 %v3708
      %v4257 = vunpack.c.h.b16 %v3708
      %v4258 = vunpack.c.l.b16 %v3709
      %v4259 = vunpack.c.h.b16 %v3709
      %v4260 = vunpack.c.l.b16 %v3710
      %v4261 = vunpack.c.h.b16 %v3710
      %v4262 = vunpack.c.l.b16 %v3711
      %v4263 = vunpack.c.h.b16 %v3711
      %v4264 = vunpack.c.l.b16 %v3712
      %v4265 = vunpack.c.h.b16 %v3712
      %v4266 = vunpack.c.l.b16 %v3713
      %v4267 = vunpack.c.h.b16 %v3713
      %v4268 = vunpack.c.l.b16 %v3714
      %v4269 = vunpack.c.h.b16 %v3714
      %v4270 = vunpack.c.l.b16 %v3715
      %v4271 = vunpack.c.h.b16 %v3715
      %v4272 = vunpack.c.l.b16 %v3716
      %v4273 = vunpack.c.h.b16 %v3716
      %v4274 = vunpack.c.l.b16 %v3717
      %v4275 = vunpack.c.h.b16 %v3717
      %v4276 = vunpack.c.l.b16 %v3718
      %v4277 = vunpack.c.h.b16 %v3718
      %v4278 = vunpack.c.l.b16 %v3719
      %v4279 = vunpack.c.h.b16 %v3719
      %v4280 = vunpack.c.l.b16 %v3720
      %v4281 = vunpack.c.h.b16 %v3720
      %v4282 = vunpack.c.l.b16 %v3721
      %v4283 = vunpack.c.h.b16 %v3721
      %v4284 = vunpack.c.l.b16 %v3722
      %v4285 = vunpack.c.h.b16 %v3722
      %v4286 = vunpack.c.l.b16 %v3723
      %v4287 = vunpack.c.h.b16 %v3723
      %v4288 = vunpack.c.l.b16 %v3724
      %v4289 = vunpack.c.h.b16 %v3724
      %v4290 = vunpack.c.l.b16 %v3725
      %v4291 = vunpack.c.h.b16 %v3725
      %v4292 = vunpack.c.l.b16 %v3726
      %v4293 = vunpack.c.h.b16 %v3726
      %v4294 = vunpack.c.l.b16 %v3727
      %v4295 = vunpack.c.h.b16 %v3727
      %v4296 = vunpack.c.l.b16 %v3728
      %v4297 = vunpack.c.h.b16 %v3728
      %v4298 = vunpack.c.l.b16 %v3729
      %v4299 = vunpack.c.h.b16 %v3729
      %v4300 = vunpack.c.l.b16 %v3730
      %v4301 = vunpack.c.h.b16 %v3730
      %v4302 = vunpack.c.l.b16 %v3731
      %v4303 = vunpack.c.h.b16 %v3731
      %v4304 = vunpack.c.l.b16 %v3732
      %v4305 = vunpack.c.h.b16 %v3732
      %v4306 = vunpack.c.l.b16 %v3733
      %v4307 = vunpack.c.h.b16 %v3733
      %v4308 = vunpack.c.l.b16 %v3734
      %v4309 = vunpack.c.h.b16 %v3734
      %v4310 = vunpack.c.l.b16 %v3735
      %v4311 = vunpack.c.h.b16 %v3735
      %v4312 = vunpack.c.l.b16 %v3736
      %v4313 = vunpack.c.h.b16 %v3736
      %v4314 = vunpack.c.l.b16 %v3737
      %v4315 = vunpack.c.h.b16 %v3737
      %v4316 = vunpack.c.l.b16 %v3738
      %v4317 = vunpack.c.h.b16 %v3738
      %v4318 = vunpack.c.l.b16 %v3739
      %v4319 = vunpack.c.h.b16 %v3739
      %v4320 = vunpack.c.l.b16 %v3740
      %v4321 = vunpack.c.h.b16 %v3740
      %v4322 = vunpack.c.l.b16 %v3741
      %v4323 = vunpack.c.h.b16 %v3741
      %v4324 = vunpack.c.l.b16 %v3742
      %v4325 = vunpack.c.h.b16 %v3742
      %v4326 = vunpack.c.l.b16 %v3743
      %v4327 = vunpack.c.h.b16 %v3743
      %v4328 = vunpack.c.l.b16 %v3744
      %v4329 = vunpack.c.h.b16 %v3744
      %v4330 = vunpack.c.l.b16 %v3745
      %v4331 = vunpack.c.h.b16 %v3745
      %v4332 = vunpack.c.l.b16 %v3746
      %v4333 = vunpack.c.h.b16 %v3746
      %v4334 = vunpack.c.l.b16 %v3747
      %v4335 = vunpack.c.h.b16 %v3747
      %v4336 = vunpack.c.l.b16 %v3748
      %v4337 = vunpack.c.h.b16 %v3748
      %v4338 = vunpack.c.l.b16 %v3749
      %v4339 = vunpack.c.h.b16 %v3749
      %v4340 = vunpack.c.l.b16 %v3750
      %v4341 = vunpack.c.h.b16 %v3750
      %v4342 = vunpack.c.l.b16 %v3751
      %v4343 = vunpack.c.h.b16 %v3751
      %v4344 = vunpack.c.l.b16 %v3752
      %v4345 = vunpack.c.h.b16 %v3752
      %v4346 = vunpack.c.l.b16 %v3753
      %v4347 = vunpack.c.h.b16 %v3753
      %v4348 = vunpack.c.l.b16 %v3754
      %v4349 = vunpack.c.h.b16 %v3754
      %v4350 = vunpack.c.l.b16 %v3755
      %v4351 = vunpack.c.h.b16 %v3755
      %v4352 = vunpack.c.l.b16 %v3756
      %v4353 = vunpack.c.h.b16 %v3756
      %v4354 = vunpack.c.l.b16 %v3757
      %v4355 = vunpack.c.h.b16 %v3757
      %v4356 = vunpack.c.l.b16 %v3758
      %v4357 = vunpack.c.h.b16 %v3758
      %v4358 = vunpack.c.l.b16 %v3759
      %v4359 = vunpack.c.h.b16 %v3759
      %v4360 = vunpack.c.l.b16 %v3760
      %v4361 = vunpack.c.h.b16 %v3760
      %v4362 = vunpack.c.l.b16 %v3761
      %v4363 = vunpack.c.h.b16 %v3761
      %v4364 = vunpack.c.l.b16 %v3762
      %v4365 = vunpack.c.h.b16 %v3762
      %v4366 = vunpack.c.l.b16 %v3763
      %v4367 = vunpack.c.h.b16 %v3763
      %v4368 = vunpack.c.l.b16 %v3764
      %v4369 = vunpack.c.h.b16 %v3764
      %v4370 = vunpack.c.l.b16 %v3765
      %v4371 = vunpack.c.h.b16 %v3765
      %v4372 = vunpack.c.l.b16 %v3766
      %v4373 = vunpack.c.h.b16 %v3766
      %v4374 = vunpack.c.l.b16 %v3767
      %v4375 = vunpack.c.h.b16 %v3767
      %v4376 = vunpack.c.l.b16 %v3768
      %v4377 = vunpack.c.h.b16 %v3768
      %v4378 = vunpack.c.l.b16 %v3769
      %v4379 = vunpack.c.h.b16 %v3769
      %v4380 = vunpack.c.l.b16 %v3770
      %v4381 = vunpack.c.h.b16 %v3770
      %v4382 = vunpack.c.l.b16 %v3771
      %v4383 = vunpack.c.h.b16 %v3771
      %v4384 = vunpack.c.l.b16 %v3772
      %v4385 = vunpack.c.h.b16 %v3772
      %v4386 = vunpack.c.l.b16 %v3773
      %v4387 = vunpack.c.h.b16 %v3773
      %v4388 = vunpack.c.l.b16 %v3774
      %v4389 = vunpack.c.h.b16 %v3774
      %v4390 = vunpack.c.l.b16 %v3775
      %v4391 = vunpack.c.h.b16 %v3775
      %v4392 = vunpack.c.l.b16 %v3776
      %v4393 = vunpack.c.h.b16 %v3776
      %v4394 = vunpack.c.l.b16 %v3777
      %v4395 = vunpack.c.h.b16 %v3777
      %v4396 = vunpack.c.l.b16 %v3778
      %v4397 = vunpack.c.h.b16 %v3778
      %v4398 = vunpack.c.l.b16 %v3779
      %v4399 = vunpack.c.h.b16 %v3779
      %v4400 = vunpack.c.l.b16 %v3780
      %v4401 = vunpack.c.h.b16 %v3780
      %v4402 = vunpack.c.l.b16 %v3781
      %v4403 = vunpack.c.h.b16 %v3781
      %v4404 = vunpack.c.l.b16 %v3782
      %v4405 = vunpack.c.h.b16 %v3782
      %v4406 = vunpack.c.l.b16 %v3783
      %v4407 = vunpack.c.h.b16 %v3783
      %v4408 = vunpack.c.l.b16 %v3784
      %v4409 = vunpack.c.h.b16 %v3784
      %v4410 = vunpack.c.l.b16 %v3785
      %v4411 = vunpack.c.h.b16 %v3785
      %v4412 = vunpack.c.l.b16 %v3786
      %v4413 = vunpack.c.h.b16 %v3786
      %v4414 = vunpack.c.l.b16 %v3787
      %v4415 = vunpack.c.h.b16 %v3787
      %v4416 = vunpack.c.l.b16 %v3788
      %v4417 = vunpack.c.h.b16 %v3788
      %v4418 = vunpack.c.l.b16 %v3789
      %v4419 = vunpack.c.h.b16 %v3789
      %v4420 = vunpack.c.l.b16 %v3790
      %v4421 = vunpack.c.h.b16 %v3790
      %v4422 = vunpack.c.l.b16 %v3791
      %v4423 = vunpack.c.h.b16 %v3791
      %v4424 = vunpack.c.l.b16 %v3792
      %v4425 = vunpack.c.h.b16 %v3792
      %v4426 = vunpack.c.l.b16 %v3793
      %v4427 = vunpack.c.h.b16 %v3793
      %v4428 = vunpack.c.l.b16 %v3794
      %v4429 = vunpack.c.h.b16 %v3794
      %v4430 = vunpack.c.l.b16 %v3795
      %v4431 = vunpack.c.h.b16 %v3795
      %v4432 = vunpack.c.l.b16 %v3796
      %v4433 = vunpack.c.h.b16 %v3796
      %v4434 = vunpack.c.l.b16 %v3797
      %v4435 = vunpack.c.h.b16 %v3797
      %v4436 = vunpack.c.l.b16 %v3798
      %v4437 = vunpack.c.h.b16 %v3798
      %v4438 = vunpack.c.l.b16 %v3799
      %v4439 = vunpack.c.h.b16 %v3799
      %v4440 = vunpack.c.l.b16 %v3800
      %v4441 = vunpack.c.h.b16 %v3800
      %v4442 = vunpack.c.l.b16 %v3801
      %v4443 = vunpack.c.h.b16 %v3801
      %v4444 = vunpack.c.l.b16 %v3802
      %v4445 = vunpack.c.h.b16 %v3802
      %v4446 = vunpack.c.l.b16 %v3803
      %v4447 = vunpack.c.h.b16 %v3803
      %v4448 = vunpack.c.l.b16 %v3804
      %v4449 = vunpack.c.h.b16 %v3804
      %v4450 = vunpack.c.l.b16 %v3805
      %v4451 = vunpack.c.h.b16 %v3805
      %v4452 = vunpack.c.l.b16 %v3806
      %v4453 = vunpack.c.h.b16 %v3806
      %v4454 = vunpack.c.l.b16 %v3807
      %v4455 = vunpack.c.h.b16 %v3807
      %v4456 = vunpack.c.l.b16 %v3808
      %v4457 = vunpack.c.h.b16 %v3808
      %v4458 = vunpack.c.l.b16 %v3809
      %v4459 = vunpack.c.h.b16 %v3809
      %v4460 = vunpack.c.l.b16 %v3810
      %v4461 = vunpack.c.h.b16 %v3810
      %v4462 = vunpack.c.l.b16 %v3811
      %v4463 = vunpack.c.h.b16 %v3811
      %v4464 = vunpack.c.l.b16 %v3812
      %v4465 = vunpack.c.h.b16 %v3812
      %v4466 = vunpack.c.l.b16 %v3813
      %v4467 = vunpack.c.h.b16 %v3813
      %v4468 = vunpack.c.l.b16 %v3814
      %v4469 = vunpack.c.h.b16 %v3814
      %v4470 = vunpack.c.l.b16 %v3815
      %v4471 = vunpack.c.h.b16 %v3815
      %v4472 = vunpack.c.l.b16 %v3816
      %v4473 = vunpack.c.h.b16 %v3816
      %v4474 = vunpack.c.l.b16 %v3817
      %v4475 = vunpack.c.h.b16 %v3817
      %v4476 = vunpack.c.l.b16 %v3818
      %v4477 = vunpack.c.h.b16 %v3818
      %v4478 = vunpack.c.l.b16 %v3819
      %v4479 = vunpack.c.h.b16 %v3819
      %v4480 = vunpack.c.l.b16 %v3820
      %v4481 = vunpack.c.h.b16 %v3820
      %v4482 = vunpack.c.l.b16 %v3821
      %v4483 = vunpack.c.h.b16 %v3821
      %v4484 = vunpack.c.l.b16 %v3822
      %v4485 = vunpack.c.h.b16 %v3822
      %v4486 = vunpack.c.l.b16 %v3823
      %v4487 = vunpack.c.h.b16 %v3823
      %v4488 = vunpack.c.l.b16 %v3824
      %v4489 = vunpack.c.h.b16 %v3824
      %v4490 = vunpack.c.l.b16 %v3825
      %v4491 = vunpack.c.h.b16 %v3825
      %v4492 = vunpack.c.l.b16 %v3826
      %v4493 = vunpack.c.h.b16 %v3826
      %v4494 = vunpack.c.l.b16 %v3827
      %v4495 = vunpack.c.h.b16 %v3827
      %v4496 = vunpack.c.l.b16 %v3828
      %v4497 = vunpack.c.h.b16 %v3828
      %v4498 = vunpack.c.l.b16 %v3829
      %v4499 = vunpack.c.h.b16 %v3829
      %v4500 = vunpack.c.l.b16 %v3830
      %v4501 = vunpack.c.h.b16 %v3830
      %v4502 = vunpack.c.l.b16 %v3831
      %v4503 = vunpack.c.h.b16 %v3831
      %v4504 = vunpack.c.l.b16 %v3832
      %v4505 = vunpack.c.h.b16 %v3832
      %v4506 = vunpack.c.l.b16 %v3833
      %v4507 = vunpack.c.h.b16 %v3833
      %v4508 = vunpack.c.l.b16 %v3834
      %v4509 = vunpack.c.h.b16 %v3834
      %v4510 = vunpack.c.l.b16 %v3835
      %v4511 = vunpack.c.h.b16 %v3835
      %v4512 = vunpack.c.l.b16 %v3836
      %v4513 = vunpack.c.h.b16 %v3836
      %v4514 = vunpack.c.l.b16 %v3837
      %v4515 = vunpack.c.h.b16 %v3837
      %v4516 = vunpack.c.l.b16 %v3838
      %v4517 = vunpack.c.h.b16 %v3838
      %v4518 = vunpack.c.l.b16 %v3839
      %v4519 = vunpack.c.h.b16 %v3839
      %v4520 = vunpack.c.l.b16 %v3840
      %v4521 = vunpack.c.h.b16 %v3840
      %v4522 = vunpack.c.l.b16 %v3841
      %v4523 = vunpack.c.h.b16 %v3841
      %v4524 = vunpack.c.l.b16 %v3842
      %v4525 = vunpack.c.h.b16 %v3842
      %v4526 = vunpack.c.l.b16 %v3843
      %v4527 = vunpack.c.h.b16 %v3843
      %v4528 = vunpack.c.l.b16 %v3844
      %v4529 = vunpack.c.h.b16 %v3844
      %v4530 = vunpack.c.l.b16 %v3845
      %v4531 = vunpack.c.h.b16 %v3845
      %v4532 = vunpack.c.l.b16 %v3846
      %v4533 = vunpack.c.h.b16 %v3846
      %v4534 = vunpack.c.l.b16 %v3847
      %v4535 = vunpack.c.h.b16 %v3847
      %v4536 = vunpack.c.l.b16 %v3848
      %v4537 = vunpack.c.h.b16 %v3848
      %v4538 = vunpack.c.l.b16 %v3849
      %v4539 = vunpack.c.h.b16 %v3849
      %v4540 = vunpack.c.l.b16 %v3850
      %v4541 = vunpack.c.h.b16 %v3850
      %v4542 = vunpack.c.l.b16 %v3851
      %v4543 = vunpack.c.h.b16 %v3851
      %v4544 = vunpack.c.l.b16 %v3852
      %v4545 = vunpack.c.h.b16 %v3852
      %v4546 = vunpack.c.l.b16 %v3853
      %v4547 = vunpack.c.h.b16 %v3853
      %v4548 = vunpack.c.l.b16 %v3854
      %v4549 = vunpack.c.h.b16 %v3854
      %v4550 = vunpack.c.l.b16 %v3855
      %v4551 = vunpack.c.h.b16 %v3855
      %v4552 = vunpack.c.l.b16 %v3856
      %v4553 = vunpack.c.h.b16 %v3856
      %v4554 = vunpack.c.l.b16 %v3857
      %v4555 = vunpack.c.h.b16 %v3857
      %v4556 = vunpack.c.l.b16 %v3858
      %v4557 = vunpack.c.h.b16 %v3858
      %v4558 = vunpack.c.l.b16 %v3859
      %v4559 = vunpack.c.h.b16 %v3859
      %v4560 = vunpack.c.l.b16 %v3860
      %v4561 = vunpack.c.h.b16 %v3860
      %v4562 = vunpack.c.l.b16 %v3861
      %v4563 = vunpack.c.h.b16 %v3861
      %v4564 = vunpack.c.l.b16 %v3862
      %v4565 = vunpack.c.h.b16 %v3862
      %v4566 = vunpack.c.l.b16 %v3863
      %v4567 = vunpack.c.h.b16 %v3863
      %v4568 = vunpack.c.l.b16 %v3864
      %v4569 = vunpack.c.h.b16 %v3864
      %v4570 = vunpack.c.l.b16 %v3865
      %v4571 = vunpack.c.h.b16 %v3865
      %v4572 = vunpack.c.l.b16 %v3866
      %v4573 = vunpack.c.h.b16 %v3866
      %v4574 = vunpack.c.l.b16 %v3867
      %v4575 = vunpack.c.h.b16 %v3867
      %v4576 = vunpack.c.l.b16 %v3868
      %v4577 = vunpack.c.h.b16 %v3868
      %v4578 = vunpack.c.l.b16 %v3869
      %v4579 = vunpack.c.h.b16 %v3869
      %v4580 = vunpack.c.l.b16 %v3870
      %v4581 = vunpack.c.h.b16 %v3870
      %v4582 = vunpack.c.l.b16 %v3871
      %v4583 = vunpack.c.h.b16 %v3871
      %v4584 = vunpack.c.l.b16 %v3872
      %v4585 = vunpack.c.h.b16 %v3872
      %v4586 = vunpack.c.l.b16 %v3873
      %v4587 = vunpack.c.h.b16 %v3873
      %v4588 = vunpack.c.l.b16 %v3874
      %v4589 = vunpack.c.h.b16 %v3874
      %v4590 = vunpack.c.l.b16 %v3875
      %v4591 = vunpack.c.h.b16 %v3875
      %v4592 = vunpack.c.l.b16 %v3876
      %v4593 = vunpack.c.h.b16 %v3876
      %v4594 = vunpack.c.l.b16 %v3877
      %v4595 = vunpack.c.h.b16 %v3877
      %v4596 = vunpack.c.l.b16 %v3878
      %v4597 = vunpack.c.h.b16 %v3878
      %v4598 = vunpack.c.l.b16 %v3879
      %v4599 = vunpack.c.h.b16 %v3879
      %v4600 = vunpack.c.l.b16 %v3880
      %v4601 = vunpack.c.h.b16 %v3880
      %v4602 = vunpack.c.l.b16 %v3881
      %v4603 = vunpack.c.h.b16 %v3881
      %v4604 = vunpack.c.l.b16 %v3882
      %v4605 = vunpack.c.h.b16 %v3882
      %v4606 = vunpack.c.l.b16 %v3883
      %v4607 = vunpack.c.h.b16 %v3883
      %v4608 = vunpack.c.l.b16 %v3884
      %v4609 = vunpack.c.h.b16 %v3884
      %v4610 = vunpack.c.l.b16 %v3885
      %v4611 = vunpack.c.h.b16 %v3885
      %v4612 = vunpack.c.l.b16 %v3886
      %v4613 = vunpack.c.h.b16 %v3886
      %v4614 = vunpack.c.l.b16 %v3887
      %v4615 = vunpack.c.h.b16 %v3887
      %v4616 = vunpack.c.l.b16 %v3888
      %v4617 = vunpack.c.h.b16 %v3888
      %v4618 = vunpack.c.l.b16 %v3889
      %v4619 = vunpack.c.h.b16 %v3889
      %v4620 = vunpack.c.l.b16 %v3890
      %v4621 = vunpack.c.h.b16 %v3890
      %v4622 = vunpack.c.l.b16 %v3891
      %v4623 = vunpack.c.h.b16 %v3891
      %v4624 = vunpack.c.l.b16 %v3892
      %v4625 = vunpack.c.h.b16 %v3892
      %v4626 = vunpack.c.l.b16 %v3893
      %v4627 = vunpack.c.h.b16 %v3893
      %v4628 = vunpack.c.l.b16 %v3894
      %v4629 = vunpack.c.h.b16 %v3894
      %v4630 = vunpack.c.l.b16 %v3895
      %v4631 = vunpack.c.h.b16 %v3895
      %v4632 = vunpack.c.l.b16 %v3896
      %v4633 = vunpack.c.h.b16 %v3896
      %v4634 = vunpack.c.l.b16 %v3897
      %v4635 = vunpack.c.h.b16 %v3897
      %v4636 = vunpack.c.l.b16 %v3898
      %v4637 = vunpack.c.h.b16 %v3898
      %v4638 = vunpack.c.l.b16 %v3899
      %v4639 = vunpack.c.h.b16 %v3899
      %v4640 = vunpack.c.l.b16 %v3900
      %v4641 = vunpack.c.h.b16 %v3900
      %v4642 = vunpack.c.l.b16 %v3901
      %v4643 = vunpack.c.h.b16 %v3901
      %v4644 = vunpack.c.l.b16 %v3902
      %v4645 = vunpack.c.h.b16 %v3902
      %v4646 = vunpack.c.l.b16 %v3903
      %v4647 = vunpack.c.h.b16 %v3903
      %v4648 = vunpack.c.l.b16 %v3904
      %v4649 = vunpack.c.h.b16 %v3904
      %v4650 = vunpack.c.l.b16 %v3905
      %v4651 = vunpack.c.h.b16 %v3905
      %v4652 = vunpack.c.l.b16 %v3906
      %v4653 = vunpack.c.h.b16 %v3906
      %v4654 = vunpack.c.l.b16 %v3907
      %v4655 = vunpack.c.h.b16 %v3907
      %v4656 = vunpack.c.l.b16 %v3908
      %v4657 = vunpack.c.h.b16 %v3908
      %v4658 = vunpack.c.l.b16 %v3909
      %v4659 = vunpack.c.h.b16 %v3909
      %v4660 = vunpack.c.l.b16 %v3910
      %v4661 = vunpack.c.h.b16 %v3910
      %v4662 = vunpack.c.l.b16 %v3911
      %v4663 = vunpack.c.h.b16 %v3911
      %v4664 = vunpack.c.l.b16 %v3912
      %v4665 = vunpack.c.h.b16 %v3912
      %v4666 = vunpack.c.l.b16 %v3913
      %v4667 = vunpack.c.h.b16 %v3913
      %v4668 = vunpack.c.l.b16 %v3914
      %v4669 = vunpack.c.h.b16 %v3914
      %v4670 = vunpack.c.l.b16 %v3915
      %v4671 = vunpack.c.h.b16 %v3915
      %v4672 = vunpack.c.l.b16 %v3916
      %v4673 = vunpack.c.h.b16 %v3916
      %v4674 = vunpack.c.l.b16 %v3917
      %v4675 = vunpack.c.h.b16 %v3917
      %v4676 = vunpack.c.l.b16 %v3918
      %v4677 = vunpack.c.h.b16 %v3918
      %v4678 = vunpack.c.l.b16 %v3919
      %v4679 = vunpack.c.h.b16 %v3919
      %v4680 = vunpack.c.l.b16 %v3920
      %v4681 = vunpack.c.h.b16 %v3920
      %v4682 = vunpack.c.l.b16 %v3921
      %v4683 = vunpack.c.h.b16 %v3921
      %v4684 = vunpack.c.l.b16 %v3922
      %v4685 = vunpack.c.h.b16 %v3922
      %v4686 = vunpack.c.l.b16 %v3923
      %v4687 = vunpack.c.h.b16 %v3923
      %v4688 = vunpack.c.l.b16 %v3924
      %v4689 = vunpack.c.h.b16 %v3924
      %v4690 = vunpack.c.l.b16 %v3925
      %v4691 = vunpack.c.h.b16 %v3925
      %v4692 = vunpack.c.l.b16 %v3926
      %v4693 = vunpack.c.h.b16 %v3926
      %v4694 = vunpack.c.l.b16 %v3927
      %v4695 = vunpack.c.h.b16 %v3927
      %v4696 = vpack.c.b16 %v4186, %v4184
      %v4697 = vpack.c.b16 %v4187, %v4185
      %v4698 = vpack.c.b16 %v4190, %v4188
      %v4699 = vpack.c.b16 %v4191, %v4189
      %v4700 = vpack.c.b16 %v4194, %v4192
      %v4701 = vpack.c.b16 %v4195, %v4193
      %v4702 = vpack.c.b16 %v4198, %v4196
      %v4703 = vpack.c.b16 %v4199, %v4197
      %v4704 = vpack.c.b16 %v4202, %v4200
      %v4705 = vpack.c.b16 %v4203, %v4201
      %v4706 = vpack.c.b16 %v4206, %v4204
      %v4707 = vpack.c.b16 %v4207, %v4205
      %v4708 = vpack.c.b16 %v4210, %v4208
      %v4709 = vpack.c.b16 %v4211, %v4209
      %v4710 = vpack.c.b16 %v4214, %v4212
      %v4711 = vpack.c.b16 %v4215, %v4213
      %v4712 = vpack.c.b16 %v4218, %v4216
      %v4713 = vpack.c.b16 %v4219, %v4217
      %v4714 = vpack.c.b16 %v4222, %v4220
      %v4715 = vpack.c.b16 %v4223, %v4221
      %v4716 = vpack.c.b16 %v4226, %v4224
      %v4717 = vpack.c.b16 %v4227, %v4225
      %v4718 = vpack.c.b16 %v4230, %v4228
      %v4719 = vpack.c.b16 %v4231, %v4229
      %v4720 = vpack.c.b16 %v4234, %v4232
      %v4721 = vpack.c.b16 %v4235, %v4233
      %v4722 = vpack.c.b16 %v4238, %v4236
      %v4723 = vpack.c.b16 %v4239, %v4237
      %v4724 = vpack.c.b16 %v4242, %v4240
      %v4725 = vpack.c.b16 %v4243, %v4241
      %v4726 = vpack.c.b16 %v4246, %v4244
      %v4727 = vpack.c.b16 %v4247, %v4245
      %v4728 = vpack.c.b16 %v4250, %v4248
      %v4729 = vpack.c.b16 %v4251, %v4249
      %v4730 = vpack.c.b16 %v4254, %v4252
      %v4731 = vpack.c.b16 %v4255, %v4253
      %v4732 = vpack.c.b16 %v4258, %v4256
      %v4733 = vpack.c.b16 %v4259, %v4257
      %v4734 = vpack.c.b16 %v4262, %v4260
      %v4735 = vpack.c.b16 %v4263, %v4261
      %v4736 = vpack.c.b16 %v4266, %v4264
      %v4737 = vpack.c.b16 %v4267, %v4265
      %v4738 = vpack.c.b16 %v4270, %v4268
      %v4739 = vpack.c.b16 %v4271, %v4269
      %v4740 = vpack.c.b16 %v4274, %v4272
      %v4741 = vpack.c.b16 %v4275, %v4273
      %v4742 = vpack.c.b16 %v4278, %v4276
      %v4743 = vpack.c.b16 %v4279, %v4277
      %v4744 = vpack.c.b16 %v4282, %v4280
      %v4745 = vpack.c.b16 %v4283, %v4281
      %v4746 = vpack.c.b16 %v4286, %v4284
      %v4747 = vpack.c.b16 %v4287, %v4285
      %v4748 = vpack.c.b16 %v4290, %v4288
      %v4749 = vpack.c.b16 %v4291, %v4289
      %v4750 = vpack.c.b16 %v4294, %v4292
      %v4751 = vpack.c.b16 %v4295, %v4293
      %v4752 = vpack.c.b16 %v4298, %v4296
      %v4753 = vpack.c.b16 %v4299, %v4297
      %v4754 = vpack.c.b16 %v4302, %v4300
      %v4755 = vpack.c.b16 %v4303, %v4301
      %v4756 = vpack.c.b16 %v4306, %v4304
      %v4757 = vpack.c.b16 %v4307, %v4305
      %v4758 = vpack.c.b16 %v4310, %v4308
      %v4759 = vpack.c.b16 %v4311, %v4309
      %v4760 = vpack.c.b16 %v4314, %v4312
      %v4761 = vpack.c.b16 %v4315, %v4313
      %v4762 = vpack.c.b16 %v4318, %v4316
      %v4763 = vpack.c.b16 %v4319, %v4317
      %v4764 = vpack.c.b16 %v4322, %v4320
      %v4765 = vpack.c.b16 %v4323, %v4321
      %v4766 = vpack.c.b16 %v4326, %v4324
      %v4767 = vpack.c.b16 %v4327, %v4325
      %v4768 = vpack.c.b16 %v4330, %v4328
      %v4769 = vpack.c.b16 %v4331, %v4329
      %v4770 = vpack.c.b16 %v4334, %v4332
      %v4771 = vpack.c.b16 %v4335, %v4333
      %v4772 = vpack.c.b16 %v4338, %v4336
      %v4773 = vpack.c.b16 %v4339, %v4337
      %v4774 = vpack.c.b16 %v4342, %v4340
      %v4775 = vpack.c.b16 %v4343, %v4341
      %v4776 = vpack.c.b16 %v4346, %v4344
      %v4777 = vpack.c.b16 %v4347, %v4345
      %v4778 = vpack.c.b16 %v4350, %v4348
      %v4779 = vpack.c.b16 %v4351, %v4349
      %v4780 = vpack.c.b16 %v4354, %v4352
      %v4781 = vpack.c.b16 %v4355, %v4353
      %v4782 = vpack.c.b16 %v4358, %v4356
      %v4783 = vpack.c.b16 %v4359, %v4357
      %v4784 = vpack.c.b16 %v4362, %v4360
      %v4785 = vpack.c.b16 %v4363, %v4361
      %v4786 = vpack.c.b16 %v4366, %v4364
      %v4787 = vpack.c.b16 %v4367, %v4365
      %v4788 = vpack.c.b16 %v4370, %v4368
      %v4789 = vpack.c.b16 %v4371, %v4369
      %v4790 = vpack.c.b16 %v4374, %v4372
      %v4791 = vpack.c.b16 %v4375, %v4373
      %v4792 = vpack.c.b16 %v4378, %v4376
      %v4793 = vpack.c.b16 %v4379, %v4377
      %v4794 = vpack.c.b16 %v4382, %v4380
      %v4795 = vpack.c.b16 %v4383, %v4381
      %v4796 = vpack.c.b16 %v4386, %v4384
      %v4797 = vpack.c.b16 %v4387, %v4385
      %v4798 = vpack.c.b16 %v4390, %v4388
      %v4799 = vpack.c.b16 %v4391, %v4389
      %v4800 = vpack.c.b16 %v4394, %v4392
      %v4801 = vpack.c.b16 %v4395, %v4393
      %v4802 = vpack.c.b16 %v4398, %v4396
      %v4803 = vpack.c.b16 %v4399, %v4397
      %v4804 = vpack.c.b16 %v4402, %v4400
      %v4805 = vpack.c.b16 %v4403, %v4401
      %v4806 = vpack.c.b16 %v4406, %v4404
      %v4807 = vpack.c.b16 %v4407, %v4405
      %v4808 = vpack.c.b16 %v4410, %v4408
      %v4809 = vpack.c.b16 %v4411, %v4409
      %v4810 = vpack.c.b16 %v4414, %v4412
      %v4811 = vpack.c.b16 %v4415, %v4413
      %v4812 = vpack.c.b16 %v4418, %v4416
      %v4813 = vpack.c.b16 %v4419, %v4417
      %v4814 = vpack.c.b16 %v4422, %v4420
      %v4815 = vpack.c.b16 %v4423, %v4421
      %v4816 = vpack.c.b16 %v4426, %v4424
      %v4817 = vpack.c.b16 %v4427, %v4425
      %v4818 = vpack.c.b16 %v4430, %v4428
      %v4819 = vpack.c.b16 %v4431, %v4429
      %v4820 = vpack.c.b16 %v4434, %v4432
      %v4821 = vpack.c.b16 %v4435, %v4433
      %v4822 = vpack.c.b16 %v4438, %v4436
      %v4823 = vpack.c.b16 %v4439, %v4437
      %v4824 = vpack.c.b16 %v4442, %v4440
      %v4825 = vpack.c.b16 %v4443, %v4441
      %v4826 = vpack.c.b16 %v4446, %v4444
      %v4827 = vpack.c.b16 %v4447, %v4445
      %v4828 = vpack.c.b16 %v4450, %v4448
      %v4829 = vpack.c.b16 %v4451, %v4449
      %v4830 = vpack.c.b16 %v4454, %v4452
      %v4831 = vpack.c.b16 %v4455, %v4453
      %v4832 = vpack.c.b16 %v4458, %v4456
      %v4833 = vpack.c.b16 %v4459, %v4457
      %v4834 = vpack.c.b16 %v4462, %v4460
      %v4835 = vpack.c.b16 %v4463, %v4461
      %v4836 = vpack.c.b16 %v4466, %v4464
      %v4837 = vpack.c.b16 %v4467, %v4465
      %v4838 = vpack.c.b16 %v4470, %v4468
      %v4839 = vpack.c.b16 %v4471, %v4469
      %v4840 = vpack.c.b16 %v4474, %v4472
      %v4841 = vpack.c.b16 %v4475, %v4473
      %v4842 = vpack.c.b16 %v4478, %v4476
      %v4843 = vpack.c.b16 %v4479, %v4477
      %v4844 = vpack.c.b16 %v4482, %v4480
      %v4845 = vpack.c.b16 %v4483, %v4481
      %v4846 = vpack.c.b16 %v4486, %v4484
      %v4847 = vpack.c.b16 %v4487, %v4485
      %v4848 = vpack.c.b16 %v4490, %v4488
      %v4849 = vpack.c.b16 %v4491, %v4489
      %v4850 = vpack.c.b16 %v4494, %v4492
      %v4851 = vpack.c.b16 %v4495, %v4493
      %v4852 = vpack.c.b16 %v4498, %v4496
      %v4853 = vpack.c.b16 %v4499, %v4497
      %v4854 = vpack.c.b16 %v4502, %v4500
      %v4855 = vpack.c.b16 %v4503, %v4501
      %v4856 = vpack.c.b16 %v4506, %v4504
      %v4857 = vpack.c.b16 %v4507, %v4505
      %v4858 = vpack.c.b16 %v4510, %v4508
      %v4859 = vpack.c.b16 %v4511, %v4509
      %v4860 = vpack.c.b16 %v4514, %v4512
      %v4861 = vpack.c.b16 %v4515, %v4513
      %v4862 = vpack.c.b16 %v4518, %v4516
      %v4863 = vpack.c.b16 %v4519, %v4517
      %v4864 = vpack.c.b16 %v4522, %v4520
      %v4865 = vpack.c.b16 %v4523, %v4521
      %v4866 = vpack.c.b16 %v4526, %v4524
      %v4867 = vpack.c.b16 %v4527, %v4525
      %v4868 = vpack.c.b16 %v4530, %v4528
      %v4869 = vpack.c.b16 %v4531, %v4529
      %v4870 = vpack.c.b16 %v4534, %v4532
      %v4871 = vpack.c.b16 %v4535, %v4533
      %v4872 = vpack.c.b16 %v4538, %v4536
      %v4873 = vpack.c.b16 %v4539, %v4537
      %v4874 = vpack.c.b16 %v4542, %v4540
      %v4875 = vpack.c.b16 %v4543, %v4541
      %v4876 = vpack.c.b16 %v4546, %v4544
      %v4877 = vpack.c.b16 %v4547, %v4545
      %v4878 = vpack.c.b16 %v4550, %v4548
      %v4879 = vpack.c.b16 %v4551, %v4549
      %v4880 = vpack.c.b16 %v4554, %v4552
      %v4881 = vpack.c.b16 %v4555, %v4553
      %v4882 = vpack.c.b16 %v4558, %v4556
      %v4883 = vpack.c.b16 %v4559, %v4557
      %v4884 = vpack.c.b16 %v4562, %v4560
      %v4885 = vpack.c.b16 %v4563, %v4561
      %v4886 = vpack.c.b16 %v4566, %v4564
      %v4887 = vpack.c.b16 %v4567, %v4565
      %v4888 = vpack.c.b16 %v4570, %v4568
      %v4889 = vpack.c.b16 %v4571, %v4569
      %v4890 = vpack.c.b16 %v4574, %v4572
      %v4891 = vpack.c.b16 %v4575, %v4573
      %v4892 = vpack.c.b16 %v4578, %v4576
      %v4893 = vpack.c.b16 %v4579, %v4577
      %v4894 = vpack.c.b16 %v4582, %v4580
      %v4895 = vpack.c.b16 %v4583, %v4581
      %v4896 = vpack.c.b16 %v4586, %v4584
      %v4897 = vpack.c.b16 %v4587, %v4585
      %v4898 = vpack.c.b16 %v4590, %v4588
      %v4899 = vpack.c.b16 %v4591, %v4589
      %v4900 = vpack.c.b16 %v4594, %v4592
      %v4901 = vpack.c.b16 %v4595, %v4593
      %v4902 = vpack.c.b16 %v4598, %v4596
      %v4903 = vpack.c.b16 %v4599, %v4597
      %v4904 = vpack.c.b16 %v4602, %v4600
      %v4905 = vpack.c.b16 %v4603, %v4601
      %v4906 = vpack.c.b16 %v4606, %v4604
      %v4907 = vpack.c.b16 %v4607, %v4605
      %v4908 = vpack.c.b16 %v4610, %v4608
      %v4909 = vpack.c.b16 %v4611, %v4609
      %v4910 = vpack.c.b16 %v4614, %v4612
      %v4911 = vpack.c.b16 %v4615, %v4613
      %v4912 = vpack.c.b16 %v4618, %v4616
      %v4913 = vpack.c.b16 %v4619, %v4617
      %v4914 = vpack.c.b16 %v4622, %v4620
      %v4915 = vpack.c.b16 %v4623, %v4621
      %v4916 = vpack.c.b16 %v4626, %v4624
      %v4917 = vpack.c.b16 %v4627, %v4625
      %v4918 = vpack.c.b16 %v4630, %v4628
      %v4919 = vpack.c.b16 %v4631, %v4629
      %v4920 = vpack.c.b16 %v4634, %v4632
      %v4921 = vpack.c.b16 %v4635, %v4633
      %v4922 = vpack.c.b16 %v4638, %v4636
      %v4923 = vpack.c.b16 %v4639, %v4637
      %v4924 = vpack.c.b16 %v4642, %v4640
      %v4925 = vpack.c.b16 %v4643, %v4641
      %v4926 = vpack.c.b16 %v4646, %v4644
      %v4927 = vpack.c.b16 %v4647, %v4645
      %v4928 = vpack.c.b16 %v4650, %v4648
      %v4929 = vpack.c.b16 %v4651, %v4649
      %v4930 = vpack.c.b16 %v4654, %v4652
      %v4931 = vpack.c.b16 %v4655, %v4653
      %v4932 = vpack.c.b16 %v4658, %v4656
      %v4933 = vpack.c.b16 %v4659, %v4657
      %v4934 = vpack.c.b16 %v4662, %v4660
      %v4935 = vpack.c.b16 %v4663, %v4661
      %v4936 = vpack.c.b16 %v4666, %v4664
      %v4937 = vpack.c.b16 %v4667, %v4665
      %v4938 = vpack.c.b16 %v4670, %v4668
      %v4939 = vpack.c.b16 %v4671, %v4669
      %v4940 = vpack.c.b16 %v4674, %v4672
      %v4941 = vpack.c.b16 %v4675, %v4673
      %v4942 = vpack.c.b16 %v4678, %v4676
      %v4943 = vpack.c.b16 %v4679, %v4677
      %v4944 = vpack.c.b16 %v4682, %v4680
      %v4945 = vpack.c.b16 %v4683, %v4681
      %v4946 = vpack.c.b16 %v4686, %v4684
      %v4947 = vpack.c.b16 %v4687, %v4685
      %v4948 = vpack.c.b16 %v4690, %v4688
      %v4949 = vpack.c.b16 %v4691, %v4689
      %v4950 = vpack.c.b16 %v4694, %v4692
      %v4951 = vpack.c.b16 %v4695, %v4693
      %5208 = vmatprep.subr.bf16.mxu0 %v4697
      %5209 = vmatpush1.bf16.msra.mxu0 %v4696
      %5210 = vmatprep.subr.bf16.mxu0 %v4699
      %5211 = vmatpush1.bf16.msra.mxu0 %v4698
      %5212 = vmatprep.subr.bf16.mxu0 %v4701
      %5213 = vmatpush1.bf16.msra.mxu0 %v4700
      %5214 = vmatprep.subr.bf16.mxu0 %v4703
      %5215 = vmatpush1.bf16.msra.mxu0 %v4702
      %5216 = vmatprep.subr.bf16.mxu0 %v4705
      %5217 = vmatpush1.bf16.msra.mxu0 %v4704
      %5218 = vmatprep.subr.bf16.mxu0 %v4707
      %5219 = vmatpush1.bf16.msra.mxu0 %v4706
      %5220 = vmatprep.subr.bf16.mxu0 %v4709
      %5221 = vmatpush1.bf16.msra.mxu0 %v4708
      %5222 = vmatprep.subr.bf16.mxu0 %v4711
      %5223 = vmatpush1.bf16.msra.mxu0 %v4710
      %5224 = vmatprep.subr.bf16.mxu0 %v4713
      %5225 = vmatpush1.bf16.msra.mxu0 %v4712
      %5226 = vmatprep.subr.bf16.mxu0 %v4715
      %5227 = vmatpush1.bf16.msra.mxu0 %v4714
      %5228 = vmatprep.subr.bf16.mxu0 %v4717
      %5229 = vmatpush1.bf16.msra.mxu0 %v4716
      %5230 = vmatprep.subr.bf16.mxu0 %v4719
      %5231 = vmatpush1.bf16.msra.mxu0 %v4718
      %5232 = vmatprep.subr.bf16.mxu0 %v4721
      %5233 = vmatpush1.bf16.msra.mxu0 %v4720
      %5234 = vmatprep.subr.bf16.mxu0 %v4723
      %5235 = vmatpush1.bf16.msra.mxu0 %v4722
      %5236 = vmatprep.subr.bf16.mxu0 %v4725
      %5237 = vmatpush1.bf16.msra.mxu0 %v4724
      %5238 = vmatprep.subr.bf16.mxu0 %v4727
      %5239 = vmatpush1.bf16.msra.mxu0 %v4726
      %5240 = vmatprep.mubr.bf16.mxu0 %v3657
      %5241 = vmatmul.mubr.bf16.gmra.mrb[0].mxu0 %v3656
      %v5242 = vpop.f32.mrb[0].mxu0
      %v5243 = vadd.f32 0.0, %v5242
      %v5244 = vpop.f32.mrb[0].mxu0
      %v5245 = vadd.f32 0.0, %v5244
      %v5246 = vpop.f32.mrb[0].mxu0
      %v5247 = vadd.f32 0.0, %v5246
      %v5248 = vpop.f32.mrb[0].mxu0
      %v5249 = vadd.f32 0.0, %v5248
      %5250 = vdwg.mxu0
      %5251 = vmatprep.subr.bf16.mxu0 %v4729
      %5252 = vmatpush1.bf16.msra.mxu0 %v4728
      %5253 = vmatprep.subr.bf16.mxu0 %v4731
      %5254 = vmatpush1.bf16.msra.mxu0 %v4730
      %5255 = vmatprep.subr.bf16.mxu0 %v4733
      %5256 = vmatpush1.bf16.msra.mxu0 %v4732
      %5257 = vmatprep.subr.bf16.mxu0 %v4735
      %5258 = vmatpush1.bf16.msra.mxu0 %v4734
      %5259 = vmatprep.subr.bf16.mxu0 %v4737
      %5260 = vmatpush1.bf16.msra.mxu0 %v4736
      %5261 = vmatprep.subr.bf16.mxu0 %v4739
      %5262 = vmatpush1.bf16.msra.mxu0 %v4738
      %5263 = vmatprep.subr.bf16.mxu0 %v4741
      %5264 = vmatpush1.bf16.msra.mxu0 %v4740
      %5265 = vmatprep.subr.bf16.mxu0 %v4743
      %5266 = vmatpush1.bf16.msra.mxu0 %v4742
      %5267 = vmatprep.subr.bf16.mxu0 %v4745
      %5268 = vmatpush1.bf16.msra.mxu0 %v4744
      %5269 = vmatprep.subr.bf16.mxu0 %v4747
      %5270 = vmatpush1.bf16.msra.mxu0 %v4746
      %5271 = vmatprep.subr.bf16.mxu0 %v4749
      %5272 = vmatpush1.bf16.msra.mxu0 %v4748
      %5273 = vmatprep.subr.bf16.mxu0 %v4751
      %5274 = vmatpush1.bf16.msra.mxu0 %v4750
      %5275 = vmatprep.subr.bf16.mxu0 %v4753
      %5276 = vmatpush1.bf16.msra.mxu0 %v4752
      %5277 = vmatprep.subr.bf16.mxu0 %v4755
      %5278 = vmatpush1.bf16.msra.mxu0 %v4754
      %5279 = vmatprep.subr.bf16.mxu0 %v4757
      %5280 = vmatpush1.bf16.msra.mxu0 %v4756
      %5281 = vmatprep.subr.bf16.mxu0 %v4759
      %5282 = vmatpush1.bf16.msra.mxu0 %v4758
      %5283 = vmatprep.mubr.bf16.mxu0 %v3659
      %5284 = vmatmul.mubr.bf16.gmra.mrb[0].mxu0 %v3658
      %v5285 = vpop.f32.mrb[0].mxu0
      %v5286 = vadd.f32 %v5243, %v5285
      %v5287 = vpop.f32.mrb[0].mxu0
      %v5288 = vadd.f32 %v5245, %v5287
      %v5289 = vpop.f32.mrb[0].mxu0
      %v5290 = vadd.f32 %v5247, %v5289
      %v5291 = vpop.f32.mrb[0].mxu0
      %v5292 = vadd.f32 %v5249, %v5291
      %5293 = vdwg.mxu0
      %5294 = vmatprep.subr.bf16.mxu0 %v4761
      %5295 = vmatpush1.bf16.msra.mxu0 %v4760
      %5296 = vmatprep.subr.bf16.mxu0 %v4763
      %5297 = vmatpush1.bf16.msra.mxu0 %v4762
      %5298 = vmatprep.subr.bf16.mxu0 %v4765
      %5299 = vmatpush1.bf16.msra.mxu0 %v4764
      %5300 = vmatprep.subr.bf16.mxu0 %v4767
      %5301 = vmatpush1.bf16.msra.mxu0 %v4766
      %5302 = vmatprep.subr.bf16.mxu0 %v4769
      %5303 = vmatpush1.bf16.msra.mxu0 %v4768
      %5304 = vmatprep.subr.bf16.mxu0 %v4771
      %5305 = vmatpush1.bf16.msra.mxu0 %v4770
      %5306 = vmatprep.subr.bf16.mxu0 %v4773
      %5307 = vmatpush1.bf16.msra.mxu0 %v4772
      %5308 = vmatprep.subr.bf16.mxu0 %v4775
      %5309 = vmatpush1.bf16.msra.mxu0 %v4774
      %5310 = vmatprep.subr.bf16.mxu0 %v4777
      %5311 = vmatpush1.bf16.msra.mxu0 %v4776
      %5312 = vmatprep.subr.bf16.mxu0 %v4779
      %5313 = vmatpush1.bf16.msra.mxu0 %v4778
      %5314 = vmatprep.subr.bf16.mxu0 %v4781
      %5315 = vmatpush1.bf16.msra.mxu0 %v4780
      %5316 = vmatprep.subr.bf16.mxu0 %v4783
      %5317 = vmatpush1.bf16.msra.mxu0 %v4782
      %5318 = vmatprep.subr.bf16.mxu0 %v4785
      %5319 = vmatpush1.bf16.msra.mxu0 %v4784
      %5320 = vmatprep.subr.bf16.mxu0 %v4787
      %5321 = vmatpush1.bf16.msra.mxu0 %v4786
      %5322 = vmatprep.subr.bf16.mxu0 %v4789
      %5323 = vmatpush1.bf16.msra.mxu0 %v4788
      %5324 = vmatprep.subr.bf16.mxu0 %v4791
      %5325 = vmatpush1.bf16.msra.mxu0 %v4790
      %5326 = vmatprep.mubr.bf16.mxu0 %v3661
      %5327 = vmatmul.mubr.bf16.gmra.mrb[0].mxu0 %v3660
      %v5328 = vpop.f32.mrb[0].mxu0
      %v5329 = vadd.f32 %v5286, %v5328
      %v5330 = vpop.f32.mrb[0].mxu0
      %v5331 = vadd.f32 %v5288, %v5330
      %v5332 = vpop.f32.mrb[0].mxu0
      %v5333 = vadd.f32 %v5290, %v5332
      %v5334 = vpop.f32.mrb[0].mxu0
      %v5335 = vadd.f32 %v5292, %v5334
      %5336 = vdwg.mxu0
      %5337 = vmatprep.subr.bf16.mxu0 %v4793
      %5338 = vmatpush1.bf16.msra.mxu0 %v4792
      %5339 = vmatprep.subr.bf16.mxu0 %v4795
      %5340 = vmatpush1.bf16.msra.mxu0 %v4794
      %5341 = vmatprep.subr.bf16.mxu0 %v4797
      %5342 = vmatpush1.bf16.msra.mxu0 %v4796
      %5343 = vmatprep.subr.bf16.mxu0 %v4799
      %5344 = vmatpush1.bf16.msra.mxu0 %v4798
      %5345 = vmatprep.subr.bf16.mxu0 %v4801
      %5346 = vmatpush1.bf16.msra.mxu0 %v4800
      %5347 = vmatprep.subr.bf16.mxu0 %v4803
      %5348 = vmatpush1.bf16.msra.mxu0 %v4802
      %5349 = vmatprep.subr.bf16.mxu0 %v4805
      %5350 = vmatpush1.bf16.msra.mxu0 %v4804
      %5351 = vmatprep.subr.bf16.mxu0 %v4807
      %5352 = vmatpush1.bf16.msra.mxu0 %v4806
      %5353 = vmatprep.subr.bf16.mxu0 %v4809
      %5354 = vmatpush1.bf16.msra.mxu0 %v4808
      %5355 = vmatprep.subr.bf16.mxu0 %v4811
      %5356 = vmatpush1.bf16.msra.mxu0 %v4810
      %5357 = vmatprep.subr.bf16.mxu0 %v4813
      %5358 = vmatpush1.bf16.msra.mxu0 %v4812
      %5359 = vmatprep.subr.bf16.mxu0 %v4815
      %5360 = vmatpush1.bf16.msra.mxu0 %v4814
      %5361 = vmatprep.subr.bf16.mxu0 %v4817
      %5362 = vmatpush1.bf16.msra.mxu0 %v4816
      %5363 = vmatprep.subr.bf16.mxu0 %v4819
      %5364 = vmatpush1.bf16.msra.mxu0 %v4818
      %5365 = vmatprep.subr.bf16.mxu0 %v4821
      %5366 = vmatpush1.bf16.msra.mxu0 %v4820
      %5367 = vmatprep.subr.bf16.mxu0 %v4823
      %5368 = vmatpush1.bf16.msra.mxu0 %v4822
      %5369 = vmatprep.mubr.bf16.mxu0 %v3663
      %5370 = vmatmul.mubr.bf16.gmra.mrb[0].mxu0 %v3662
      %v5371 = vpop.f32.mrb[0].mxu0
      %v5372 = vadd.f32 %v5329, %v5371
      %v5373 = vpop.f32.mrb[0].mxu0
      %v5374 = vadd.f32 %v5331, %v5373
      %v5375 = vpop.f32.mrb[0].mxu0
      %v5376 = vadd.f32 %v5333, %v5375
      %v5377 = vpop.f32.mrb[0].mxu0
      %v5378 = vadd.f32 %v5335, %v5377
      %5379 = vdwg.mxu0
      %5380 = vmatprep.subr.bf16.mxu0 %v4825
      %5381 = vmatpush1.bf16.msra.mxu0 %v4824
      %5382 = vmatprep.subr.bf16.mxu0 %v4827
      %5383 = vmatpush1.bf16.msra.mxu0 %v4826
      %5384 = vmatprep.subr.bf16.mxu0 %v4829
      %5385 = vmatpush1.bf16.msra.mxu0 %v4828
      %5386 = vmatprep.subr.bf16.mxu0 %v4831
      %5387 = vmatpush1.bf16.msra.mxu0 %v4830
      %5388 = vmatprep.subr.bf16.mxu0 %v4833
      %5389 = vmatpush1.bf16.msra.mxu0 %v4832
      %5390 = vmatprep.subr.bf16.mxu0 %v4835
      %5391 = vmatpush1.bf16.msra.mxu0 %v4834
      %5392 = vmatprep.subr.bf16.mxu0 %v4837
      %5393 = vmatpush1.bf16.msra.mxu0 %v4836
      %5394 = vmatprep.subr.bf16.mxu0 %v4839
      %5395 = vmatpush1.bf16.msra.mxu0 %v4838
      %5396 = vmatprep.subr.bf16.mxu0 %v4841
      %5397 = vmatpush1.bf16.msra.mxu0 %v4840
      %5398 = vmatprep.subr.bf16.mxu0 %v4843
      %5399 = vmatpush1.bf16.msra.mxu0 %v4842
      %5400 = vmatprep.subr.bf16.mxu0 %v4845
      %5401 = vmatpush1.bf16.msra.mxu0 %v4844
      %5402 = vmatprep.subr.bf16.mxu0 %v4847
      %5403 = vmatpush1.bf16.msra.mxu0 %v4846
      %5404 = vmatprep.subr.bf16.mxu0 %v4849
      %5405 = vmatpush1.bf16.msra.mxu0 %v4848
      %5406 = vmatprep.subr.bf16.mxu0 %v4851
      %5407 = vmatpush1.bf16.msra.mxu0 %v4850
      %5408 = vmatprep.subr.bf16.mxu0 %v4853
      %5409 = vmatpush1.bf16.msra.mxu0 %v4852
      %5410 = vmatprep.subr.bf16.mxu0 %v4855
      %5411 = vmatpush1.bf16.msra.mxu0 %v4854
      %5412 = vmatprep.mubr.bf16.mxu0 %v3665
      %5413 = vmatmul.mubr.bf16.gmra.mrb[0].mxu0 %v3664
      %v5414 = vpop.f32.mrb[0].mxu0
      %v5415 = vadd.f32 %v5372, %v5414
      %v5416 = vpop.f32.mrb[0].mxu0
      %v5417 = vadd.f32 %v5374, %v5416
      %v5418 = vpop.f32.mrb[0].mxu0
      %v5419 = vadd.f32 %v5376, %v5418
      %v5420 = vpop.f32.mrb[0].mxu0
      %v5421 = vadd.f32 %v5378, %v5420
      %5422 = vdwg.mxu0
      %5423 = vmatprep.subr.bf16.mxu0 %v4857
      %5424 = vmatpush1.bf16.msra.mxu0 %v4856
      %5425 = vmatprep.subr.bf16.mxu0 %v4859
      %5426 = vmatpush1.bf16.msra.mxu0 %v4858
      %5427 = vmatprep.subr.bf16.mxu0 %v4861
      %5428 = vmatpush1.bf16.msra.mxu0 %v4860
      %5429 = vmatprep.subr.bf16.mxu0 %v4863
      %5430 = vmatpush1.bf16.msra.mxu0 %v4862
      %5431 = vmatprep.subr.bf16.mxu0 %v4865
      %5432 = vmatpush1.bf16.msra.mxu0 %v4864
      %5433 = vmatprep.subr.bf16.mxu0 %v4867
      %5434 = vmatpush1.bf16.msra.mxu0 %v4866
      %5435 = vmatprep.subr.bf16.mxu0 %v4869
      %5436 = vmatpush1.bf16.msra.mxu0 %v4868
      %5437 = vmatprep.subr.bf16.mxu0 %v4871
      %5438 = vmatpush1.bf16.msra.mxu0 %v4870
      %5439 = vmatprep.subr.bf16.mxu0 %v4873
      %5440 = vmatpush1.bf16.msra.mxu0 %v4872
      %5441 = vmatprep.subr.bf16.mxu0 %v4875
      %5442 = vmatpush1.bf16.msra.mxu0 %v4874
      %5443 = vmatprep.subr.bf16.mxu0 %v4877
      %5444 = vmatpush1.bf16.msra.mxu0 %v4876
      %5445 = vmatprep.subr.bf16.mxu0 %v4879
      %5446 = vmatpush1.bf16.msra.mxu0 %v4878
      %5447 = vmatprep.subr.bf16.mxu0 %v4881
      %5448 = vmatpush1.bf16.msra.mxu0 %v4880
      %5449 = vmatprep.subr.bf16.mxu0 %v4883
      %5450 = vmatpush1.bf16.msra.mxu0 %v4882
      %5451 = vmatprep.subr.bf16.mxu0 %v4885
      %5452 = vmatpush1.bf16.msra.mxu0 %v4884
      %5453 = vmatprep.subr.bf16.mxu0 %v4887
      %5454 = vmatpush1.bf16.msra.mxu0 %v4886
      %5455 = vmatprep.mubr.bf16.mxu0 %v3667
      %5456 = vmatmul.mubr.bf16.gmra.mrb[0].mxu0 %v3666
      %v5457 = vpop.f32.mrb[0].mxu0
      %v5458 = vadd.f32 %v5415, %v5457
      %v5459 = vpop.f32.mrb[0].mxu0
      %v5460 = vadd.f32 %v5417, %v5459
      %v5461 = vpop.f32.mrb[0].mxu0
      %v5462 = vadd.f32 %v5419, %v5461
      %v5463 = vpop.f32.mrb[0].mxu0
      %v5464 = vadd.f32 %v5421, %v5463
      %5465 = vdwg.mxu0
      %5466 = vmatprep.subr.bf16.mxu0 %v4889
      %5467 = vmatpush1.bf16.msra.mxu0 %v4888
      %5468 = vmatprep.subr.bf16.mxu0 %v4891
      %5469 = vmatpush1.bf16.msra.mxu0 %v4890
      %5470 = vmatprep.subr.bf16.mxu0 %v4893
      %5471 = vmatpush1.bf16.msra.mxu0 %v4892
      %5472 = vmatprep.subr.bf16.mxu0 %v4895
      %5473 = vmatpush1.bf16.msra.mxu0 %v4894
      %5474 = vmatprep.subr.bf16.mxu0 %v4897
      %5475 = vmatpush1.bf16.msra.mxu0 %v4896
      %5476 = vmatprep.subr.bf16.mxu0 %v4899
      %5477 = vmatpush1.bf16.msra.mxu0 %v4898
      %5478 = vmatprep.subr.bf16.mxu0 %v4901
      %5479 = vmatpush1.bf16.msra.mxu0 %v4900
      %5480 = vmatprep.subr.bf16.mxu0 %v4903
      %5481 = vmatpush1.bf16.msra.mxu0 %v4902
      %5482 = vmatprep.subr.bf16.mxu0 %v4905
      %5483 = vmatpush1.bf16.msra.mxu0 %v4904
      %5484 = vmatprep.subr.bf16.mxu0 %v4907
      %5485 = vmatpush1.bf16.msra.mxu0 %v4906
      %5486 = vmatprep.subr.bf16.mxu0 %v4909
      %5487 = vmatpush1.bf16.msra.mxu0 %v4908
      %5488 = vmatprep.subr.bf16.mxu0 %v4911
      %5489 = vmatpush1.bf16.msra.mxu0 %v4910
      %5490 = vmatprep.subr.bf16.mxu0 %v4913
      %5491 = vmatpush1.bf16.msra.mxu0 %v4912
      %5492 = vmatprep.subr.bf16.mxu0 %v4915
      %5493 = vmatpush1.bf16.msra.mxu0 %v4914
      %5494 = vmatprep.subr.bf16.mxu0 %v4917
      %5495 = vmatpush1.bf16.msra.mxu0 %v4916
      %5496 = vmatprep.subr.bf16.mxu0 %v4919
      %5497 = vmatpush1.bf16.msra.mxu0 %v4918
      %5498 = vmatprep.mubr.bf16.mxu0 %v3669
      %5499 = vmatmul.mubr.bf16.gmra.mrb[0].mxu0 %v3668
      %v5500 = vpop.f32.mrb[0].mxu0
      %v5501 = vadd.f32 %v5458, %v5500
      %v5502 = vpop.f32.mrb[0].mxu0
      %v5503 = vadd.f32 %v5460, %v5502
      %v5504 = vpop.f32.mrb[0].mxu0
      %v5505 = vadd.f32 %v5462, %v5504
      %v5506 = vpop.f32.mrb[0].mxu0
      %v5507 = vadd.f32 %v5464, %v5506
      %5508 = vdwg.mxu0
      %5509 = vmatprep.subr.bf16.mxu0 %v4921
      %5510 = vmatpush1.bf16.msra.mxu0 %v4920
      %5511 = vmatprep.subr.bf16.mxu0 %v4923
      %5512 = vmatpush1.bf16.msra.mxu0 %v4922
      %5513 = vmatprep.subr.bf16.mxu0 %v4925
      %5514 = vmatpush1.bf16.msra.mxu0 %v4924
      %5515 = vmatprep.subr.bf16.mxu0 %v4927
      %5516 = vmatpush1.bf16.msra.mxu0 %v4926
      %5517 = vmatprep.subr.bf16.mxu0 %v4929
      %5518 = vmatpush1.bf16.msra.mxu0 %v4928
      %5519 = vmatprep.subr.bf16.mxu0 %v4931
      %5520 = vmatpush1.bf16.msra.mxu0 %v4930
      %5521 = vmatprep.subr.bf16.mxu0 %v4933
      %5522 = vmatpush1.bf16.msra.mxu0 %v4932
      %5523 = vmatprep.subr.bf16.mxu0 %v4935
      %5524 = vmatpush1.bf16.msra.mxu0 %v4934
      %5525 = vmatprep.subr.bf16.mxu0 %v4937
      %5526 = vmatpush1.bf16.msra.mxu0 %v4936
      %5527 = vmatprep.subr.bf16.mxu0 %v4939
      %5528 = vmatpush1.bf16.msra.mxu0 %v4938
      %5529 = vmatprep.subr.bf16.mxu0 %v4941
      %5530 = vmatpush1.bf16.msra.mxu0 %v4940
      %5531 = vmatprep.subr.bf16.mxu0 %v4943
      %5532 = vmatpush1.bf16.msra.mxu0 %v4942
      %5533 = vmatprep.subr.bf16.mxu0 %v4945
      %5534 = vmatpush1.bf16.msra.mxu0 %v4944
      %5535 = vmatprep.subr.bf16.mxu0 %v4947
      %5536 = vmatpush1.bf16.msra.mxu0 %v4946
      %5537 = vmatprep.subr.bf16.mxu0 %v4949
      %5538 = vmatpush1.bf16.msra.mxu0 %v4948
      %5539 = vmatprep.subr.bf16.mxu0 %v4951
      %5540 = vmatpush1.bf16.msra.mxu0 %v4950
      %5541 = vmatprep.mubr.bf16.mxu0 %v3671
      %5542 = vmatmul.mubr.bf16.gmra.mrb[0].mxu0 %v3670
      %v5543 = vpop.f32.mrb[0].mxu0
      %v5544 = vadd.f32 %v5501, %v5543
      %v5545 = vpop.f32.mrb[0].mxu0
      %v5546 = vadd.f32 %v5503, %v5545
      %v5547 = vpop.f32.mrb[0].mxu0
      %v5548 = vadd.f32 %v5505, %v5547
      %v5549 = vpop.f32.mrb[0].mxu0
      %v5550 = vadd.f32 %v5507, %v5549
      %5551 = vdwg.mxu0
      %v5552 = vadd.f32 %v5544, %v5548
      %v5553 = vrot.slane %v5552, 4
      %v5554 = vadd.f32 %v5552, %v5553
      %v5555 = vrot.slane %v5554, 2
      %v5556 = vadd.f32 %v5554, %v5555
      %v5557 = vrot.slane %v5556, 1
      %v5558 = vadd.f32 %v5556, %v5557
      %v5559 = vadd.f32 %v5546, %v5550
      %v5560 = vrot.slane %v5559, 4
      %v5561 = vadd.f32 %v5559, %v5560
      %v5562 = vrot.slane %v5561, 2
      %v5563 = vadd.f32 %v5561, %v5562
      %v5564 = vrot.slane %v5563, 1
      %v5565 = vadd.f32 %v5563, %v5564
      %v5566 = vrcp.pop 16.0
      %v5567 = vmul.f32 %v5558, %v5566
      %v5568 = vmul.f32 %v5565, %v5566
      %v5569 = vsub.f32 %v5544, %v5567
      %v5570 = vsub.f32 %v5546, %v5568
      %v5571 = vsub.f32 %v5548, %v5567
      %v5572 = vsub.f32 %v5550, %v5568
      %v5573 = vmul.f32 %v5569, %v5569
      %v5574 = vmul.f32 %v5570, %v5570
      %v5575 = vmul.f32 %v5571, %v5571
      %v5576 = vmul.f32 %v5572, %v5572
      %v5577 = vadd.f32 %v5573, %v5575
      %v5578 = vrot.slane %v5577, 4
      %v5579 = vadd.f32 %v5577, %v5578
      %v5580 = vrot.slane %v5579, 2
      %v5581 = vadd.f32 %v5579, %v5580
      %v5582 = vrot.slane %v5581, 1
      %v5583 = vadd.f32 %v5581, %v5582
      %v5584 = vadd.f32 %v5574, %v5576
      %v5585 = vrot.slane %v5584, 4
      %v5586 = vadd.f32 %v5584, %v5585
      %v5587 = vrot.slane %v5586, 2
      %v5588 = vadd.f32 %v5586, %v5587
      %v5589 = vrot.slane %v5588, 1
      %v5590 = vadd.f32 %v5588, %v5589
      %v5591 = vmul.f32 %v5583, %v5566
      %v5592 = vmul.f32 %v5590, %v5566
      %v5593 = vadd.f32 %v5591, 1e-05
      %v5594 = vadd.f32 %v5592, 1e-05
      %v5595 = vrsqrt.pop %v5593
      %v5596 = vrsqrt.pop %v5594
      %v5597 = vmul.f32 %v5569, %v5595
      %v5598 = vmul.f32 %v5570, %v5596
      %v5599 = vmul.f32 %v5571, %v5595
      %v5600 = vmul.f32 %v5572, %v5596
      %vm5601 = vcmp.ge.f32.partialorder %v5597, 0.0
      %vm5602 = vcmp.ge.f32.partialorder %v5598, 0.0
      %vm5603 = vcmp.ge.f32.partialorder %v5599, 0.0
      %vm5604 = vcmp.ge.f32.partialorder %v5600, 0.0
      %v5605 = vmul.f32 %v5597, 0.2
      %v5606 = vmul.f32 %v5598, 0.2
      %v5607 = vmul.f32 %v5599, 0.2
      %v5608 = vmul.f32 %v5600, 0.2
      %v5609 = vsel %vm5601, %v5597, %v5605
      %v5610 = vsel %vm5602, %v5598, %v5606
      %v5611 = vsel %vm5603, %v5599, %v5607
      %v5612 = vsel %vm5604, %v5600, %v5608
      %v5613 = vpack.c.bf16 %v5611, %v5609
      %v5614 = vpack.c.bf16 %v5612, %v5610
      %v5615 = vld [vmem:[%s7] sm:$0xf]
      %v5616 = vld [vmem:[%s7 + $0x4] sm:$0xf]
      %v5617 = vld [vmem:[%s7 + $0x8] sm:$0xf]
      %v5618 = vld [vmem:[%s7 + $0xc] sm:$0xf]
      %v5619 = vld [vmem:[%s7 + $0x10] sm:$0xf]
      %v5620 = vld [vmem:[%s7 + $0x14] sm:$0xf]
      %v5621 = vld [vmem:[%s7 + $0x18] sm:$0xf]
      %v5622 = vld [vmem:[%s7 + $0x1c] sm:$0xf]
      %v5631 = vunpack.c.l.b16 %v5615
      %v5632 = vunpack.c.l.b16 %v5616
      %v5633 = vunpack.c.l.b16 %v5617
      %v5634 = vunpack.c.l.b16 %v5618
      %v5635 = vunpack.c.l.b16 %v5619
      %v5636 = vunpack.c.l.b16 %v5620
      %v5637 = vunpack.c.l.b16 %v5621
      %v5638 = vunpack.c.l.b16 %v5622
      %v5639 = vpack.c.b16 %v5632, %v5631
      %v5640 = vpack.c.b16 %v5634, %v5633
      %v5641 = vpack.c.b16 %v5636, %v5635
      %v5642 = vpack.c.b16 %v5638, %v5637
      %vm5643 = vcmask 130048
      %v5645 = vsel %vm5643, %v5639, 0
      %v5648 = vsel %vm5643, %v5640, 0
      %v5651 = vsel %vm5643, %v5641, 0
      %v5654 = vsel %vm5643, %v5642, 0
      %5656 = vmatprep.subr.bf16.mxu0 %v5614
      %5657 = vmatpush1.bf16.msra.mxu0 %v5613
      %5658 = vmatprep.subr.bf16.mxu0 0
      %5659 = vmatpush1.bf16.msra.mxu0 0
      %5660 = vmatprep.subr.bf16.mxu0 0
      %5661 = vmatpush1.bf16.msra.mxu0 0
      %5662 = vmatprep.subr.bf16.mxu0 0
      %5663 = vmatpush1.bf16.msra.mxu0 0
      %5664 = vmatprep.subr.bf16.mxu0 0
      %5665 = vmatpush1.bf16.msra.mxu0 0
      %5666 = vmatprep.subr.bf16.mxu0 0
      %5667 = vmatpush1.bf16.msra.mxu0 0
      %5668 = vmatprep.subr.bf16.mxu0 0
      %5669 = vmatpush1.bf16.msra.mxu0 0
      %5670 = vmatprep.subr.bf16.mxu0 0
      %5671 = vmatpush1.bf16.msra.mxu0 0
      %5672 = vmatprep.subr.bf16.mxu0 0
      %5673 = vmatpush1.bf16.msra.mxu0 0
      %5674 = vmatprep.subr.bf16.mxu0 0
      %5675 = vmatpush1.bf16.msra.mxu0 0
      %5676 = vmatprep.subr.bf16.mxu0 0
      %5677 = vmatpush1.bf16.msra.mxu0 0
      %5678 = vmatprep.subr.bf16.mxu0 0
      %5679 = vmatpush1.bf16.msra.mxu0 0
      %5680 = vmatprep.subr.bf16.mxu0 0
      %5681 = vmatpush1.bf16.msra.mxu0 0
      %5682 = vmatprep.subr.bf16.mxu0 0
      %5683 = vmatpush1.bf16.msra.mxu0 0
      %5684 = vmatprep.subr.bf16.mxu0 0
      %5685 = vmatpush1.bf16.msra.mxu0 0
      %5686 = vmatprep.subr.bf16.mxu0 0
      %5687 = vmatpush1.bf16.msra.mxu0 0
      %5688 = vmatprep.mubr.bf16.mxu0 0
      %5689 = vmatmul.mubr.bf16.gmra.mrb[0].mxu0 %v5645
      %v5690 = vpop.f32.mrb[0].mxu0
      %v5691 = vadd.f32 0.0, %v5690
      %v5692 = vpop.f32.mrb[0].mxu0
      %v5693 = vadd.f32 0.0, %v5692
      %v5694 = vpop.f32.mrb[0].mxu0
      %v5695 = vadd.f32 0.0, %v5694
      %v5696 = vpop.f32.mrb[0].mxu0
      %v5697 = vadd.f32 0.0, %v5696
      %5698 = vmatprep.mubr.bf16.mxu0 0
      %5699 = vmatmul.mubr.bf16.gmra.mrb[0].mxu0 %v5648
      %v5700 = vpop.f32.mrb[0].mxu0
      %v5701 = vadd.f32 0.0, %v5700
      %v5702 = vpop.f32.mrb[0].mxu0
      %v5703 = vadd.f32 0.0, %v5702
      %v5704 = vpop.f32.mrb[0].mxu0
      %v5705 = vadd.f32 0.0, %v5704
      %v5706 = vpop.f32.mrb[0].mxu0
      %v5707 = vadd.f32 0.0, %v5706
      %5708 = vmatprep.mubr.bf16.mxu0 0
      %5709 = vmatmul.mubr.bf16.gmra.mrb[0].mxu0 %v5651
      %v5710 = vpop.f32.mrb[0].mxu0
      %v5711 = vadd.f32 0.0, %v5710
      %v5712 = vpop.f32.mrb[0].mxu0
      %v5713 = vadd.f32 0.0, %v5712
      %v5714 = vpop.f32.mrb[0].mxu0
      %v5715 = vadd.f32 0.0, %v5714
      %v5716 = vpop.f32.mrb[0].mxu0
      %v5717 = vadd.f32 0.0, %v5716
      %5718 = vmatprep.mubr.bf16.mxu0 0
      %5719 = vmatmul.mubr.bf16.gmra.mrb[0].mxu0 %v5654
      %v5720 = vpop.f32.mrb[0].mxu0
      %v5721 = vadd.f32 0.0, %v5720
      %v5722 = vpop.f32.mrb[0].mxu0
      %v5723 = vadd.f32 0.0, %v5722
      %v5724 = vpop.f32.mrb[0].mxu0
      %v5725 = vadd.f32 0.0, %v5724
      %v5726 = vpop.f32.mrb[0].mxu0
      %v5727 = vadd.f32 0.0, %v5726
      %5728 = vdwg.mxu0
      %v5729 = vpack.c.bf16 %v5695, %v5691
      %v5730 = vpack.c.bf16 %v5697, %v5693
      %v5731 = vpack.c.bf16 %v5705, %v5701
      %v5732 = vpack.c.bf16 %v5707, %v5703
      %v5733 = vpack.c.bf16 %v5715, %v5711
      %v5734 = vpack.c.bf16 %v5717, %v5713
      %v5735 = vpack.c.bf16 %v5725, %v5721
      %v5736 = vpack.c.bf16 %v5727, %v5723
      %v5739 = vrot.slane %v5729, 2
      %v5740 = vrot.slane %v5730, 2
      %v5743 = vrot.slane %v5729, 4
      %v5744 = vrot.slane %v5730, 4
      %v5747 = vrot.slane %v5729, 6
      %v5748 = vrot.slane %v5730, 6
      %v5753 = vrot.slane %v5731, 2
      %v5754 = vrot.slane %v5732, 2
      %v5757 = vrot.slane %v5731, 4
      %v5758 = vrot.slane %v5732, 4
      %v5761 = vrot.slane %v5731, 6
      %v5762 = vrot.slane %v5732, 6
      %v5767 = vrot.slane %v5733, 2
      %v5768 = vrot.slane %v5734, 2
      %v5771 = vrot.slane %v5733, 4
      %v5772 = vrot.slane %v5734, 4
      %v5775 = vrot.slane %v5733, 6
      %v5776 = vrot.slane %v5734, 6
      %v5781 = vrot.slane %v5735, 2
      %v5782 = vrot.slane %v5736, 2
      %v5785 = vrot.slane %v5735, 4
      %v5786 = vrot.slane %v5736, 4
      %v5789 = vrot.slane %v5735, 6
      %v5790 = vrot.slane %v5736, 6
      %v5793 = vld [vmem:[%s8] sm:$0xff]
      %v5794 = vld [vmem:[%s8 + $0x8] sm:$0xff]
      %v5795 = vld [vmem:[%s8 + $0x10] sm:$0xff]
      %v5796 = vld [vmem:[%s8 + $0x18] sm:$0xff]
      %v5797 = vld [vmem:[%s8 + $0x20] sm:$0xff]
      %v5798 = vld [vmem:[%s8 + $0x28] sm:$0xff]
      %v5799 = vld [vmem:[%s8 + $0x30] sm:$0xff]
      %v5800 = vld [vmem:[%s8 + $0x38] sm:$0xff]
      %v5801 = vld [vmem:[%s8 + $0x40] sm:$0xff]
      %v5802 = vld [vmem:[%s8 + $0x48] sm:$0xff]
      %v5803 = vld [vmem:[%s8 + $0x50] sm:$0xff]
      %v5804 = vld [vmem:[%s8 + $0x58] sm:$0xff]
      %v5805 = vld [vmem:[%s8 + $0x60] sm:$0xff]
      %v5806 = vld [vmem:[%s8 + $0x68] sm:$0xff]
      %v5807 = vld [vmem:[%s8 + $0x70] sm:$0xff]
      %v5808 = vld [vmem:[%s8 + $0x78] sm:$0xff]
      %v5809 = vld [vmem:[%s8 + $0x80] sm:$0xff]
      %v5810 = vld [vmem:[%s8 + $0x88] sm:$0xff]
      %v5811 = vld [vmem:[%s8 + $0x90] sm:$0xff]
      %v5812 = vld [vmem:[%s8 + $0x98] sm:$0xff]
      %v5813 = vld [vmem:[%s8 + $0xa0] sm:$0xff]
      %v5814 = vld [vmem:[%s8 + $0xa8] sm:$0xff]
      %v5815 = vld [vmem:[%s8 + $0xb0] sm:$0xff]
      %v5816 = vld [vmem:[%s8 + $0xb8] sm:$0xff]
      %v5817 = vld [vmem:[%s8 + $0xc0] sm:$0xff]
      %v5818 = vld [vmem:[%s8 + $0xc8] sm:$0xff]
      %v5819 = vld [vmem:[%s8 + $0xd0] sm:$0xff]
      %v5820 = vld [vmem:[%s8 + $0xd8] sm:$0xff]
      %v5821 = vld [vmem:[%s8 + $0xe0] sm:$0xff]
      %v5822 = vld [vmem:[%s8 + $0xe8] sm:$0xff]
      %v5823 = vld [vmem:[%s8 + $0xf0] sm:$0xff]
      %v5824 = vld [vmem:[%s8 + $0xf8] sm:$0xff]
      %v5825 = vld [vmem:[%s8 + $0x100] sm:$0xff]
      %v5826 = vld [vmem:[%s8 + $0x108] sm:$0xff]
      %v5827 = vld [vmem:[%s8 + $0x110] sm:$0xff]
      %v5828 = vld [vmem:[%s8 + $0x118] sm:$0xff]
      %v5829 = vld [vmem:[%s8 + $0x120] sm:$0xff]
      %v5830 = vld [vmem:[%s8 + $0x128] sm:$0xff]
      %v5831 = vld [vmem:[%s8 + $0x130] sm:$0xff]
      %v5832 = vld [vmem:[%s8 + $0x138] sm:$0xff]
      %v5833 = vld [vmem:[%s8 + $0x140] sm:$0xff]
      %v5834 = vld [vmem:[%s8 + $0x148] sm:$0xff]
      %v5835 = vld [vmem:[%s8 + $0x150] sm:$0xff]
      %v5836 = vld [vmem:[%s8 + $0x158] sm:$0xff]
      %v5837 = vld [vmem:[%s8 + $0x160] sm:$0xff]
      %v5838 = vld [vmem:[%s8 + $0x168] sm:$0xff]
      %v5839 = vld [vmem:[%s8 + $0x170] sm:$0xff]
      %v5840 = vld [vmem:[%s8 + $0x178] sm:$0xff]
      %v5841 = vld [vmem:[%s8 + $0x180] sm:$0xff]
      %v5842 = vld [vmem:[%s8 + $0x188] sm:$0xff]
      %v5843 = vld [vmem:[%s8 + $0x190] sm:$0xff]
      %v5844 = vld [vmem:[%s8 + $0x198] sm:$0xff]
      %v5845 = vld [vmem:[%s8 + $0x1a0] sm:$0xff]
      %v5846 = vld [vmem:[%s8 + $0x1a8] sm:$0xff]
      %v5847 = vld [vmem:[%s8 + $0x1b0] sm:$0xff]
      %v5848 = vld [vmem:[%s8 + $0x1b8] sm:$0xff]
      %v5849 = vld [vmem:[%s8 + $0x1c0] sm:$0xff]
      %v5850 = vld [vmem:[%s8 + $0x1c8] sm:$0xff]
      %v5851 = vld [vmem:[%s8 + $0x1d0] sm:$0xff]
      %v5852 = vld [vmem:[%s8 + $0x1d8] sm:$0xff]
      %v5853 = vld [vmem:[%s8 + $0x1e0] sm:$0xff]
      %v5854 = vld [vmem:[%s8 + $0x1e8] sm:$0xff]
      %v5855 = vld [vmem:[%s8 + $0x1f0] sm:$0xff]
      %v5856 = vld [vmem:[%s8 + $0x1f8] sm:$0xff]
      %v5857 = vld [vmem:[%s8 + $0x200] sm:$0xff]
      %v5858 = vld [vmem:[%s8 + $0x208] sm:$0xff]
      %v5859 = vld [vmem:[%s8 + $0x210] sm:$0xff]
      %v5860 = vld [vmem:[%s8 + $0x218] sm:$0xff]
      %v5861 = vld [vmem:[%s8 + $0x220] sm:$0xff]
      %v5862 = vld [vmem:[%s8 + $0x228] sm:$0xff]
      %v5863 = vld [vmem:[%s8 + $0x230] sm:$0xff]
      %v5864 = vld [vmem:[%s8 + $0x238] sm:$0xff]
      %v5865 = vld [vmem:[%s8 + $0x240] sm:$0xff]
      %v5866 = vld [vmem:[%s8 + $0x248] sm:$0xff]
      %v5867 = vld [vmem:[%s8 + $0x250] sm:$0xff]
      %v5868 = vld [vmem:[%s8 + $0x258] sm:$0xff]
      %v5869 = vld [vmem:[%s8 + $0x260] sm:$0xff]
      %v5870 = vld [vmem:[%s8 + $0x268] sm:$0xff]
      %v5871 = vld [vmem:[%s8 + $0x270] sm:$0xff]
      %v5872 = vld [vmem:[%s8 + $0x278] sm:$0xff]
      %v5873 = vld [vmem:[%s8 + $0x280] sm:$0xff]
      %v5874 = vld [vmem:[%s8 + $0x288] sm:$0xff]
      %v5875 = vld [vmem:[%s8 + $0x290] sm:$0xff]
      %v5876 = vld [vmem:[%s8 + $0x298] sm:$0xff]
      %v5877 = vld [vmem:[%s8 + $0x2a0] sm:$0xff]
      %v5878 = vld [vmem:[%s8 + $0x2a8] sm:$0xff]
      %v5879 = vld [vmem:[%s8 + $0x2b0] sm:$0xff]
      %v5880 = vld [vmem:[%s8 + $0x2b8] sm:$0xff]
      %v5881 = vld [vmem:[%s8 + $0x2c0] sm:$0xff]
      %v5882 = vld [vmem:[%s8 + $0x2c8] sm:$0xff]
      %v5883 = vld [vmem:[%s8 + $0x2d0] sm:$0xff]
      %v5884 = vld [vmem:[%s8 + $0x2d8] sm:$0xff]
      %v5885 = vld [vmem:[%s8 + $0x2e0] sm:$0xff]
      %v5886 = vld [vmem:[%s8 + $0x2e8] sm:$0xff]
      %v5887 = vld [vmem:[%s8 + $0x2f0] sm:$0xff]
      %v5888 = vld [vmem:[%s8 + $0x2f8] sm:$0xff]
      %v5889 = vld [vmem:[%s8 + $0x300] sm:$0xff]
      %v5890 = vld [vmem:[%s8 + $0x308] sm:$0xff]
      %v5891 = vld [vmem:[%s8 + $0x310] sm:$0xff]
      %v5892 = vld [vmem:[%s8 + $0x318] sm:$0xff]
      %v5893 = vld [vmem:[%s8 + $0x320] sm:$0xff]
      %v5894 = vld [vmem:[%s8 + $0x328] sm:$0xff]
      %v5895 = vld [vmem:[%s8 + $0x330] sm:$0xff]
      %v5896 = vld [vmem:[%s8 + $0x338] sm:$0xff]
      %v5897 = vld [vmem:[%s8 + $0x340] sm:$0xff]
      %v5898 = vld [vmem:[%s8 + $0x348] sm:$0xff]
      %v5899 = vld [vmem:[%s8 + $0x350] sm:$0xff]
      %v5900 = vld [vmem:[%s8 + $0x358] sm:$0xff]
      %v5901 = vld [vmem:[%s8 + $0x360] sm:$0xff]
      %v5902 = vld [vmem:[%s8 + $0x368] sm:$0xff]
      %v5903 = vld [vmem:[%s8 + $0x370] sm:$0xff]
      %v5904 = vld [vmem:[%s8 + $0x378] sm:$0xff]
      %v5905 = vld [vmem:[%s8 + $0x380] sm:$0xff]
      %v5906 = vld [vmem:[%s8 + $0x388] sm:$0xff]
      %v5907 = vld [vmem:[%s8 + $0x390] sm:$0xff]
      %v5908 = vld [vmem:[%s8 + $0x398] sm:$0xff]
      %v5909 = vld [vmem:[%s8 + $0x3a0] sm:$0xff]
      %v5910 = vld [vmem:[%s8 + $0x3a8] sm:$0xff]
      %v5911 = vld [vmem:[%s8 + $0x3b0] sm:$0xff]
      %v5912 = vld [vmem:[%s8 + $0x3b8] sm:$0xff]
      %v5913 = vld [vmem:[%s8 + $0x3c0] sm:$0xff]
      %v5914 = vld [vmem:[%s8 + $0x3c8] sm:$0xff]
      %v5915 = vld [vmem:[%s8 + $0x3d0] sm:$0xff]
      %v5916 = vld [vmem:[%s8 + $0x3d8] sm:$0xff]
      %v5917 = vld [vmem:[%s8 + $0x3e0] sm:$0xff]
      %v5918 = vld [vmem:[%s8 + $0x3e8] sm:$0xff]
      %v5919 = vld [vmem:[%s8 + $0x3f0] sm:$0xff]
      %v5920 = vld [vmem:[%s8 + $0x3f8] sm:$0xff]
      %v5921 = vld [vmem:[%s8 + $0x400] sm:$0xff]
      %v5922 = vld [vmem:[%s8 + $0x408] sm:$0xff]
      %v5923 = vld [vmem:[%s8 + $0x410] sm:$0xff]
      %v5924 = vld [vmem:[%s8 + $0x418] sm:$0xff]
      %v5925 = vld [vmem:[%s8 + $0x420] sm:$0xff]
      %v5926 = vld [vmem:[%s8 + $0x428] sm:$0xff]
      %v5927 = vld [vmem:[%s8 + $0x430] sm:$0xff]
      %v5928 = vld [vmem:[%s8 + $0x438] sm:$0xff]
      %v5929 = vld [vmem:[%s8 + $0x440] sm:$0xff]
      %v5930 = vld [vmem:[%s8 + $0x448] sm:$0xff]
      %v5931 = vld [vmem:[%s8 + $0x450] sm:$0xff]
      %v5932 = vld [vmem:[%s8 + $0x458] sm:$0xff]
      %v5933 = vld [vmem:[%s8 + $0x460] sm:$0xff]
      %v5934 = vld [vmem:[%s8 + $0x468] sm:$0xff]
      %v5935 = vld [vmem:[%s8 + $0x470] sm:$0xff]
      %v5936 = vld [vmem:[%s8 + $0x478] sm:$0xff]
      %v5937 = vld [vmem:[%s8 + $0x480] sm:$0xff]
      %v5938 = vld [vmem:[%s8 + $0x488] sm:$0xff]
      %v5939 = vld [vmem:[%s8 + $0x490] sm:$0xff]
      %v5940 = vld [vmem:[%s8 + $0x498] sm:$0xff]
      %v5941 = vld [vmem:[%s8 + $0x4a0] sm:$0xff]
      %v5942 = vld [vmem:[%s8 + $0x4a8] sm:$0xff]
      %v5943 = vld [vmem:[%s8 + $0x4b0] sm:$0xff]
      %v5944 = vld [vmem:[%s8 + $0x4b8] sm:$0xff]
      %v5945 = vld [vmem:[%s8 + $0x4c0] sm:$0xff]
      %v5946 = vld [vmem:[%s8 + $0x4c8] sm:$0xff]
      %v5947 = vld [vmem:[%s8 + $0x4d0] sm:$0xff]
      %v5948 = vld [vmem:[%s8 + $0x4d8] sm:$0xff]
      %v5949 = vld [vmem:[%s8 + $0x4e0] sm:$0xff]
      %v5950 = vld [vmem:[%s8 + $0x4e8] sm:$0xff]
      %v5951 = vld [vmem:[%s8 + $0x4f0] sm:$0xff]
      %v5952 = vld [vmem:[%s8 + $0x4f8] sm:$0xff]
      %v5953 = vld [vmem:[%s8 + $0x500] sm:$0xff]
      %v5954 = vld [vmem:[%s8 + $0x508] sm:$0xff]
      %v5955 = vld [vmem:[%s8 + $0x510] sm:$0xff]
      %v5956 = vld [vmem:[%s8 + $0x518] sm:$0xff]
      %v5957 = vld [vmem:[%s8 + $0x520] sm:$0xff]
      %v5958 = vld [vmem:[%s8 + $0x528] sm:$0xff]
      %v5959 = vld [vmem:[%s8 + $0x530] sm:$0xff]
      %v5960 = vld [vmem:[%s8 + $0x538] sm:$0xff]
      %v5961 = vld [vmem:[%s8 + $0x540] sm:$0xff]
      %v5962 = vld [vmem:[%s8 + $0x548] sm:$0xff]
      %v5963 = vld [vmem:[%s8 + $0x550] sm:$0xff]
      %v5964 = vld [vmem:[%s8 + $0x558] sm:$0xff]
      %v5965 = vld [vmem:[%s8 + $0x560] sm:$0xff]
      %v5966 = vld [vmem:[%s8 + $0x568] sm:$0xff]
      %v5967 = vld [vmem:[%s8 + $0x570] sm:$0xff]
      %v5968 = vld [vmem:[%s8 + $0x578] sm:$0xff]
      %v5969 = vld [vmem:[%s8 + $0x580] sm:$0xff]
      %v5970 = vld [vmem:[%s8 + $0x588] sm:$0xff]
      %v5971 = vld [vmem:[%s8 + $0x590] sm:$0xff]
      %v5972 = vld [vmem:[%s8 + $0x598] sm:$0xff]
      %v5973 = vld [vmem:[%s8 + $0x5a0] sm:$0xff]
      %v5974 = vld [vmem:[%s8 + $0x5a8] sm:$0xff]
      %v5975 = vld [vmem:[%s8 + $0x5b0] sm:$0xff]
      %v5976 = vld [vmem:[%s8 + $0x5b8] sm:$0xff]
      %v5977 = vld [vmem:[%s8 + $0x5c0] sm:$0xff]
      %v5978 = vld [vmem:[%s8 + $0x5c8] sm:$0xff]
      %v5979 = vld [vmem:[%s8 + $0x5d0] sm:$0xff]
      %v5980 = vld [vmem:[%s8 + $0x5d8] sm:$0xff]
      %v5981 = vld [vmem:[%s8 + $0x5e0] sm:$0xff]
      %v5982 = vld [vmem:[%s8 + $0x5e8] sm:$0xff]
      %v5983 = vld [vmem:[%s8 + $0x5f0] sm:$0xff]
      %v5984 = vld [vmem:[%s8 + $0x5f8] sm:$0xff]
      %v5985 = vld [vmem:[%s8 + $0x600] sm:$0xff]
      %v5986 = vld [vmem:[%s8 + $0x608] sm:$0xff]
      %v5987 = vld [vmem:[%s8 + $0x610] sm:$0xff]
      %v5988 = vld [vmem:[%s8 + $0x618] sm:$0xff]
      %v5989 = vld [vmem:[%s8 + $0x620] sm:$0xff]
      %v5990 = vld [vmem:[%s8 + $0x628] sm:$0xff]
      %v5991 = vld [vmem:[%s8 + $0x630] sm:$0xff]
      %v5992 = vld [vmem:[%s8 + $0x638] sm:$0xff]
      %v5993 = vld [vmem:[%s8 + $0x640] sm:$0xff]
      %v5994 = vld [vmem:[%s8 + $0x648] sm:$0xff]
      %v5995 = vld [vmem:[%s8 + $0x650] sm:$0xff]
      %v5996 = vld [vmem:[%s8 + $0x658] sm:$0xff]
      %v5997 = vld [vmem:[%s8 + $0x660] sm:$0xff]
      %v5998 = vld [vmem:[%s8 + $0x668] sm:$0xff]
      %v5999 = vld [vmem:[%s8 + $0x670] sm:$0xff]
      %v6000 = vld [vmem:[%s8 + $0x678] sm:$0xff]
      %v6001 = vld [vmem:[%s8 + $0x680] sm:$0xff]
      %v6002 = vld [vmem:[%s8 + $0x688] sm:$0xff]
      %v6003 = vld [vmem:[%s8 + $0x690] sm:$0xff]
      %v6004 = vld [vmem:[%s8 + $0x698] sm:$0xff]
      %v6005 = vld [vmem:[%s8 + $0x6a0] sm:$0xff]
      %v6006 = vld [vmem:[%s8 + $0x6a8] sm:$0xff]
      %v6007 = vld [vmem:[%s8 + $0x6b0] sm:$0xff]
      %v6008 = vld [vmem:[%s8 + $0x6b8] sm:$0xff]
      %v6009 = vld [vmem:[%s8 + $0x6c0] sm:$0xff]
      %v6010 = vld [vmem:[%s8 + $0x6c8] sm:$0xff]
      %v6011 = vld [vmem:[%s8 + $0x6d0] sm:$0xff]
      %v6012 = vld [vmem:[%s8 + $0x6d8] sm:$0xff]
      %v6013 = vld [vmem:[%s8 + $0x6e0] sm:$0xff]
      %v6014 = vld [vmem:[%s8 + $0x6e8] sm:$0xff]
      %v6015 = vld [vmem:[%s8 + $0x6f0] sm:$0xff]
      %v6016 = vld [vmem:[%s8 + $0x6f8] sm:$0xff]
      %v6017 = vld [vmem:[%s8 + $0x700] sm:$0xff]
      %v6018 = vld [vmem:[%s8 + $0x708] sm:$0xff]
      %v6019 = vld [vmem:[%s8 + $0x710] sm:$0xff]
      %v6020 = vld [vmem:[%s8 + $0x718] sm:$0xff]
      %v6021 = vld [vmem:[%s8 + $0x720] sm:$0xff]
      %v6022 = vld [vmem:[%s8 + $0x728] sm:$0xff]
      %v6023 = vld [vmem:[%s8 + $0x730] sm:$0xff]
      %v6024 = vld [vmem:[%s8 + $0x738] sm:$0xff]
      %v6025 = vld [vmem:[%s8 + $0x740] sm:$0xff]
      %v6026 = vld [vmem:[%s8 + $0x748] sm:$0xff]
      %v6027 = vld [vmem:[%s8 + $0x750] sm:$0xff]
      %v6028 = vld [vmem:[%s8 + $0x758] sm:$0xff]
      %v6029 = vld [vmem:[%s8 + $0x760] sm:$0xff]
      %v6030 = vld [vmem:[%s8 + $0x768] sm:$0xff]
      %v6031 = vld [vmem:[%s8 + $0x770] sm:$0xff]
      %v6032 = vld [vmem:[%s8 + $0x778] sm:$0xff]
      %v6033 = vld [vmem:[%s8 + $0x780] sm:$0xff]
      %v6034 = vld [vmem:[%s8 + $0x788] sm:$0xff]
      %v6035 = vld [vmem:[%s8 + $0x790] sm:$0xff]
      %v6036 = vld [vmem:[%s8 + $0x798] sm:$0xff]
      %v6037 = vld [vmem:[%s8 + $0x7a0] sm:$0xff]
      %v6038 = vld [vmem:[%s8 + $0x7a8] sm:$0xff]
      %v6039 = vld [vmem:[%s8 + $0x7b0] sm:$0xff]
      %v6040 = vld [vmem:[%s8 + $0x7b8] sm:$0xff]
      %v6041 = vld [vmem:[%s8 + $0x7c0] sm:$0xff]
      %v6042 = vld [vmem:[%s8 + $0x7c8] sm:$0xff]
      %v6043 = vld [vmem:[%s8 + $0x7d0] sm:$0xff]
      %v6044 = vld [vmem:[%s8 + $0x7d8] sm:$0xff]
      %v6045 = vld [vmem:[%s8 + $0x7e0] sm:$0xff]
      %v6046 = vld [vmem:[%s8 + $0x7e8] sm:$0xff]
      %v6047 = vld [vmem:[%s8 + $0x7f0] sm:$0xff]
      %v6048 = vld [vmem:[%s8 + $0x7f8] sm:$0xff]
      %v6049 = vld [vmem:[%s8 + $0x800] sm:$0xff]
      %v6050 = vld [vmem:[%s8 + $0x808] sm:$0xff]
      %v6051 = vld [vmem:[%s8 + $0x810] sm:$0xff]
      %v6052 = vld [vmem:[%s8 + $0x818] sm:$0xff]
      %v6053 = vld [vmem:[%s8 + $0x820] sm:$0xff]
      %v6054 = vld [vmem:[%s8 + $0x828] sm:$0xff]
      %v6055 = vld [vmem:[%s8 + $0x830] sm:$0xff]
      %v6056 = vld [vmem:[%s8 + $0x838] sm:$0xff]
      %v6057 = vld [vmem:[%s8 + $0x840] sm:$0xff]
      %v6058 = vld [vmem:[%s8 + $0x848] sm:$0xff]
      %v6059 = vld [vmem:[%s8 + $0x850] sm:$0xff]
      %v6060 = vld [vmem:[%s8 + $0x858] sm:$0xff]
      %v6061 = vld [vmem:[%s8 + $0x860] sm:$0xff]
      %v6062 = vld [vmem:[%s8 + $0x868] sm:$0xff]
      %v6063 = vld [vmem:[%s8 + $0x870] sm:$0xff]
      %v6064 = vld [vmem:[%s8 + $0x878] sm:$0xff]
      %v6065 = vld [vmem:[%s8 + $0x880] sm:$0xff]
      %v6066 = vld [vmem:[%s8 + $0x888] sm:$0xff]
      %v6067 = vld [vmem:[%s8 + $0x890] sm:$0xff]
      %v6068 = vld [vmem:[%s8 + $0x898] sm:$0xff]
      %v6069 = vld [vmem:[%s8 + $0x8a0] sm:$0xff]
      %v6070 = vld [vmem:[%s8 + $0x8a8] sm:$0xff]
      %v6071 = vld [vmem:[%s8 + $0x8b0] sm:$0xff]
      %v6072 = vld [vmem:[%s8 + $0x8b8] sm:$0xff]
      %v6073 = vld [vmem:[%s8 + $0x8c0] sm:$0xff]
      %v6074 = vld [vmem:[%s8 + $0x8c8] sm:$0xff]
      %v6075 = vld [vmem:[%s8 + $0x8d0] sm:$0xff]
      %v6076 = vld [vmem:[%s8 + $0x8d8] sm:$0xff]
      %v6077 = vld [vmem:[%s8 + $0x8e0] sm:$0xff]
      %v6078 = vld [vmem:[%s8 + $0x8e8] sm:$0xff]
      %v6079 = vld [vmem:[%s8 + $0x8f0] sm:$0xff]
      %v6080 = vld [vmem:[%s8 + $0x8f8] sm:$0xff]
      %v6081 = vld [vmem:[%s8 + $0x900] sm:$0xff]
      %v6082 = vld [vmem:[%s8 + $0x908] sm:$0xff]
      %v6083 = vld [vmem:[%s8 + $0x910] sm:$0xff]
      %v6084 = vld [vmem:[%s8 + $0x918] sm:$0xff]
      %v6085 = vld [vmem:[%s8 + $0x920] sm:$0xff]
      %v6086 = vld [vmem:[%s8 + $0x928] sm:$0xff]
      %v6087 = vld [vmem:[%s8 + $0x930] sm:$0xff]
      %v6088 = vld [vmem:[%s8 + $0x938] sm:$0xff]
      %v6089 = vld [vmem:[%s8 + $0x940] sm:$0xff]
      %v6090 = vld [vmem:[%s8 + $0x948] sm:$0xff]
      %v6091 = vld [vmem:[%s8 + $0x950] sm:$0xff]
      %v6092 = vld [vmem:[%s8 + $0x958] sm:$0xff]
      %v6093 = vld [vmem:[%s8 + $0x960] sm:$0xff]
      %v6094 = vld [vmem:[%s8 + $0x968] sm:$0xff]
      %v6095 = vld [vmem:[%s8 + $0x970] sm:$0xff]
      %v6096 = vld [vmem:[%s8 + $0x978] sm:$0xff]
      %v6097 = vld [vmem:[%s8 + $0x980] sm:$0xff]
      %v6098 = vld [vmem:[%s8 + $0x988] sm:$0xff]
      %v6099 = vld [vmem:[%s8 + $0x990] sm:$0xff]
      %v6100 = vld [vmem:[%s8 + $0x998] sm:$0xff]
      %v6101 = vld [vmem:[%s8 + $0x9a0] sm:$0xff]
      %v6102 = vld [vmem:[%s8 + $0x9a8] sm:$0xff]
      %v6103 = vld [vmem:[%s8 + $0x9b0] sm:$0xff]
      %v6104 = vld [vmem:[%s8 + $0x9b8] sm:$0xff]
      %v6105 = vld [vmem:[%s8 + $0x9c0] sm:$0xff]
      %v6106 = vld [vmem:[%s8 + $0x9c8] sm:$0xff]
      %v6107 = vld [vmem:[%s8 + $0x9d0] sm:$0xff]
      %v6108 = vld [vmem:[%s8 + $0x9d8] sm:$0xff]
      %v6109 = vld [vmem:[%s8 + $0x9e0] sm:$0xff]
      %v6110 = vld [vmem:[%s8 + $0x9e8] sm:$0xff]
      %v6111 = vld [vmem:[%s8 + $0x9f0] sm:$0xff]
      %v6112 = vld [vmem:[%s8 + $0x9f8] sm:$0xff]
      %v6113 = vld [vmem:[%s8 + $0xa00] sm:$0xff]
      %v6114 = vld [vmem:[%s8 + $0xa08] sm:$0xff]
      %v6115 = vld [vmem:[%s8 + $0xa10] sm:$0xff]
      %v6116 = vld [vmem:[%s8 + $0xa18] sm:$0xff]
      %v6117 = vld [vmem:[%s8 + $0xa20] sm:$0xff]
      %v6118 = vld [vmem:[%s8 + $0xa28] sm:$0xff]
      %v6119 = vld [vmem:[%s8 + $0xa30] sm:$0xff]
      %v6120 = vld [vmem:[%s8 + $0xa38] sm:$0xff]
      %v6121 = vld [vmem:[%s8 + $0xa40] sm:$0xff]
      %v6122 = vld [vmem:[%s8 + $0xa48] sm:$0xff]
      %v6123 = vld [vmem:[%s8 + $0xa50] sm:$0xff]
      %v6124 = vld [vmem:[%s8 + $0xa58] sm:$0xff]
      %v6125 = vld [vmem:[%s8 + $0xa60] sm:$0xff]
      %v6126 = vld [vmem:[%s8 + $0xa68] sm:$0xff]
      %v6127 = vld [vmem:[%s8 + $0xa70] sm:$0xff]
      %v6128 = vld [vmem:[%s8 + $0xa78] sm:$0xff]
      %v6129 = vld [vmem:[%s8 + $0xa80] sm:$0xff]
      %v6130 = vld [vmem:[%s8 + $0xa88] sm:$0xff]
      %v6131 = vld [vmem:[%s8 + $0xa90] sm:$0xff]
      %v6132 = vld [vmem:[%s8 + $0xa98] sm:$0xff]
      %v6133 = vld [vmem:[%s8 + $0xaa0] sm:$0xff]
      %v6134 = vld [vmem:[%s8 + $0xaa8] sm:$0xff]
      %v6135 = vld [vmem:[%s8 + $0xab0] sm:$0xff]
      %v6136 = vld [vmem:[%s8 + $0xab8] sm:$0xff]
      %v6137 = vld [vmem:[%s8 + $0xac0] sm:$0xff]
      %v6138 = vld [vmem:[%s8 + $0xac8] sm:$0xff]
      %v6139 = vld [vmem:[%s8 + $0xad0] sm:$0xff]
      %v6140 = vld [vmem:[%s8 + $0xad8] sm:$0xff]
      %v6141 = vld [vmem:[%s8 + $0xae0] sm:$0xff]
      %v6142 = vld [vmem:[%s8 + $0xae8] sm:$0xff]
      %v6143 = vld [vmem:[%s8 + $0xaf0] sm:$0xff]
      %v6144 = vld [vmem:[%s8 + $0xaf8] sm:$0xff]
      %v6145 = vld [vmem:[%s8 + $0xb00] sm:$0xff]
      %v6146 = vld [vmem:[%s8 + $0xb08] sm:$0xff]
      %v6147 = vld [vmem:[%s8 + $0xb10] sm:$0xff]
      %v6148 = vld [vmem:[%s8 + $0xb18] sm:$0xff]
      %v6149 = vld [vmem:[%s8 + $0xb20] sm:$0xff]
      %v6150 = vld [vmem:[%s8 + $0xb28] sm:$0xff]
      %v6151 = vld [vmem:[%s8 + $0xb30] sm:$0xff]
      %v6152 = vld [vmem:[%s8 + $0xb38] sm:$0xff]
      %v6153 = vld [vmem:[%s8 + $0xb40] sm:$0xff]
      %v6154 = vld [vmem:[%s8 + $0xb48] sm:$0xff]
      %v6155 = vld [vmem:[%s8 + $0xb50] sm:$0xff]
      %v6156 = vld [vmem:[%s8 + $0xb58] sm:$0xff]
      %v6157 = vld [vmem:[%s8 + $0xb60] sm:$0xff]
      %v6158 = vld [vmem:[%s8 + $0xb68] sm:$0xff]
      %v6159 = vld [vmem:[%s8 + $0xb70] sm:$0xff]
      %v6160 = vld [vmem:[%s8 + $0xb78] sm:$0xff]
      %v6161 = vld [vmem:[%s8 + $0xb80] sm:$0xff]
      %v6162 = vld [vmem:[%s8 + $0xb88] sm:$0xff]
      %v6163 = vld [vmem:[%s8 + $0xb90] sm:$0xff]
      %v6164 = vld [vmem:[%s8 + $0xb98] sm:$0xff]
      %v6165 = vld [vmem:[%s8 + $0xba0] sm:$0xff]
      %v6166 = vld [vmem:[%s8 + $0xba8] sm:$0xff]
      %v6167 = vld [vmem:[%s8 + $0xbb0] sm:$0xff]
      %v6168 = vld [vmem:[%s8 + $0xbb8] sm:$0xff]
      %v6169 = vld [vmem:[%s8 + $0xbc0] sm:$0xff]
      %v6170 = vld [vmem:[%s8 + $0xbc8] sm:$0xff]
      %v6171 = vld [vmem:[%s8 + $0xbd0] sm:$0xff]
      %v6172 = vld [vmem:[%s8 + $0xbd8] sm:$0xff]
      %v6173 = vld [vmem:[%s8 + $0xbe0] sm:$0xff]
      %v6174 = vld [vmem:[%s8 + $0xbe8] sm:$0xff]
      %v6175 = vld [vmem:[%s8 + $0xbf0] sm:$0xff]
      %v6176 = vld [vmem:[%s8 + $0xbf8] sm:$0xff]
      %v6177 = vld [vmem:[%s8 + $0xc00] sm:$0xff]
      %v6178 = vld [vmem:[%s8 + $0xc08] sm:$0xff]
      %v6179 = vld [vmem:[%s8 + $0xc10] sm:$0xff]
      %v6180 = vld [vmem:[%s8 + $0xc18] sm:$0xff]
      %v6181 = vld [vmem:[%s8 + $0xc20] sm:$0xff]
      %v6182 = vld [vmem:[%s8 + $0xc28] sm:$0xff]
      %v6183 = vld [vmem:[%s8 + $0xc30] sm:$0xff]
      %v6184 = vld [vmem:[%s8 + $0xc38] sm:$0xff]
      %v6185 = vld [vmem:[%s8 + $0xc40] sm:$0xff]
      %v6186 = vld [vmem:[%s8 + $0xc48] sm:$0xff]
      %v6187 = vld [vmem:[%s8 + $0xc50] sm:$0xff]
      %v6188 = vld [vmem:[%s8 + $0xc58] sm:$0xff]
      %v6189 = vld [vmem:[%s8 + $0xc60] sm:$0xff]
      %v6190 = vld [vmem:[%s8 + $0xc68] sm:$0xff]
      %v6191 = vld [vmem:[%s8 + $0xc70] sm:$0xff]
      %v6192 = vld [vmem:[%s8 + $0xc78] sm:$0xff]
      %v6193 = vld [vmem:[%s8 + $0xc80] sm:$0xff]
      %v6194 = vld [vmem:[%s8 + $0xc88] sm:$0xff]
      %v6195 = vld [vmem:[%s8 + $0xc90] sm:$0xff]
      %v6196 = vld [vmem:[%s8 + $0xc98] sm:$0xff]
      %v6197 = vld [vmem:[%s8 + $0xca0] sm:$0xff]
      %v6198 = vld [vmem:[%s8 + $0xca8] sm:$0xff]
      %v6199 = vld [vmem:[%s8 + $0xcb0] sm:$0xff]
      %v6200 = vld [vmem:[%s8 + $0xcb8] sm:$0xff]
      %v6201 = vld [vmem:[%s8 + $0xcc0] sm:$0xff]
      %v6202 = vld [vmem:[%s8 + $0xcc8] sm:$0xff]
      %v6203 = vld [vmem:[%s8 + $0xcd0] sm:$0xff]
      %v6204 = vld [vmem:[%s8 + $0xcd8] sm:$0xff]
      %v6205 = vld [vmem:[%s8 + $0xce0] sm:$0xff]
      %v6206 = vld [vmem:[%s8 + $0xce8] sm:$0xff]
      %v6207 = vld [vmem:[%s8 + $0xcf0] sm:$0xff]
      %v6208 = vld [vmem:[%s8 + $0xcf8] sm:$0xff]
      %v6209 = vld [vmem:[%s8 + $0xd00] sm:$0xff]
      %v6210 = vld [vmem:[%s8 + $0xd08] sm:$0xff]
      %v6211 = vld [vmem:[%s8 + $0xd10] sm:$0xff]
      %v6212 = vld [vmem:[%s8 + $0xd18] sm:$0xff]
      %v6213 = vld [vmem:[%s8 + $0xd20] sm:$0xff]
      %v6214 = vld [vmem:[%s8 + $0xd28] sm:$0xff]
      %v6215 = vld [vmem:[%s8 + $0xd30] sm:$0xff]
      %v6216 = vld [vmem:[%s8 + $0xd38] sm:$0xff]
      %v6217 = vld [vmem:[%s8 + $0xd40] sm:$0xff]
      %v6218 = vld [vmem:[%s8 + $0xd48] sm:$0xff]
      %v6219 = vld [vmem:[%s8 + $0xd50] sm:$0xff]
      %v6220 = vld [vmem:[%s8 + $0xd58] sm:$0xff]
      %v6221 = vld [vmem:[%s8 + $0xd60] sm:$0xff]
      %v6222 = vld [vmem:[%s8 + $0xd68] sm:$0xff]
      %v6223 = vld [vmem:[%s8 + $0xd70] sm:$0xff]
      %v6224 = vld [vmem:[%s8 + $0xd78] sm:$0xff]
      %v6225 = vld [vmem:[%s8 + $0xd80] sm:$0xff]
      %v6226 = vld [vmem:[%s8 + $0xd88] sm:$0xff]
      %v6227 = vld [vmem:[%s8 + $0xd90] sm:$0xff]
      %v6228 = vld [vmem:[%s8 + $0xd98] sm:$0xff]
      %v6229 = vld [vmem:[%s8 + $0xda0] sm:$0xff]
      %v6230 = vld [vmem:[%s8 + $0xda8] sm:$0xff]
      %v6231 = vld [vmem:[%s8 + $0xdb0] sm:$0xff]
      %v6232 = vld [vmem:[%s8 + $0xdb8] sm:$0xff]
      %v6233 = vld [vmem:[%s8 + $0xdc0] sm:$0xff]
      %v6234 = vld [vmem:[%s8 + $0xdc8] sm:$0xff]
      %v6235 = vld [vmem:[%s8 + $0xdd0] sm:$0xff]
      %v6236 = vld [vmem:[%s8 + $0xdd8] sm:$0xff]
      %v6237 = vld [vmem:[%s8 + $0xde0] sm:$0xff]
      %v6238 = vld [vmem:[%s8 + $0xde8] sm:$0xff]
      %v6239 = vld [vmem:[%s8 + $0xdf0] sm:$0xff]
      %v6240 = vld [vmem:[%s8 + $0xdf8] sm:$0xff]
      %v6241 = vld [vmem:[%s8 + $0xe00] sm:$0xff]
      %v6242 = vld [vmem:[%s8 + $0xe08] sm:$0xff]
      %v6243 = vld [vmem:[%s8 + $0xe10] sm:$0xff]
      %v6244 = vld [vmem:[%s8 + $0xe18] sm:$0xff]
      %v6245 = vld [vmem:[%s8 + $0xe20] sm:$0xff]
      %v6246 = vld [vmem:[%s8 + $0xe28] sm:$0xff]
      %v6247 = vld [vmem:[%s8 + $0xe30] sm:$0xff]
      %v6248 = vld [vmem:[%s8 + $0xe38] sm:$0xff]
      %v6249 = vld [vmem:[%s8 + $0xe40] sm:$0xff]
      %v6250 = vld [vmem:[%s8 + $0xe48] sm:$0xff]
      %v6251 = vld [vmem:[%s8 + $0xe50] sm:$0xff]
      %v6252 = vld [vmem:[%s8 + $0xe58] sm:$0xff]
      %v6253 = vld [vmem:[%s8 + $0xe60] sm:$0xff]
      %v6254 = vld [vmem:[%s8 + $0xe68] sm:$0xff]
      %v6255 = vld [vmem:[%s8 + $0xe70] sm:$0xff]
      %v6256 = vld [vmem:[%s8 + $0xe78] sm:$0xff]
      %v6257 = vld [vmem:[%s8 + $0xe80] sm:$0xff]
      %v6258 = vld [vmem:[%s8 + $0xe88] sm:$0xff]
      %v6259 = vld [vmem:[%s8 + $0xe90] sm:$0xff]
      %v6260 = vld [vmem:[%s8 + $0xe98] sm:$0xff]
      %v6261 = vld [vmem:[%s8 + $0xea0] sm:$0xff]
      %v6262 = vld [vmem:[%s8 + $0xea8] sm:$0xff]
      %v6263 = vld [vmem:[%s8 + $0xeb0] sm:$0xff]
      %v6264 = vld [vmem:[%s8 + $0xeb8] sm:$0xff]
      %v6265 = vld [vmem:[%s8 + $0xec0] sm:$0xff]
      %v6266 = vld [vmem:[%s8 + $0xec8] sm:$0xff]
      %v6267 = vld [vmem:[%s8 + $0xed0] sm:$0xff]
      %v6268 = vld [vmem:[%s8 + $0xed8] sm:$0xff]
      %v6269 = vld [vmem:[%s8 + $0xee0] sm:$0xff]
      %v6270 = vld [vmem:[%s8 + $0xee8] sm:$0xff]
      %v6271 = vld [vmem:[%s8 + $0xef0] sm:$0xff]
      %v6272 = vld [vmem:[%s8 + $0xef8] sm:$0xff]
      %v6273 = vld [vmem:[%s8 + $0xf00] sm:$0xff]
      %v6274 = vld [vmem:[%s8 + $0xf08] sm:$0xff]
      %v6275 = vld [vmem:[%s8 + $0xf10] sm:$0xff]
      %v6276 = vld [vmem:[%s8 + $0xf18] sm:$0xff]
      %v6277 = vld [vmem:[%s8 + $0xf20] sm:$0xff]
      %v6278 = vld [vmem:[%s8 + $0xf28] sm:$0xff]
      %v6279 = vld [vmem:[%s8 + $0xf30] sm:$0xff]
      %v6280 = vld [vmem:[%s8 + $0xf38] sm:$0xff]
      %v6281 = vld [vmem:[%s8 + $0xf40] sm:$0xff]
      %v6282 = vld [vmem:[%s8 + $0xf48] sm:$0xff]
      %v6283 = vld [vmem:[%s8 + $0xf50] sm:$0xff]
      %v6284 = vld [vmem:[%s8 + $0xf58] sm:$0xff]
      %v6285 = vld [vmem:[%s8 + $0xf60] sm:$0xff]
      %v6286 = vld [vmem:[%s8 + $0xf68] sm:$0xff]
      %v6287 = vld [vmem:[%s8 + $0xf70] sm:$0xff]
      %v6288 = vld [vmem:[%s8 + $0xf78] sm:$0xff]
      %v6289 = vld [vmem:[%s8 + $0xf80] sm:$0xff]
      %v6290 = vld [vmem:[%s8 + $0xf88] sm:$0xff]
      %v6291 = vld [vmem:[%s8 + $0xf90] sm:$0xff]
      %v6292 = vld [vmem:[%s8 + $0xf98] sm:$0xff]
      %v6293 = vld [vmem:[%s8 + $0xfa0] sm:$0xff]
      %v6294 = vld [vmem:[%s8 + $0xfa8] sm:$0xff]
      %v6295 = vld [vmem:[%s8 + $0xfb0] sm:$0xff]
      %v6296 = vld [vmem:[%s8 + $0xfb8] sm:$0xff]
      %v6297 = vld [vmem:[%s8 + $0xfc0] sm:$0xff]
      %v6298 = vld [vmem:[%s8 + $0xfc8] sm:$0xff]
      %v6299 = vld [vmem:[%s8 + $0xfd0] sm:$0xff]
      %v6300 = vld [vmem:[%s8 + $0xfd8] sm:$0xff]
      %v6301 = vld [vmem:[%s8 + $0xfe0] sm:$0xff]
      %v6302 = vld [vmem:[%s8 + $0xfe8] sm:$0xff]
      %v6303 = vld [vmem:[%s8 + $0xff0] sm:$0xff]
      %v6304 = vld [vmem:[%s8 + $0xff8] sm:$0xff]
      %v6305 = vld [vmem:[%s8 + $0x1000] sm:$0xff]
      %v6306 = vld [vmem:[%s8 + $0x1008] sm:$0xff]
      %v6307 = vld [vmem:[%s8 + $0x1010] sm:$0xff]
      %v6308 = vld [vmem:[%s8 + $0x1018] sm:$0xff]
      %v6309 = vld [vmem:[%s8 + $0x1020] sm:$0xff]
      %v6310 = vld [vmem:[%s8 + $0x1028] sm:$0xff]
      %v6311 = vld [vmem:[%s8 + $0x1030] sm:$0xff]
      %v6312 = vld [vmem:[%s8 + $0x1038] sm:$0xff]
      %v6313 = vld [vmem:[%s8 + $0x1040] sm:$0xff]
      %v6314 = vld [vmem:[%s8 + $0x1048] sm:$0xff]
      %v6315 = vld [vmem:[%s8 + $0x1050] sm:$0xff]
      %v6316 = vld [vmem:[%s8 + $0x1058] sm:$0xff]
      %v6317 = vld [vmem:[%s8 + $0x1060] sm:$0xff]
      %v6318 = vld [vmem:[%s8 + $0x1068] sm:$0xff]
      %v6319 = vld [vmem:[%s8 + $0x1070] sm:$0xff]
      %v6320 = vld [vmem:[%s8 + $0x1078] sm:$0xff]
      %v6321 = vld [vmem:[%s8 + $0x1080] sm:$0xff]
      %v6322 = vld [vmem:[%s8 + $0x1088] sm:$0xff]
      %v6323 = vld [vmem:[%s8 + $0x1090] sm:$0xff]
      %v6324 = vld [vmem:[%s8 + $0x1098] sm:$0xff]
      %v6325 = vld [vmem:[%s8 + $0x10a0] sm:$0xff]
      %v6326 = vld [vmem:[%s8 + $0x10a8] sm:$0xff]
      %v6327 = vld [vmem:[%s8 + $0x10b0] sm:$0xff]
      %v6328 = vld [vmem:[%s8 + $0x10b8] sm:$0xff]
      %v6329 = vld [vmem:[%s8 + $0x10c0] sm:$0xff]
      %v6330 = vld [vmem:[%s8 + $0x10c8] sm:$0xff]
      %v6331 = vld [vmem:[%s8 + $0x10d0] sm:$0xff]
      %v6332 = vld [vmem:[%s8 + $0x10d8] sm:$0xff]
      %v6333 = vld [vmem:[%s8 + $0x10e0] sm:$0xff]
      %v6334 = vld [vmem:[%s8 + $0x10e8] sm:$0xff]
      %v6335 = vld [vmem:[%s8 + $0x10f0] sm:$0xff]
      %v6336 = vld [vmem:[%s8 + $0x10f8] sm:$0xff]
      %v6337 = vld [vmem:[%s8 + $0x1100] sm:$0xff]
      %v6338 = vld [vmem:[%s8 + $0x1108] sm:$0xff]
      %v6339 = vld [vmem:[%s8 + $0x1110] sm:$0xff]
      %v6340 = vld [vmem:[%s8 + $0x1118] sm:$0xff]
      %v6341 = vld [vmem:[%s8 + $0x1120] sm:$0xff]
      %v6342 = vld [vmem:[%s8 + $0x1128] sm:$0xff]
      %v6343 = vld [vmem:[%s8 + $0x1130] sm:$0xff]
      %v6344 = vld [vmem:[%s8 + $0x1138] sm:$0xff]
      %v6345 = vld [vmem:[%s8 + $0x1140] sm:$0xff]
      %v6346 = vld [vmem:[%s8 + $0x1148] sm:$0xff]
      %v6347 = vld [vmem:[%s8 + $0x1150] sm:$0xff]
      %v6348 = vld [vmem:[%s8 + $0x1158] sm:$0xff]
      %v6349 = vld [vmem:[%s8 + $0x1160] sm:$0xff]
      %v6350 = vld [vmem:[%s8 + $0x1168] sm:$0xff]
      %v6351 = vld [vmem:[%s8 + $0x1170] sm:$0xff]
      %v6352 = vld [vmem:[%s8 + $0x1178] sm:$0xff]
      %v6353 = vld [vmem:[%s8 + $0x1180] sm:$0xff]
      %v6354 = vld [vmem:[%s8 + $0x1188] sm:$0xff]
      %v6355 = vld [vmem:[%s8 + $0x1190] sm:$0xff]
      %v6356 = vld [vmem:[%s8 + $0x1198] sm:$0xff]
      %v6357 = vld [vmem:[%s8 + $0x11a0] sm:$0xff]
      %v6358 = vld [vmem:[%s8 + $0x11a8] sm:$0xff]
      %v6359 = vld [vmem:[%s8 + $0x11b0] sm:$0xff]
      %v6360 = vld [vmem:[%s8 + $0x11b8] sm:$0xff]
      %v6361 = vld [vmem:[%s8 + $0x11c0] sm:$0xff]
      %v6362 = vld [vmem:[%s8 + $0x11c8] sm:$0xff]
      %v6363 = vld [vmem:[%s8 + $0x11d0] sm:$0xff]
      %v6364 = vld [vmem:[%s8 + $0x11d8] sm:$0xff]
      %v6365 = vld [vmem:[%s8 + $0x11e0] sm:$0xff]
      %v6366 = vld [vmem:[%s8 + $0x11e8] sm:$0xff]
      %v6367 = vld [vmem:[%s8 + $0x11f0] sm:$0xff]
      %v6368 = vld [vmem:[%s8 + $0x11f8] sm:$0xff]
      %v6369 = vld [vmem:[%s8 + $0x1200] sm:$0xff]
      %v6370 = vld [vmem:[%s8 + $0x1208] sm:$0xff]
      %v6371 = vld [vmem:[%s8 + $0x1210] sm:$0xff]
      %v6372 = vld [vmem:[%s8 + $0x1218] sm:$0xff]
      %v6373 = vld [vmem:[%s8 + $0x1220] sm:$0xff]
      %v6374 = vld [vmem:[%s8 + $0x1228] sm:$0xff]
      %v6375 = vld [vmem:[%s8 + $0x1230] sm:$0xff]
      %v6376 = vld [vmem:[%s8 + $0x1238] sm:$0xff]
      %v6377 = vld [vmem:[%s8 + $0x1240] sm:$0xff]
      %v6378 = vld [vmem:[%s8 + $0x1248] sm:$0xff]
      %v6379 = vld [vmem:[%s8 + $0x1250] sm:$0xff]
      %v6380 = vld [vmem:[%s8 + $0x1258] sm:$0xff]
      %v6381 = vld [vmem:[%s8 + $0x1260] sm:$0xff]
      %v6382 = vld [vmem:[%s8 + $0x1268] sm:$0xff]
      %v6383 = vld [vmem:[%s8 + $0x1270] sm:$0xff]
      %v6384 = vld [vmem:[%s8 + $0x1278] sm:$0xff]
      %v6385 = vld [vmem:[%s8 + $0x1280] sm:$0xff]
      %v6386 = vld [vmem:[%s8 + $0x1288] sm:$0xff]
      %v6387 = vld [vmem:[%s8 + $0x1290] sm:$0xff]
      %v6388 = vld [vmem:[%s8 + $0x1298] sm:$0xff]
      %v6389 = vld [vmem:[%s8 + $0x12a0] sm:$0xff]
      %v6390 = vld [vmem:[%s8 + $0x12a8] sm:$0xff]
      %v6391 = vld [vmem:[%s8 + $0x12b0] sm:$0xff]
      %v6392 = vld [vmem:[%s8 + $0x12b8] sm:$0xff]
      %v6393 = vld [vmem:[%s8 + $0x12c0] sm:$0xff]
      %v6394 = vld [vmem:[%s8 + $0x12c8] sm:$0xff]
      %v6395 = vld [vmem:[%s8 + $0x12d0] sm:$0xff]
      %v6396 = vld [vmem:[%s8 + $0x12d8] sm:$0xff]
      %v6397 = vld [vmem:[%s8 + $0x12e0] sm:$0xff]
      %v6398 = vld [vmem:[%s8 + $0x12e8] sm:$0xff]
      %v6399 = vld [vmem:[%s8 + $0x12f0] sm:$0xff]
      %v6400 = vld [vmem:[%s8 + $0x12f8] sm:$0xff]
      %v6401 = vld [vmem:[%s8 + $0x1300] sm:$0xff]
      %v6402 = vld [vmem:[%s8 + $0x1308] sm:$0xff]
      %v6403 = vld [vmem:[%s8 + $0x1310] sm:$0xff]
      %v6404 = vld [vmem:[%s8 + $0x1318] sm:$0xff]
      %v6405 = vld [vmem:[%s8 + $0x1320] sm:$0xff]
      %v6406 = vld [vmem:[%s8 + $0x1328] sm:$0xff]
      %v6407 = vld [vmem:[%s8 + $0x1330] sm:$0xff]
      %v6408 = vld [vmem:[%s8 + $0x1338] sm:$0xff]
      %v6409 = vld [vmem:[%s8 + $0x1340] sm:$0xff]
      %v6410 = vld [vmem:[%s8 + $0x1348] sm:$0xff]
      %v6411 = vld [vmem:[%s8 + $0x1350] sm:$0xff]
      %v6412 = vld [vmem:[%s8 + $0x1358] sm:$0xff]
      %v6413 = vld [vmem:[%s8 + $0x1360] sm:$0xff]
      %v6414 = vld [vmem:[%s8 + $0x1368] sm:$0xff]
      %v6415 = vld [vmem:[%s8 + $0x1370] sm:$0xff]
      %v6416 = vld [vmem:[%s8 + $0x1378] sm:$0xff]
      %v6417 = vld [vmem:[%s8 + $0x1380] sm:$0xff]
      %v6418 = vld [vmem:[%s8 + $0x1388] sm:$0xff]
      %v6419 = vld [vmem:[%s8 + $0x1390] sm:$0xff]
      %v6420 = vld [vmem:[%s8 + $0x1398] sm:$0xff]
      %v6421 = vld [vmem:[%s8 + $0x13a0] sm:$0xff]
      %v6422 = vld [vmem:[%s8 + $0x13a8] sm:$0xff]
      %v6423 = vld [vmem:[%s8 + $0x13b0] sm:$0xff]
      %v6424 = vld [vmem:[%s8 + $0x13b8] sm:$0xff]
      %v6425 = vld [vmem:[%s8 + $0x13c0] sm:$0xff]
      %v6426 = vld [vmem:[%s8 + $0x13c8] sm:$0xff]
      %v6427 = vld [vmem:[%s8 + $0x13d0] sm:$0xff]
      %v6428 = vld [vmem:[%s8 + $0x13d8] sm:$0xff]
      %v6429 = vld [vmem:[%s8 + $0x13e0] sm:$0xff]
      %v6430 = vld [vmem:[%s8 + $0x13e8] sm:$0xff]
      %v6431 = vld [vmem:[%s8 + $0x13f0] sm:$0xff]
      %v6432 = vld [vmem:[%s8 + $0x13f8] sm:$0xff]
      %v6433 = vld [vmem:[%s8 + $0x1400] sm:$0xff]
      %v6434 = vld [vmem:[%s8 + $0x1408] sm:$0xff]
      %v6435 = vld [vmem:[%s8 + $0x1410] sm:$0xff]
      %v6436 = vld [vmem:[%s8 + $0x1418] sm:$0xff]
      %v6437 = vld [vmem:[%s8 + $0x1420] sm:$0xff]
      %v6438 = vld [vmem:[%s8 + $0x1428] sm:$0xff]
      %v6439 = vld [vmem:[%s8 + $0x1430] sm:$0xff]
      %v6440 = vld [vmem:[%s8 + $0x1438] sm:$0xff]
      %v6441 = vld [vmem:[%s8 + $0x1440] sm:$0xff]
      %v6442 = vld [vmem:[%s8 + $0x1448] sm:$0xff]
      %v6443 = vld [vmem:[%s8 + $0x1450] sm:$0xff]
      %v6444 = vld [vmem:[%s8 + $0x1458] sm:$0xff]
      %v6445 = vld [vmem:[%s8 + $0x1460] sm:$0xff]
      %v6446 = vld [vmem:[%s8 + $0x1468] sm:$0xff]
      %v6447 = vld [vmem:[%s8 + $0x1470] sm:$0xff]
      %v6448 = vld [vmem:[%s8 + $0x1478] sm:$0xff]
      %v6449 = vld [vmem:[%s8 + $0x1480] sm:$0xff]
      %v6450 = vld [vmem:[%s8 + $0x1488] sm:$0xff]
      %v6451 = vld [vmem:[%s8 + $0x1490] sm:$0xff]
      %v6452 = vld [vmem:[%s8 + $0x1498] sm:$0xff]
      %v6453 = vld [vmem:[%s8 + $0x14a0] sm:$0xff]
      %v6454 = vld [vmem:[%s8 + $0x14a8] sm:$0xff]
      %v6455 = vld [vmem:[%s8 + $0x14b0] sm:$0xff]
      %v6456 = vld [vmem:[%s8 + $0x14b8] sm:$0xff]
      %v6457 = vld [vmem:[%s8 + $0x14c0] sm:$0xff]
      %v6458 = vld [vmem:[%s8 + $0x14c8] sm:$0xff]
      %v6459 = vld [vmem:[%s8 + $0x14d0] sm:$0xff]
      %v6460 = vld [vmem:[%s8 + $0x14d8] sm:$0xff]
      %v6461 = vld [vmem:[%s8 + $0x14e0] sm:$0xff]
      %v6462 = vld [vmem:[%s8 + $0x14e8] sm:$0xff]
      %v6463 = vld [vmem:[%s8 + $0x14f0] sm:$0xff]
      %v6464 = vld [vmem:[%s8 + $0x14f8] sm:$0xff]
      %v6465 = vld [vmem:[%s8 + $0x1500] sm:$0xff]
      %v6466 = vld [vmem:[%s8 + $0x1508] sm:$0xff]
      %v6467 = vld [vmem:[%s8 + $0x1510] sm:$0xff]
      %v6468 = vld [vmem:[%s8 + $0x1518] sm:$0xff]
      %v6469 = vld [vmem:[%s8 + $0x1520] sm:$0xff]
      %v6470 = vld [vmem:[%s8 + $0x1528] sm:$0xff]
      %v6471 = vld [vmem:[%s8 + $0x1530] sm:$0xff]
      %v6472 = vld [vmem:[%s8 + $0x1538] sm:$0xff]
      %v6473 = vld [vmem:[%s8 + $0x1540] sm:$0xff]
      %v6474 = vld [vmem:[%s8 + $0x1548] sm:$0xff]
      %v6475 = vld [vmem:[%s8 + $0x1550] sm:$0xff]
      %v6476 = vld [vmem:[%s8 + $0x1558] sm:$0xff]
      %v6477 = vld [vmem:[%s8 + $0x1560] sm:$0xff]
      %v6478 = vld [vmem:[%s8 + $0x1568] sm:$0xff]
      %v6479 = vld [vmem:[%s8 + $0x1570] sm:$0xff]
      %v6480 = vld [vmem:[%s8 + $0x1578] sm:$0xff]
      %v6481 = vld [vmem:[%s8 + $0x1580] sm:$0xff]
      %v6482 = vld [vmem:[%s8 + $0x1588] sm:$0xff]
      %v6483 = vld [vmem:[%s8 + $0x1590] sm:$0xff]
      %v6484 = vld [vmem:[%s8 + $0x1598] sm:$0xff]
      %v6485 = vld [vmem:[%s8 + $0x15a0] sm:$0xff]
      %v6486 = vld [vmem:[%s8 + $0x15a8] sm:$0xff]
      %v6487 = vld [vmem:[%s8 + $0x15b0] sm:$0xff]
      %v6488 = vld [vmem:[%s8 + $0x15b8] sm:$0xff]
      %v6489 = vld [vmem:[%s8 + $0x15c0] sm:$0xff]
      %v6490 = vld [vmem:[%s8 + $0x15c8] sm:$0xff]
      %v6491 = vld [vmem:[%s8 + $0x15d0] sm:$0xff]
      %v6492 = vld [vmem:[%s8 + $0x15d8] sm:$0xff]
      %v6493 = vld [vmem:[%s8 + $0x15e0] sm:$0xff]
      %v6494 = vld [vmem:[%s8 + $0x15e8] sm:$0xff]
      %v6495 = vld [vmem:[%s8 + $0x15f0] sm:$0xff]
      %v6496 = vld [vmem:[%s8 + $0x15f8] sm:$0xff]
      %v6497 = vld [vmem:[%s8 + $0x1600] sm:$0xff]
      %v6498 = vld [vmem:[%s8 + $0x1608] sm:$0xff]
      %v6499 = vld [vmem:[%s8 + $0x1610] sm:$0xff]
      %v6500 = vld [vmem:[%s8 + $0x1618] sm:$0xff]
      %v6501 = vld [vmem:[%s8 + $0x1620] sm:$0xff]
      %v6502 = vld [vmem:[%s8 + $0x1628] sm:$0xff]
      %v6503 = vld [vmem:[%s8 + $0x1630] sm:$0xff]
      %v6504 = vld [vmem:[%s8 + $0x1638] sm:$0xff]
      %v6505 = vld [vmem:[%s8 + $0x1640] sm:$0xff]
      %v6506 = vld [vmem:[%s8 + $0x1648] sm:$0xff]
      %v6507 = vld [vmem:[%s8 + $0x1650] sm:$0xff]
      %v6508 = vld [vmem:[%s8 + $0x1658] sm:$0xff]
      %v6509 = vld [vmem:[%s8 + $0x1660] sm:$0xff]
      %v6510 = vld [vmem:[%s8 + $0x1668] sm:$0xff]
      %v6511 = vld [vmem:[%s8 + $0x1670] sm:$0xff]
      %v6512 = vld [vmem:[%s8 + $0x1678] sm:$0xff]
      %v6513 = vld [vmem:[%s8 + $0x1680] sm:$0xff]
      %v6514 = vld [vmem:[%s8 + $0x1688] sm:$0xff]
      %v6515 = vld [vmem:[%s8 + $0x1690] sm:$0xff]
      %v6516 = vld [vmem:[%s8 + $0x1698] sm:$0xff]
      %v6517 = vld [vmem:[%s8 + $0x16a0] sm:$0xff]
      %v6518 = vld [vmem:[%s8 + $0x16a8] sm:$0xff]
      %v6519 = vld [vmem:[%s8 + $0x16b0] sm:$0xff]
      %v6520 = vld [vmem:[%s8 + $0x16b8] sm:$0xff]
      %v6521 = vld [vmem:[%s8 + $0x16c0] sm:$0xff]
      %v6522 = vld [vmem:[%s8 + $0x16c8] sm:$0xff]
      %v6523 = vld [vmem:[%s8 + $0x16d0] sm:$0xff]
      %v6524 = vld [vmem:[%s8 + $0x16d8] sm:$0xff]
      %v6525 = vld [vmem:[%s8 + $0x16e0] sm:$0xff]
      %v6526 = vld [vmem:[%s8 + $0x16e8] sm:$0xff]
      %v6527 = vld [vmem:[%s8 + $0x16f0] sm:$0xff]
      %v6528 = vld [vmem:[%s8 + $0x16f8] sm:$0xff]
      %v6529 = vld [vmem:[%s8 + $0x1700] sm:$0xff]
      %v6530 = vld [vmem:[%s8 + $0x1708] sm:$0xff]
      %v6531 = vld [vmem:[%s8 + $0x1710] sm:$0xff]
      %v6532 = vld [vmem:[%s8 + $0x1718] sm:$0xff]
      %v6533 = vld [vmem:[%s8 + $0x1720] sm:$0xff]
      %v6534 = vld [vmem:[%s8 + $0x1728] sm:$0xff]
      %v6535 = vld [vmem:[%s8 + $0x1730] sm:$0xff]
      %v6536 = vld [vmem:[%s8 + $0x1738] sm:$0xff]
      %v6537 = vld [vmem:[%s8 + $0x1740] sm:$0xff]
      %v6538 = vld [vmem:[%s8 + $0x1748] sm:$0xff]
      %v6539 = vld [vmem:[%s8 + $0x1750] sm:$0xff]
      %v6540 = vld [vmem:[%s8 + $0x1758] sm:$0xff]
      %v6541 = vld [vmem:[%s8 + $0x1760] sm:$0xff]
      %v6542 = vld [vmem:[%s8 + $0x1768] sm:$0xff]
      %v6543 = vld [vmem:[%s8 + $0x1770] sm:$0xff]
      %v6544 = vld [vmem:[%s8 + $0x1778] sm:$0xff]
      %v6545 = vld [vmem:[%s8 + $0x1780] sm:$0xff]
      %v6546 = vld [vmem:[%s8 + $0x1788] sm:$0xff]
      %v6547 = vld [vmem:[%s8 + $0x1790] sm:$0xff]
      %v6548 = vld [vmem:[%s8 + $0x1798] sm:$0xff]
      %v6549 = vld [vmem:[%s8 + $0x17a0] sm:$0xff]
      %v6550 = vld [vmem:[%s8 + $0x17a8] sm:$0xff]
      %v6551 = vld [vmem:[%s8 + $0x17b0] sm:$0xff]
      %v6552 = vld [vmem:[%s8 + $0x17b8] sm:$0xff]
      %v6553 = vld [vmem:[%s8 + $0x17c0] sm:$0xff]
      %v6554 = vld [vmem:[%s8 + $0x17c8] sm:$0xff]
      %v6555 = vld [vmem:[%s8 + $0x17d0] sm:$0xff]
      %v6556 = vld [vmem:[%s8 + $0x17d8] sm:$0xff]
      %v6557 = vld [vmem:[%s8 + $0x17e0] sm:$0xff]
      %v6558 = vld [vmem:[%s8 + $0x17e8] sm:$0xff]
      %v6559 = vld [vmem:[%s8 + $0x17f0] sm:$0xff]
      %v6560 = vld [vmem:[%s8 + $0x17f8] sm:$0xff]
      %v6561 = vld [vmem:[%s8 + $0x1800] sm:$0xff]
      %v6562 = vld [vmem:[%s8 + $0x1808] sm:$0xff]
      %v6563 = vld [vmem:[%s8 + $0x1810] sm:$0xff]
      %v6564 = vld [vmem:[%s8 + $0x1818] sm:$0xff]
      %v6565 = vld [vmem:[%s8 + $0x1820] sm:$0xff]
      %v6566 = vld [vmem:[%s8 + $0x1828] sm:$0xff]
      %v6567 = vld [vmem:[%s8 + $0x1830] sm:$0xff]
      %v6568 = vld [vmem:[%s8 + $0x1838] sm:$0xff]
      %v6569 = vld [vmem:[%s8 + $0x1840] sm:$0xff]
      %v6570 = vld [vmem:[%s8 + $0x1848] sm:$0xff]
      %v6571 = vld [vmem:[%s8 + $0x1850] sm:$0xff]
      %v6572 = vld [vmem:[%s8 + $0x1858] sm:$0xff]
      %v6573 = vld [vmem:[%s8 + $0x1860] sm:$0xff]
      %v6574 = vld [vmem:[%s8 + $0x1868] sm:$0xff]
      %v6575 = vld [vmem:[%s8 + $0x1870] sm:$0xff]
      %v6576 = vld [vmem:[%s8 + $0x1878] sm:$0xff]
      %v6577 = vld [vmem:[%s8 + $0x1880] sm:$0xff]
      %v6578 = vld [vmem:[%s8 + $0x1888] sm:$0xff]
      %v6579 = vld [vmem:[%s8 + $0x1890] sm:$0xff]
      %v6580 = vld [vmem:[%s8 + $0x1898] sm:$0xff]
      %v6581 = vld [vmem:[%s8 + $0x18a0] sm:$0xff]
      %v6582 = vld [vmem:[%s8 + $0x18a8] sm:$0xff]
      %v6583 = vld [vmem:[%s8 + $0x18b0] sm:$0xff]
      %v6584 = vld [vmem:[%s8 + $0x18b8] sm:$0xff]
      %v6585 = vld [vmem:[%s8 + $0x18c0] sm:$0xff]
      %v6586 = vld [vmem:[%s8 + $0x18c8] sm:$0xff]
      %v6587 = vld [vmem:[%s8 + $0x18d0] sm:$0xff]
      %v6588 = vld [vmem:[%s8 + $0x18d8] sm:$0xff]
      %v6589 = vld [vmem:[%s8 + $0x18e0] sm:$0xff]
      %v6590 = vld [vmem:[%s8 + $0x18e8] sm:$0xff]
      %v6591 = vld [vmem:[%s8 + $0x18f0] sm:$0xff]
      %v6592 = vld [vmem:[%s8 + $0x18f8] sm:$0xff]
      %v6593 = vld [vmem:[%s8 + $0x1900] sm:$0xff]
      %v6594 = vld [vmem:[%s8 + $0x1908] sm:$0xff]
      %v6595 = vld [vmem:[%s8 + $0x1910] sm:$0xff]
      %v6596 = vld [vmem:[%s8 + $0x1918] sm:$0xff]
      %v6597 = vld [vmem:[%s8 + $0x1920] sm:$0xff]
      %v6598 = vld [vmem:[%s8 + $0x1928] sm:$0xff]
      %v6599 = vld [vmem:[%s8 + $0x1930] sm:$0xff]
      %v6600 = vld [vmem:[%s8 + $0x1938] sm:$0xff]
      %v6601 = vld [vmem:[%s8 + $0x1940] sm:$0xff]
      %v6602 = vld [vmem:[%s8 + $0x1948] sm:$0xff]
      %v6603 = vld [vmem:[%s8 + $0x1950] sm:$0xff]
      %v6604 = vld [vmem:[%s8 + $0x1958] sm:$0xff]
      %v6605 = vld [vmem:[%s8 + $0x1960] sm:$0xff]
      %v6606 = vld [vmem:[%s8 + $0x1968] sm:$0xff]
      %v6607 = vld [vmem:[%s8 + $0x1970] sm:$0xff]
      %v6608 = vld [vmem:[%s8 + $0x1978] sm:$0xff]
      %v6609 = vld [vmem:[%s8 + $0x1980] sm:$0xff]
      %v6610 = vld [vmem:[%s8 + $0x1988] sm:$0xff]
      %v6611 = vld [vmem:[%s8 + $0x1990] sm:$0xff]
      %v6612 = vld [vmem:[%s8 + $0x1998] sm:$0xff]
      %v6613 = vld [vmem:[%s8 + $0x19a0] sm:$0xff]
      %v6614 = vld [vmem:[%s8 + $0x19a8] sm:$0xff]
      %v6615 = vld [vmem:[%s8 + $0x19b0] sm:$0xff]
      %v6616 = vld [vmem:[%s8 + $0x19b8] sm:$0xff]
      %v6617 = vld [vmem:[%s8 + $0x19c0] sm:$0xff]
      %v6618 = vld [vmem:[%s8 + $0x19c8] sm:$0xff]
      %v6619 = vld [vmem:[%s8 + $0x19d0] sm:$0xff]
      %v6620 = vld [vmem:[%s8 + $0x19d8] sm:$0xff]
      %v6621 = vld [vmem:[%s8 + $0x19e0] sm:$0xff]
      %v6622 = vld [vmem:[%s8 + $0x19e8] sm:$0xff]
      %v6623 = vld [vmem:[%s8 + $0x19f0] sm:$0xff]
      %v6624 = vld [vmem:[%s8 + $0x19f8] sm:$0xff]
      %v6625 = vld [vmem:[%s8 + $0x1a00] sm:$0xff]
      %v6626 = vld [vmem:[%s8 + $0x1a08] sm:$0xff]
      %v6627 = vld [vmem:[%s8 + $0x1a10] sm:$0xff]
      %v6628 = vld [vmem:[%s8 + $0x1a18] sm:$0xff]
      %v6629 = vld [vmem:[%s8 + $0x1a20] sm:$0xff]
      %v6630 = vld [vmem:[%s8 + $0x1a28] sm:$0xff]
      %v6631 = vld [vmem:[%s8 + $0x1a30] sm:$0xff]
      %v6632 = vld [vmem:[%s8 + $0x1a38] sm:$0xff]
      %v6633 = vld [vmem:[%s8 + $0x1a40] sm:$0xff]
      %v6634 = vld [vmem:[%s8 + $0x1a48] sm:$0xff]
      %v6635 = vld [vmem:[%s8 + $0x1a50] sm:$0xff]
      %v6636 = vld [vmem:[%s8 + $0x1a58] sm:$0xff]
      %v6637 = vld [vmem:[%s8 + $0x1a60] sm:$0xff]
      %v6638 = vld [vmem:[%s8 + $0x1a68] sm:$0xff]
      %v6639 = vld [vmem:[%s8 + $0x1a70] sm:$0xff]
      %v6640 = vld [vmem:[%s8 + $0x1a78] sm:$0xff]
      %v6641 = vld [vmem:[%s8 + $0x1a80] sm:$0xff]
      %v6642 = vld [vmem:[%s8 + $0x1a88] sm:$0xff]
      %v6643 = vld [vmem:[%s8 + $0x1a90] sm:$0xff]
      %v6644 = vld [vmem:[%s8 + $0x1a98] sm:$0xff]
      %v6645 = vld [vmem:[%s8 + $0x1aa0] sm:$0xff]
      %v6646 = vld [vmem:[%s8 + $0x1aa8] sm:$0xff]
      %v6647 = vld [vmem:[%s8 + $0x1ab0] sm:$0xff]
      %v6648 = vld [vmem:[%s8 + $0x1ab8] sm:$0xff]
      %v6649 = vld [vmem:[%s8 + $0x1ac0] sm:$0xff]
      %v6650 = vld [vmem:[%s8 + $0x1ac8] sm:$0xff]
      %v6651 = vld [vmem:[%s8 + $0x1ad0] sm:$0xff]
      %v6652 = vld [vmem:[%s8 + $0x1ad8] sm:$0xff]
      %v6653 = vld [vmem:[%s8 + $0x1ae0] sm:$0xff]
      %v6654 = vld [vmem:[%s8 + $0x1ae8] sm:$0xff]
      %v6655 = vld [vmem:[%s8 + $0x1af0] sm:$0xff]
      %v6656 = vld [vmem:[%s8 + $0x1af8] sm:$0xff]
      %v6657 = vld [vmem:[%s8 + $0x1b00] sm:$0xff]
      %v6658 = vld [vmem:[%s8 + $0x1b08] sm:$0xff]
      %v6659 = vld [vmem:[%s8 + $0x1b10] sm:$0xff]
      %v6660 = vld [vmem:[%s8 + $0x1b18] sm:$0xff]
      %v6661 = vld [vmem:[%s8 + $0x1b20] sm:$0xff]
      %v6662 = vld [vmem:[%s8 + $0x1b28] sm:$0xff]
      %v6663 = vld [vmem:[%s8 + $0x1b30] sm:$0xff]
      %v6664 = vld [vmem:[%s8 + $0x1b38] sm:$0xff]
      %v6665 = vld [vmem:[%s8 + $0x1b40] sm:$0xff]
      %v6666 = vld [vmem:[%s8 + $0x1b48] sm:$0xff]
      %v6667 = vld [vmem:[%s8 + $0x1b50] sm:$0xff]
      %v6668 = vld [vmem:[%s8 + $0x1b58] sm:$0xff]
      %v6669 = vld [vmem:[%s8 + $0x1b60] sm:$0xff]
      %v6670 = vld [vmem:[%s8 + $0x1b68] sm:$0xff]
      %v6671 = vld [vmem:[%s8 + $0x1b70] sm:$0xff]
      %v6672 = vld [vmem:[%s8 + $0x1b78] sm:$0xff]
      %v6673 = vld [vmem:[%s8 + $0x1b80] sm:$0xff]
      %v6674 = vld [vmem:[%s8 + $0x1b88] sm:$0xff]
      %v6675 = vld [vmem:[%s8 + $0x1b90] sm:$0xff]
      %v6676 = vld [vmem:[%s8 + $0x1b98] sm:$0xff]
      %v6677 = vld [vmem:[%s8 + $0x1ba0] sm:$0xff]
      %v6678 = vld [vmem:[%s8 + $0x1ba8] sm:$0xff]
      %v6679 = vld [vmem:[%s8 + $0x1bb0] sm:$0xff]
      %v6680 = vld [vmem:[%s8 + $0x1bb8] sm:$0xff]
      %v6681 = vld [vmem:[%s8 + $0x1bc0] sm:$0xff]
      %v6682 = vld [vmem:[%s8 + $0x1bc8] sm:$0xff]
      %v6683 = vld [vmem:[%s8 + $0x1bd0] sm:$0xff]
      %v6684 = vld [vmem:[%s8 + $0x1bd8] sm:$0xff]
      %v6685 = vld [vmem:[%s8 + $0x1be0] sm:$0xff]
      %v6686 = vld [vmem:[%s8 + $0x1be8] sm:$0xff]
      %v6687 = vld [vmem:[%s8 + $0x1bf0] sm:$0xff]
      %v6688 = vld [vmem:[%s8 + $0x1bf8] sm:$0xff]
      %v6689 = vld [vmem:[%s8 + $0x1c00] sm:$0xff]
      %v6690 = vld [vmem:[%s8 + $0x1c08] sm:$0xff]
      %v6691 = vld [vmem:[%s8 + $0x1c10] sm:$0xff]
      %v6692 = vld [vmem:[%s8 + $0x1c18] sm:$0xff]
      %v6693 = vld [vmem:[%s8 + $0x1c20] sm:$0xff]
      %v6694 = vld [vmem:[%s8 + $0x1c28] sm:$0xff]
      %v6695 = vld [vmem:[%s8 + $0x1c30] sm:$0xff]
      %v6696 = vld [vmem:[%s8 + $0x1c38] sm:$0xff]
      %v6697 = vld [vmem:[%s8 + $0x1c40] sm:$0xff]
      %v6698 = vld [vmem:[%s8 + $0x1c48] sm:$0xff]
      %v6699 = vld [vmem:[%s8 + $0x1c50] sm:$0xff]
      %v6700 = vld [vmem:[%s8 + $0x1c58] sm:$0xff]
      %v6701 = vld [vmem:[%s8 + $0x1c60] sm:$0xff]
      %v6702 = vld [vmem:[%s8 + $0x1c68] sm:$0xff]
      %v6703 = vld [vmem:[%s8 + $0x1c70] sm:$0xff]
      %v6704 = vld [vmem:[%s8 + $0x1c78] sm:$0xff]
      %v6705 = vld [vmem:[%s8 + $0x1c80] sm:$0xff]
      %v6706 = vld [vmem:[%s8 + $0x1c88] sm:$0xff]
      %v6707 = vld [vmem:[%s8 + $0x1c90] sm:$0xff]
      %v6708 = vld [vmem:[%s8 + $0x1c98] sm:$0xff]
      %v6709 = vld [vmem:[%s8 + $0x1ca0] sm:$0xff]
      %v6710 = vld [vmem:[%s8 + $0x1ca8] sm:$0xff]
      %v6711 = vld [vmem:[%s8 + $0x1cb0] sm:$0xff]
      %v6712 = vld [vmem:[%s8 + $0x1cb8] sm:$0xff]
      %v6713 = vld [vmem:[%s8 + $0x1cc0] sm:$0xff]
      %v6714 = vld [vmem:[%s8 + $0x1cc8] sm:$0xff]
      %v6715 = vld [vmem:[%s8 + $0x1cd0] sm:$0xff]
      %v6716 = vld [vmem:[%s8 + $0x1cd8] sm:$0xff]
      %v6717 = vld [vmem:[%s8 + $0x1ce0] sm:$0xff]
      %v6718 = vld [vmem:[%s8 + $0x1ce8] sm:$0xff]
      %v6719 = vld [vmem:[%s8 + $0x1cf0] sm:$0xff]
      %v6720 = vld [vmem:[%s8 + $0x1cf8] sm:$0xff]
      %v6721 = vld [vmem:[%s8 + $0x1d00] sm:$0xff]
      %v6722 = vld [vmem:[%s8 + $0x1d08] sm:$0xff]
      %v6723 = vld [vmem:[%s8 + $0x1d10] sm:$0xff]
      %v6724 = vld [vmem:[%s8 + $0x1d18] sm:$0xff]
      %v6725 = vld [vmem:[%s8 + $0x1d20] sm:$0xff]
      %v6726 = vld [vmem:[%s8 + $0x1d28] sm:$0xff]
      %v6727 = vld [vmem:[%s8 + $0x1d30] sm:$0xff]
      %v6728 = vld [vmem:[%s8 + $0x1d38] sm:$0xff]
      %v6729 = vld [vmem:[%s8 + $0x1d40] sm:$0xff]
      %v6730 = vld [vmem:[%s8 + $0x1d48] sm:$0xff]
      %v6731 = vld [vmem:[%s8 + $0x1d50] sm:$0xff]
      %v6732 = vld [vmem:[%s8 + $0x1d58] sm:$0xff]
      %v6733 = vld [vmem:[%s8 + $0x1d60] sm:$0xff]
      %v6734 = vld [vmem:[%s8 + $0x1d68] sm:$0xff]
      %v6735 = vld [vmem:[%s8 + $0x1d70] sm:$0xff]
      %v6736 = vld [vmem:[%s8 + $0x1d78] sm:$0xff]
      %v6737 = vld [vmem:[%s8 + $0x1d80] sm:$0xff]
      %v6738 = vld [vmem:[%s8 + $0x1d88] sm:$0xff]
      %v6739 = vld [vmem:[%s8 + $0x1d90] sm:$0xff]
      %v6740 = vld [vmem:[%s8 + $0x1d98] sm:$0xff]
      %v6741 = vld [vmem:[%s8 + $0x1da0] sm:$0xff]
      %v6742 = vld [vmem:[%s8 + $0x1da8] sm:$0xff]
      %v6743 = vld [vmem:[%s8 + $0x1db0] sm:$0xff]
      %v6744 = vld [vmem:[%s8 + $0x1db8] sm:$0xff]
      %v6745 = vld [vmem:[%s8 + $0x1dc0] sm:$0xff]
      %v6746 = vld [vmem:[%s8 + $0x1dc8] sm:$0xff]
      %v6747 = vld [vmem:[%s8 + $0x1dd0] sm:$0xff]
      %v6748 = vld [vmem:[%s8 + $0x1dd8] sm:$0xff]
      %v6749 = vld [vmem:[%s8 + $0x1de0] sm:$0xff]
      %v6750 = vld [vmem:[%s8 + $0x1de8] sm:$0xff]
      %v6751 = vld [vmem:[%s8 + $0x1df0] sm:$0xff]
      %v6752 = vld [vmem:[%s8 + $0x1df8] sm:$0xff]
      %v6753 = vld [vmem:[%s8 + $0x1e00] sm:$0xff]
      %v6754 = vld [vmem:[%s8 + $0x1e08] sm:$0xff]
      %v6755 = vld [vmem:[%s8 + $0x1e10] sm:$0xff]
      %v6756 = vld [vmem:[%s8 + $0x1e18] sm:$0xff]
      %v6757 = vld [vmem:[%s8 + $0x1e20] sm:$0xff]
      %v6758 = vld [vmem:[%s8 + $0x1e28] sm:$0xff]
      %v6759 = vld [vmem:[%s8 + $0x1e30] sm:$0xff]
      %v6760 = vld [vmem:[%s8 + $0x1e38] sm:$0xff]
      %v6761 = vld [vmem:[%s8 + $0x1e40] sm:$0xff]
      %v6762 = vld [vmem:[%s8 + $0x1e48] sm:$0xff]
      %v6763 = vld [vmem:[%s8 + $0x1e50] sm:$0xff]
      %v6764 = vld [vmem:[%s8 + $0x1e58] sm:$0xff]
      %v6765 = vld [vmem:[%s8 + $0x1e60] sm:$0xff]
      %v6766 = vld [vmem:[%s8 + $0x1e68] sm:$0xff]
      %v6767 = vld [vmem:[%s8 + $0x1e70] sm:$0xff]
      %v6768 = vld [vmem:[%s8 + $0x1e78] sm:$0xff]
      %v6769 = vld [vmem:[%s8 + $0x1e80] sm:$0xff]
      %v6770 = vld [vmem:[%s8 + $0x1e88] sm:$0xff]
      %v6771 = vld [vmem:[%s8 + $0x1e90] sm:$0xff]
      %v6772 = vld [vmem:[%s8 + $0x1e98] sm:$0xff]
      %v6773 = vld [vmem:[%s8 + $0x1ea0] sm:$0xff]
      %v6774 = vld [vmem:[%s8 + $0x1ea8] sm:$0xff]
      %v6775 = vld [vmem:[%s8 + $0x1eb0] sm:$0xff]
      %v6776 = vld [vmem:[%s8 + $0x1eb8] sm:$0xff]
      %v6777 = vld [vmem:[%s8 + $0x1ec0] sm:$0xff]
      %v6778 = vld [vmem:[%s8 + $0x1ec8] sm:$0xff]
      %v6779 = vld [vmem:[%s8 + $0x1ed0] sm:$0xff]
      %v6780 = vld [vmem:[%s8 + $0x1ed8] sm:$0xff]
      %v6781 = vld [vmem:[%s8 + $0x1ee0] sm:$0xff]
      %v6782 = vld [vmem:[%s8 + $0x1ee8] sm:$0xff]
      %v6783 = vld [vmem:[%s8 + $0x1ef0] sm:$0xff]
      %v6784 = vld [vmem:[%s8 + $0x1ef8] sm:$0xff]
      %v6785 = vld [vmem:[%s8 + $0x1f00] sm:$0xff]
      %v6786 = vld [vmem:[%s8 + $0x1f08] sm:$0xff]
      %v6787 = vld [vmem:[%s8 + $0x1f10] sm:$0xff]
      %v6788 = vld [vmem:[%s8 + $0x1f18] sm:$0xff]
      %v6789 = vld [vmem:[%s8 + $0x1f20] sm:$0xff]
      %v6790 = vld [vmem:[%s8 + $0x1f28] sm:$0xff]
      %v6791 = vld [vmem:[%s8 + $0x1f30] sm:$0xff]
      %v6792 = vld [vmem:[%s8 + $0x1f38] sm:$0xff]
      %v6793 = vld [vmem:[%s8 + $0x1f40] sm:$0xff]
      %v6794 = vld [vmem:[%s8 + $0x1f48] sm:$0xff]
      %v6795 = vld [vmem:[%s8 + $0x1f50] sm:$0xff]
      %v6796 = vld [vmem:[%s8 + $0x1f58] sm:$0xff]
      %v6797 = vld [vmem:[%s8 + $0x1f60] sm:$0xff]
      %v6798 = vld [vmem:[%s8 + $0x1f68] sm:$0xff]
      %v6799 = vld [vmem:[%s8 + $0x1f70] sm:$0xff]
      %v6800 = vld [vmem:[%s8 + $0x1f78] sm:$0xff]
      %v6801 = vld [vmem:[%s8 + $0x1f80] sm:$0xff]
      %v6802 = vld [vmem:[%s8 + $0x1f88] sm:$0xff]
      %v6803 = vld [vmem:[%s8 + $0x1f90] sm:$0xff]
      %v6804 = vld [vmem:[%s8 + $0x1f98] sm:$0xff]
      %v6805 = vld [vmem:[%s8 + $0x1fa0] sm:$0xff]
      %v6806 = vld [vmem:[%s8 + $0x1fa8] sm:$0xff]
      %v6807 = vld [vmem:[%s8 + $0x1fb0] sm:$0xff]
      %v6808 = vld [vmem:[%s8 + $0x1fb8] sm:$0xff]
      %v6809 = vld [vmem:[%s8 + $0x1fc0] sm:$0xff]
      %v6810 = vld [vmem:[%s8 + $0x1fc8] sm:$0xff]
      %v6811 = vld [vmem:[%s8 + $0x1fd0] sm:$0xff]
      %v6812 = vld [vmem:[%s8 + $0x1fd8] sm:$0xff]
      %v6813 = vld [vmem:[%s8 + $0x1fe0] sm:$0xff]
      %v6814 = vld [vmem:[%s8 + $0x1fe8] sm:$0xff]
      %v6815 = vld [vmem:[%s8 + $0x1ff0] sm:$0xff]
      %v6816 = vld [vmem:[%s8 + $0x1ff8] sm:$0xff]
      %v7841 = vunpack.c.l.b16 %v5793
      %v7842 = vunpack.c.h.b16 %v5793
      %v7843 = vunpack.c.l.b16 %v5794
      %v7844 = vunpack.c.h.b16 %v5794
      %v7845 = vunpack.c.l.b16 %v5795
      %v7846 = vunpack.c.h.b16 %v5795
      %v7847 = vunpack.c.l.b16 %v5796
      %v7848 = vunpack.c.h.b16 %v5796
      %v7849 = vunpack.c.l.b16 %v5797
      %v7850 = vunpack.c.h.b16 %v5797
      %v7851 = vunpack.c.l.b16 %v5798
      %v7852 = vunpack.c.h.b16 %v5798
      %v7853 = vunpack.c.l.b16 %v5799
      %v7854 = vunpack.c.h.b16 %v5799
      %v7855 = vunpack.c.l.b16 %v5800
      %v7856 = vunpack.c.h.b16 %v5800
      %v7857 = vunpack.c.l.b16 %v5801
      %v7858 = vunpack.c.h.b16 %v5801
      %v7859 = vunpack.c.l.b16 %v5802
      %v7860 = vunpack.c.h.b16 %v5802
      %v7861 = vunpack.c.l.b16 %v5803
      %v7862 = vunpack.c.h.b16 %v5803
      %v7863 = vunpack.c.l.b16 %v5804
      %v7864 = vunpack.c.h.b16 %v5804
      %v7865 = vunpack.c.l.b16 %v5805
      %v7866 = vunpack.c.h.b16 %v5805
      %v7867 = vunpack.c.l.b16 %v5806
      %v7868 = vunpack.c.h.b16 %v5806
      %v7869 = vunpack.c.l.b16 %v5807
      %v7870 = vunpack.c.h.b16 %v5807
      %v7871 = vunpack.c.l.b16 %v5808
      %v7872 = vunpack.c.h.b16 %v5808
      %v7873 = vunpack.c.l.b16 %v5809
      %v7874 = vunpack.c.h.b16 %v5809
      %v7875 = vunpack.c.l.b16 %v5810
      %v7876 = vunpack.c.h.b16 %v5810
      %v7877 = vunpack.c.l.b16 %v5811
      %v7878 = vunpack.c.h.b16 %v5811
      %v7879 = vunpack.c.l.b16 %v5812
      %v7880 = vunpack.c.h.b16 %v5812
      %v7881 = vunpack.c.l.b16 %v5813
      %v7882 = vunpack.c.h.b16 %v5813
      %v7883 = vunpack.c.l.b16 %v5814
      %v7884 = vunpack.c.h.b16 %v5814
      %v7885 = vunpack.c.l.b16 %v5815
      %v7886 = vunpack.c.h.b16 %v5815
      %v7887 = vunpack.c.l.b16 %v5816
      %v7888 = vunpack.c.h.b16 %v5816
      %v7889 = vunpack.c.l.b16 %v5817
      %v7890 = vunpack.c.h.b16 %v5817
      %v7891 = vunpack.c.l.b16 %v5818
      %v7892 = vunpack.c.h.b16 %v5818
      %v7893 = vunpack.c.l.b16 %v5819
      %v7894 = vunpack.c.h.b16 %v5819
      %v7895 = vunpack.c.l.b16 %v5820
      %v7896 = vunpack.c.h.b16 %v5820
      %v7897 = vunpack.c.l.b16 %v5821
      %v7898 = vunpack.c.h.b16 %v5821
      %v7899 = vunpack.c.l.b16 %v5822
      %v7900 = vunpack.c.h.b16 %v5822
      %v7901 = vunpack.c.l.b16 %v5823
      %v7902 = vunpack.c.h.b16 %v5823
      %v7903 = vunpack.c.l.b16 %v5824
      %v7904 = vunpack.c.h.b16 %v5824
      %v7905 = vunpack.c.l.b16 %v5825
      %v7906 = vunpack.c.h.b16 %v5825
      %v7907 = vunpack.c.l.b16 %v5826
      %v7908 = vunpack.c.h.b16 %v5826
      %v7909 = vunpack.c.l.b16 %v5827
      %v7910 = vunpack.c.h.b16 %v5827
      %v7911 = vunpack.c.l.b16 %v5828
      %v7912 = vunpack.c.h.b16 %v5828
      %v7913 = vunpack.c.l.b16 %v5829
      %v7914 = vunpack.c.h.b16 %v5829
      %v7915 = vunpack.c.l.b16 %v5830
      %v7916 = vunpack.c.h.b16 %v5830
      %v7917 = vunpack.c.l.b16 %v5831
      %v7918 = vunpack.c.h.b16 %v5831
      %v7919 = vunpack.c.l.b16 %v5832
      %v7920 = vunpack.c.h.b16 %v5832
      %v7921 = vunpack.c.l.b16 %v5833
      %v7922 = vunpack.c.h.b16 %v5833
      %v7923 = vunpack.c.l.b16 %v5834
      %v7924 = vunpack.c.h.b16 %v5834
      %v7925 = vunpack.c.l.b16 %v5835
      %v7926 = vunpack.c.h.b16 %v5835
      %v7927 = vunpack.c.l.b16 %v5836
      %v7928 = vunpack.c.h.b16 %v5836
      %v7929 = vunpack.c.l.b16 %v5837
      %v7930 = vunpack.c.h.b16 %v5837
      %v7931 = vunpack.c.l.b16 %v5838
      %v7932 = vunpack.c.h.b16 %v5838
      %v7933 = vunpack.c.l.b16 %v5839
      %v7934 = vunpack.c.h.b16 %v5839
      %v7935 = vunpack.c.l.b16 %v5840
      %v7936 = vunpack.c.h.b16 %v5840
      %v7937 = vunpack.c.l.b16 %v5841
      %v7938 = vunpack.c.h.b16 %v5841
      %v7939 = vunpack.c.l.b16 %v5842
      %v7940 = vunpack.c.h.b16 %v5842
      %v7941 = vunpack.c.l.b16 %v5843
      %v7942 = vunpack.c.h.b16 %v5843
      %v7943 = vunpack.c.l.b16 %v5844
      %v7944 = vunpack.c.h.b16 %v5844
      %v7945 = vunpack.c.l.b16 %v5845
      %v7946 = vunpack.c.h.b16 %v5845
      %v7947 = vunpack.c.l.b16 %v5846
      %v7948 = vunpack.c.h.b16 %v5846
      %v7949 = vunpack.c.l.b16 %v5847
      %v7950 = vunpack.c.h.b16 %v5847
      %v7951 = vunpack.c.l.b16 %v5848
      %v7952 = vunpack.c.h.b16 %v5848
      %v7953 = vunpack.c.l.b16 %v5849
      %v7954 = vunpack.c.h.b16 %v5849
      %v7955 = vunpack.c.l.b16 %v5850
      %v7956 = vunpack.c.h.b16 %v5850
      %v7957 = vunpack.c.l.b16 %v5851
      %v7958 = vunpack.c.h.b16 %v5851
      %v7959 = vunpack.c.l.b16 %v5852
      %v7960 = vunpack.c.h.b16 %v5852
      %v7961 = vunpack.c.l.b16 %v5853
      %v7962 = vunpack.c.h.b16 %v5853
      %v7963 = vunpack.c.l.b16 %v5854
      %v7964 = vunpack.c.h.b16 %v5854
      %v7965 = vunpack.c.l.b16 %v5855
      %v7966 = vunpack.c.h.b16 %v5855
      %v7967 = vunpack.c.l.b16 %v5856
      %v7968 = vunpack.c.h.b16 %v5856
      %v7969 = vunpack.c.l.b16 %v5857
      %v7970 = vunpack.c.h.b16 %v5857
      %v7971 = vunpack.c.l.b16 %v5858
      %v7972 = vunpack.c.h.b16 %v5858
      %v7973 = vunpack.c.l.b16 %v5859
      %v7974 = vunpack.c.h.b16 %v5859
      %v7975 = vunpack.c.l.b16 %v5860
      %v7976 = vunpack.c.h.b16 %v5860
      %v7977 = vunpack.c.l.b16 %v5861
      %v7978 = vunpack.c.h.b16 %v5861
      %v7979 = vunpack.c.l.b16 %v5862
      %v7980 = vunpack.c.h.b16 %v5862
      %v7981 = vunpack.c.l.b16 %v5863
      %v7982 = vunpack.c.h.b16 %v5863
      %v7983 = vunpack.c.l.b16 %v5864
      %v7984 = vunpack.c.h.b16 %v5864
      %v7985 = vunpack.c.l.b16 %v5865
      %v7986 = vunpack.c.h.b16 %v5865
      %v7987 = vunpack.c.l.b16 %v5866
      %v7988 = vunpack.c.h.b16 %v5866
      %v7989 = vunpack.c.l.b16 %v5867
      %v7990 = vunpack.c.h.b16 %v5867
      %v7991 = vunpack.c.l.b16 %v5868
      %v7992 = vunpack.c.h.b16 %v5868
      %v7993 = vunpack.c.l.b16 %v5869
      %v7994 = vunpack.c.h.b16 %v5869
      %v7995 = vunpack.c.l.b16 %v5870
      %v7996 = vunpack.c.h.b16 %v5870
      %v7997 = vunpack.c.l.b16 %v5871
      %v7998 = vunpack.c.h.b16 %v5871
      %v7999 = vunpack.c.l.b16 %v5872
      %v8000 = vunpack.c.h.b16 %v5872
      %v8001 = vunpack.c.l.b16 %v5873
      %v8002 = vunpack.c.h.b16 %v5873
      %v8003 = vunpack.c.l.b16 %v5874
      %v8004 = vunpack.c.h.b16 %v5874
      %v8005 = vunpack.c.l.b16 %v5875
      %v8006 = vunpack.c.h.b16 %v5875
      %v8007 = vunpack.c.l.b16 %v5876
      %v8008 = vunpack.c.h.b16 %v5876
      %v8009 = vunpack.c.l.b16 %v5877
      %v8010 = vunpack.c.h.b16 %v5877
      %v8011 = vunpack.c.l.b16 %v5878
      %v8012 = vunpack.c.h.b16 %v5878
      %v8013 = vunpack.c.l.b16 %v5879
      %v8014 = vunpack.c.h.b16 %v5879
      %v8015 = vunpack.c.l.b16 %v5880
      %v8016 = vunpack.c.h.b16 %v5880
      %v8017 = vunpack.c.l.b16 %v5881
      %v8018 = vunpack.c.h.b16 %v5881
      %v8019 = vunpack.c.l.b16 %v5882
      %v8020 = vunpack.c.h.b16 %v5882
      %v8021 = vunpack.c.l.b16 %v5883
      %v8022 = vunpack.c.h.b16 %v5883
      %v8023 = vunpack.c.l.b16 %v5884
      %v8024 = vunpack.c.h.b16 %v5884
      %v8025 = vunpack.c.l.b16 %v5885
      %v8026 = vunpack.c.h.b16 %v5885
      %v8027 = vunpack.c.l.b16 %v5886
      %v8028 = vunpack.c.h.b16 %v5886
      %v8029 = vunpack.c.l.b16 %v5887
      %v8030 = vunpack.c.h.b16 %v5887
      %v8031 = vunpack.c.l.b16 %v5888
      %v8032 = vunpack.c.h.b16 %v5888
      %v8033 = vunpack.c.l.b16 %v5889
      %v8034 = vunpack.c.h.b16 %v5889
      %v8035 = vunpack.c.l.b16 %v5890
      %v8036 = vunpack.c.h.b16 %v5890
      %v8037 = vunpack.c.l.b16 %v5891
      %v8038 = vunpack.c.h.b16 %v5891
      %v8039 = vunpack.c.l.b16 %v5892
      %v8040 = vunpack.c.h.b16 %v5892
      %v8041 = vunpack.c.l.b16 %v5893
      %v8042 = vunpack.c.h.b16 %v5893
      %v8043 = vunpack.c.l.b16 %v5894
      %v8044 = vunpack.c.h.b16 %v5894
      %v8045 = vunpack.c.l.b16 %v5895
      %v8046 = vunpack.c.h.b16 %v5895
      %v8047 = vunpack.c.l.b16 %v5896
      %v8048 = vunpack.c.h.b16 %v5896
      %v8049 = vunpack.c.l.b16 %v5897
      %v8050 = vunpack.c.h.b16 %v5897
      %v8051 = vunpack.c.l.b16 %v5898
      %v8052 = vunpack.c.h.b16 %v5898
      %v8053 = vunpack.c.l.b16 %v5899
      %v8054 = vunpack.c.h.b16 %v5899
      %v8055 = vunpack.c.l.b16 %v5900
      %v8056 = vunpack.c.h.b16 %v5900
      %v8057 = vunpack.c.l.b16 %v5901
      %v8058 = vunpack.c.h.b16 %v5901
      %v8059 = vunpack.c.l.b16 %v5902
      %v8060 = vunpack.c.h.b16 %v5902
      %v8061 = vunpack.c.l.b16 %v5903
      %v8062 = vunpack.c.h.b16 %v5903
      %v8063 = vunpack.c.l.b16 %v5904
      %v8064 = vunpack.c.h.b16 %v5904
      %v8065 = vunpack.c.l.b16 %v5905
      %v8066 = vunpack.c.h.b16 %v5905
      %v8067 = vunpack.c.l.b16 %v5906
      %v8068 = vunpack.c.h.b16 %v5906
      %v8069 = vunpack.c.l.b16 %v5907
      %v8070 = vunpack.c.h.b16 %v5907
      %v8071 = vunpack.c.l.b16 %v5908
      %v8072 = vunpack.c.h.b16 %v5908
      %v8073 = vunpack.c.l.b16 %v5909
      %v8074 = vunpack.c.h.b16 %v5909
      %v8075 = vunpack.c.l.b16 %v5910
      %v8076 = vunpack.c.h.b16 %v5910
      %v8077 = vunpack.c.l.b16 %v5911
      %v8078 = vunpack.c.h.b16 %v5911
      %v8079 = vunpack.c.l.b16 %v5912
      %v8080 = vunpack.c.h.b16 %v5912
      %v8081 = vunpack.c.l.b16 %v5913
      %v8082 = vunpack.c.h.b16 %v5913
      %v8083 = vunpack.c.l.b16 %v5914
      %v8084 = vunpack.c.h.b16 %v5914
      %v8085 = vunpack.c.l.b16 %v5915
      %v8086 = vunpack.c.h.b16 %v5915
      %v8087 = vunpack.c.l.b16 %v5916
      %v8088 = vunpack.c.h.b16 %v5916
      %v8089 = vunpack.c.l.b16 %v5917
      %v8090 = vunpack.c.h.b16 %v5917
      %v8091 = vunpack.c.l.b16 %v5918
      %v8092 = vunpack.c.h.b16 %v5918
      %v8093 = vunpack.c.l.b16 %v5919
      %v8094 = vunpack.c.h.b16 %v5919
      %v8095 = vunpack.c.l.b16 %v5920
      %v8096 = vunpack.c.h.b16 %v5920
      %v8097 = vunpack.c.l.b16 %v5921
      %v8098 = vunpack.c.h.b16 %v5921
      %v8099 = vunpack.c.l.b16 %v5922
      %v8100 = vunpack.c.h.b16 %v5922
      %v8101 = vunpack.c.l.b16 %v5923
      %v8102 = vunpack.c.h.b16 %v5923
      %v8103 = vunpack.c.l.b16 %v5924
      %v8104 = vunpack.c.h.b16 %v5924
      %v8105 = vunpack.c.l.b16 %v5925
      %v8106 = vunpack.c.h.b16 %v5925
      %v8107 = vunpack.c.l.b16 %v5926
      %v8108 = vunpack.c.h.b16 %v5926
      %v8109 = vunpack.c.l.b16 %v5927
      %v8110 = vunpack.c.h.b16 %v5927
      %v8111 = vunpack.c.l.b16 %v5928
      %v8112 = vunpack.c.h.b16 %v5928
      %v8113 = vunpack.c.l.b16 %v5929
      %v8114 = vunpack.c.h.b16 %v5929
      %v8115 = vunpack.c.l.b16 %v5930
      %v8116 = vunpack.c.h.b16 %v5930
      %v8117 = vunpack.c.l.b16 %v5931
      %v8118 = vunpack.c.h.b16 %v5931
      %v8119 = vunpack.c.l.b16 %v5932
      %v8120 = vunpack.c.h.b16 %v5932
      %v8121 = vunpack.c.l.b16 %v5933
      %v8122 = vunpack.c.h.b16 %v5933
      %v8123 = vunpack.c.l.b16 %v5934
      %v8124 = vunpack.c.h.b16 %v5934
      %v8125 = vunpack.c.l.b16 %v5935
      %v8126 = vunpack.c.h.b16 %v5935
      %v8127 = vunpack.c.l.b16 %v5936
      %v8128 = vunpack.c.h.b16 %v5936
      %v8129 = vunpack.c.l.b16 %v5937
      %v8130 = vunpack.c.h.b16 %v5937
      %v8131 = vunpack.c.l.b16 %v5938
      %v8132 = vunpack.c.h.b16 %v5938
      %v8133 = vunpack.c.l.b16 %v5939
      %v8134 = vunpack.c.h.b16 %v5939
      %v8135 = vunpack.c.l.b16 %v5940
      %v8136 = vunpack.c.h.b16 %v5940
      %v8137 = vunpack.c.l.b16 %v5941
      %v8138 = vunpack.c.h.b16 %v5941
      %v8139 = vunpack.c.l.b16 %v5942
      %v8140 = vunpack.c.h.b16 %v5942
      %v8141 = vunpack.c.l.b16 %v5943
      %v8142 = vunpack.c.h.b16 %v5943
      %v8143 = vunpack.c.l.b16 %v5944
      %v8144 = vunpack.c.h.b16 %v5944
      %v8145 = vunpack.c.l.b16 %v5945
      %v8146 = vunpack.c.h.b16 %v5945
      %v8147 = vunpack.c.l.b16 %v5946
      %v8148 = vunpack.c.h.b16 %v5946
      %v8149 = vunpack.c.l.b16 %v5947
      %v8150 = vunpack.c.h.b16 %v5947
      %v8151 = vunpack.c.l.b16 %v5948
      %v8152 = vunpack.c.h.b16 %v5948
      %v8153 = vunpack.c.l.b16 %v5949
      %v8154 = vunpack.c.h.b16 %v5949
      %v8155 = vunpack.c.l.b16 %v5950
      %v8156 = vunpack.c.h.b16 %v5950
      %v8157 = vunpack.c.l.b16 %v5951
      %v8158 = vunpack.c.h.b16 %v5951
      %v8159 = vunpack.c.l.b16 %v5952
      %v8160 = vunpack.c.h.b16 %v5952
      %v8161 = vunpack.c.l.b16 %v5953
      %v8162 = vunpack.c.h.b16 %v5953
      %v8163 = vunpack.c.l.b16 %v5954
      %v8164 = vunpack.c.h.b16 %v5954
      %v8165 = vunpack.c.l.b16 %v5955
      %v8166 = vunpack.c.h.b16 %v5955
      %v8167 = vunpack.c.l.b16 %v5956
      %v8168 = vunpack.c.h.b16 %v5956
      %v8169 = vunpack.c.l.b16 %v5957
      %v8170 = vunpack.c.h.b16 %v5957
      %v8171 = vunpack.c.l.b16 %v5958
      %v8172 = vunpack.c.h.b16 %v5958
      %v8173 = vunpack.c.l.b16 %v5959
      %v8174 = vunpack.c.h.b16 %v5959
      %v8175 = vunpack.c.l.b16 %v5960
      %v8176 = vunpack.c.h.b16 %v5960
      %v8177 = vunpack.c.l.b16 %v5961
      %v8178 = vunpack.c.h.b16 %v5961
      %v8179 = vunpack.c.l.b16 %v5962
      %v8180 = vunpack.c.h.b16 %v5962
      %v8181 = vunpack.c.l.b16 %v5963
      %v8182 = vunpack.c.h.b16 %v5963
      %v8183 = vunpack.c.l.b16 %v5964
      %v8184 = vunpack.c.h.b16 %v5964
      %v8185 = vunpack.c.l.b16 %v5965
      %v8186 = vunpack.c.h.b16 %v5965
      %v8187 = vunpack.c.l.b16 %v5966
      %v8188 = vunpack.c.h.b16 %v5966
      %v8189 = vunpack.c.l.b16 %v5967
      %v8190 = vunpack.c.h.b16 %v5967
      %v8191 = vunpack.c.l.b16 %v5968
      %v8192 = vunpack.c.h.b16 %v5968
      %v8193 = vunpack.c.l.b16 %v5969
      %v8194 = vunpack.c.h.b16 %v5969
      %v8195 = vunpack.c.l.b16 %v5970
      %v8196 = vunpack.c.h.b16 %v5970
      %v8197 = vunpack.c.l.b16 %v5971
      %v8198 = vunpack.c.h.b16 %v5971
      %v8199 = vunpack.c.l.b16 %v5972
      %v8200 = vunpack.c.h.b16 %v5972
      %v8201 = vunpack.c.l.b16 %v5973
      %v8202 = vunpack.c.h.b16 %v5973
      %v8203 = vunpack.c.l.b16 %v5974
      %v8204 = vunpack.c.h.b16 %v5974
      %v8205 = vunpack.c.l.b16 %v5975
      %v8206 = vunpack.c.h.b16 %v5975
      %v8207 = vunpack.c.l.b16 %v5976
      %v8208 = vunpack.c.h.b16 %v5976
      %v8209 = vunpack.c.l.b16 %v5977
      %v8210 = vunpack.c.h.b16 %v5977
      %v8211 = vunpack.c.l.b16 %v5978
      %v8212 = vunpack.c.h.b16 %v5978
      %v8213 = vunpack.c.l.b16 %v5979
      %v8214 = vunpack.c.h.b16 %v5979
      %v8215 = vunpack.c.l.b16 %v5980
      %v8216 = vunpack.c.h.b16 %v5980
      %v8217 = vunpack.c.l.b16 %v5981
      %v8218 = vunpack.c.h.b16 %v5981
      %v8219 = vunpack.c.l.b16 %v5982
      %v8220 = vunpack.c.h.b16 %v5982
      %v8221 = vunpack.c.l.b16 %v5983
      %v8222 = vunpack.c.h.b16 %v5983
      %v8223 = vunpack.c.l.b16 %v5984
      %v8224 = vunpack.c.h.b16 %v5984
      %v8225 = vunpack.c.l.b16 %v5985
      %v8226 = vunpack.c.h.b16 %v5985
      %v8227 = vunpack.c.l.b16 %v5986
      %v8228 = vunpack.c.h.b16 %v5986
      %v8229 = vunpack.c.l.b16 %v5987
      %v8230 = vunpack.c.h.b16 %v5987
      %v8231 = vunpack.c.l.b16 %v5988
      %v8232 = vunpack.c.h.b16 %v5988
      %v8233 = vunpack.c.l.b16 %v5989
      %v8234 = vunpack.c.h.b16 %v5989
      %v8235 = vunpack.c.l.b16 %v5990
      %v8236 = vunpack.c.h.b16 %v5990
      %v8237 = vunpack.c.l.b16 %v5991
      %v8238 = vunpack.c.h.b16 %v5991
      %v8239 = vunpack.c.l.b16 %v5992
      %v8240 = vunpack.c.h.b16 %v5992
      %v8241 = vunpack.c.l.b16 %v5993
      %v8242 = vunpack.c.h.b16 %v5993
      %v8243 = vunpack.c.l.b16 %v5994
      %v8244 = vunpack.c.h.b16 %v5994
      %v8245 = vunpack.c.l.b16 %v5995
      %v8246 = vunpack.c.h.b16 %v5995
      %v8247 = vunpack.c.l.b16 %v5996
      %v8248 = vunpack.c.h.b16 %v5996
      %v8249 = vunpack.c.l.b16 %v5997
      %v8250 = vunpack.c.h.b16 %v5997
      %v8251 = vunpack.c.l.b16 %v5998
      %v8252 = vunpack.c.h.b16 %v5998
      %v8253 = vunpack.c.l.b16 %v5999
      %v8254 = vunpack.c.h.b16 %v5999
      %v8255 = vunpack.c.l.b16 %v6000
      %v8256 = vunpack.c.h.b16 %v6000
      %v8257 = vunpack.c.l.b16 %v6001
      %v8258 = vunpack.c.h.b16 %v6001
      %v8259 = vunpack.c.l.b16 %v6002
      %v8260 = vunpack.c.h.b16 %v6002
      %v8261 = vunpack.c.l.b16 %v6003
      %v8262 = vunpack.c.h.b16 %v6003
      %v8263 = vunpack.c.l.b16 %v6004
      %v8264 = vunpack.c.h.b16 %v6004
      %v8265 = vunpack.c.l.b16 %v6005
      %v8266 = vunpack.c.h.b16 %v6005
      %v8267 = vunpack.c.l.b16 %v6006
      %v8268 = vunpack.c.h.b16 %v6006
      %v8269 = vunpack.c.l.b16 %v6007
      %v8270 = vunpack.c.h.b16 %v6007
      %v8271 = vunpack.c.l.b16 %v6008
      %v8272 = vunpack.c.h.b16 %v6008
      %v8273 = vunpack.c.l.b16 %v6009
      %v8274 = vunpack.c.h.b16 %v6009
      %v8275 = vunpack.c.l.b16 %v6010
      %v8276 = vunpack.c.h.b16 %v6010
      %v8277 = vunpack.c.l.b16 %v6011
      %v8278 = vunpack.c.h.b16 %v6011
      %v8279 = vunpack.c.l.b16 %v6012
      %v8280 = vunpack.c.h.b16 %v6012
      %v8281 = vunpack.c.l.b16 %v6013
      %v8282 = vunpack.c.h.b16 %v6013
      %v8283 = vunpack.c.l.b16 %v6014
      %v8284 = vunpack.c.h.b16 %v6014
      %v8285 = vunpack.c.l.b16 %v6015
      %v8286 = vunpack.c.h.b16 %v6015
      %v8287 = vunpack.c.l.b16 %v6016
      %v8288 = vunpack.c.h.b16 %v6016
      %v8289 = vunpack.c.l.b16 %v6017
      %v8290 = vunpack.c.h.b16 %v6017
      %v8291 = vunpack.c.l.b16 %v6018
      %v8292 = vunpack.c.h.b16 %v6018
      %v8293 = vunpack.c.l.b16 %v6019
      %v8294 = vunpack.c.h.b16 %v6019
      %v8295 = vunpack.c.l.b16 %v6020
      %v8296 = vunpack.c.h.b16 %v6020
      %v8297 = vunpack.c.l.b16 %v6021
      %v8298 = vunpack.c.h.b16 %v6021
      %v8299 = vunpack.c.l.b16 %v6022
      %v8300 = vunpack.c.h.b16 %v6022
      %v8301 = vunpack.c.l.b16 %v6023
      %v8302 = vunpack.c.h.b16 %v6023
      %v8303 = vunpack.c.l.b16 %v6024
      %v8304 = vunpack.c.h.b16 %v6024
      %v8305 = vunpack.c.l.b16 %v6025
      %v8306 = vunpack.c.h.b16 %v6025
      %v8307 = vunpack.c.l.b16 %v6026
      %v8308 = vunpack.c.h.b16 %v6026
      %v8309 = vunpack.c.l.b16 %v6027
      %v8310 = vunpack.c.h.b16 %v6027
      %v8311 = vunpack.c.l.b16 %v6028
      %v8312 = vunpack.c.h.b16 %v6028
      %v8313 = vunpack.c.l.b16 %v6029
      %v8314 = vunpack.c.h.b16 %v6029
      %v8315 = vunpack.c.l.b16 %v6030
      %v8316 = vunpack.c.h.b16 %v6030
      %v8317 = vunpack.c.l.b16 %v6031
      %v8318 = vunpack.c.h.b16 %v6031
      %v8319 = vunpack.c.l.b16 %v6032
      %v8320 = vunpack.c.h.b16 %v6032
      %v8321 = vunpack.c.l.b16 %v6033
      %v8322 = vunpack.c.h.b16 %v6033
      %v8323 = vunpack.c.l.b16 %v6034
      %v8324 = vunpack.c.h.b16 %v6034
      %v8325 = vunpack.c.l.b16 %v6035
      %v8326 = vunpack.c.h.b16 %v6035
      %v8327 = vunpack.c.l.b16 %v6036
      %v8328 = vunpack.c.h.b16 %v6036
      %v8329 = vunpack.c.l.b16 %v6037
      %v8330 = vunpack.c.h.b16 %v6037
      %v8331 = vunpack.c.l.b16 %v6038
      %v8332 = vunpack.c.h.b16 %v6038
      %v8333 = vunpack.c.l.b16 %v6039
      %v8334 = vunpack.c.h.b16 %v6039
      %v8335 = vunpack.c.l.b16 %v6040
      %v8336 = vunpack.c.h.b16 %v6040
      %v8337 = vunpack.c.l.b16 %v6041
      %v8338 = vunpack.c.h.b16 %v6041
      %v8339 = vunpack.c.l.b16 %v6042
      %v8340 = vunpack.c.h.b16 %v6042
      %v8341 = vunpack.c.l.b16 %v6043
      %v8342 = vunpack.c.h.b16 %v6043
      %v8343 = vunpack.c.l.b16 %v6044
      %v8344 = vunpack.c.h.b16 %v6044
      %v8345 = vunpack.c.l.b16 %v6045
      %v8346 = vunpack.c.h.b16 %v6045
      %v8347 = vunpack.c.l.b16 %v6046
      %v8348 = vunpack.c.h.b16 %v6046
      %v8349 = vunpack.c.l.b16 %v6047
      %v8350 = vunpack.c.h.b16 %v6047
      %v8351 = vunpack.c.l.b16 %v6048
      %v8352 = vunpack.c.h.b16 %v6048
      %v8353 = vunpack.c.l.b16 %v6049
      %v8354 = vunpack.c.h.b16 %v6049
      %v8355 = vunpack.c.l.b16 %v6050
      %v8356 = vunpack.c.h.b16 %v6050
      %v8357 = vunpack.c.l.b16 %v6051
      %v8358 = vunpack.c.h.b16 %v6051
      %v8359 = vunpack.c.l.b16 %v6052
      %v8360 = vunpack.c.h.b16 %v6052
      %v8361 = vunpack.c.l.b16 %v6053
      %v8362 = vunpack.c.h.b16 %v6053
      %v8363 = vunpack.c.l.b16 %v6054
      %v8364 = vunpack.c.h.b16 %v6054
      %v8365 = vunpack.c.l.b16 %v6055
      %v8366 = vunpack.c.h.b16 %v6055
      %v8367 = vunpack.c.l.b16 %v6056
      %v8368 = vunpack.c.h.b16 %v6056
      %v8369 = vunpack.c.l.b16 %v6057
      %v8370 = vunpack.c.h.b16 %v6057
      %v8371 = vunpack.c.l.b16 %v6058
      %v8372 = vunpack.c.h.b16 %v6058
      %v8373 = vunpack.c.l.b16 %v6059
      %v8374 = vunpack.c.h.b16 %v6059
      %v8375 = vunpack.c.l.b16 %v6060
      %v8376 = vunpack.c.h.b16 %v6060
      %v8377 = vunpack.c.l.b16 %v6061
      %v8378 = vunpack.c.h.b16 %v6061
      %v8379 = vunpack.c.l.b16 %v6062
      %v8380 = vunpack.c.h.b16 %v6062
      %v8381 = vunpack.c.l.b16 %v6063
      %v8382 = vunpack.c.h.b16 %v6063
      %v8383 = vunpack.c.l.b16 %v6064
      %v8384 = vunpack.c.h.b16 %v6064
      %v8385 = vunpack.c.l.b16 %v6065
      %v8386 = vunpack.c.h.b16 %v6065
      %v8387 = vunpack.c.l.b16 %v6066
      %v8388 = vunpack.c.h.b16 %v6066
      %v8389 = vunpack.c.l.b16 %v6067
      %v8390 = vunpack.c.h.b16 %v6067
      %v8391 = vunpack.c.l.b16 %v6068
      %v8392 = vunpack.c.h.b16 %v6068
      %v8393 = vunpack.c.l.b16 %v6069
      %v8394 = vunpack.c.h.b16 %v6069
      %v8395 = vunpack.c.l.b16 %v6070
      %v8396 = vunpack.c.h.b16 %v6070
      %v8397 = vunpack.c.l.b16 %v6071
      %v8398 = vunpack.c.h.b16 %v6071
      %v8399 = vunpack.c.l.b16 %v6072
      %v8400 = vunpack.c.h.b16 %v6072
      %v8401 = vunpack.c.l.b16 %v6073
      %v8402 = vunpack.c.h.b16 %v6073
      %v8403 = vunpack.c.l.b16 %v6074
      %v8404 = vunpack.c.h.b16 %v6074
      %v8405 = vunpack.c.l.b16 %v6075
      %v8406 = vunpack.c.h.b16 %v6075
      %v8407 = vunpack.c.l.b16 %v6076
      %v8408 = vunpack.c.h.b16 %v6076
      %v8409 = vunpack.c.l.b16 %v6077
      %v8410 = vunpack.c.h.b16 %v6077
      %v8411 = vunpack.c.l.b16 %v6078
      %v8412 = vunpack.c.h.b16 %v6078
      %v8413 = vunpack.c.l.b16 %v6079
      %v8414 = vunpack.c.h.b16 %v6079
      %v8415 = vunpack.c.l.b16 %v6080
      %v8416 = vunpack.c.h.b16 %v6080
      %v8417 = vunpack.c.l.b16 %v6081
      %v8418 = vunpack.c.h.b16 %v6081
      %v8419 = vunpack.c.l.b16 %v6082
      %v8420 = vunpack.c.h.b16 %v6082
      %v8421 = vunpack.c.l.b16 %v6083
      %v8422 = vunpack.c.h.b16 %v6083
      %v8423 = vunpack.c.l.b16 %v6084
      %v8424 = vunpack.c.h.b16 %v6084
      %v8425 = vunpack.c.l.b16 %v6085
      %v8426 = vunpack.c.h.b16 %v6085
      %v8427 = vunpack.c.l.b16 %v6086
      %v8428 = vunpack.c.h.b16 %v6086
      %v8429 = vunpack.c.l.b16 %v6087
      %v8430 = vunpack.c.h.b16 %v6087
      %v8431 = vunpack.c.l.b16 %v6088
      %v8432 = vunpack.c.h.b16 %v6088
      %v8433 = vunpack.c.l.b16 %v6089
      %v8434 = vunpack.c.h.b16 %v6089
      %v8435 = vunpack.c.l.b16 %v6090
      %v8436 = vunpack.c.h.b16 %v6090
      %v8437 = vunpack.c.l.b16 %v6091
      %v8438 = vunpack.c.h.b16 %v6091
      %v8439 = vunpack.c.l.b16 %v6092
      %v8440 = vunpack.c.h.b16 %v6092
      %v8441 = vunpack.c.l.b16 %v6093
      %v8442 = vunpack.c.h.b16 %v6093
      %v8443 = vunpack.c.l.b16 %v6094
      %v8444 = vunpack.c.h.b16 %v6094
      %v8445 = vunpack.c.l.b16 %v6095
      %v8446 = vunpack.c.h.b16 %v6095
      %v8447 = vunpack.c.l.b16 %v6096
      %v8448 = vunpack.c.h.b16 %v6096
      %v8449 = vunpack.c.l.b16 %v6097
      %v8450 = vunpack.c.h.b16 %v6097
      %v8451 = vunpack.c.l.b16 %v6098
      %v8452 = vunpack.c.h.b16 %v6098
      %v8453 = vunpack.c.l.b16 %v6099
      %v8454 = vunpack.c.h.b16 %v6099
      %v8455 = vunpack.c.l.b16 %v6100
      %v8456 = vunpack.c.h.b16 %v6100
      %v8457 = vunpack.c.l.b16 %v6101
      %v8458 = vunpack.c.h.b16 %v6101
      %v8459 = vunpack.c.l.b16 %v6102
      %v8460 = vunpack.c.h.b16 %v6102
      %v8461 = vunpack.c.l.b16 %v6103
      %v8462 = vunpack.c.h.b16 %v6103
      %v8463 = vunpack.c.l.b16 %v6104
      %v8464 = vunpack.c.h.b16 %v6104
      %v8465 = vunpack.c.l.b16 %v6105
      %v8466 = vunpack.c.h.b16 %v6105
      %v8467 = vunpack.c.l.b16 %v6106
      %v8468 = vunpack.c.h.b16 %v6106
      %v8469 = vunpack.c.l.b16 %v6107
      %v8470 = vunpack.c.h.b16 %v6107
      %v8471 = vunpack.c.l.b16 %v6108
      %v8472 = vunpack.c.h.b16 %v6108
      %v8473 = vunpack.c.l.b16 %v6109
      %v8474 = vunpack.c.h.b16 %v6109
      %v8475 = vunpack.c.l.b16 %v6110
      %v8476 = vunpack.c.h.b16 %v6110
      %v8477 = vunpack.c.l.b16 %v6111
      %v8478 = vunpack.c.h.b16 %v6111
      %v8479 = vunpack.c.l.b16 %v6112
      %v8480 = vunpack.c.h.b16 %v6112
      %v8481 = vunpack.c.l.b16 %v6113
      %v8482 = vunpack.c.h.b16 %v6113
      %v8483 = vunpack.c.l.b16 %v6114
      %v8484 = vunpack.c.h.b16 %v6114
      %v8485 = vunpack.c.l.b16 %v6115
      %v8486 = vunpack.c.h.b16 %v6115
      %v8487 = vunpack.c.l.b16 %v6116
      %v8488 = vunpack.c.h.b16 %v6116
      %v8489 = vunpack.c.l.b16 %v6117
      %v8490 = vunpack.c.h.b16 %v6117
      %v8491 = vunpack.c.l.b16 %v6118
      %v8492 = vunpack.c.h.b16 %v6118
      %v8493 = vunpack.c.l.b16 %v6119
      %v8494 = vunpack.c.h.b16 %v6119
      %v8495 = vunpack.c.l.b16 %v6120
      %v8496 = vunpack.c.h.b16 %v6120
      %v8497 = vunpack.c.l.b16 %v6121
      %v8498 = vunpack.c.h.b16 %v6121
      %v8499 = vunpack.c.l.b16 %v6122
      %v8500 = vunpack.c.h.b16 %v6122
      %v8501 = vunpack.c.l.b16 %v6123
      %v8502 = vunpack.c.h.b16 %v6123
      %v8503 = vunpack.c.l.b16 %v6124
      %v8504 = vunpack.c.h.b16 %v6124
      %v8505 = vunpack.c.l.b16 %v6125
      %v8506 = vunpack.c.h.b16 %v6125
      %v8507 = vunpack.c.l.b16 %v6126
      %v8508 = vunpack.c.h.b16 %v6126
      %v8509 = vunpack.c.l.b16 %v6127
      %v8510 = vunpack.c.h.b16 %v6127
      %v8511 = vunpack.c.l.b16 %v6128
      %v8512 = vunpack.c.h.b16 %v6128
      %v8513 = vunpack.c.l.b16 %v6129
      %v8514 = vunpack.c.h.b16 %v6129
      %v8515 = vunpack.c.l.b16 %v6130
      %v8516 = vunpack.c.h.b16 %v6130
      %v8517 = vunpack.c.l.b16 %v6131
      %v8518 = vunpack.c.h.b16 %v6131
      %v8519 = vunpack.c.l.b16 %v6132
      %v8520 = vunpack.c.h.b16 %v6132
      %v8521 = vunpack.c.l.b16 %v6133
      %v8522 = vunpack.c.h.b16 %v6133
      %v8523 = vunpack.c.l.b16 %v6134
      %v8524 = vunpack.c.h.b16 %v6134
      %v8525 = vunpack.c.l.b16 %v6135
      %v8526 = vunpack.c.h.b16 %v6135
      %v8527 = vunpack.c.l.b16 %v6136
      %v8528 = vunpack.c.h.b16 %v6136
      %v8529 = vunpack.c.l.b16 %v6137
      %v8530 = vunpack.c.h.b16 %v6137
      %v8531 = vunpack.c.l.b16 %v6138
      %v8532 = vunpack.c.h.b16 %v6138
      %v8533 = vunpack.c.l.b16 %v6139
      %v8534 = vunpack.c.h.b16 %v6139
      %v8535 = vunpack.c.l.b16 %v6140
      %v8536 = vunpack.c.h.b16 %v6140
      %v8537 = vunpack.c.l.b16 %v6141
      %v8538 = vunpack.c.h.b16 %v6141
      %v8539 = vunpack.c.l.b16 %v6142
      %v8540 = vunpack.c.h.b16 %v6142
      %v8541 = vunpack.c.l.b16 %v6143
      %v8542 = vunpack.c.h.b16 %v6143
      %v8543 = vunpack.c.l.b16 %v6144
      %v8544 = vunpack.c.h.b16 %v6144
      %v8545 = vunpack.c.l.b16 %v6145
      %v8546 = vunpack.c.h.b16 %v6145
      %v8547 = vunpack.c.l.b16 %v6146
      %v8548 = vunpack.c.h.b16 %v6146
      %v8549 = vunpack.c.l.b16 %v6147
      %v8550 = vunpack.c.h.b16 %v6147
      %v8551 = vunpack.c.l.b16 %v6148
      %v8552 = vunpack.c.h.b16 %v6148
      %v8553 = vunpack.c.l.b16 %v6149
      %v8554 = vunpack.c.h.b16 %v6149
      %v8555 = vunpack.c.l.b16 %v6150
      %v8556 = vunpack.c.h.b16 %v6150
      %v8557 = vunpack.c.l.b16 %v6151
      %v8558 = vunpack.c.h.b16 %v6151
      %v8559 = vunpack.c.l.b16 %v6152
      %v8560 = vunpack.c.h.b16 %v6152
      %v8561 = vunpack.c.l.b16 %v6153
      %v8562 = vunpack.c.h.b16 %v6153
      %v8563 = vunpack.c.l.b16 %v6154
      %v8564 = vunpack.c.h.b16 %v6154
      %v8565 = vunpack.c.l.b16 %v6155
      %v8566 = vunpack.c.h.b16 %v6155
      %v8567 = vunpack.c.l.b16 %v6156
      %v8568 = vunpack.c.h.b16 %v6156
      %v8569 = vunpack.c.l.b16 %v6157
      %v8570 = vunpack.c.h.b16 %v6157
      %v8571 = vunpack.c.l.b16 %v6158
      %v8572 = vunpack.c.h.b16 %v6158
      %v8573 = vunpack.c.l.b16 %v6159
      %v8574 = vunpack.c.h.b16 %v6159
      %v8575 = vunpack.c.l.b16 %v6160
      %v8576 = vunpack.c.h.b16 %v6160
      %v8577 = vunpack.c.l.b16 %v6161
      %v8578 = vunpack.c.h.b16 %v6161
      %v8579 = vunpack.c.l.b16 %v6162
      %v8580 = vunpack.c.h.b16 %v6162
      %v8581 = vunpack.c.l.b16 %v6163
      %v8582 = vunpack.c.h.b16 %v6163
      %v8583 = vunpack.c.l.b16 %v6164
      %v8584 = vunpack.c.h.b16 %v6164
      %v8585 = vunpack.c.l.b16 %v6165
      %v8586 = vunpack.c.h.b16 %v6165
      %v8587 = vunpack.c.l.b16 %v6166
      %v8588 = vunpack.c.h.b16 %v6166
      %v8589 = vunpack.c.l.b16 %v6167
      %v8590 = vunpack.c.h.b16 %v6167
      %v8591 = vunpack.c.l.b16 %v6168
      %v8592 = vunpack.c.h.b16 %v6168
      %v8593 = vunpack.c.l.b16 %v6169
      %v8594 = vunpack.c.h.b16 %v6169
      %v8595 = vunpack.c.l.b16 %v6170
      %v8596 = vunpack.c.h.b16 %v6170
      %v8597 = vunpack.c.l.b16 %v6171
      %v8598 = vunpack.c.h.b16 %v6171
      %v8599 = vunpack.c.l.b16 %v6172
      %v8600 = vunpack.c.h.b16 %v6172
      %v8601 = vunpack.c.l.b16 %v6173
      %v8602 = vunpack.c.h.b16 %v6173
      %v8603 = vunpack.c.l.b16 %v6174
      %v8604 = vunpack.c.h.b16 %v6174
      %v8605 = vunpack.c.l.b16 %v6175
      %v8606 = vunpack.c.h.b16 %v6175
      %v8607 = vunpack.c.l.b16 %v6176
      %v8608 = vunpack.c.h.b16 %v6176
      %v8609 = vunpack.c.l.b16 %v6177
      %v8610 = vunpack.c.h.b16 %v6177
      %v8611 = vunpack.c.l.b16 %v6178
      %v8612 = vunpack.c.h.b16 %v6178
      %v8613 = vunpack.c.l.b16 %v6179
      %v8614 = vunpack.c.h.b16 %v6179
      %v8615 = vunpack.c.l.b16 %v6180
      %v8616 = vunpack.c.h.b16 %v6180
      %v8617 = vunpack.c.l.b16 %v6181
      %v8618 = vunpack.c.h.b16 %v6181
      %v8619 = vunpack.c.l.b16 %v6182
      %v8620 = vunpack.c.h.b16 %v6182
      %v8621 = vunpack.c.l.b16 %v6183
      %v8622 = vunpack.c.h.b16 %v6183
      %v8623 = vunpack.c.l.b16 %v6184
      %v8624 = vunpack.c.h.b16 %v6184
      %v8625 = vunpack.c.l.b16 %v6185
      %v8626 = vunpack.c.h.b16 %v6185
      %v8627 = vunpack.c.l.b16 %v6186
      %v8628 = vunpack.c.h.b16 %v6186
      %v8629 = vunpack.c.l.b16 %v6187
      %v8630 = vunpack.c.h.b16 %v6187
      %v8631 = vunpack.c.l.b16 %v6188
      %v8632 = vunpack.c.h.b16 %v6188
      %v8633 = vunpack.c.l.b16 %v6189
      %v8634 = vunpack.c.h.b16 %v6189
      %v8635 = vunpack.c.l.b16 %v6190
      %v8636 = vunpack.c.h.b16 %v6190
      %v8637 = vunpack.c.l.b16 %v6191
      %v8638 = vunpack.c.h.b16 %v6191
      %v8639 = vunpack.c.l.b16 %v6192
      %v8640 = vunpack.c.h.b16 %v6192
      %v8641 = vunpack.c.l.b16 %v6193
      %v8642 = vunpack.c.h.b16 %v6193
      %v8643 = vunpack.c.l.b16 %v6194
      %v8644 = vunpack.c.h.b16 %v6194
      %v8645 = vunpack.c.l.b16 %v6195
      %v8646 = vunpack.c.h.b16 %v6195
      %v8647 = vunpack.c.l.b16 %v6196
      %v8648 = vunpack.c.h.b16 %v6196
      %v8649 = vunpack.c.l.b16 %v6197
      %v8650 = vunpack.c.h.b16 %v6197
      %v8651 = vunpack.c.l.b16 %v6198
      %v8652 = vunpack.c.h.b16 %v6198
      %v8653 = vunpack.c.l.b16 %v6199
      %v8654 = vunpack.c.h.b16 %v6199
      %v8655 = vunpack.c.l.b16 %v6200
      %v8656 = vunpack.c.h.b16 %v6200
      %v8657 = vunpack.c.l.b16 %v6201
      %v8658 = vunpack.c.h.b16 %v6201
      %v8659 = vunpack.c.l.b16 %v6202
      %v8660 = vunpack.c.h.b16 %v6202
      %v8661 = vunpack.c.l.b16 %v6203
      %v8662 = vunpack.c.h.b16 %v6203
      %v8663 = vunpack.c.l.b16 %v6204
      %v8664 = vunpack.c.h.b16 %v6204
      %v8665 = vunpack.c.l.b16 %v6205
      %v8666 = vunpack.c.h.b16 %v6205
      %v8667 = vunpack.c.l.b16 %v6206
      %v8668 = vunpack.c.h.b16 %v6206
      %v8669 = vunpack.c.l.b16 %v6207
      %v8670 = vunpack.c.h.b16 %v6207
      %v8671 = vunpack.c.l.b16 %v6208
      %v8672 = vunpack.c.h.b16 %v6208
      %v8673 = vunpack.c.l.b16 %v6209
      %v8674 = vunpack.c.h.b16 %v6209
      %v8675 = vunpack.c.l.b16 %v6210
      %v8676 = vunpack.c.h.b16 %v6210
      %v8677 = vunpack.c.l.b16 %v6211
      %v8678 = vunpack.c.h.b16 %v6211
      %v8679 = vunpack.c.l.b16 %v6212
      %v8680 = vunpack.c.h.b16 %v6212
      %v8681 = vunpack.c.l.b16 %v6213
      %v8682 = vunpack.c.h.b16 %v6213
      %v8683 = vunpack.c.l.b16 %v6214
      %v8684 = vunpack.c.h.b16 %v6214
      %v8685 = vunpack.c.l.b16 %v6215
      %v8686 = vunpack.c.h.b16 %v6215
      %v8687 = vunpack.c.l.b16 %v6216
      %v8688 = vunpack.c.h.b16 %v6216
      %v8689 = vunpack.c.l.b16 %v6217
      %v8690 = vunpack.c.h.b16 %v6217
      %v8691 = vunpack.c.l.b16 %v6218
      %v8692 = vunpack.c.h.b16 %v6218
      %v8693 = vunpack.c.l.b16 %v6219
      %v8694 = vunpack.c.h.b16 %v6219
      %v8695 = vunpack.c.l.b16 %v6220
      %v8696 = vunpack.c.h.b16 %v6220
      %v8697 = vunpack.c.l.b16 %v6221
      %v8698 = vunpack.c.h.b16 %v6221
      %v8699 = vunpack.c.l.b16 %v6222
      %v8700 = vunpack.c.h.b16 %v6222
      %v8701 = vunpack.c.l.b16 %v6223
      %v8702 = vunpack.c.h.b16 %v6223
      %v8703 = vunpack.c.l.b16 %v6224
      %v8704 = vunpack.c.h.b16 %v6224
      %v8705 = vunpack.c.l.b16 %v6225
      %v8706 = vunpack.c.h.b16 %v6225
      %v8707 = vunpack.c.l.b16 %v6226
      %v8708 = vunpack.c.h.b16 %v6226
      %v8709 = vunpack.c.l.b16 %v6227
      %v8710 = vunpack.c.h.b16 %v6227
      %v8711 = vunpack.c.l.b16 %v6228
      %v8712 = vunpack.c.h.b16 %v6228
      %v8713 = vunpack.c.l.b16 %v6229
      %v8714 = vunpack.c.h.b16 %v6229
      %v8715 = vunpack.c.l.b16 %v6230
      %v8716 = vunpack.c.h.b16 %v6230
      %v8717 = vunpack.c.l.b16 %v6231
      %v8718 = vunpack.c.h.b16 %v6231
      %v8719 = vunpack.c.l.b16 %v6232
      %v8720 = vunpack.c.h.b16 %v6232
      %v8721 = vunpack.c.l.b16 %v6233
      %v8722 = vunpack.c.h.b16 %v6233
      %v8723 = vunpack.c.l.b16 %v6234
      %v8724 = vunpack.c.h.b16 %v6234
      %v8725 = vunpack.c.l.b16 %v6235
      %v8726 = vunpack.c.h.b16 %v6235
      %v8727 = vunpack.c.l.b16 %v6236
      %v8728 = vunpack.c.h.b16 %v6236
      %v8729 = vunpack.c.l.b16 %v6237
      %v8730 = vunpack.c.h.b16 %v6237
      %v8731 = vunpack.c.l.b16 %v6238
      %v8732 = vunpack.c.h.b16 %v6238
      %v8733 = vunpack.c.l.b16 %v6239
      %v8734 = vunpack.c.h.b16 %v6239
      %v8735 = vunpack.c.l.b16 %v6240
      %v8736 = vunpack.c.h.b16 %v6240
      %v8737 = vunpack.c.l.b16 %v6241
      %v8738 = vunpack.c.h.b16 %v6241
      %v8739 = vunpack.c.l.b16 %v6242
      %v8740 = vunpack.c.h.b16 %v6242
      %v8741 = vunpack.c.l.b16 %v6243
      %v8742 = vunpack.c.h.b16 %v6243
      %v8743 = vunpack.c.l.b16 %v6244
      %v8744 = vunpack.c.h.b16 %v6244
      %v8745 = vunpack.c.l.b16 %v6245
      %v8746 = vunpack.c.h.b16 %v6245
      %v8747 = vunpack.c.l.b16 %v6246
      %v8748 = vunpack.c.h.b16 %v6246
      %v8749 = vunpack.c.l.b16 %v6247
      %v8750 = vunpack.c.h.b16 %v6247
      %v8751 = vunpack.c.l.b16 %v6248
      %v8752 = vunpack.c.h.b16 %v6248
      %v8753 = vunpack.c.l.b16 %v6249
      %v8754 = vunpack.c.h.b16 %v6249
      %v8755 = vunpack.c.l.b16 %v6250
      %v8756 = vunpack.c.h.b16 %v6250
      %v8757 = vunpack.c.l.b16 %v6251
      %v8758 = vunpack.c.h.b16 %v6251
      %v8759 = vunpack.c.l.b16 %v6252
      %v8760 = vunpack.c.h.b16 %v6252
      %v8761 = vunpack.c.l.b16 %v6253
      %v8762 = vunpack.c.h.b16 %v6253
      %v8763 = vunpack.c.l.b16 %v6254
      %v8764 = vunpack.c.h.b16 %v6254
      %v8765 = vunpack.c.l.b16 %v6255
      %v8766 = vunpack.c.h.b16 %v6255
      %v8767 = vunpack.c.l.b16 %v6256
      %v8768 = vunpack.c.h.b16 %v6256
      %v8769 = vunpack.c.l.b16 %v6257
      %v8770 = vunpack.c.h.b16 %v6257
      %v8771 = vunpack.c.l.b16 %v6258
      %v8772 = vunpack.c.h.b16 %v6258
      %v8773 = vunpack.c.l.b16 %v6259
      %v8774 = vunpack.c.h.b16 %v6259
      %v8775 = vunpack.c.l.b16 %v6260
      %v8776 = vunpack.c.h.b16 %v6260
      %v8777 = vunpack.c.l.b16 %v6261
      %v8778 = vunpack.c.h.b16 %v6261
      %v8779 = vunpack.c.l.b16 %v6262
      %v8780 = vunpack.c.h.b16 %v6262
      %v8781 = vunpack.c.l.b16 %v6263
      %v8782 = vunpack.c.h.b16 %v6263
      %v8783 = vunpack.c.l.b16 %v6264
      %v8784 = vunpack.c.h.b16 %v6264
      %v8785 = vunpack.c.l.b16 %v6265
      %v8786 = vunpack.c.h.b16 %v6265
      %v8787 = vunpack.c.l.b16 %v6266
      %v8788 = vunpack.c.h.b16 %v6266
      %v8789 = vunpack.c.l.b16 %v6267
      %v8790 = vunpack.c.h.b16 %v6267
      %v8791 = vunpack.c.l.b16 %v6268
      %v8792 = vunpack.c.h.b16 %v6268
      %v8793 = vunpack.c.l.b16 %v6269
      %v8794 = vunpack.c.h.b16 %v6269
      %v8795 = vunpack.c.l.b16 %v6270
      %v8796 = vunpack.c.h.b16 %v6270
      %v8797 = vunpack.c.l.b16 %v6271
      %v8798 = vunpack.c.h.b16 %v6271
      %v8799 = vunpack.c.l.b16 %v6272
      %v8800 = vunpack.c.h.b16 %v6272
      %v8801 = vunpack.c.l.b16 %v6273
      %v8802 = vunpack.c.h.b16 %v6273
      %v8803 = vunpack.c.l.b16 %v6274
      %v8804 = vunpack.c.h.b16 %v6274
      %v8805 = vunpack.c.l.b16 %v6275
      %v8806 = vunpack.c.h.b16 %v6275
      %v8807 = vunpack.c.l.b16 %v6276
      %v8808 = vunpack.c.h.b16 %v6276
      %v8809 = vunpack.c.l.b16 %v6277
      %v8810 = vunpack.c.h.b16 %v6277
      %v8811 = vunpack.c.l.b16 %v6278
      %v8812 = vunpack.c.h.b16 %v6278
      %v8813 = vunpack.c.l.b16 %v6279
      %v8814 = vunpack.c.h.b16 %v6279
      %v8815 = vunpack.c.l.b16 %v6280
      %v8816 = vunpack.c.h.b16 %v6280
      %v8817 = vunpack.c.l.b16 %v6281
      %v8818 = vunpack.c.h.b16 %v6281
      %v8819 = vunpack.c.l.b16 %v6282
      %v8820 = vunpack.c.h.b16 %v6282
      %v8821 = vunpack.c.l.b16 %v6283
      %v8822 = vunpack.c.h.b16 %v6283
      %v8823 = vunpack.c.l.b16 %v6284
      %v8824 = vunpack.c.h.b16 %v6284
      %v8825 = vunpack.c.l.b16 %v6285
      %v8826 = vunpack.c.h.b16 %v6285
      %v8827 = vunpack.c.l.b16 %v6286
      %v8828 = vunpack.c.h.b16 %v6286
      %v8829 = vunpack.c.l.b16 %v6287
      %v8830 = vunpack.c.h.b16 %v6287
      %v8831 = vunpack.c.l.b16 %v6288
      %v8832 = vunpack.c.h.b16 %v6288
      %v8833 = vunpack.c.l.b16 %v6289
      %v8834 = vunpack.c.h.b16 %v6289
      %v8835 = vunpack.c.l.b16 %v6290
      %v8836 = vunpack.c.h.b16 %v6290
      %v8837 = vunpack.c.l.b16 %v6291
      %v8838 = vunpack.c.h.b16 %v6291
      %v8839 = vunpack.c.l.b16 %v6292
      %v8840 = vunpack.c.h.b16 %v6292
      %v8841 = vunpack.c.l.b16 %v6293
      %v8842 = vunpack.c.h.b16 %v6293
      %v8843 = vunpack.c.l.b16 %v6294
      %v8844 = vunpack.c.h.b16 %v6294
      %v8845 = vunpack.c.l.b16 %v6295
      %v8846 = vunpack.c.h.b16 %v6295
      %v8847 = vunpack.c.l.b16 %v6296
      %v8848 = vunpack.c.h.b16 %v6296
      %v8849 = vunpack.c.l.b16 %v6297
      %v8850 = vunpack.c.h.b16 %v6297
      %v8851 = vunpack.c.l.b16 %v6298
      %v8852 = vunpack.c.h.b16 %v6298
      %v8853 = vunpack.c.l.b16 %v6299
      %v8854 = vunpack.c.h.b16 %v6299
      %v8855 = vunpack.c.l.b16 %v6300
      %v8856 = vunpack.c.h.b16 %v6300
      %v8857 = vunpack.c.l.b16 %v6301
      %v8858 = vunpack.c.h.b16 %v6301
      %v8859 = vunpack.c.l.b16 %v6302
      %v8860 = vunpack.c.h.b16 %v6302
      %v8861 = vunpack.c.l.b16 %v6303
      %v8862 = vunpack.c.h.b16 %v6303
      %v8863 = vunpack.c.l.b16 %v6304
      %v8864 = vunpack.c.h.b16 %v6304
      %v8865 = vunpack.c.l.b16 %v6305
      %v8866 = vunpack.c.h.b16 %v6305
      %v8867 = vunpack.c.l.b16 %v6306
      %v8868 = vunpack.c.h.b16 %v6306
      %v8869 = vunpack.c.l.b16 %v6307
      %v8870 = vunpack.c.h.b16 %v6307
      %v8871 = vunpack.c.l.b16 %v6308
      %v8872 = vunpack.c.h.b16 %v6308
      %v8873 = vunpack.c.l.b16 %v6309
      %v8874 = vunpack.c.h.b16 %v6309
      %v8875 = vunpack.c.l.b16 %v6310
      %v8876 = vunpack.c.h.b16 %v6310
      %v8877 = vunpack.c.l.b16 %v6311
      %v8878 = vunpack.c.h.b16 %v6311
      %v8879 = vunpack.c.l.b16 %v6312
      %v8880 = vunpack.c.h.b16 %v6312
      %v8881 = vunpack.c.l.b16 %v6313
      %v8882 = vunpack.c.h.b16 %v6313
      %v8883 = vunpack.c.l.b16 %v6314
      %v8884 = vunpack.c.h.b16 %v6314
      %v8885 = vunpack.c.l.b16 %v6315
      %v8886 = vunpack.c.h.b16 %v6315
      %v8887 = vunpack.c.l.b16 %v6316
      %v8888 = vunpack.c.h.b16 %v6316
      %v8889 = vunpack.c.l.b16 %v6317
      %v8890 = vunpack.c.h.b16 %v6317
      %v8891 = vunpack.c.l.b16 %v6318
      %v8892 = vunpack.c.h.b16 %v6318
      %v8893 = vunpack.c.l.b16 %v6319
      %v8894 = vunpack.c.h.b16 %v6319
      %v8895 = vunpack.c.l.b16 %v6320
      %v8896 = vunpack.c.h.b16 %v6320
      %v8897 = vunpack.c.l.b16 %v6321
      %v8898 = vunpack.c.h.b16 %v6321
      %v8899 = vunpack.c.l.b16 %v6322
      %v8900 = vunpack.c.h.b16 %v6322
      %v8901 = vunpack.c.l.b16 %v6323
      %v8902 = vunpack.c.h.b16 %v6323
      %v8903 = vunpack.c.l.b16 %v6324
      %v8904 = vunpack.c.h.b16 %v6324
      %v8905 = vunpack.c.l.b16 %v6325
      %v8906 = vunpack.c.h.b16 %v6325
      %v8907 = vunpack.c.l.b16 %v6326
      %v8908 = vunpack.c.h.b16 %v6326
      %v8909 = vunpack.c.l.b16 %v6327
      %v8910 = vunpack.c.h.b16 %v6327
      %v8911 = vunpack.c.l.b16 %v6328
      %v8912 = vunpack.c.h.b16 %v6328
      %v8913 = vunpack.c.l.b16 %v6329
      %v8914 = vunpack.c.h.b16 %v6329
      %v8915 = vunpack.c.l.b16 %v6330
      %v8916 = vunpack.c.h.b16 %v6330
      %v8917 = vunpack.c.l.b16 %v6331
      %v8918 = vunpack.c.h.b16 %v6331
      %v8919 = vunpack.c.l.b16 %v6332
      %v8920 = vunpack.c.h.b16 %v6332
      %v8921 = vunpack.c.l.b16 %v6333
      %v8922 = vunpack.c.h.b16 %v6333
      %v8923 = vunpack.c.l.b16 %v6334
      %v8924 = vunpack.c.h.b16 %v6334
      %v8925 = vunpack.c.l.b16 %v6335
      %v8926 = vunpack.c.h.b16 %v6335
      %v8927 = vunpack.c.l.b16 %v6336
      %v8928 = vunpack.c.h.b16 %v6336
      %v8929 = vunpack.c.l.b16 %v6337
      %v8930 = vunpack.c.h.b16 %v6337
      %v8931 = vunpack.c.l.b16 %v6338
      %v8932 = vunpack.c.h.b16 %v6338
      %v8933 = vunpack.c.l.b16 %v6339
      %v8934 = vunpack.c.h.b16 %v6339
      %v8935 = vunpack.c.l.b16 %v6340
      %v8936 = vunpack.c.h.b16 %v6340
      %v8937 = vunpack.c.l.b16 %v6341
      %v8938 = vunpack.c.h.b16 %v6341
      %v8939 = vunpack.c.l.b16 %v6342
      %v8940 = vunpack.c.h.b16 %v6342
      %v8941 = vunpack.c.l.b16 %v6343
      %v8942 = vunpack.c.h.b16 %v6343
      %v8943 = vunpack.c.l.b16 %v6344
      %v8944 = vunpack.c.h.b16 %v6344
      %v8945 = vunpack.c.l.b16 %v6345
      %v8946 = vunpack.c.h.b16 %v6345
      %v8947 = vunpack.c.l.b16 %v6346
      %v8948 = vunpack.c.h.b16 %v6346
      %v8949 = vunpack.c.l.b16 %v6347
      %v8950 = vunpack.c.h.b16 %v6347
      %v8951 = vunpack.c.l.b16 %v6348
      %v8952 = vunpack.c.h.b16 %v6348
      %v8953 = vunpack.c.l.b16 %v6349
      %v8954 = vunpack.c.h.b16 %v6349
      %v8955 = vunpack.c.l.b16 %v6350
      %v8956 = vunpack.c.h.b16 %v6350
      %v8957 = vunpack.c.l.b16 %v6351
      %v8958 = vunpack.c.h.b16 %v6351
      %v8959 = vunpack.c.l.b16 %v6352
      %v8960 = vunpack.c.h.b16 %v6352
      %v8961 = vunpack.c.l.b16 %v6353
      %v8962 = vunpack.c.h.b16 %v6353
      %v8963 = vunpack.c.l.b16 %v6354
      %v8964 = vunpack.c.h.b16 %v6354
      %v8965 = vunpack.c.l.b16 %v6355
      %v8966 = vunpack.c.h.b16 %v6355
      %v8967 = vunpack.c.l.b16 %v6356
      %v8968 = vunpack.c.h.b16 %v6356
      %v8969 = vunpack.c.l.b16 %v6357
      %v8970 = vunpack.c.h.b16 %v6357
      %v8971 = vunpack.c.l.b16 %v6358
      %v8972 = vunpack.c.h.b16 %v6358
      %v8973 = vunpack.c.l.b16 %v6359
      %v8974 = vunpack.c.h.b16 %v6359
      %v8975 = vunpack.c.l.b16 %v6360
      %v8976 = vunpack.c.h.b16 %v6360
      %v8977 = vunpack.c.l.b16 %v6361
      %v8978 = vunpack.c.h.b16 %v6361
      %v8979 = vunpack.c.l.b16 %v6362
      %v8980 = vunpack.c.h.b16 %v6362
      %v8981 = vunpack.c.l.b16 %v6363
      %v8982 = vunpack.c.h.b16 %v6363
      %v8983 = vunpack.c.l.b16 %v6364
      %v8984 = vunpack.c.h.b16 %v6364
      %v8985 = vunpack.c.l.b16 %v6365
      %v8986 = vunpack.c.h.b16 %v6365
      %v8987 = vunpack.c.l.b16 %v6366
      %v8988 = vunpack.c.h.b16 %v6366
      %v8989 = vunpack.c.l.b16 %v6367
      %v8990 = vunpack.c.h.b16 %v6367
      %v8991 = vunpack.c.l.b16 %v6368
      %v8992 = vunpack.c.h.b16 %v6368
      %v8993 = vunpack.c.l.b16 %v6369
      %v8994 = vunpack.c.h.b16 %v6369
      %v8995 = vunpack.c.l.b16 %v6370
      %v8996 = vunpack.c.h.b16 %v6370
      %v8997 = vunpack.c.l.b16 %v6371
      %v8998 = vunpack.c.h.b16 %v6371
      %v8999 = vunpack.c.l.b16 %v6372
      %v9000 = vunpack.c.h.b16 %v6372
      %v9001 = vunpack.c.l.b16 %v6373
      %v9002 = vunpack.c.h.b16 %v6373
      %v9003 = vunpack.c.l.b16 %v6374
      %v9004 = vunpack.c.h.b16 %v6374
      %v9005 = vunpack.c.l.b16 %v6375
      %v9006 = vunpack.c.h.b16 %v6375
      %v9007 = vunpack.c.l.b16 %v6376
      %v9008 = vunpack.c.h.b16 %v6376
      %v9009 = vunpack.c.l.b16 %v6377
      %v9010 = vunpack.c.h.b16 %v6377
      %v9011 = vunpack.c.l.b16 %v6378
      %v9012 = vunpack.c.h.b16 %v6378
      %v9013 = vunpack.c.l.b16 %v6379
      %v9014 = vunpack.c.h.b16 %v6379
      %v9015 = vunpack.c.l.b16 %v6380
      %v9016 = vunpack.c.h.b16 %v6380
      %v9017 = vunpack.c.l.b16 %v6381
      %v9018 = vunpack.c.h.b16 %v6381
      %v9019 = vunpack.c.l.b16 %v6382
      %v9020 = vunpack.c.h.b16 %v6382
      %v9021 = vunpack.c.l.b16 %v6383
      %v9022 = vunpack.c.h.b16 %v6383
      %v9023 = vunpack.c.l.b16 %v6384
      %v9024 = vunpack.c.h.b16 %v6384
      %v9025 = vunpack.c.l.b16 %v6385
      %v9026 = vunpack.c.h.b16 %v6385
      %v9027 = vunpack.c.l.b16 %v6386
      %v9028 = vunpack.c.h.b16 %v6386
      %v9029 = vunpack.c.l.b16 %v6387
      %v9030 = vunpack.c.h.b16 %v6387
      %v9031 = vunpack.c.l.b16 %v6388
      %v9032 = vunpack.c.h.b16 %v6388
      %v9033 = vunpack.c.l.b16 %v6389
      %v9034 = vunpack.c.h.b16 %v6389
      %v9035 = vunpack.c.l.b16 %v6390
      %v9036 = vunpack.c.h.b16 %v6390
      %v9037 = vunpack.c.l.b16 %v6391
      %v9038 = vunpack.c.h.b16 %v6391
      %v9039 = vunpack.c.l.b16 %v6392
      %v9040 = vunpack.c.h.b16 %v6392
      %v9041 = vunpack.c.l.b16 %v6393
      %v9042 = vunpack.c.h.b16 %v6393
      %v9043 = vunpack.c.l.b16 %v6394
      %v9044 = vunpack.c.h.b16 %v6394
      %v9045 = vunpack.c.l.b16 %v6395
      %v9046 = vunpack.c.h.b16 %v6395
      %v9047 = vunpack.c.l.b16 %v6396
      %v9048 = vunpack.c.h.b16 %v6396
      %v9049 = vunpack.c.l.b16 %v6397
      %v9050 = vunpack.c.h.b16 %v6397
      %v9051 = vunpack.c.l.b16 %v6398
      %v9052 = vunpack.c.h.b16 %v6398
      %v9053 = vunpack.c.l.b16 %v6399
      %v9054 = vunpack.c.h.b16 %v6399
      %v9055 = vunpack.c.l.b16 %v6400
      %v9056 = vunpack.c.h.b16 %v6400
      %v9057 = vunpack.c.l.b16 %v6401
      %v9058 = vunpack.c.h.b16 %v6401
      %v9059 = vunpack.c.l.b16 %v6402
      %v9060 = vunpack.c.h.b16 %v6402
      %v9061 = vunpack.c.l.b16 %v6403
      %v9062 = vunpack.c.h.b16 %v6403
      %v9063 = vunpack.c.l.b16 %v6404
      %v9064 = vunpack.c.h.b16 %v6404
      %v9065 = vunpack.c.l.b16 %v6405
      %v9066 = vunpack.c.h.b16 %v6405
      %v9067 = vunpack.c.l.b16 %v6406
      %v9068 = vunpack.c.h.b16 %v6406
      %v9069 = vunpack.c.l.b16 %v6407
      %v9070 = vunpack.c.h.b16 %v6407
      %v9071 = vunpack.c.l.b16 %v6408
      %v9072 = vunpack.c.h.b16 %v6408
      %v9073 = vunpack.c.l.b16 %v6409
      %v9074 = vunpack.c.h.b16 %v6409
      %v9075 = vunpack.c.l.b16 %v6410
      %v9076 = vunpack.c.h.b16 %v6410
      %v9077 = vunpack.c.l.b16 %v6411
      %v9078 = vunpack.c.h.b16 %v6411
      %v9079 = vunpack.c.l.b16 %v6412
      %v9080 = vunpack.c.h.b16 %v6412
      %v9081 = vunpack.c.l.b16 %v6413
      %v9082 = vunpack.c.h.b16 %v6413
      %v9083 = vunpack.c.l.b16 %v6414
      %v9084 = vunpack.c.h.b16 %v6414
      %v9085 = vunpack.c.l.b16 %v6415
      %v9086 = vunpack.c.h.b16 %v6415
      %v9087 = vunpack.c.l.b16 %v6416
      %v9088 = vunpack.c.h.b16 %v6416
      %v9089 = vunpack.c.l.b16 %v6417
      %v9090 = vunpack.c.h.b16 %v6417
      %v9091 = vunpack.c.l.b16 %v6418
      %v9092 = vunpack.c.h.b16 %v6418
      %v9093 = vunpack.c.l.b16 %v6419
      %v9094 = vunpack.c.h.b16 %v6419
      %v9095 = vunpack.c.l.b16 %v6420
      %v9096 = vunpack.c.h.b16 %v6420
      %v9097 = vunpack.c.l.b16 %v6421
      %v9098 = vunpack.c.h.b16 %v6421
      %v9099 = vunpack.c.l.b16 %v6422
      %v9100 = vunpack.c.h.b16 %v6422
      %v9101 = vunpack.c.l.b16 %v6423
      %v9102 = vunpack.c.h.b16 %v6423
      %v9103 = vunpack.c.l.b16 %v6424
      %v9104 = vunpack.c.h.b16 %v6424
      %v9105 = vunpack.c.l.b16 %v6425
      %v9106 = vunpack.c.h.b16 %v6425
      %v9107 = vunpack.c.l.b16 %v6426
      %v9108 = vunpack.c.h.b16 %v6426
      %v9109 = vunpack.c.l.b16 %v6427
      %v9110 = vunpack.c.h.b16 %v6427
      %v9111 = vunpack.c.l.b16 %v6428
      %v9112 = vunpack.c.h.b16 %v6428
      %v9113 = vunpack.c.l.b16 %v6429
      %v9114 = vunpack.c.h.b16 %v6429
      %v9115 = vunpack.c.l.b16 %v6430
      %v9116 = vunpack.c.h.b16 %v6430
      %v9117 = vunpack.c.l.b16 %v6431
      %v9118 = vunpack.c.h.b16 %v6431
      %v9119 = vunpack.c.l.b16 %v6432
      %v9120 = vunpack.c.h.b16 %v6432
      %v9121 = vunpack.c.l.b16 %v6433
      %v9122 = vunpack.c.h.b16 %v6433
      %v9123 = vunpack.c.l.b16 %v6434
      %v9124 = vunpack.c.h.b16 %v6434
      %v9125 = vunpack.c.l.b16 %v6435
      %v9126 = vunpack.c.h.b16 %v6435
      %v9127 = vunpack.c.l.b16 %v6436
      %v9128 = vunpack.c.h.b16 %v6436
      %v9129 = vunpack.c.l.b16 %v6437
      %v9130 = vunpack.c.h.b16 %v6437
      %v9131 = vunpack.c.l.b16 %v6438
      %v9132 = vunpack.c.h.b16 %v6438
      %v9133 = vunpack.c.l.b16 %v6439
      %v9134 = vunpack.c.h.b16 %v6439
      %v9135 = vunpack.c.l.b16 %v6440
      %v9136 = vunpack.c.h.b16 %v6440
      %v9137 = vunpack.c.l.b16 %v6441
      %v9138 = vunpack.c.h.b16 %v6441
      %v9139 = vunpack.c.l.b16 %v6442
      %v9140 = vunpack.c.h.b16 %v6442
      %v9141 = vunpack.c.l.b16 %v6443
      %v9142 = vunpack.c.h.b16 %v6443
      %v9143 = vunpack.c.l.b16 %v6444
      %v9144 = vunpack.c.h.b16 %v6444
      %v9145 = vunpack.c.l.b16 %v6445
      %v9146 = vunpack.c.h.b16 %v6445
      %v9147 = vunpack.c.l.b16 %v6446
      %v9148 = vunpack.c.h.b16 %v6446
      %v9149 = vunpack.c.l.b16 %v6447
      %v9150 = vunpack.c.h.b16 %v6447
      %v9151 = vunpack.c.l.b16 %v6448
      %v9152 = vunpack.c.h.b16 %v6448
      %v9153 = vunpack.c.l.b16 %v6449
      %v9154 = vunpack.c.h.b16 %v6449
      %v9155 = vunpack.c.l.b16 %v6450
      %v9156 = vunpack.c.h.b16 %v6450
      %v9157 = vunpack.c.l.b16 %v6451
      %v9158 = vunpack.c.h.b16 %v6451
      %v9159 = vunpack.c.l.b16 %v6452
      %v9160 = vunpack.c.h.b16 %v6452
      %v9161 = vunpack.c.l.b16 %v6453
      %v9162 = vunpack.c.h.b16 %v6453
      %v9163 = vunpack.c.l.b16 %v6454
      %v9164 = vunpack.c.h.b16 %v6454
      %v9165 = vunpack.c.l.b16 %v6455
      %v9166 = vunpack.c.h.b16 %v6455
      %v9167 = vunpack.c.l.b16 %v6456
      %v9168 = vunpack.c.h.b16 %v6456
      %v9169 = vunpack.c.l.b16 %v6457
      %v9170 = vunpack.c.h.b16 %v6457
      %v9171 = vunpack.c.l.b16 %v6458
      %v9172 = vunpack.c.h.b16 %v6458
      %v9173 = vunpack.c.l.b16 %v6459
      %v9174 = vunpack.c.h.b16 %v6459
      %v9175 = vunpack.c.l.b16 %v6460
      %v9176 = vunpack.c.h.b16 %v6460
      %v9177 = vunpack.c.l.b16 %v6461
      %v9178 = vunpack.c.h.b16 %v6461
      %v9179 = vunpack.c.l.b16 %v6462
      %v9180 = vunpack.c.h.b16 %v6462
      %v9181 = vunpack.c.l.b16 %v6463
      %v9182 = vunpack.c.h.b16 %v6463
      %v9183 = vunpack.c.l.b16 %v6464
      %v9184 = vunpack.c.h.b16 %v6464
      %v9185 = vunpack.c.l.b16 %v6465
      %v9186 = vunpack.c.h.b16 %v6465
      %v9187 = vunpack.c.l.b16 %v6466
      %v9188 = vunpack.c.h.b16 %v6466
      %v9189 = vunpack.c.l.b16 %v6467
      %v9190 = vunpack.c.h.b16 %v6467
      %v9191 = vunpack.c.l.b16 %v6468
      %v9192 = vunpack.c.h.b16 %v6468
      %v9193 = vunpack.c.l.b16 %v6469
      %v9194 = vunpack.c.h.b16 %v6469
      %v9195 = vunpack.c.l.b16 %v6470
      %v9196 = vunpack.c.h.b16 %v6470
      %v9197 = vunpack.c.l.b16 %v6471
      %v9198 = vunpack.c.h.b16 %v6471
      %v9199 = vunpack.c.l.b16 %v6472
      %v9200 = vunpack.c.h.b16 %v6472
      %v9201 = vunpack.c.l.b16 %v6473
      %v9202 = vunpack.c.h.b16 %v6473
      %v9203 = vunpack.c.l.b16 %v6474
      %v9204 = vunpack.c.h.b16 %v6474
      %v9205 = vunpack.c.l.b16 %v6475
      %v9206 = vunpack.c.h.b16 %v6475
      %v9207 = vunpack.c.l.b16 %v6476
      %v9208 = vunpack.c.h.b16 %v6476
      %v9209 = vunpack.c.l.b16 %v6477
      %v9210 = vunpack.c.h.b16 %v6477
      %v9211 = vunpack.c.l.b16 %v6478
      %v9212 = vunpack.c.h.b16 %v6478
      %v9213 = vunpack.c.l.b16 %v6479
      %v9214 = vunpack.c.h.b16 %v6479
      %v9215 = vunpack.c.l.b16 %v6480
      %v9216 = vunpack.c.h.b16 %v6480
      %v9217 = vunpack.c.l.b16 %v6481
      %v9218 = vunpack.c.h.b16 %v6481
      %v9219 = vunpack.c.l.b16 %v6482
      %v9220 = vunpack.c.h.b16 %v6482
      %v9221 = vunpack.c.l.b16 %v6483
      %v9222 = vunpack.c.h.b16 %v6483
      %v9223 = vunpack.c.l.b16 %v6484
      %v9224 = vunpack.c.h.b16 %v6484
      %v9225 = vunpack.c.l.b16 %v6485
      %v9226 = vunpack.c.h.b16 %v6485
      %v9227 = vunpack.c.l.b16 %v6486
      %v9228 = vunpack.c.h.b16 %v6486
      %v9229 = vunpack.c.l.b16 %v6487
      %v9230 = vunpack.c.h.b16 %v6487
      %v9231 = vunpack.c.l.b16 %v6488
      %v9232 = vunpack.c.h.b16 %v6488
      %v9233 = vunpack.c.l.b16 %v6489
      %v9234 = vunpack.c.h.b16 %v6489
      %v9235 = vunpack.c.l.b16 %v6490
      %v9236 = vunpack.c.h.b16 %v6490
      %v9237 = vunpack.c.l.b16 %v6491
      %v9238 = vunpack.c.h.b16 %v6491
      %v9239 = vunpack.c.l.b16 %v6492
      %v9240 = vunpack.c.h.b16 %v6492
      %v9241 = vunpack.c.l.b16 %v6493
      %v9242 = vunpack.c.h.b16 %v6493
      %v9243 = vunpack.c.l.b16 %v6494
      %v9244 = vunpack.c.h.b16 %v6494
      %v9245 = vunpack.c.l.b16 %v6495
      %v9246 = vunpack.c.h.b16 %v6495
      %v9247 = vunpack.c.l.b16 %v6496
      %v9248 = vunpack.c.h.b16 %v6496
      %v9249 = vunpack.c.l.b16 %v6497
      %v9250 = vunpack.c.h.b16 %v6497
      %v9251 = vunpack.c.l.b16 %v6498
      %v9252 = vunpack.c.h.b16 %v6498
      %v9253 = vunpack.c.l.b16 %v6499
      %v9254 = vunpack.c.h.b16 %v6499
      %v9255 = vunpack.c.l.b16 %v6500
      %v9256 = vunpack.c.h.b16 %v6500
      %v9257 = vunpack.c.l.b16 %v6501
      %v9258 = vunpack.c.h.b16 %v6501
      %v9259 = vunpack.c.l.b16 %v6502
      %v9260 = vunpack.c.h.b16 %v6502
      %v9261 = vunpack.c.l.b16 %v6503
      %v9262 = vunpack.c.h.b16 %v6503
      %v9263 = vunpack.c.l.b16 %v6504
      %v9264 = vunpack.c.h.b16 %v6504
      %v9265 = vunpack.c.l.b16 %v6505
      %v9266 = vunpack.c.h.b16 %v6505
      %v9267 = vunpack.c.l.b16 %v6506
      %v9268 = vunpack.c.h.b16 %v6506
      %v9269 = vunpack.c.l.b16 %v6507
      %v9270 = vunpack.c.h.b16 %v6507
      %v9271 = vunpack.c.l.b16 %v6508
      %v9272 = vunpack.c.h.b16 %v6508
      %v9273 = vunpack.c.l.b16 %v6509
      %v9274 = vunpack.c.h.b16 %v6509
      %v9275 = vunpack.c.l.b16 %v6510
      %v9276 = vunpack.c.h.b16 %v6510
      %v9277 = vunpack.c.l.b16 %v6511
      %v9278 = vunpack.c.h.b16 %v6511
      %v9279 = vunpack.c.l.b16 %v6512
      %v9280 = vunpack.c.h.b16 %v6512
      %v9281 = vunpack.c.l.b16 %v6513
      %v9282 = vunpack.c.h.b16 %v6513
      %v9283 = vunpack.c.l.b16 %v6514
      %v9284 = vunpack.c.h.b16 %v6514
      %v9285 = vunpack.c.l.b16 %v6515
      %v9286 = vunpack.c.h.b16 %v6515
      %v9287 = vunpack.c.l.b16 %v6516
      %v9288 = vunpack.c.h.b16 %v6516
      %v9289 = vunpack.c.l.b16 %v6517
      %v9290 = vunpack.c.h.b16 %v6517
      %v9291 = vunpack.c.l.b16 %v6518
      %v9292 = vunpack.c.h.b16 %v6518
      %v9293 = vunpack.c.l.b16 %v6519
      %v9294 = vunpack.c.h.b16 %v6519
      %v9295 = vunpack.c.l.b16 %v6520
      %v9296 = vunpack.c.h.b16 %v6520
      %v9297 = vunpack.c.l.b16 %v6521
      %v9298 = vunpack.c.h.b16 %v6521
      %v9299 = vunpack.c.l.b16 %v6522
      %v9300 = vunpack.c.h.b16 %v6522
      %v9301 = vunpack.c.l.b16 %v6523
      %v9302 = vunpack.c.h.b16 %v6523
      %v9303 = vunpack.c.l.b16 %v6524
      %v9304 = vunpack.c.h.b16 %v6524
      %v9305 = vunpack.c.l.b16 %v6525
      %v9306 = vunpack.c.h.b16 %v6525
      %v9307 = vunpack.c.l.b16 %v6526
      %v9308 = vunpack.c.h.b16 %v6526
      %v9309 = vunpack.c.l.b16 %v6527
      %v9310 = vunpack.c.h.b16 %v6527
      %v9311 = vunpack.c.l.b16 %v6528
      %v9312 = vunpack.c.h.b16 %v6528
      %v9313 = vunpack.c.l.b16 %v6529
      %v9314 = vunpack.c.h.b16 %v6529
      %v9315 = vunpack.c.l.b16 %v6530
      %v9316 = vunpack.c.h.b16 %v6530
      %v9317 = vunpack.c.l.b16 %v6531
      %v9318 = vunpack.c.h.b16 %v6531
      %v9319 = vunpack.c.l.b16 %v6532
      %v9320 = vunpack.c.h.b16 %v6532
      %v9321 = vunpack.c.l.b16 %v6533
      %v9322 = vunpack.c.h.b16 %v6533
      %v9323 = vunpack.c.l.b16 %v6534
      %v9324 = vunpack.c.h.b16 %v6534
      %v9325 = vunpack.c.l.b16 %v6535
      %v9326 = vunpack.c.h.b16 %v6535
      %v9327 = vunpack.c.l.b16 %v6536
      %v9328 = vunpack.c.h.b16 %v6536
      %v9329 = vunpack.c.l.b16 %v6537
      %v9330 = vunpack.c.h.b16 %v6537
      %v9331 = vunpack.c.l.b16 %v6538
      %v9332 = vunpack.c.h.b16 %v6538
      %v9333 = vunpack.c.l.b16 %v6539
      %v9334 = vunpack.c.h.b16 %v6539
      %v9335 = vunpack.c.l.b16 %v6540
      %v9336 = vunpack.c.h.b16 %v6540
      %v9337 = vunpack.c.l.b16 %v6541
      %v9338 = vunpack.c.h.b16 %v6541
      %v9339 = vunpack.c.l.b16 %v6542
      %v9340 = vunpack.c.h.b16 %v6542
      %v9341 = vunpack.c.l.b16 %v6543
      %v9342 = vunpack.c.h.b16 %v6543
      %v9343 = vunpack.c.l.b16 %v6544
      %v9344 = vunpack.c.h.b16 %v6544
      %v9345 = vunpack.c.l.b16 %v6545
      %v9346 = vunpack.c.h.b16 %v6545
      %v9347 = vunpack.c.l.b16 %v6546
      %v9348 = vunpack.c.h.b16 %v6546
      %v9349 = vunpack.c.l.b16 %v6547
      %v9350 = vunpack.c.h.b16 %v6547
      %v9351 = vunpack.c.l.b16 %v6548
      %v9352 = vunpack.c.h.b16 %v6548
      %v9353 = vunpack.c.l.b16 %v6549
      %v9354 = vunpack.c.h.b16 %v6549
      %v9355 = vunpack.c.l.b16 %v6550
      %v9356 = vunpack.c.h.b16 %v6550
      %v9357 = vunpack.c.l.b16 %v6551
      %v9358 = vunpack.c.h.b16 %v6551
      %v9359 = vunpack.c.l.b16 %v6552
      %v9360 = vunpack.c.h.b16 %v6552
      %v9361 = vunpack.c.l.b16 %v6553
      %v9362 = vunpack.c.h.b16 %v6553
      %v9363 = vunpack.c.l.b16 %v6554
      %v9364 = vunpack.c.h.b16 %v6554
      %v9365 = vunpack.c.l.b16 %v6555
      %v9366 = vunpack.c.h.b16 %v6555
      %v9367 = vunpack.c.l.b16 %v6556
      %v9368 = vunpack.c.h.b16 %v6556
      %v9369 = vunpack.c.l.b16 %v6557
      %v9370 = vunpack.c.h.b16 %v6557
      %v9371 = vunpack.c.l.b16 %v6558
      %v9372 = vunpack.c.h.b16 %v6558
      %v9373 = vunpack.c.l.b16 %v6559
      %v9374 = vunpack.c.h.b16 %v6559
      %v9375 = vunpack.c.l.b16 %v6560
      %v9376 = vunpack.c.h.b16 %v6560
      %v9377 = vunpack.c.l.b16 %v6561
      %v9378 = vunpack.c.h.b16 %v6561
      %v9379 = vunpack.c.l.b16 %v6562
      %v9380 = vunpack.c.h.b16 %v6562
      %v9381 = vunpack.c.l.b16 %v6563
      %v9382 = vunpack.c.h.b16 %v6563
      %v9383 = vunpack.c.l.b16 %v6564
      %v9384 = vunpack.c.h.b16 %v6564
      %v9385 = vunpack.c.l.b16 %v6565
      %v9386 = vunpack.c.h.b16 %v6565
      %v9387 = vunpack.c.l.b16 %v6566
      %v9388 = vunpack.c.h.b16 %v6566
      %v9389 = vunpack.c.l.b16 %v6567
      %v9390 = vunpack.c.h.b16 %v6567
      %v9391 = vunpack.c.l.b16 %v6568
      %v9392 = vunpack.c.h.b16 %v6568
      %v9393 = vunpack.c.l.b16 %v6569
      %v9394 = vunpack.c.h.b16 %v6569
      %v9395 = vunpack.c.l.b16 %v6570
      %v9396 = vunpack.c.h.b16 %v6570
      %v9397 = vunpack.c.l.b16 %v6571
      %v9398 = vunpack.c.h.b16 %v6571
      %v9399 = vunpack.c.l.b16 %v6572
      %v9400 = vunpack.c.h.b16 %v6572
      %v9401 = vunpack.c.l.b16 %v6573
      %v9402 = vunpack.c.h.b16 %v6573
      %v9403 = vunpack.c.l.b16 %v6574
      %v9404 = vunpack.c.h.b16 %v6574
      %v9405 = vunpack.c.l.b16 %v6575
      %v9406 = vunpack.c.h.b16 %v6575
      %v9407 = vunpack.c.l.b16 %v6576
      %v9408 = vunpack.c.h.b16 %v6576
      %v9409 = vunpack.c.l.b16 %v6577
      %v9410 = vunpack.c.h.b16 %v6577
      %v9411 = vunpack.c.l.b16 %v6578
      %v9412 = vunpack.c.h.b16 %v6578
      %v9413 = vunpack.c.l.b16 %v6579
      %v9414 = vunpack.c.h.b16 %v6579
      %v9415 = vunpack.c.l.b16 %v6580
      %v9416 = vunpack.c.h.b16 %v6580
      %v9417 = vunpack.c.l.b16 %v6581
      %v9418 = vunpack.c.h.b16 %v6581
      %v9419 = vunpack.c.l.b16 %v6582
      %v9420 = vunpack.c.h.b16 %v6582
      %v9421 = vunpack.c.l.b16 %v6583
      %v9422 = vunpack.c.h.b16 %v6583
      %v9423 = vunpack.c.l.b16 %v6584
      %v9424 = vunpack.c.h.b16 %v6584
      %v9425 = vunpack.c.l.b16 %v6585
      %v9426 = vunpack.c.h.b16 %v6585
      %v9427 = vunpack.c.l.b16 %v6586
      %v9428 = vunpack.c.h.b16 %v6586
      %v9429 = vunpack.c.l.b16 %v6587
      %v9430 = vunpack.c.h.b16 %v6587
      %v9431 = vunpack.c.l.b16 %v6588
      %v9432 = vunpack.c.h.b16 %v6588
      %v9433 = vunpack.c.l.b16 %v6589
      %v9434 = vunpack.c.h.b16 %v6589
      %v9435 = vunpack.c.l.b16 %v6590
      %v9436 = vunpack.c.h.b16 %v6590
      %v9437 = vunpack.c.l.b16 %v6591
      %v9438 = vunpack.c.h.b16 %v6591
      %v9439 = vunpack.c.l.b16 %v6592
      %v9440 = vunpack.c.h.b16 %v6592
      %v9441 = vunpack.c.l.b16 %v6593
      %v9442 = vunpack.c.h.b16 %v6593
      %v9443 = vunpack.c.l.b16 %v6594
      %v9444 = vunpack.c.h.b16 %v6594
      %v9445 = vunpack.c.l.b16 %v6595
      %v9446 = vunpack.c.h.b16 %v6595
      %v9447 = vunpack.c.l.b16 %v6596
      %v9448 = vunpack.c.h.b16 %v6596
      %v9449 = vunpack.c.l.b16 %v6597
      %v9450 = vunpack.c.h.b16 %v6597
      %v9451 = vunpack.c.l.b16 %v6598
      %v9452 = vunpack.c.h.b16 %v6598
      %v9453 = vunpack.c.l.b16 %v6599
      %v9454 = vunpack.c.h.b16 %v6599
      %v9455 = vunpack.c.l.b16 %v6600
      %v9456 = vunpack.c.h.b16 %v6600
      %v9457 = vunpack.c.l.b16 %v6601
      %v9458 = vunpack.c.h.b16 %v6601
      %v9459 = vunpack.c.l.b16 %v6602
      %v9460 = vunpack.c.h.b16 %v6602
      %v9461 = vunpack.c.l.b16 %v6603
      %v9462 = vunpack.c.h.b16 %v6603
      %v9463 = vunpack.c.l.b16 %v6604
      %v9464 = vunpack.c.h.b16 %v6604
      %v9465 = vunpack.c.l.b16 %v6605
      %v9466 = vunpack.c.h.b16 %v6605
      %v9467 = vunpack.c.l.b16 %v6606
      %v9468 = vunpack.c.h.b16 %v6606
      %v9469 = vunpack.c.l.b16 %v6607
      %v9470 = vunpack.c.h.b16 %v6607
      %v9471 = vunpack.c.l.b16 %v6608
      %v9472 = vunpack.c.h.b16 %v6608
      %v9473 = vunpack.c.l.b16 %v6609
      %v9474 = vunpack.c.h.b16 %v6609
      %v9475 = vunpack.c.l.b16 %v6610
      %v9476 = vunpack.c.h.b16 %v6610
      %v9477 = vunpack.c.l.b16 %v6611
      %v9478 = vunpack.c.h.b16 %v6611
      %v9479 = vunpack.c.l.b16 %v6612
      %v9480 = vunpack.c.h.b16 %v6612
      %v9481 = vunpack.c.l.b16 %v6613
      %v9482 = vunpack.c.h.b16 %v6613
      %v9483 = vunpack.c.l.b16 %v6614
      %v9484 = vunpack.c.h.b16 %v6614
      %v9485 = vunpack.c.l.b16 %v6615
      %v9486 = vunpack.c.h.b16 %v6615
      %v9487 = vunpack.c.l.b16 %v6616
      %v9488 = vunpack.c.h.b16 %v6616
      %v9489 = vunpack.c.l.b16 %v6617
      %v9490 = vunpack.c.h.b16 %v6617
      %v9491 = vunpack.c.l.b16 %v6618
      %v9492 = vunpack.c.h.b16 %v6618
      %v9493 = vunpack.c.l.b16 %v6619
      %v9494 = vunpack.c.h.b16 %v6619
      %v9495 = vunpack.c.l.b16 %v6620
      %v9496 = vunpack.c.h.b16 %v6620
      %v9497 = vunpack.c.l.b16 %v6621
      %v9498 = vunpack.c.h.b16 %v6621
      %v9499 = vunpack.c.l.b16 %v6622
      %v9500 = vunpack.c.h.b16 %v6622
      %v9501 = vunpack.c.l.b16 %v6623
      %v9502 = vunpack.c.h.b16 %v6623
      %v9503 = vunpack.c.l.b16 %v6624
      %v9504 = vunpack.c.h.b16 %v6624
      %v9505 = vunpack.c.l.b16 %v6625
      %v9506 = vunpack.c.h.b16 %v6625
      %v9507 = vunpack.c.l.b16 %v6626
      %v9508 = vunpack.c.h.b16 %v6626
      %v9509 = vunpack.c.l.b16 %v6627
      %v9510 = vunpack.c.h.b16 %v6627
      %v9511 = vunpack.c.l.b16 %v6628
      %v9512 = vunpack.c.h.b16 %v6628
      %v9513 = vunpack.c.l.b16 %v6629
      %v9514 = vunpack.c.h.b16 %v6629
      %v9515 = vunpack.c.l.b16 %v6630
      %v9516 = vunpack.c.h.b16 %v6630
      %v9517 = vunpack.c.l.b16 %v6631
      %v9518 = vunpack.c.h.b16 %v6631
      %v9519 = vunpack.c.l.b16 %v6632
      %v9520 = vunpack.c.h.b16 %v6632
      %v9521 = vunpack.c.l.b16 %v6633
      %v9522 = vunpack.c.h.b16 %v6633
      %v9523 = vunpack.c.l.b16 %v6634
      %v9524 = vunpack.c.h.b16 %v6634
      %v9525 = vunpack.c.l.b16 %v6635
      %v9526 = vunpack.c.h.b16 %v6635
      %v9527 = vunpack.c.l.b16 %v6636
      %v9528 = vunpack.c.h.b16 %v6636
      %v9529 = vunpack.c.l.b16 %v6637
      %v9530 = vunpack.c.h.b16 %v6637
      %v9531 = vunpack.c.l.b16 %v6638
      %v9532 = vunpack.c.h.b16 %v6638
      %v9533 = vunpack.c.l.b16 %v6639
      %v9534 = vunpack.c.h.b16 %v6639
      %v9535 = vunpack.c.l.b16 %v6640
      %v9536 = vunpack.c.h.b16 %v6640
      %v9537 = vunpack.c.l.b16 %v6641
      %v9538 = vunpack.c.h.b16 %v6641
      %v9539 = vunpack.c.l.b16 %v6642
      %v9540 = vunpack.c.h.b16 %v6642
      %v9541 = vunpack.c.l.b16 %v6643
      %v9542 = vunpack.c.h.b16 %v6643
      %v9543 = vunpack.c.l.b16 %v6644
      %v9544 = vunpack.c.h.b16 %v6644
      %v9545 = vunpack.c.l.b16 %v6645
      %v9546 = vunpack.c.h.b16 %v6645
      %v9547 = vunpack.c.l.b16 %v6646
      %v9548 = vunpack.c.h.b16 %v6646
      %v9549 = vunpack.c.l.b16 %v6647
      %v9550 = vunpack.c.h.b16 %v6647
      %v9551 = vunpack.c.l.b16 %v6648
      %v9552 = vunpack.c.h.b16 %v6648
      %v9553 = vunpack.c.l.b16 %v6649
      %v9554 = vunpack.c.h.b16 %v6649
      %v9555 = vunpack.c.l.b16 %v6650
      %v9556 = vunpack.c.h.b16 %v6650
      %v9557 = vunpack.c.l.b16 %v6651
      %v9558 = vunpack.c.h.b16 %v6651
      %v9559 = vunpack.c.l.b16 %v6652
      %v9560 = vunpack.c.h.b16 %v6652
      %v9561 = vunpack.c.l.b16 %v6653
      %v9562 = vunpack.c.h.b16 %v6653
      %v9563 = vunpack.c.l.b16 %v6654
      %v9564 = vunpack.c.h.b16 %v6654
      %v9565 = vunpack.c.l.b16 %v6655
      %v9566 = vunpack.c.h.b16 %v6655
      %v9567 = vunpack.c.l.b16 %v6656
      %v9568 = vunpack.c.h.b16 %v6656
      %v9569 = vunpack.c.l.b16 %v6657
      %v9570 = vunpack.c.h.b16 %v6657
      %v9571 = vunpack.c.l.b16 %v6658
      %v9572 = vunpack.c.h.b16 %v6658
      %v9573 = vunpack.c.l.b16 %v6659
      %v9574 = vunpack.c.h.b16 %v6659
      %v9575 = vunpack.c.l.b16 %v6660
      %v9576 = vunpack.c.h.b16 %v6660
      %v9577 = vunpack.c.l.b16 %v6661
      %v9578 = vunpack.c.h.b16 %v6661
      %v9579 = vunpack.c.l.b16 %v6662
      %v9580 = vunpack.c.h.b16 %v6662
      %v9581 = vunpack.c.l.b16 %v6663
      %v9582 = vunpack.c.h.b16 %v6663
      %v9583 = vunpack.c.l.b16 %v6664
      %v9584 = vunpack.c.h.b16 %v6664
      %v9585 = vunpack.c.l.b16 %v6665
      %v9586 = vunpack.c.h.b16 %v6665
      %v9587 = vunpack.c.l.b16 %v6666
      %v9588 = vunpack.c.h.b16 %v6666
      %v9589 = vunpack.c.l.b16 %v6667
      %v9590 = vunpack.c.h.b16 %v6667
      %v9591 = vunpack.c.l.b16 %v6668
      %v9592 = vunpack.c.h.b16 %v6668
      %v9593 = vunpack.c.l.b16 %v6669
      %v9594 = vunpack.c.h.b16 %v6669
      %v9595 = vunpack.c.l.b16 %v6670
      %v9596 = vunpack.c.h.b16 %v6670
      %v9597 = vunpack.c.l.b16 %v6671
      %v9598 = vunpack.c.h.b16 %v6671
      %v9599 = vunpack.c.l.b16 %v6672
      %v9600 = vunpack.c.h.b16 %v6672
      %v9601 = vunpack.c.l.b16 %v6673
      %v9602 = vunpack.c.h.b16 %v6673
      %v9603 = vunpack.c.l.b16 %v6674
      %v9604 = vunpack.c.h.b16 %v6674
      %v9605 = vunpack.c.l.b16 %v6675
      %v9606 = vunpack.c.h.b16 %v6675
      %v9607 = vunpack.c.l.b16 %v6676
      %v9608 = vunpack.c.h.b16 %v6676
      %v9609 = vunpack.c.l.b16 %v6677
      %v9610 = vunpack.c.h.b16 %v6677
      %v9611 = vunpack.c.l.b16 %v6678
      %v9612 = vunpack.c.h.b16 %v6678
      %v9613 = vunpack.c.l.b16 %v6679
      %v9614 = vunpack.c.h.b16 %v6679
      %v9615 = vunpack.c.l.b16 %v6680
      %v9616 = vunpack.c.h.b16 %v6680
      %v9617 = vunpack.c.l.b16 %v6681
      %v9618 = vunpack.c.h.b16 %v6681
      %v9619 = vunpack.c.l.b16 %v6682
      %v9620 = vunpack.c.h.b16 %v6682
      %v9621 = vunpack.c.l.b16 %v6683
      %v9622 = vunpack.c.h.b16 %v6683
      %v9623 = vunpack.c.l.b16 %v6684
      %v9624 = vunpack.c.h.b16 %v6684
      %v9625 = vunpack.c.l.b16 %v6685
      %v9626 = vunpack.c.h.b16 %v6685
      %v9627 = vunpack.c.l.b16 %v6686
      %v9628 = vunpack.c.h.b16 %v6686
      %v9629 = vunpack.c.l.b16 %v6687
      %v9630 = vunpack.c.h.b16 %v6687
      %v9631 = vunpack.c.l.b16 %v6688
      %v9632 = vunpack.c.h.b16 %v6688
      %v9633 = vunpack.c.l.b16 %v6689
      %v9634 = vunpack.c.h.b16 %v6689
      %v9635 = vunpack.c.l.b16 %v6690
      %v9636 = vunpack.c.h.b16 %v6690
      %v9637 = vunpack.c.l.b16 %v6691
      %v9638 = vunpack.c.h.b16 %v6691
      %v9639 = vunpack.c.l.b16 %v6692
      %v9640 = vunpack.c.h.b16 %v6692
      %v9641 = vunpack.c.l.b16 %v6693
      %v9642 = vunpack.c.h.b16 %v6693
      %v9643 = vunpack.c.l.b16 %v6694
      %v9644 = vunpack.c.h.b16 %v6694
      %v9645 = vunpack.c.l.b16 %v6695
      %v9646 = vunpack.c.h.b16 %v6695
      %v9647 = vunpack.c.l.b16 %v6696
      %v9648 = vunpack.c.h.b16 %v6696
      %v9649 = vunpack.c.l.b16 %v6697
      %v9650 = vunpack.c.h.b16 %v6697
      %v9651 = vunpack.c.l.b16 %v6698
      %v9652 = vunpack.c.h.b16 %v6698
      %v9653 = vunpack.c.l.b16 %v6699
      %v9654 = vunpack.c.h.b16 %v6699
      %v9655 = vunpack.c.l.b16 %v6700
      %v9656 = vunpack.c.h.b16 %v6700
      %v9657 = vunpack.c.l.b16 %v6701
      %v9658 = vunpack.c.h.b16 %v6701
      %v9659 = vunpack.c.l.b16 %v6702
      %v9660 = vunpack.c.h.b16 %v6702
      %v9661 = vunpack.c.l.b16 %v6703
      %v9662 = vunpack.c.h.b16 %v6703
      %v9663 = vunpack.c.l.b16 %v6704
      %v9664 = vunpack.c.h.b16 %v6704
      %v9665 = vunpack.c.l.b16 %v6705
      %v9666 = vunpack.c.h.b16 %v6705
      %v9667 = vunpack.c.l.b16 %v6706
      %v9668 = vunpack.c.h.b16 %v6706
      %v9669 = vunpack.c.l.b16 %v6707
      %v9670 = vunpack.c.h.b16 %v6707
      %v9671 = vunpack.c.l.b16 %v6708
      %v9672 = vunpack.c.h.b16 %v6708
      %v9673 = vunpack.c.l.b16 %v6709
      %v9674 = vunpack.c.h.b16 %v6709
      %v9675 = vunpack.c.l.b16 %v6710
      %v9676 = vunpack.c.h.b16 %v6710
      %v9677 = vunpack.c.l.b16 %v6711
      %v9678 = vunpack.c.h.b16 %v6711
      %v9679 = vunpack.c.l.b16 %v6712
      %v9680 = vunpack.c.h.b16 %v6712
      %v9681 = vunpack.c.l.b16 %v6713
      %v9682 = vunpack.c.h.b16 %v6713
      %v9683 = vunpack.c.l.b16 %v6714
      %v9684 = vunpack.c.h.b16 %v6714
      %v9685 = vunpack.c.l.b16 %v6715
      %v9686 = vunpack.c.h.b16 %v6715
      %v9687 = vunpack.c.l.b16 %v6716
      %v9688 = vunpack.c.h.b16 %v6716
      %v9689 = vunpack.c.l.b16 %v6717
      %v9690 = vunpack.c.h.b16 %v6717
      %v9691 = vunpack.c.l.b16 %v6718
      %v9692 = vunpack.c.h.b16 %v6718
      %v9693 = vunpack.c.l.b16 %v6719
      %v9694 = vunpack.c.h.b16 %v6719
      %v9695 = vunpack.c.l.b16 %v6720
      %v9696 = vunpack.c.h.b16 %v6720
      %v9697 = vunpack.c.l.b16 %v6721
      %v9698 = vunpack.c.h.b16 %v6721
      %v9699 = vunpack.c.l.b16 %v6722
      %v9700 = vunpack.c.h.b16 %v6722
      %v9701 = vunpack.c.l.b16 %v6723
      %v9702 = vunpack.c.h.b16 %v6723
      %v9703 = vunpack.c.l.b16 %v6724
      %v9704 = vunpack.c.h.b16 %v6724
      %v9705 = vunpack.c.l.b16 %v6725
      %v9706 = vunpack.c.h.b16 %v6725
      %v9707 = vunpack.c.l.b16 %v6726
      %v9708 = vunpack.c.h.b16 %v6726
      %v9709 = vunpack.c.l.b16 %v6727
      %v9710 = vunpack.c.h.b16 %v6727
      %v9711 = vunpack.c.l.b16 %v6728
      %v9712 = vunpack.c.h.b16 %v6728
      %v9713 = vunpack.c.l.b16 %v6729
      %v9714 = vunpack.c.h.b16 %v6729
      %v9715 = vunpack.c.l.b16 %v6730
      %v9716 = vunpack.c.h.b16 %v6730
      %v9717 = vunpack.c.l.b16 %v6731
      %v9718 = vunpack.c.h.b16 %v6731
      %v9719 = vunpack.c.l.b16 %v6732
      %v9720 = vunpack.c.h.b16 %v6732
      %v9721 = vunpack.c.l.b16 %v6733
      %v9722 = vunpack.c.h.b16 %v6733
      %v9723 = vunpack.c.l.b16 %v6734
      %v9724 = vunpack.c.h.b16 %v6734
      %v9725 = vunpack.c.l.b16 %v6735
      %v9726 = vunpack.c.h.b16 %v6735
      %v9727 = vunpack.c.l.b16 %v6736
      %v9728 = vunpack.c.h.b16 %v6736
      %v9729 = vunpack.c.l.b16 %v6737
      %v9730 = vunpack.c.h.b16 %v6737
      %v9731 = vunpack.c.l.b16 %v6738
      %v9732 = vunpack.c.h.b16 %v6738
      %v9733 = vunpack.c.l.b16 %v6739
      %v9734 = vunpack.c.h.b16 %v6739
      %v9735 = vunpack.c.l.b16 %v6740
      %v9736 = vunpack.c.h.b16 %v6740
      %v9737 = vunpack.c.l.b16 %v6741
      %v9738 = vunpack.c.h.b16 %v6741
      %v9739 = vunpack.c.l.b16 %v6742
      %v9740 = vunpack.c.h.b16 %v6742
      %v9741 = vunpack.c.l.b16 %v6743
      %v9742 = vunpack.c.h.b16 %v6743
      %v9743 = vunpack.c.l.b16 %v6744
      %v9744 = vunpack.c.h.b16 %v6744
      %v9745 = vunpack.c.l.b16 %v6745
      %v9746 = vunpack.c.h.b16 %v6745
      %v9747 = vunpack.c.l.b16 %v6746
      %v9748 = vunpack.c.h.b16 %v6746
      %v9749 = vunpack.c.l.b16 %v6747
      %v9750 = vunpack.c.h.b16 %v6747
      %v9751 = vunpack.c.l.b16 %v6748
      %v9752 = vunpack.c.h.b16 %v6748
      %v9753 = vunpack.c.l.b16 %v6749
      %v9754 = vunpack.c.h.b16 %v6749
      %v9755 = vunpack.c.l.b16 %v6750
      %v9756 = vunpack.c.h.b16 %v6750
      %v9757 = vunpack.c.l.b16 %v6751
      %v9758 = vunpack.c.h.b16 %v6751
      %v9759 = vunpack.c.l.b16 %v6752
      %v9760 = vunpack.c.h.b16 %v6752
      %v9761 = vunpack.c.l.b16 %v6753
      %v9762 = vunpack.c.h.b16 %v6753
      %v9763 = vunpack.c.l.b16 %v6754
      %v9764 = vunpack.c.h.b16 %v6754
      %v9765 = vunpack.c.l.b16 %v6755
      %v9766 = vunpack.c.h.b16 %v6755
      %v9767 = vunpack.c.l.b16 %v6756
      %v9768 = vunpack.c.h.b16 %v6756
      %v9769 = vunpack.c.l.b16 %v6757
      %v9770 = vunpack.c.h.b16 %v6757
      %v9771 = vunpack.c.l.b16 %v6758
      %v9772 = vunpack.c.h.b16 %v6758
      %v9773 = vunpack.c.l.b16 %v6759
      %v9774 = vunpack.c.h.b16 %v6759
      %v9775 = vunpack.c.l.b16 %v6760
      %v9776 = vunpack.c.h.b16 %v6760
      %v9777 = vunpack.c.l.b16 %v6761
      %v9778 = vunpack.c.h.b16 %v6761
      %v9779 = vunpack.c.l.b16 %v6762
      %v9780 = vunpack.c.h.b16 %v6762
      %v9781 = vunpack.c.l.b16 %v6763
      %v9782 = vunpack.c.h.b16 %v6763
      %v9783 = vunpack.c.l.b16 %v6764
      %v9784 = vunpack.c.h.b16 %v6764
      %v9785 = vunpack.c.l.b16 %v6765
      %v9786 = vunpack.c.h.b16 %v6765
      %v9787 = vunpack.c.l.b16 %v6766
      %v9788 = vunpack.c.h.b16 %v6766
      %v9789 = vunpack.c.l.b16 %v6767
      %v9790 = vunpack.c.h.b16 %v6767
      %v9791 = vunpack.c.l.b16 %v6768
      %v9792 = vunpack.c.h.b16 %v6768
      %v9793 = vunpack.c.l.b16 %v6769
      %v9794 = vunpack.c.h.b16 %v6769
      %v9795 = vunpack.c.l.b16 %v6770
      %v9796 = vunpack.c.h.b16 %v6770
      %v9797 = vunpack.c.l.b16 %v6771
      %v9798 = vunpack.c.h.b16 %v6771
      %v9799 = vunpack.c.l.b16 %v6772
      %v9800 = vunpack.c.h.b16 %v6772
      %v9801 = vunpack.c.l.b16 %v6773
      %v9802 = vunpack.c.h.b16 %v6773
      %v9803 = vunpack.c.l.b16 %v6774
      %v9804 = vunpack.c.h.b16 %v6774
      %v9805 = vunpack.c.l.b16 %v6775
      %v9806 = vunpack.c.h.b16 %v6775
      %v9807 = vunpack.c.l.b16 %v6776
      %v9808 = vunpack.c.h.b16 %v6776
      %v9809 = vunpack.c.l.b16 %v6777
      %v9810 = vunpack.c.h.b16 %v6777
      %v9811 = vunpack.c.l.b16 %v6778
      %v9812 = vunpack.c.h.b16 %v6778
      %v9813 = vunpack.c.l.b16 %v6779
      %v9814 = vunpack.c.h.b16 %v6779
      %v9815 = vunpack.c.l.b16 %v6780
      %v9816 = vunpack.c.h.b16 %v6780
      %v9817 = vunpack.c.l.b16 %v6781
      %v9818 = vunpack.c.h.b16 %v6781
      %v9819 = vunpack.c.l.b16 %v6782
      %v9820 = vunpack.c.h.b16 %v6782
      %v9821 = vunpack.c.l.b16 %v6783
      %v9822 = vunpack.c.h.b16 %v6783
      %v9823 = vunpack.c.l.b16 %v6784
      %v9824 = vunpack.c.h.b16 %v6784
      %v9825 = vunpack.c.l.b16 %v6785
      %v9826 = vunpack.c.h.b16 %v6785
      %v9827 = vunpack.c.l.b16 %v6786
      %v9828 = vunpack.c.h.b16 %v6786
      %v9829 = vunpack.c.l.b16 %v6787
      %v9830 = vunpack.c.h.b16 %v6787
      %v9831 = vunpack.c.l.b16 %v6788
      %v9832 = vunpack.c.h.b16 %v6788
      %v9833 = vunpack.c.l.b16 %v6789
      %v9834 = vunpack.c.h.b16 %v6789
      %v9835 = vunpack.c.l.b16 %v6790
      %v9836 = vunpack.c.h.b16 %v6790
      %v9837 = vunpack.c.l.b16 %v6791
      %v9838 = vunpack.c.h.b16 %v6791
      %v9839 = vunpack.c.l.b16 %v6792
      %v9840 = vunpack.c.h.b16 %v6792
      %v9841 = vunpack.c.l.b16 %v6793
      %v9842 = vunpack.c.h.b16 %v6793
      %v9843 = vunpack.c.l.b16 %v6794
      %v9844 = vunpack.c.h.b16 %v6794
      %v9845 = vunpack.c.l.b16 %v6795
      %v9846 = vunpack.c.h.b16 %v6795
      %v9847 = vunpack.c.l.b16 %v6796
      %v9848 = vunpack.c.h.b16 %v6796
      %v9849 = vunpack.c.l.b16 %v6797
      %v9850 = vunpack.c.h.b16 %v6797
      %v9851 = vunpack.c.l.b16 %v6798
      %v9852 = vunpack.c.h.b16 %v6798
      %v9853 = vunpack.c.l.b16 %v6799
      %v9854 = vunpack.c.h.b16 %v6799
      %v9855 = vunpack.c.l.b16 %v6800
      %v9856 = vunpack.c.h.b16 %v6800
      %v9857 = vunpack.c.l.b16 %v6801
      %v9858 = vunpack.c.h.b16 %v6801
      %v9859 = vunpack.c.l.b16 %v6802
      %v9860 = vunpack.c.h.b16 %v6802
      %v9861 = vunpack.c.l.b16 %v6803
      %v9862 = vunpack.c.h.b16 %v6803
      %v9863 = vunpack.c.l.b16 %v6804
      %v9864 = vunpack.c.h.b16 %v6804
      %v9865 = vunpack.c.l.b16 %v6805
      %v9866 = vunpack.c.h.b16 %v6805
      %v9867 = vunpack.c.l.b16 %v6806
      %v9868 = vunpack.c.h.b16 %v6806
      %v9869 = vunpack.c.l.b16 %v6807
      %v9870 = vunpack.c.h.b16 %v6807
      %v9871 = vunpack.c.l.b16 %v6808
      %v9872 = vunpack.c.h.b16 %v6808
      %v9873 = vunpack.c.l.b16 %v6809
      %v9874 = vunpack.c.h.b16 %v6809
      %v9875 = vunpack.c.l.b16 %v6810
      %v9876 = vunpack.c.h.b16 %v6810
      %v9877 = vunpack.c.l.b16 %v6811
      %v9878 = vunpack.c.h.b16 %v6811
      %v9879 = vunpack.c.l.b16 %v6812
      %v9880 = vunpack.c.h.b16 %v6812
      %v9881 = vunpack.c.l.b16 %v6813
      %v9882 = vunpack.c.h.b16 %v6813
      %v9883 = vunpack.c.l.b16 %v6814
      %v9884 = vunpack.c.h.b16 %v6814
      %v9885 = vunpack.c.l.b16 %v6815
      %v9886 = vunpack.c.h.b16 %v6815
      %v9887 = vunpack.c.l.b16 %v6816
      %v9888 = vunpack.c.h.b16 %v6816
      %v9889 = vpack.c.b16 %v7845, %v7841
      %v9890 = vpack.c.b16 %v7846, %v7842
      %v9891 = vpack.c.b16 %v7847, %v7843
      %v9892 = vpack.c.b16 %v7848, %v7844
      %v9893 = vpack.c.b16 %v7853, %v7849
      %v9894 = vpack.c.b16 %v7854, %v7850
      %v9895 = vpack.c.b16 %v7855, %v7851
      %v9896 = vpack.c.b16 %v7856, %v7852
      %v9897 = vpack.c.b16 %v7861, %v7857
      %v9898 = vpack.c.b16 %v7862, %v7858
      %v9899 = vpack.c.b16 %v7863, %v7859
      %v9900 = vpack.c.b16 %v7864, %v7860
      %v9901 = vpack.c.b16 %v7869, %v7865
      %v9902 = vpack.c.b16 %v7870, %v7866
      %v9903 = vpack.c.b16 %v7871, %v7867
      %v9904 = vpack.c.b16 %v7872, %v7868
      %v9905 = vpack.c.b16 %v7877, %v7873
      %v9906 = vpack.c.b16 %v7878, %v7874
      %v9907 = vpack.c.b16 %v7879, %v7875
      %v9908 = vpack.c.b16 %v7880, %v7876
      %v9909 = vpack.c.b16 %v7885, %v7881
      %v9910 = vpack.c.b16 %v7886, %v7882
      %v9911 = vpack.c.b16 %v7887, %v7883
      %v9912 = vpack.c.b16 %v7888, %v7884
      %v9913 = vpack.c.b16 %v7893, %v7889
      %v9914 = vpack.c.b16 %v7894, %v7890
      %v9915 = vpack.c.b16 %v7895, %v7891
      %v9916 = vpack.c.b16 %v7896, %v7892
      %v9917 = vpack.c.b16 %v7901, %v7897
      %v9918 = vpack.c.b16 %v7902, %v7898
      %v9919 = vpack.c.b16 %v7903, %v7899
      %v9920 = vpack.c.b16 %v7904, %v7900
      %v9921 = vpack.c.b16 %v7909, %v7905
      %v9922 = vpack.c.b16 %v7910, %v7906
      %v9923 = vpack.c.b16 %v7911, %v7907
      %v9924 = vpack.c.b16 %v7912, %v7908
      %v9925 = vpack.c.b16 %v7917, %v7913
      %v9926 = vpack.c.b16 %v7918, %v7914
      %v9927 = vpack.c.b16 %v7919, %v7915
      %v9928 = vpack.c.b16 %v7920, %v7916
      %v9929 = vpack.c.b16 %v7925, %v7921
      %v9930 = vpack.c.b16 %v7926, %v7922
      %v9931 = vpack.c.b16 %v7927, %v7923
      %v9932 = vpack.c.b16 %v7928, %v7924
      %v9933 = vpack.c.b16 %v7933, %v7929
      %v9934 = vpack.c.b16 %v7934, %v7930
      %v9935 = vpack.c.b16 %v7935, %v7931
      %v9936 = vpack.c.b16 %v7936, %v7932
      %v9937 = vpack.c.b16 %v7941, %v7937
      %v9938 = vpack.c.b16 %v7942, %v7938
      %v9939 = vpack.c.b16 %v7943, %v7939
      %v9940 = vpack.c.b16 %v7944, %v7940
      %v9941 = vpack.c.b16 %v7949, %v7945
      %v9942 = vpack.c.b16 %v7950, %v7946
      %v9943 = vpack.c.b16 %v7951, %v7947
      %v9944 = vpack.c.b16 %v7952, %v7948
      %v9945 = vpack.c.b16 %v7957, %v7953
      %v9946 = vpack.c.b16 %v7958, %v7954
      %v9947 = vpack.c.b16 %v7959, %v7955
      %v9948 = vpack.c.b16 %v7960, %v7956
      %v9949 = vpack.c.b16 %v7965, %v7961
      %v9950 = vpack.c.b16 %v7966, %v7962
      %v9951 = vpack.c.b16 %v7967, %v7963
      %v9952 = vpack.c.b16 %v7968, %v7964
      %v9953 = vpack.c.b16 %v7973, %v7969
      %v9954 = vpack.c.b16 %v7974, %v7970
      %v9955 = vpack.c.b16 %v7975, %v7971
      %v9956 = vpack.c.b16 %v7976, %v7972
      %v9957 = vpack.c.b16 %v7981, %v7977
      %v9958 = vpack.c.b16 %v7982, %v7978
      %v9959 = vpack.c.b16 %v7983, %v7979
      %v9960 = vpack.c.b16 %v7984, %v7980
      %v9961 = vpack.c.b16 %v7989, %v7985
      %v9962 = vpack.c.b16 %v7990, %v7986
      %v9963 = vpack.c.b16 %v7991, %v7987
      %v9964 = vpack.c.b16 %v7992, %v7988
      %v9965 = vpack.c.b16 %v7997, %v7993
      %v9966 = vpack.c.b16 %v7998, %v7994
      %v9967 = vpack.c.b16 %v7999, %v7995
      %v9968 = vpack.c.b16 %v8000, %v7996
      %v9969 = vpack.c.b16 %v8005, %v8001
      %v9970 = vpack.c.b16 %v8006, %v8002
      %v9971 = vpack.c.b16 %v8007, %v8003
      %v9972 = vpack.c.b16 %v8008, %v8004
      %v9973 = vpack.c.b16 %v8013, %v8009
      %v9974 = vpack.c.b16 %v8014, %v8010
      %v9975 = vpack.c.b16 %v8015, %v8011
      %v9976 = vpack.c.b16 %v8016, %v8012
      %v9977 = vpack.c.b16 %v8021, %v8017
      %v9978 = vpack.c.b16 %v8022, %v8018
      %v9979 = vpack.c.b16 %v8023, %v8019
      %v9980 = vpack.c.b16 %v8024, %v8020
      %v9981 = vpack.c.b16 %v8029, %v8025
      %v9982 = vpack.c.b16 %v8030, %v8026
      %v9983 = vpack.c.b16 %v8031, %v8027
      %v9984 = vpack.c.b16 %v8032, %v8028
      %v9985 = vpack.c.b16 %v8037, %v8033
      %v9986 = vpack.c.b16 %v8038, %v8034
      %v9987 = vpack.c.b16 %v8039, %v8035
      %v9988 = vpack.c.b16 %v8040, %v8036
      %v9989 = vpack.c.b16 %v8045, %v8041
      %v9990 = vpack.c.b16 %v8046, %v8042
      %v9991 = vpack.c.b16 %v8047, %v8043
      %v9992 = vpack.c.b16 %v8048, %v8044
      %v9993 = vpack.c.b16 %v8053, %v8049
      %v9994 = vpack.c.b16 %v8054, %v8050
      %v9995 = vpack.c.b16 %v8055, %v8051
      %v9996 = vpack.c.b16 %v8056, %v8052
      %v9997 = vpack.c.b16 %v8061, %v8057
      %v9998 = vpack.c.b16 %v8062, %v8058
      %v9999 = vpack.c.b16 %v8063, %v8059
      %v10000 = vpack.c.b16 %v8064, %v8060
      %v10001 = vpack.c.b16 %v8069, %v8065
      %v10002 = vpack.c.b16 %v8070, %v8066
      %v10003 = vpack.c.b16 %v8071, %v8067
      %v10004 = vpack.c.b16 %v8072, %v8068
      %v10005 = vpack.c.b16 %v8077, %v8073
      %v10006 = vpack.c.b16 %v8078, %v8074
      %v10007 = vpack.c.b16 %v8079, %v8075
      %v10008 = vpack.c.b16 %v8080, %v8076
      %v10009 = vpack.c.b16 %v8085, %v8081
      %v10010 = vpack.c.b16 %v8086, %v8082
      %v10011 = vpack.c.b16 %v8087, %v8083
      %v10012 = vpack.c.b16 %v8088, %v8084
      %v10013 = vpack.c.b16 %v8093, %v8089
      %v10014 = vpack.c.b16 %v8094, %v8090
      %v10015 = vpack.c.b16 %v8095, %v8091
      %v10016 = vpack.c.b16 %v8096, %v8092
      %v10017 = vpack.c.b16 %v8101, %v8097
      %v10018 = vpack.c.b16 %v8102, %v8098
      %v10019 = vpack.c.b16 %v8103, %v8099
      %v10020 = vpack.c.b16 %v8104, %v8100
      %v10021 = vpack.c.b16 %v8109, %v8105
      %v10022 = vpack.c.b16 %v8110, %v8106
      %v10023 = vpack.c.b16 %v8111, %v8107
      %v10024 = vpack.c.b16 %v8112, %v8108
      %v10025 = vpack.c.b16 %v8117, %v8113
      %v10026 = vpack.c.b16 %v8118, %v8114
      %v10027 = vpack.c.b16 %v8119, %v8115
      %v10028 = vpack.c.b16 %v8120, %v8116
      %v10029 = vpack.c.b16 %v8125, %v8121
      %v10030 = vpack.c.b16 %v8126, %v8122
      %v10031 = vpack.c.b16 %v8127, %v8123
      %v10032 = vpack.c.b16 %v8128, %v8124
      %v10033 = vpack.c.b16 %v8133, %v8129
      %v10034 = vpack.c.b16 %v8134, %v8130
      %v10035 = vpack.c.b16 %v8135, %v8131
      %v10036 = vpack.c.b16 %v8136, %v8132
      %v10037 = vpack.c.b16 %v8141, %v8137
      %v10038 = vpack.c.b16 %v8142, %v8138
      %v10039 = vpack.c.b16 %v8143, %v8139
      %v10040 = vpack.c.b16 %v8144, %v8140
      %v10041 = vpack.c.b16 %v8149, %v8145
      %v10042 = vpack.c.b16 %v8150, %v8146
      %v10043 = vpack.c.b16 %v8151, %v8147
      %v10044 = vpack.c.b16 %v8152, %v8148
      %v10045 = vpack.c.b16 %v8157, %v8153
      %v10046 = vpack.c.b16 %v8158, %v8154
      %v10047 = vpack.c.b16 %v8159, %v8155
      %v10048 = vpack.c.b16 %v8160, %v8156
      %v10049 = vpack.c.b16 %v8165, %v8161
      %v10050 = vpack.c.b16 %v8166, %v8162
      %v10051 = vpack.c.b16 %v8167, %v8163
      %v10052 = vpack.c.b16 %v8168, %v8164
      %v10053 = vpack.c.b16 %v8173, %v8169
      %v10054 = vpack.c.b16 %v8174, %v8170
      %v10055 = vpack.c.b16 %v8175, %v8171
      %v10056 = vpack.c.b16 %v8176, %v8172
      %v10057 = vpack.c.b16 %v8181, %v8177
      %v10058 = vpack.c.b16 %v8182, %v8178
      %v10059 = vpack.c.b16 %v8183, %v8179
      %v10060 = vpack.c.b16 %v8184, %v8180
      %v10061 = vpack.c.b16 %v8189, %v8185
      %v10062 = vpack.c.b16 %v8190, %v8186
      %v10063 = vpack.c.b16 %v8191, %v8187
      %v10064 = vpack.c.b16 %v8192, %v8188
      %v10065 = vpack.c.b16 %v8197, %v8193
      %v10066 = vpack.c.b16 %v8198, %v8194
      %v10067 = vpack.c.b16 %v8199, %v8195
      %v10068 = vpack.c.b16 %v8200, %v8196
      %v10069 = vpack.c.b16 %v8205, %v8201
      %v10070 = vpack.c.b16 %v8206, %v8202
      %v10071 = vpack.c.b16 %v8207, %v8203
      %v10072 = vpack.c.b16 %v8208, %v8204
      %v10073 = vpack.c.b16 %v8213, %v8209
      %v10074 = vpack.c.b16 %v8214, %v8210
      %v10075 = vpack.c.b16 %v8215, %v8211
      %v10076 = vpack.c.b16 %v8216, %v8212
      %v10077 = vpack.c.b16 %v8221, %v8217
      %v10078 = vpack.c.b16 %v8222, %v8218
      %v10079 = vpack.c.b16 %v8223, %v8219
      %v10080 = vpack.c.b16 %v8224, %v8220
      %v10081 = vpack.c.b16 %v8229, %v8225
      %v10082 = vpack.c.b16 %v8230, %v8226
      %v10083 = vpack.c.b16 %v8231, %v8227
      %v10084 = vpack.c.b16 %v8232, %v8228
      %v10085 = vpack.c.b16 %v8237, %v8233
      %v10086 = vpack.c.b16 %v8238, %v8234
      %v10087 = vpack.c.b16 %v8239, %v8235
      %v10088 = vpack.c.b16 %v8240, %v8236
      %v10089 = vpack.c.b16 %v8245, %v8241
      %v10090 = vpack.c.b16 %v8246, %v8242
      %v10091 = vpack.c.b16 %v8247, %v8243
      %v10092 = vpack.c.b16 %v8248, %v8244
      %v10093 = vpack.c.b16 %v8253, %v8249
      %v10094 = vpack.c.b16 %v8254, %v8250
      %v10095 = vpack.c.b16 %v8255, %v8251
      %v10096 = vpack.c.b16 %v8256, %v8252
      %v10097 = vpack.c.b16 %v8261, %v8257
      %v10098 = vpack.c.b16 %v8262, %v8258
      %v10099 = vpack.c.b16 %v8263, %v8259
      %v10100 = vpack.c.b16 %v8264, %v8260
      %v10101 = vpack.c.b16 %v8269, %v8265
      %v10102 = vpack.c.b16 %v8270, %v8266
      %v10103 = vpack.c.b16 %v8271, %v8267
      %v10104 = vpack.c.b16 %v8272, %v8268
      %v10105 = vpack.c.b16 %v8277, %v8273
      %v10106 = vpack.c.b16 %v8278, %v8274
      %v10107 = vpack.c.b16 %v8279, %v8275
      %v10108 = vpack.c.b16 %v8280, %v8276
      %v10109 = vpack.c.b16 %v8285, %v8281
      %v10110 = vpack.c.b16 %v8286, %v8282
      %v10111 = vpack.c.b16 %v8287, %v8283
      %v10112 = vpack.c.b16 %v8288, %v8284
      %v10113 = vpack.c.b16 %v8293, %v8289
      %v10114 = vpack.c.b16 %v8294, %v8290
      %v10115 = vpack.c.b16 %v8295, %v8291
      %v10116 = vpack.c.b16 %v8296, %v8292
      %v10117 = vpack.c.b16 %v8301, %v8297
      %v10118 = vpack.c.b16 %v8302, %v8298
      %v10119 = vpack.c.b16 %v8303, %v8299
      %v10120 = vpack.c.b16 %v8304, %v8300
      %v10121 = vpack.c.b16 %v8309, %v8305
      %v10122 = vpack.c.b16 %v8310, %v8306
      %v10123 = vpack.c.b16 %v8311, %v8307
      %v10124 = vpack.c.b16 %v8312, %v8308
      %v10125 = vpack.c.b16 %v8317, %v8313
      %v10126 = vpack.c.b16 %v8318, %v8314
      %v10127 = vpack.c.b16 %v8319, %v8315
      %v10128 = vpack.c.b16 %v8320, %v8316
      %v10129 = vpack.c.b16 %v8325, %v8321
      %v10130 = vpack.c.b16 %v8326, %v8322
      %v10131 = vpack.c.b16 %v8327, %v8323
      %v10132 = vpack.c.b16 %v8328, %v8324
      %v10133 = vpack.c.b16 %v8333, %v8329
      %v10134 = vpack.c.b16 %v8334, %v8330
      %v10135 = vpack.c.b16 %v8335, %v8331
      %v10136 = vpack.c.b16 %v8336, %v8332
      %v10137 = vpack.c.b16 %v8341, %v8337
      %v10138 = vpack.c.b16 %v8342, %v8338
      %v10139 = vpack.c.b16 %v8343, %v8339
      %v10140 = vpack.c.b16 %v8344, %v8340
      %v10141 = vpack.c.b16 %v8349, %v8345
      %v10142 = vpack.c.b16 %v8350, %v8346
      %v10143 = vpack.c.b16 %v8351, %v8347
      %v10144 = vpack.c.b16 %v8352, %v8348
      %v10145 = vpack.c.b16 %v8357, %v8353
      %v10146 = vpack.c.b16 %v8358, %v8354
      %v10147 = vpack.c.b16 %v8359, %v8355
      %v10148 = vpack.c.b16 %v8360, %v8356
      %v10149 = vpack.c.b16 %v8365, %v8361
      %v10150 = vpack.c.b16 %v8366, %v8362
      %v10151 = vpack.c.b16 %v8367, %v8363
      %v10152 = vpack.c.b16 %v8368, %v8364
      %v10153 = vpack.c.b16 %v8373, %v8369
      %v10154 = vpack.c.b16 %v8374, %v8370
      %v10155 = vpack.c.b16 %v8375, %v8371
      %v10156 = vpack.c.b16 %v8376, %v8372
      %v10157 = vpack.c.b16 %v8381, %v8377
      %v10158 = vpack.c.b16 %v8382, %v8378
      %v10159 = vpack.c.b16 %v8383, %v8379
      %v10160 = vpack.c.b16 %v8384, %v8380
      %v10161 = vpack.c.b16 %v8389, %v8385
      %v10162 = vpack.c.b16 %v8390, %v8386
      %v10163 = vpack.c.b16 %v8391, %v8387
      %v10164 = vpack.c.b16 %v8392, %v8388
      %v10165 = vpack.c.b16 %v8397, %v8393
      %v10166 = vpack.c.b16 %v8398, %v8394
      %v10167 = vpack.c.b16 %v8399, %v8395
      %v10168 = vpack.c.b16 %v8400, %v8396
      %v10169 = vpack.c.b16 %v8405, %v8401
      %v10170 = vpack.c.b16 %v8406, %v8402
      %v10171 = vpack.c.b16 %v8407, %v8403
      %v10172 = vpack.c.b16 %v8408, %v8404
      %v10173 = vpack.c.b16 %v8413, %v8409
      %v10174 = vpack.c.b16 %v8414, %v8410
      %v10175 = vpack.c.b16 %v8415, %v8411
      %v10176 = vpack.c.b16 %v8416, %v8412
      %v10177 = vpack.c.b16 %v8421, %v8417
      %v10178 = vpack.c.b16 %v8422, %v8418
      %v10179 = vpack.c.b16 %v8423, %v8419
      %v10180 = vpack.c.b16 %v8424, %v8420
      %v10181 = vpack.c.b16 %v8429, %v8425
      %v10182 = vpack.c.b16 %v8430, %v8426
      %v10183 = vpack.c.b16 %v8431, %v8427
      %v10184 = vpack.c.b16 %v8432, %v8428
      %v10185 = vpack.c.b16 %v8437, %v8433
      %v10186 = vpack.c.b16 %v8438, %v8434
      %v10187 = vpack.c.b16 %v8439, %v8435
      %v10188 = vpack.c.b16 %v8440, %v8436
      %v10189 = vpack.c.b16 %v8445, %v8441
      %v10190 = vpack.c.b16 %v8446, %v8442
      %v10191 = vpack.c.b16 %v8447, %v8443
      %v10192 = vpack.c.b16 %v8448, %v8444
      %v10193 = vpack.c.b16 %v8453, %v8449
      %v10194 = vpack.c.b16 %v8454, %v8450
      %v10195 = vpack.c.b16 %v8455, %v8451
      %v10196 = vpack.c.b16 %v8456, %v8452
      %v10197 = vpack.c.b16 %v8461, %v8457
      %v10198 = vpack.c.b16 %v8462, %v8458
      %v10199 = vpack.c.b16 %v8463, %v8459
      %v10200 = vpack.c.b16 %v8464, %v8460
      %v10201 = vpack.c.b16 %v8469, %v8465
      %v10202 = vpack.c.b16 %v8470, %v8466
      %v10203 = vpack.c.b16 %v8471, %v8467
      %v10204 = vpack.c.b16 %v8472, %v8468
      %v10205 = vpack.c.b16 %v8477, %v8473
      %v10206 = vpack.c.b16 %v8478, %v8474
      %v10207 = vpack.c.b16 %v8479, %v8475
      %v10208 = vpack.c.b16 %v8480, %v8476
      %v10209 = vpack.c.b16 %v8485, %v8481
      %v10210 = vpack.c.b16 %v8486, %v8482
      %v10211 = vpack.c.b16 %v8487, %v8483
      %v10212 = vpack.c.b16 %v8488, %v8484
      %v10213 = vpack.c.b16 %v8493, %v8489
      %v10214 = vpack.c.b16 %v8494, %v8490
      %v10215 = vpack.c.b16 %v8495, %v8491
      %v10216 = vpack.c.b16 %v8496, %v8492
      %v10217 = vpack.c.b16 %v8501, %v8497
      %v10218 = vpack.c.b16 %v8502, %v8498
      %v10219 = vpack.c.b16 %v8503, %v8499
      %v10220 = vpack.c.b16 %v8504, %v8500
      %v10221 = vpack.c.b16 %v8509, %v8505
      %v10222 = vpack.c.b16 %v8510, %v8506
      %v10223 = vpack.c.b16 %v8511, %v8507
      %v10224 = vpack.c.b16 %v8512, %v8508
      %v10225 = vpack.c.b16 %v8517, %v8513
      %v10226 = vpack.c.b16 %v8518, %v8514
      %v10227 = vpack.c.b16 %v8519, %v8515
      %v10228 = vpack.c.b16 %v8520, %v8516
      %v10229 = vpack.c.b16 %v8525, %v8521
      %v10230 = vpack.c.b16 %v8526, %v8522
      %v10231 = vpack.c.b16 %v8527, %v8523
      %v10232 = vpack.c.b16 %v8528, %v8524
      %v10233 = vpack.c.b16 %v8533, %v8529
      %v10234 = vpack.c.b16 %v8534, %v8530
      %v10235 = vpack.c.b16 %v8535, %v8531
      %v10236 = vpack.c.b16 %v8536, %v8532
      %v10237 = vpack.c.b16 %v8541, %v8537
      %v10238 = vpack.c.b16 %v8542, %v8538
      %v10239 = vpack.c.b16 %v8543, %v8539
      %v10240 = vpack.c.b16 %v8544, %v8540
      %v10241 = vpack.c.b16 %v8549, %v8545
      %v10242 = vpack.c.b16 %v8550, %v8546
      %v10243 = vpack.c.b16 %v8551, %v8547
      %v10244 = vpack.c.b16 %v8552, %v8548
      %v10245 = vpack.c.b16 %v8557, %v8553
      %v10246 = vpack.c.b16 %v8558, %v8554
      %v10247 = vpack.c.b16 %v8559, %v8555
      %v10248 = vpack.c.b16 %v8560, %v8556
      %v10249 = vpack.c.b16 %v8565, %v8561
      %v10250 = vpack.c.b16 %v8566, %v8562
      %v10251 = vpack.c.b16 %v8567, %v8563
      %v10252 = vpack.c.b16 %v8568, %v8564
      %v10253 = vpack.c.b16 %v8573, %v8569
      %v10254 = vpack.c.b16 %v8574, %v8570
      %v10255 = vpack.c.b16 %v8575, %v8571
      %v10256 = vpack.c.b16 %v8576, %v8572
      %v10257 = vpack.c.b16 %v8581, %v8577
      %v10258 = vpack.c.b16 %v8582, %v8578
      %v10259 = vpack.c.b16 %v8583, %v8579
      %v10260 = vpack.c.b16 %v8584, %v8580
      %v10261 = vpack.c.b16 %v8589, %v8585
      %v10262 = vpack.c.b16 %v8590, %v8586
      %v10263 = vpack.c.b16 %v8591, %v8587
      %v10264 = vpack.c.b16 %v8592, %v8588
      %v10265 = vpack.c.b16 %v8597, %v8593
      %v10266 = vpack.c.b16 %v8598, %v8594
      %v10267 = vpack.c.b16 %v8599, %v8595
      %v10268 = vpack.c.b16 %v8600, %v8596
      %v10269 = vpack.c.b16 %v8605, %v8601
      %v10270 = vpack.c.b16 %v8606, %v8602
      %v10271 = vpack.c.b16 %v8607, %v8603
      %v10272 = vpack.c.b16 %v8608, %v8604
      %v10273 = vpack.c.b16 %v8613, %v8609
      %v10274 = vpack.c.b16 %v8614, %v8610
      %v10275 = vpack.c.b16 %v8615, %v8611
      %v10276 = vpack.c.b16 %v8616, %v8612
      %v10277 = vpack.c.b16 %v8621, %v8617
      %v10278 = vpack.c.b16 %v8622, %v8618
      %v10279 = vpack.c.b16 %v8623, %v8619
      %v10280 = vpack.c.b16 %v8624, %v8620
      %v10281 = vpack.c.b16 %v8629, %v8625
      %v10282 = vpack.c.b16 %v8630, %v8626
      %v10283 = vpack.c.b16 %v8631, %v8627
      %v10284 = vpack.c.b16 %v8632, %v8628
      %v10285 = vpack.c.b16 %v8637, %v8633
      %v10286 = vpack.c.b16 %v8638, %v8634
      %v10287 = vpack.c.b16 %v8639, %v8635
      %v10288 = vpack.c.b16 %v8640, %v8636
      %v10289 = vpack.c.b16 %v8645, %v8641
      %v10290 = vpack.c.b16 %v8646, %v8642
      %v10291 = vpack.c.b16 %v8647, %v8643
      %v10292 = vpack.c.b16 %v8648, %v8644
      %v10293 = vpack.c.b16 %v8653, %v8649
      %v10294 = vpack.c.b16 %v8654, %v8650
      %v10295 = vpack.c.b16 %v8655, %v8651
      %v10296 = vpack.c.b16 %v8656, %v8652
      %v10297 = vpack.c.b16 %v8661, %v8657
      %v10298 = vpack.c.b16 %v8662, %v8658
      %v10299 = vpack.c.b16 %v8663, %v8659
      %v10300 = vpack.c.b16 %v8664, %v8660
      %v10301 = vpack.c.b16 %v8669, %v8665
      %v10302 = vpack.c.b16 %v8670, %v8666
      %v10303 = vpack.c.b16 %v8671, %v8667
      %v10304 = vpack.c.b16 %v8672, %v8668
      %v10305 = vpack.c.b16 %v8677, %v8673
      %v10306 = vpack.c.b16 %v8678, %v8674
      %v10307 = vpack.c.b16 %v8679, %v8675
      %v10308 = vpack.c.b16 %v8680, %v8676
      %v10309 = vpack.c.b16 %v8685, %v8681
      %v10310 = vpack.c.b16 %v8686, %v8682
      %v10311 = vpack.c.b16 %v8687, %v8683
      %v10312 = vpack.c.b16 %v8688, %v8684
      %v10313 = vpack.c.b16 %v8693, %v8689
      %v10314 = vpack.c.b16 %v8694, %v8690
      %v10315 = vpack.c.b16 %v8695, %v8691
      %v10316 = vpack.c.b16 %v8696, %v8692
      %v10317 = vpack.c.b16 %v8701, %v8697
      %v10318 = vpack.c.b16 %v8702, %v8698
      %v10319 = vpack.c.b16 %v8703, %v8699
      %v10320 = vpack.c.b16 %v8704, %v8700
      %v10321 = vpack.c.b16 %v8709, %v8705
      %v10322 = vpack.c.b16 %v8710, %v8706
      %v10323 = vpack.c.b16 %v8711, %v8707
      %v10324 = vpack.c.b16 %v8712, %v8708
      %v10325 = vpack.c.b16 %v8717, %v8713
      %v10326 = vpack.c.b16 %v8718, %v8714
      %v10327 = vpack.c.b16 %v8719, %v8715
      %v10328 = vpack.c.b16 %v8720, %v8716
      %v10329 = vpack.c.b16 %v8725, %v8721
      %v10330 = vpack.c.b16 %v8726, %v8722
      %v10331 = vpack.c.b16 %v8727, %v8723
      %v10332 = vpack.c.b16 %v8728, %v8724
      %v10333 = vpack.c.b16 %v8733, %v8729
      %v10334 = vpack.c.b16 %v8734, %v8730
      %v10335 = vpack.c.b16 %v8735, %v8731
      %v10336 = vpack.c.b16 %v8736, %v8732
      %v10337 = vpack.c.b16 %v8741, %v8737
      %v10338 = vpack.c.b16 %v8742, %v8738
      %v10339 = vpack.c.b16 %v8743, %v8739
      %v10340 = vpack.c.b16 %v8744, %v8740
      %v10341 = vpack.c.b16 %v8749, %v8745
      %v10342 = vpack.c.b16 %v8750, %v8746
      %v10343 = vpack.c.b16 %v8751, %v8747
      %v10344 = vpack.c.b16 %v8752, %v8748
      %v10345 = vpack.c.b16 %v8757, %v8753
      %v10346 = vpack.c.b16 %v8758, %v8754
      %v10347 = vpack.c.b16 %v8759, %v8755
      %v10348 = vpack.c.b16 %v8760, %v8756
      %v10349 = vpack.c.b16 %v8765, %v8761
      %v10350 = vpack.c.b16 %v8766, %v8762
      %v10351 = vpack.c.b16 %v8767, %v8763
      %v10352 = vpack.c.b16 %v8768, %v8764
      %v10353 = vpack.c.b16 %v8773, %v8769
      %v10354 = vpack.c.b16 %v8774, %v8770
      %v10355 = vpack.c.b16 %v8775, %v8771
      %v10356 = vpack.c.b16 %v8776, %v8772
      %v10357 = vpack.c.b16 %v8781, %v8777
      %v10358 = vpack.c.b16 %v8782, %v8778
      %v10359 = vpack.c.b16 %v8783, %v8779
      %v10360 = vpack.c.b16 %v8784, %v8780
      %v10361 = vpack.c.b16 %v8789, %v8785
      %v10362 = vpack.c.b16 %v8790, %v8786
      %v10363 = vpack.c.b16 %v8791, %v8787
      %v10364 = vpack.c.b16 %v8792, %v8788
      %v10365 = vpack.c.b16 %v8797, %v8793
      %v10366 = vpack.c.b16 %v8798, %v8794
      %v10367 = vpack.c.b16 %v8799, %v8795
      %v10368 = vpack.c.b16 %v8800, %v8796
      %v10369 = vpack.c.b16 %v8805, %v8801
      %v10370 = vpack.c.b16 %v8806, %v8802
      %v10371 = vpack.c.b16 %v8807, %v8803
      %v10372 = vpack.c.b16 %v8808, %v8804
      %v10373 = vpack.c.b16 %v8813, %v8809
      %v10374 = vpack.c.b16 %v8814, %v8810
      %v10375 = vpack.c.b16 %v8815, %v8811
      %v10376 = vpack.c.b16 %v8816, %v8812
      %v10377 = vpack.c.b16 %v8821, %v8817
      %v10378 = vpack.c.b16 %v8822, %v8818
      %v10379 = vpack.c.b16 %v8823, %v8819
      %v10380 = vpack.c.b16 %v8824, %v8820
      %v10381 = vpack.c.b16 %v8829, %v8825
      %v10382 = vpack.c.b16 %v8830, %v8826
      %v10383 = vpack.c.b16 %v8831, %v8827
      %v10384 = vpack.c.b16 %v8832, %v8828
      %v10385 = vpack.c.b16 %v8837, %v8833
      %v10386 = vpack.c.b16 %v8838, %v8834
      %v10387 = vpack.c.b16 %v8839, %v8835
      %v10388 = vpack.c.b16 %v8840, %v8836
      %v10389 = vpack.c.b16 %v8845, %v8841
      %v10390 = vpack.c.b16 %v8846, %v8842
      %v10391 = vpack.c.b16 %v8847, %v8843
      %v10392 = vpack.c.b16 %v8848, %v8844
      %v10393 = vpack.c.b16 %v8853, %v8849
      %v10394 = vpack.c.b16 %v8854, %v8850
      %v10395 = vpack.c.b16 %v8855, %v8851
      %v10396 = vpack.c.b16 %v8856, %v8852
      %v10397 = vpack.c.b16 %v8861, %v8857
      %v10398 = vpack.c.b16 %v8862, %v8858
      %v10399 = vpack.c.b16 %v8863, %v8859
      %v10400 = vpack.c.b16 %v8864, %v8860
      %v10401 = vpack.c.b16 %v8869, %v8865
      %v10402 = vpack.c.b16 %v8870, %v8866
      %v10403 = vpack.c.b16 %v8871, %v8867
      %v10404 = vpack.c.b16 %v8872, %v8868
      %v10405 = vpack.c.b16 %v8877, %v8873
      %v10406 = vpack.c.b16 %v8878, %v8874
      %v10407 = vpack.c.b16 %v8879, %v8875
      %v10408 = vpack.c.b16 %v8880, %v8876
      %v10409 = vpack.c.b16 %v8885, %v8881
      %v10410 = vpack.c.b16 %v8886, %v8882
      %v10411 = vpack.c.b16 %v8887, %v8883
      %v10412 = vpack.c.b16 %v8888, %v8884
      %v10413 = vpack.c.b16 %v8893, %v8889
      %v10414 = vpack.c.b16 %v8894, %v8890
      %v10415 = vpack.c.b16 %v8895, %v8891
      %v10416 = vpack.c.b16 %v8896, %v8892
      %v10417 = vpack.c.b16 %v8901, %v8897
      %v10418 = vpack.c.b16 %v8902, %v8898
      %v10419 = vpack.c.b16 %v8903, %v8899
      %v10420 = vpack.c.b16 %v8904, %v8900
      %v10421 = vpack.c.b16 %v8909, %v8905
      %v10422 = vpack.c.b16 %v8910, %v8906
      %v10423 = vpack.c.b16 %v8911, %v8907
      %v10424 = vpack.c.b16 %v8912, %v8908
      %v10425 = vpack.c.b16 %v8917, %v8913
      %v10426 = vpack.c.b16 %v8918, %v8914
      %v10427 = vpack.c.b16 %v8919, %v8915
      %v10428 = vpack.c.b16 %v8920, %v8916
      %v10429 = vpack.c.b16 %v8925, %v8921
      %v10430 = vpack.c.b16 %v8926, %v8922
      %v10431 = vpack.c.b16 %v8927, %v8923
      %v10432 = vpack.c.b16 %v8928, %v8924
      %v10433 = vpack.c.b16 %v8933, %v8929
      %v10434 = vpack.c.b16 %v8934, %v8930
      %v10435 = vpack.c.b16 %v8935, %v8931
      %v10436 = vpack.c.b16 %v8936, %v8932
      %v10437 = vpack.c.b16 %v8941, %v8937
      %v10438 = vpack.c.b16 %v8942, %v8938
      %v10439 = vpack.c.b16 %v8943, %v8939
      %v10440 = vpack.c.b16 %v8944, %v8940
      %v10441 = vpack.c.b16 %v8949, %v8945
      %v10442 = vpack.c.b16 %v8950, %v8946
      %v10443 = vpack.c.b16 %v8951, %v8947
      %v10444 = vpack.c.b16 %v8952, %v8948
      %v10445 = vpack.c.b16 %v8957, %v8953
      %v10446 = vpack.c.b16 %v8958, %v8954
      %v10447 = vpack.c.b16 %v8959, %v8955
      %v10448 = vpack.c.b16 %v8960, %v8956
      %v10449 = vpack.c.b16 %v8965, %v8961
      %v10450 = vpack.c.b16 %v8966, %v8962
      %v10451 = vpack.c.b16 %v8967, %v8963
      %v10452 = vpack.c.b16 %v8968, %v8964
      %v10453 = vpack.c.b16 %v8973, %v8969
      %v10454 = vpack.c.b16 %v8974, %v8970
      %v10455 = vpack.c.b16 %v8975, %v8971
      %v10456 = vpack.c.b16 %v8976, %v8972
      %v10457 = vpack.c.b16 %v8981, %v8977
      %v10458 = vpack.c.b16 %v8982, %v8978
      %v10459 = vpack.c.b16 %v8983, %v8979
      %v10460 = vpack.c.b16 %v8984, %v8980
      %v10461 = vpack.c.b16 %v8989, %v8985
      %v10462 = vpack.c.b16 %v8990, %v8986
      %v10463 = vpack.c.b16 %v8991, %v8987
      %v10464 = vpack.c.b16 %v8992, %v8988
      %v10465 = vpack.c.b16 %v8997, %v8993
      %v10466 = vpack.c.b16 %v8998, %v8994
      %v10467 = vpack.c.b16 %v8999, %v8995
      %v10468 = vpack.c.b16 %v9000, %v8996
      %v10469 = vpack.c.b16 %v9005, %v9001
      %v10470 = vpack.c.b16 %v9006, %v9002
      %v10471 = vpack.c.b16 %v9007, %v9003
      %v10472 = vpack.c.b16 %v9008, %v9004
      %v10473 = vpack.c.b16 %v9013, %v9009
      %v10474 = vpack.c.b16 %v9014, %v9010
      %v10475 = vpack.c.b16 %v9015, %v9011
      %v10476 = vpack.c.b16 %v9016, %v9012
      %v10477 = vpack.c.b16 %v9021, %v9017
      %v10478 = vpack.c.b16 %v9022, %v9018
      %v10479 = vpack.c.b16 %v9023, %v9019
      %v10480 = vpack.c.b16 %v9024, %v9020
      %v10481 = vpack.c.b16 %v9029, %v9025
      %v10482 = vpack.c.b16 %v9030, %v9026
      %v10483 = vpack.c.b16 %v9031, %v9027
      %v10484 = vpack.c.b16 %v9032, %v9028
      %v10485 = vpack.c.b16 %v9037, %v9033
      %v10486 = vpack.c.b16 %v9038, %v9034
      %v10487 = vpack.c.b16 %v9039, %v9035
      %v10488 = vpack.c.b16 %v9040, %v9036
      %v10489 = vpack.c.b16 %v9045, %v9041
      %v10490 = vpack.c.b16 %v9046, %v9042
      %v10491 = vpack.c.b16 %v9047, %v9043
      %v10492 = vpack.c.b16 %v9048, %v9044
      %v10493 = vpack.c.b16 %v9053, %v9049
      %v10494 = vpack.c.b16 %v9054, %v9050
      %v10495 = vpack.c.b16 %v9055, %v9051
      %v10496 = vpack.c.b16 %v9056, %v9052
      %v10497 = vpack.c.b16 %v9061, %v9057
      %v10498 = vpack.c.b16 %v9062, %v9058
      %v10499 = vpack.c.b16 %v9063, %v9059
      %v10500 = vpack.c.b16 %v9064, %v9060
      %v10501 = vpack.c.b16 %v9069, %v9065
      %v10502 = vpack.c.b16 %v9070, %v9066
      %v10503 = vpack.c.b16 %v9071, %v9067
      %v10504 = vpack.c.b16 %v9072, %v9068
      %v10505 = vpack.c.b16 %v9077, %v9073
      %v10506 = vpack.c.b16 %v9078, %v9074
      %v10507 = vpack.c.b16 %v9079, %v9075
      %v10508 = vpack.c.b16 %v9080, %v9076
      %v10509 = vpack.c.b16 %v9085, %v9081
      %v10510 = vpack.c.b16 %v9086, %v9082
      %v10511 = vpack.c.b16 %v9087, %v9083
      %v10512 = vpack.c.b16 %v9088, %v9084
      %v10513 = vpack.c.b16 %v9093, %v9089
      %v10514 = vpack.c.b16 %v9094, %v9090
      %v10515 = vpack.c.b16 %v9095, %v9091
      %v10516 = vpack.c.b16 %v9096, %v9092
      %v10517 = vpack.c.b16 %v9101, %v9097
      %v10518 = vpack.c.b16 %v9102, %v9098
      %v10519 = vpack.c.b16 %v9103, %v9099
      %v10520 = vpack.c.b16 %v9104, %v9100
      %v10521 = vpack.c.b16 %v9109, %v9105
      %v10522 = vpack.c.b16 %v9110, %v9106
      %v10523 = vpack.c.b16 %v9111, %v9107
      %v10524 = vpack.c.b16 %v9112, %v9108
      %v10525 = vpack.c.b16 %v9117, %v9113
      %v10526 = vpack.c.b16 %v9118, %v9114
      %v10527 = vpack.c.b16 %v9119, %v9115
      %v10528 = vpack.c.b16 %v9120, %v9116
      %v10529 = vpack.c.b16 %v9125, %v9121
      %v10530 = vpack.c.b16 %v9126, %v9122
      %v10531 = vpack.c.b16 %v9127, %v9123
      %v10532 = vpack.c.b16 %v9128, %v9124
      %v10533 = vpack.c.b16 %v9133, %v9129
      %v10534 = vpack.c.b16 %v9134, %v9130
      %v10535 = vpack.c.b16 %v9135, %v9131
      %v10536 = vpack.c.b16 %v9136, %v9132
      %v10537 = vpack.c.b16 %v9141, %v9137
      %v10538 = vpack.c.b16 %v9142, %v9138
      %v10539 = vpack.c.b16 %v9143, %v9139
      %v10540 = vpack.c.b16 %v9144, %v9140
      %v10541 = vpack.c.b16 %v9149, %v9145
      %v10542 = vpack.c.b16 %v9150, %v9146
      %v10543 = vpack.c.b16 %v9151, %v9147
      %v10544 = vpack.c.b16 %v9152, %v9148
      %v10545 = vpack.c.b16 %v9157, %v9153
      %v10546 = vpack.c.b16 %v9158, %v9154
      %v10547 = vpack.c.b16 %v9159, %v9155
      %v10548 = vpack.c.b16 %v9160, %v9156
      %v10549 = vpack.c.b16 %v9165, %v9161
      %v10550 = vpack.c.b16 %v9166, %v9162
      %v10551 = vpack.c.b16 %v9167, %v9163
      %v10552 = vpack.c.b16 %v9168, %v9164
      %v10553 = vpack.c.b16 %v9173, %v9169
      %v10554 = vpack.c.b16 %v9174, %v9170
      %v10555 = vpack.c.b16 %v9175, %v9171
      %v10556 = vpack.c.b16 %v9176, %v9172
      %v10557 = vpack.c.b16 %v9181, %v9177
      %v10558 = vpack.c.b16 %v9182, %v9178
      %v10559 = vpack.c.b16 %v9183, %v9179
      %v10560 = vpack.c.b16 %v9184, %v9180
      %v10561 = vpack.c.b16 %v9189, %v9185
      %v10562 = vpack.c.b16 %v9190, %v9186
      %v10563 = vpack.c.b16 %v9191, %v9187
      %v10564 = vpack.c.b16 %v9192, %v9188
      %v10565 = vpack.c.b16 %v9197, %v9193
      %v10566 = vpack.c.b16 %v9198, %v9194
      %v10567 = vpack.c.b16 %v9199, %v9195
      %v10568 = vpack.c.b16 %v9200, %v9196
      %v10569 = vpack.c.b16 %v9205, %v9201
      %v10570 = vpack.c.b16 %v9206, %v9202
      %v10571 = vpack.c.b16 %v9207, %v9203
      %v10572 = vpack.c.b16 %v9208, %v9204
      %v10573 = vpack.c.b16 %v9213, %v9209
      %v10574 = vpack.c.b16 %v9214, %v9210
      %v10575 = vpack.c.b16 %v9215, %v9211
      %v10576 = vpack.c.b16 %v9216, %v9212
      %v10577 = vpack.c.b16 %v9221, %v9217
      %v10578 = vpack.c.b16 %v9222, %v9218
      %v10579 = vpack.c.b16 %v9223, %v9219
      %v10580 = vpack.c.b16 %v9224, %v9220
      %v10581 = vpack.c.b16 %v9229, %v9225
      %v10582 = vpack.c.b16 %v9230, %v9226
      %v10583 = vpack.c.b16 %v9231, %v9227
      %v10584 = vpack.c.b16 %v9232, %v9228
      %v10585 = vpack.c.b16 %v9237, %v9233
      %v10586 = vpack.c.b16 %v9238, %v9234
      %v10587 = vpack.c.b16 %v9239, %v9235
      %v10588 = vpack.c.b16 %v9240, %v9236
      %v10589 = vpack.c.b16 %v9245, %v9241
      %v10590 = vpack.c.b16 %v9246, %v9242
      %v10591 = vpack.c.b16 %v9247, %v9243
      %v10592 = vpack.c.b16 %v9248, %v9244
      %v10593 = vpack.c.b16 %v9253, %v9249
      %v10594 = vpack.c.b16 %v9254, %v9250
      %v10595 = vpack.c.b16 %v9255, %v9251
      %v10596 = vpack.c.b16 %v9256, %v9252
      %v10597 = vpack.c.b16 %v9261, %v9257
      %v10598 = vpack.c.b16 %v9262, %v9258
      %v10599 = vpack.c.b16 %v9263, %v9259
      %v10600 = vpack.c.b16 %v9264, %v9260
      %v10601 = vpack.c.b16 %v9269, %v9265
      %v10602 = vpack.c.b16 %v9270, %v9266
      %v10603 = vpack.c.b16 %v9271, %v9267
      %v10604 = vpack.c.b16 %v9272, %v9268
      %v10605 = vpack.c.b16 %v9277, %v9273
      %v10606 = vpack.c.b16 %v9278, %v9274
      %v10607 = vpack.c.b16 %v9279, %v9275
      %v10608 = vpack.c.b16 %v9280, %v9276
      %v10609 = vpack.c.b16 %v9285, %v9281
      %v10610 = vpack.c.b16 %v9286, %v9282
      %v10611 = vpack.c.b16 %v9287, %v9283
      %v10612 = vpack.c.b16 %v9288, %v9284
      %v10613 = vpack.c.b16 %v9293, %v9289
      %v10614 = vpack.c.b16 %v9294, %v9290
      %v10615 = vpack.c.b16 %v9295, %v9291
      %v10616 = vpack.c.b16 %v9296, %v9292
      %v10617 = vpack.c.b16 %v9301, %v9297
      %v10618 = vpack.c.b16 %v9302, %v9298
      %v10619 = vpack.c.b16 %v9303, %v9299
      %v10620 = vpack.c.b16 %v9304, %v9300
      %v10621 = vpack.c.b16 %v9309, %v9305
      %v10622 = vpack.c.b16 %v9310, %v9306
      %v10623 = vpack.c.b16 %v9311, %v9307
      %v10624 = vpack.c.b16 %v9312, %v9308
      %v10625 = vpack.c.b16 %v9317, %v9313
      %v10626 = vpack.c.b16 %v9318, %v9314
      %v10627 = vpack.c.b16 %v9319, %v9315
      %v10628 = vpack.c.b16 %v9320, %v9316
      %v10629 = vpack.c.b16 %v9325, %v9321
      %v10630 = vpack.c.b16 %v9326, %v9322
      %v10631 = vpack.c.b16 %v9327, %v9323
      %v10632 = vpack.c.b16 %v9328, %v9324
      %v10633 = vpack.c.b16 %v9333, %v9329
      %v10634 = vpack.c.b16 %v9334, %v9330
      %v10635 = vpack.c.b16 %v9335, %v9331
      %v10636 = vpack.c.b16 %v9336, %v9332
      %v10637 = vpack.c.b16 %v9341, %v9337
      %v10638 = vpack.c.b16 %v9342, %v9338
      %v10639 = vpack.c.b16 %v9343, %v9339
      %v10640 = vpack.c.b16 %v9344, %v9340
      %v10641 = vpack.c.b16 %v9349, %v9345
      %v10642 = vpack.c.b16 %v9350, %v9346
      %v10643 = vpack.c.b16 %v9351, %v9347
      %v10644 = vpack.c.b16 %v9352, %v9348
      %v10645 = vpack.c.b16 %v9357, %v9353
      %v10646 = vpack.c.b16 %v9358, %v9354
      %v10647 = vpack.c.b16 %v9359, %v9355
      %v10648 = vpack.c.b16 %v9360, %v9356
      %v10649 = vpack.c.b16 %v9365, %v9361
      %v10650 = vpack.c.b16 %v9366, %v9362
      %v10651 = vpack.c.b16 %v9367, %v9363
      %v10652 = vpack.c.b16 %v9368, %v9364
      %v10653 = vpack.c.b16 %v9373, %v9369
      %v10654 = vpack.c.b16 %v9374, %v9370
      %v10655 = vpack.c.b16 %v9375, %v9371
      %v10656 = vpack.c.b16 %v9376, %v9372
      %v10657 = vpack.c.b16 %v9381, %v9377
      %v10658 = vpack.c.b16 %v9382, %v9378
      %v10659 = vpack.c.b16 %v9383, %v9379
      %v10660 = vpack.c.b16 %v9384, %v9380
      %v10661 = vpack.c.b16 %v9389, %v9385
      %v10662 = vpack.c.b16 %v9390, %v9386
      %v10663 = vpack.c.b16 %v9391, %v9387
      %v10664 = vpack.c.b16 %v9392, %v9388
      %v10665 = vpack.c.b16 %v9397, %v9393
      %v10666 = vpack.c.b16 %v9398, %v9394
      %v10667 = vpack.c.b16 %v9399, %v9395
      %v10668 = vpack.c.b16 %v9400, %v9396
      %v10669 = vpack.c.b16 %v9405, %v9401
      %v10670 = vpack.c.b16 %v9406, %v9402
      %v10671 = vpack.c.b16 %v9407, %v9403
      %v10672 = vpack.c.b16 %v9408, %v9404
      %v10673 = vpack.c.b16 %v9413, %v9409
      %v10674 = vpack.c.b16 %v9414, %v9410
      %v10675 = vpack.c.b16 %v9415, %v9411
      %v10676 = vpack.c.b16 %v9416, %v9412
      %v10677 = vpack.c.b16 %v9421, %v9417
      %v10678 = vpack.c.b16 %v9422, %v9418
      %v10679 = vpack.c.b16 %v9423, %v9419
      %v10680 = vpack.c.b16 %v9424, %v9420
      %v10681 = vpack.c.b16 %v9429, %v9425
      %v10682 = vpack.c.b16 %v9430, %v9426
      %v10683 = vpack.c.b16 %v9431, %v9427
      %v10684 = vpack.c.b16 %v9432, %v9428
      %v10685 = vpack.c.b16 %v9437, %v9433
      %v10686 = vpack.c.b16 %v9438, %v9434
      %v10687 = vpack.c.b16 %v9439, %v9435
      %v10688 = vpack.c.b16 %v9440, %v9436
      %v10689 = vpack.c.b16 %v9445, %v9441
      %v10690 = vpack.c.b16 %v9446, %v9442
      %v10691 = vpack.c.b16 %v9447, %v9443
      %v10692 = vpack.c.b16 %v9448, %v9444
      %v10693 = vpack.c.b16 %v9453, %v9449
      %v10694 = vpack.c.b16 %v9454, %v9450
      %v10695 = vpack.c.b16 %v9455, %v9451
      %v10696 = vpack.c.b16 %v9456, %v9452
      %v10697 = vpack.c.b16 %v9461, %v9457
      %v10698 = vpack.c.b16 %v9462, %v9458
      %v10699 = vpack.c.b16 %v9463, %v9459
      %v10700 = vpack.c.b16 %v9464, %v9460
      %v10701 = vpack.c.b16 %v9469, %v9465
      %v10702 = vpack.c.b16 %v9470, %v9466
      %v10703 = vpack.c.b16 %v9471, %v9467
      %v10704 = vpack.c.b16 %v9472, %v9468
      %v10705 = vpack.c.b16 %v9477, %v9473
      %v10706 = vpack.c.b16 %v9478, %v9474
      %v10707 = vpack.c.b16 %v9479, %v9475
      %v10708 = vpack.c.b16 %v9480, %v9476
      %v10709 = vpack.c.b16 %v9485, %v9481
      %v10710 = vpack.c.b16 %v9486, %v9482
      %v10711 = vpack.c.b16 %v9487, %v9483
      %v10712 = vpack.c.b16 %v9488, %v9484
      %v10713 = vpack.c.b16 %v9493, %v9489
      %v10714 = vpack.c.b16 %v9494, %v9490
      %v10715 = vpack.c.b16 %v9495, %v9491
      %v10716 = vpack.c.b16 %v9496, %v9492
      %v10717 = vpack.c.b16 %v9501, %v9497
      %v10718 = vpack.c.b16 %v9502, %v9498
      %v10719 = vpack.c.b16 %v9503, %v9499
      %v10720 = vpack.c.b16 %v9504, %v9500
      %v10721 = vpack.c.b16 %v9509, %v9505
      %v10722 = vpack.c.b16 %v9510, %v9506
      %v10723 = vpack.c.b16 %v9511, %v9507
      %v10724 = vpack.c.b16 %v9512, %v9508
      %v10725 = vpack.c.b16 %v9517, %v9513
      %v10726 = vpack.c.b16 %v9518, %v9514
      %v10727 = vpack.c.b16 %v9519, %v9515
      %v10728 = vpack.c.b16 %v9520, %v9516
      %v10729 = vpack.c.b16 %v9525, %v9521
      %v10730 = vpack.c.b16 %v9526, %v9522
      %v10731 = vpack.c.b16 %v9527, %v9523
      %v10732 = vpack.c.b16 %v9528, %v9524
      %v10733 = vpack.c.b16 %v9533, %v9529
      %v10734 = vpack.c.b16 %v9534, %v9530
      %v10735 = vpack.c.b16 %v9535, %v9531
      %v10736 = vpack.c.b16 %v9536, %v9532
      %v10737 = vpack.c.b16 %v9541, %v9537
      %v10738 = vpack.c.b16 %v9542, %v9538
      %v10739 = vpack.c.b16 %v9543, %v9539
      %v10740 = vpack.c.b16 %v9544, %v9540
      %v10741 = vpack.c.b16 %v9549, %v9545
      %v10742 = vpack.c.b16 %v9550, %v9546
      %v10743 = vpack.c.b16 %v9551, %v9547
      %v10744 = vpack.c.b16 %v9552, %v9548
      %v10745 = vpack.c.b16 %v9557, %v9553
      %v10746 = vpack.c.b16 %v9558, %v9554
      %v10747 = vpack.c.b16 %v9559, %v9555
      %v10748 = vpack.c.b16 %v9560, %v9556
      %v10749 = vpack.c.b16 %v9565, %v9561
      %v10750 = vpack.c.b16 %v9566, %v9562
      %v10751 = vpack.c.b16 %v9567, %v9563
      %v10752 = vpack.c.b16 %v9568, %v9564
      %v10753 = vpack.c.b16 %v9573, %v9569
      %v10754 = vpack.c.b16 %v9574, %v9570
      %v10755 = vpack.c.b16 %v9575, %v9571
      %v10756 = vpack.c.b16 %v9576, %v9572
      %v10757 = vpack.c.b16 %v9581, %v9577
      %v10758 = vpack.c.b16 %v9582, %v9578
      %v10759 = vpack.c.b16 %v9583, %v9579
      %v10760 = vpack.c.b16 %v9584, %v9580
      %v10761 = vpack.c.b16 %v9589, %v9585
      %v10762 = vpack.c.b16 %v9590, %v9586
      %v10763 = vpack.c.b16 %v9591, %v9587
      %v10764 = vpack.c.b16 %v9592, %v9588
      %v10765 = vpack.c.b16 %v9597, %v9593
      %v10766 = vpack.c.b16 %v9598, %v9594
      %v10767 = vpack.c.b16 %v9599, %v9595
      %v10768 = vpack.c.b16 %v9600, %v9596
      %v10769 = vpack.c.b16 %v9605, %v9601
      %v10770 = vpack.c.b16 %v9606, %v9602
      %v10771 = vpack.c.b16 %v9607, %v9603
      %v10772 = vpack.c.b16 %v9608, %v9604
      %v10773 = vpack.c.b16 %v9613, %v9609
      %v10774 = vpack.c.b16 %v9614, %v9610
      %v10775 = vpack.c.b16 %v9615, %v9611
      %v10776 = vpack.c.b16 %v9616, %v9612
      %v10777 = vpack.c.b16 %v9621, %v9617
      %v10778 = vpack.c.b16 %v9622, %v9618
      %v10779 = vpack.c.b16 %v9623, %v9619
      %v10780 = vpack.c.b16 %v9624, %v9620
      %v10781 = vpack.c.b16 %v9629, %v9625
      %v10782 = vpack.c.b16 %v9630, %v9626
      %v10783 = vpack.c.b16 %v9631, %v9627
      %v10784 = vpack.c.b16 %v9632, %v9628
      %v10785 = vpack.c.b16 %v9637, %v9633
      %v10786 = vpack.c.b16 %v9638, %v9634
      %v10787 = vpack.c.b16 %v9639, %v9635
      %v10788 = vpack.c.b16 %v9640, %v9636
      %v10789 = vpack.c.b16 %v9645, %v9641
      %v10790 = vpack.c.b16 %v9646, %v9642
      %v10791 = vpack.c.b16 %v9647, %v9643
      %v10792 = vpack.c.b16 %v9648, %v9644
      %v10793 = vpack.c.b16 %v9653, %v9649
      %v10794 = vpack.c.b16 %v9654, %v9650
      %v10795 = vpack.c.b16 %v9655, %v9651
      %v10796 = vpack.c.b16 %v9656, %v9652
      %v10797 = vpack.c.b16 %v9661, %v9657
      %v10798 = vpack.c.b16 %v9662, %v9658
      %v10799 = vpack.c.b16 %v9663, %v9659
      %v10800 = vpack.c.b16 %v9664, %v9660
      %v10801 = vpack.c.b16 %v9669, %v9665
      %v10802 = vpack.c.b16 %v9670, %v9666
      %v10803 = vpack.c.b16 %v9671, %v9667
      %v10804 = vpack.c.b16 %v9672, %v9668
      %v10805 = vpack.c.b16 %v9677, %v9673
      %v10806 = vpack.c.b16 %v9678, %v9674
      %v10807 = vpack.c.b16 %v9679, %v9675
      %v10808 = vpack.c.b16 %v9680, %v9676
      %v10809 = vpack.c.b16 %v9685, %v9681
      %v10810 = vpack.c.b16 %v9686, %v9682
      %v10811 = vpack.c.b16 %v9687, %v9683
      %v10812 = vpack.c.b16 %v9688, %v9684
      %v10813 = vpack.c.b16 %v9693, %v9689
      %v10814 = vpack.c.b16 %v9694, %v9690
      %v10815 = vpack.c.b16 %v9695, %v9691
      %v10816 = vpack.c.b16 %v9696, %v9692
      %v10817 = vpack.c.b16 %v9701, %v9697
      %v10818 = vpack.c.b16 %v9702, %v9698
      %v10819 = vpack.c.b16 %v9703, %v9699
      %v10820 = vpack.c.b16 %v9704, %v9700
      %v10821 = vpack.c.b16 %v9709, %v9705
      %v10822 = vpack.c.b16 %v9710, %v9706
      %v10823 = vpack.c.b16 %v9711, %v9707
      %v10824 = vpack.c.b16 %v9712, %v9708
      %v10825 = vpack.c.b16 %v9717, %v9713
      %v10826 = vpack.c.b16 %v9718, %v9714
      %v10827 = vpack.c.b16 %v9719, %v9715
      %v10828 = vpack.c.b16 %v9720, %v9716
      %v10829 = vpack.c.b16 %v9725, %v9721
      %v10830 = vpack.c.b16 %v9726, %v9722
      %v10831 = vpack.c.b16 %v9727, %v9723
      %v10832 = vpack.c.b16 %v9728, %v9724
      %v10833 = vpack.c.b16 %v9733, %v9729
      %v10834 = vpack.c.b16 %v9734, %v9730
      %v10835 = vpack.c.b16 %v9735, %v9731
      %v10836 = vpack.c.b16 %v9736, %v9732
      %v10837 = vpack.c.b16 %v9741, %v9737
      %v10838 = vpack.c.b16 %v9742, %v9738
      %v10839 = vpack.c.b16 %v9743, %v9739
      %v10840 = vpack.c.b16 %v9744, %v9740
      %v10841 = vpack.c.b16 %v9749, %v9745
      %v10842 = vpack.c.b16 %v9750, %v9746
      %v10843 = vpack.c.b16 %v9751, %v9747
      %v10844 = vpack.c.b16 %v9752, %v9748
      %v10845 = vpack.c.b16 %v9757, %v9753
      %v10846 = vpack.c.b16 %v9758, %v9754
      %v10847 = vpack.c.b16 %v9759, %v9755
      %v10848 = vpack.c.b16 %v9760, %v9756
      %v10849 = vpack.c.b16 %v9765, %v9761
      %v10850 = vpack.c.b16 %v9766, %v9762
      %v10851 = vpack.c.b16 %v9767, %v9763
      %v10852 = vpack.c.b16 %v9768, %v9764
      %v10853 = vpack.c.b16 %v9773, %v9769
      %v10854 = vpack.c.b16 %v9774, %v9770
      %v10855 = vpack.c.b16 %v9775, %v9771
      %v10856 = vpack.c.b16 %v9776, %v9772
      %v10857 = vpack.c.b16 %v9781, %v9777
      %v10858 = vpack.c.b16 %v9782, %v9778
      %v10859 = vpack.c.b16 %v9783, %v9779
      %v10860 = vpack.c.b16 %v9784, %v9780
      %v10861 = vpack.c.b16 %v9789, %v9785
      %v10862 = vpack.c.b16 %v9790, %v9786
      %v10863 = vpack.c.b16 %v9791, %v9787
      %v10864 = vpack.c.b16 %v9792, %v9788
      %v10865 = vpack.c.b16 %v9797, %v9793
      %v10866 = vpack.c.b16 %v9798, %v9794
      %v10867 = vpack.c.b16 %v9799, %v9795
      %v10868 = vpack.c.b16 %v9800, %v9796
      %v10869 = vpack.c.b16 %v9805, %v9801
      %v10870 = vpack.c.b16 %v9806, %v9802
      %v10871 = vpack.c.b16 %v9807, %v9803
      %v10872 = vpack.c.b16 %v9808, %v9804
      %v10873 = vpack.c.b16 %v9813, %v9809
      %v10874 = vpack.c.b16 %v9814, %v9810
      %v10875 = vpack.c.b16 %v9815, %v9811
      %v10876 = vpack.c.b16 %v9816, %v9812
      %v10877 = vpack.c.b16 %v9821, %v9817
      %v10878 = vpack.c.b16 %v9822, %v9818
      %v10879 = vpack.c.b16 %v9823, %v9819
      %v10880 = vpack.c.b16 %v9824, %v9820
      %v10881 = vpack.c.b16 %v9829, %v9825
      %v10882 = vpack.c.b16 %v9830, %v9826
      %v10883 = vpack.c.b16 %v9831, %v9827
      %v10884 = vpack.c.b16 %v9832, %v9828
      %v10885 = vpack.c.b16 %v9837, %v9833
      %v10886 = vpack.c.b16 %v9838, %v9834
      %v10887 = vpack.c.b16 %v9839, %v9835
      %v10888 = vpack.c.b16 %v9840, %v9836
      %v10889 = vpack.c.b16 %v9845, %v9841
      %v10890 = vpack.c.b16 %v9846, %v9842
      %v10891 = vpack.c.b16 %v9847, %v9843
      %v10892 = vpack.c.b16 %v9848, %v9844
      %v10893 = vpack.c.b16 %v9853, %v9849
      %v10894 = vpack.c.b16 %v9854, %v9850
      %v10895 = vpack.c.b16 %v9855, %v9851
      %v10896 = vpack.c.b16 %v9856, %v9852
      %v10897 = vpack.c.b16 %v9861, %v9857
      %v10898 = vpack.c.b16 %v9862, %v9858
      %v10899 = vpack.c.b16 %v9863, %v9859
      %v10900 = vpack.c.b16 %v9864, %v9860
      %v10901 = vpack.c.b16 %v9869, %v9865
      %v10902 = vpack.c.b16 %v9870, %v9866
      %v10903 = vpack.c.b16 %v9871, %v9867
      %v10904 = vpack.c.b16 %v9872, %v9868
      %v10905 = vpack.c.b16 %v9877, %v9873
      %v10906 = vpack.c.b16 %v9878, %v9874
      %v10907 = vpack.c.b16 %v9879, %v9875
      %v10908 = vpack.c.b16 %v9880, %v9876
      %v10909 = vpack.c.b16 %v9885, %v9881
      %v10910 = vpack.c.b16 %v9886, %v9882
      %v10911 = vpack.c.b16 %v9887, %v9883
      %v10912 = vpack.c.b16 %v9888, %v9884
      %11937 = vmatprep.subr.bf16.mxu0 %v9890
      %11938 = vmatpush1.bf16.msra.mxu0 %v9889
      %11939 = vmatprep.subr.bf16.mxu0 %v9894
      %11940 = vmatpush1.bf16.msra.mxu0 %v9893
      %11941 = vmatprep.subr.bf16.mxu0 %v9898
      %11942 = vmatpush1.bf16.msra.mxu0 %v9897
      %11943 = vmatprep.subr.bf16.mxu0 %v9902
      %11944 = vmatpush1.bf16.msra.mxu0 %v9901
      %11945 = vmatprep.subr.bf16.mxu0 %v9906
      %11946 = vmatpush1.bf16.msra.mxu0 %v9905
      %11947 = vmatprep.subr.bf16.mxu0 %v9910
      %11948 = vmatpush1.bf16.msra.mxu0 %v9909
      %11949 = vmatprep.subr.bf16.mxu0 %v9914
      %11950 = vmatpush1.bf16.msra.mxu0 %v9913
      %11951 = vmatprep.subr.bf16.mxu0 %v9918
      %11952 = vmatpush1.bf16.msra.mxu0 %v9917
      %11953 = vmatprep.subr.bf16.mxu0 %v9922
      %11954 = vmatpush1.bf16.msra.mxu0 %v9921
      %11955 = vmatprep.subr.bf16.mxu0 %v9926
      %11956 = vmatpush1.bf16.msra.mxu0 %v9925
      %11957 = vmatprep.subr.bf16.mxu0 %v9930
      %11958 = vmatpush1.bf16.msra.mxu0 %v9929
      %11959 = vmatprep.subr.bf16.mxu0 %v9934
      %11960 = vmatpush1.bf16.msra.mxu0 %v9933
      %11961 = vmatprep.subr.bf16.mxu0 %v9938
      %11962 = vmatpush1.bf16.msra.mxu0 %v9937
      %11963 = vmatprep.subr.bf16.mxu0 %v9942
      %11964 = vmatpush1.bf16.msra.mxu0 %v9941
      %11965 = vmatprep.subr.bf16.mxu0 %v9946
      %11966 = vmatpush1.bf16.msra.mxu0 %v9945
      %11967 = vmatprep.subr.bf16.mxu0 %v9950
      %11968 = vmatpush1.bf16.msra.mxu0 %v9949
      %11969 = vmatprep.mubr.bf16.mxu0 %v5730
      %11970 = vmatmul.mubr.bf16.gmra.mrb[0].mxu0 %v5729
      %v11971 = vpop.f32.mrb[0].mxu0
      %v11972 = vadd.f32 0.0, %v11971
      %v11973 = vpop.f32.mrb[0].mxu0
      %v11974 = vadd.f32 0.0, %v11973
      %v11975 = vpop.f32.mrb[0].mxu0
      %v11976 = vpop.f32.mrb[0].mxu0
      %11977 = vdwg.mxu0
      %11978 = vmatprep.subr.bf16.mxu0 %v9954
      %11979 = vmatpush1.bf16.msra.mxu0 %v9953
      %11980 = vmatprep.subr.bf16.mxu0 %v9958
      %11981 = vmatpush1.bf16.msra.mxu0 %v9957
      %11982 = vmatprep.subr.bf16.mxu0 %v9962
      %11983 = vmatpush1.bf16.msra.mxu0 %v9961
      %11984 = vmatprep.subr.bf16.mxu0 %v9966
      %11985 = vmatpush1.bf16.msra.mxu0 %v9965
      %11986 = vmatprep.subr.bf16.mxu0 %v9970
      %11987 = vmatpush1.bf16.msra.mxu0 %v9969
      %11988 = vmatprep.subr.bf16.mxu0 %v9974
      %11989 = vmatpush1.bf16.msra.mxu0 %v9973
      %11990 = vmatprep.subr.bf16.mxu0 %v9978
      %11991 = vmatpush1.bf16.msra.mxu0 %v9977
      %11992 = vmatprep.subr.bf16.mxu0 %v9982
      %11993 = vmatpush1.bf16.msra.mxu0 %v9981
      %11994 = vmatprep.subr.bf16.mxu0 %v9986
      %11995 = vmatpush1.bf16.msra.mxu0 %v9985
      %11996 = vmatprep.subr.bf16.mxu0 %v9990
      %11997 = vmatpush1.bf16.msra.mxu0 %v9989
      %11998 = vmatprep.subr.bf16.mxu0 %v9994
      %11999 = vmatpush1.bf16.msra.mxu0 %v9993
      %12000 = vmatprep.subr.bf16.mxu0 %v9998
      %12001 = vmatpush1.bf16.msra.mxu0 %v9997
      %12002 = vmatprep.subr.bf16.mxu0 %v10002
      %12003 = vmatpush1.bf16.msra.mxu0 %v10001
      %12004 = vmatprep.subr.bf16.mxu0 %v10006
      %12005 = vmatpush1.bf16.msra.mxu0 %v10005
      %12006 = vmatprep.subr.bf16.mxu0 %v10010
      %12007 = vmatpush1.bf16.msra.mxu0 %v10009
      %12008 = vmatprep.subr.bf16.mxu0 %v10014
      %12009 = vmatpush1.bf16.msra.mxu0 %v10013
      %12010 = vmatprep.mubr.bf16.mxu0 %v5740
      %12011 = vmatmul.mubr.bf16.gmra.mrb[0].mxu0 %v5739
      %v12012 = vpop.f32.mrb[0].mxu0
      %v12013 = vadd.f32 %v11972, %v12012
      %v12014 = vpop.f32.mrb[0].mxu0
      %v12015 = vadd.f32 %v11974, %v12014
      %v12016 = vpop.f32.mrb[0].mxu0
      %v12017 = vpop.f32.mrb[0].mxu0
      %12018 = vdwg.mxu0
      %12019 = vmatprep.subr.bf16.mxu0 %v10018
      %12020 = vmatpush1.bf16.msra.mxu0 %v10017
      %12021 = vmatprep.subr.bf16.mxu0 %v10022
      %12022 = vmatpush1.bf16.msra.mxu0 %v10021
      %12023 = vmatprep.subr.bf16.mxu0 %v10026
      %12024 = vmatpush1.bf16.msra.mxu0 %v10025
      %12025 = vmatprep.subr.bf16.mxu0 %v10030
      %12026 = vmatpush1.bf16.msra.mxu0 %v10029
      %12027 = vmatprep.subr.bf16.mxu0 %v10034
      %12028 = vmatpush1.bf16.msra.mxu0 %v10033
      %12029 = vmatprep.subr.bf16.mxu0 %v10038
      %12030 = vmatpush1.bf16.msra.mxu0 %v10037
      %12031 = vmatprep.subr.bf16.mxu0 %v10042
      %12032 = vmatpush1.bf16.msra.mxu0 %v10041
      %12033 = vmatprep.subr.bf16.mxu0 %v10046
      %12034 = vmatpush1.bf16.msra.mxu0 %v10045
      %12035 = vmatprep.subr.bf16.mxu0 %v10050
      %12036 = vmatpush1.bf16.msra.mxu0 %v10049
      %12037 = vmatprep.subr.bf16.mxu0 %v10054
      %12038 = vmatpush1.bf16.msra.mxu0 %v10053
      %12039 = vmatprep.subr.bf16.mxu0 %v10058
      %12040 = vmatpush1.bf16.msra.mxu0 %v10057
      %12041 = vmatprep.subr.bf16.mxu0 %v10062
      %12042 = vmatpush1.bf16.msra.mxu0 %v10061
      %12043 = vmatprep.subr.bf16.mxu0 %v10066
      %12044 = vmatpush1.bf16.msra.mxu0 %v10065
      %12045 = vmatprep.subr.bf16.mxu0 %v10070
      %12046 = vmatpush1.bf16.msra.mxu0 %v10069
      %12047 = vmatprep.subr.bf16.mxu0 %v10074
      %12048 = vmatpush1.bf16.msra.mxu0 %v10073
      %12049 = vmatprep.subr.bf16.mxu0 %v10078
      %12050 = vmatpush1.bf16.msra.mxu0 %v10077
      %12051 = vmatprep.mubr.bf16.mxu0 %v5744
      %12052 = vmatmul.mubr.bf16.gmra.mrb[0].mxu0 %v5743
      %v12053 = vpop.f32.mrb[0].mxu0
      %v12054 = vadd.f32 %v12013, %v12053
      %v12055 = vpop.f32.mrb[0].mxu0
      %v12056 = vadd.f32 %v12015, %v12055
      %v12057 = vpop.f32.mrb[0].mxu0
      %v12058 = vpop.f32.mrb[0].mxu0
      %12059 = vdwg.mxu0
      %12060 = vmatprep.subr.bf16.mxu0 %v10082
      %12061 = vmatpush1.bf16.msra.mxu0 %v10081
      %12062 = vmatprep.subr.bf16.mxu0 %v10086
      %12063 = vmatpush1.bf16.msra.mxu0 %v10085
      %12064 = vmatprep.subr.bf16.mxu0 %v10090
      %12065 = vmatpush1.bf16.msra.mxu0 %v10089
      %12066 = vmatprep.subr.bf16.mxu0 %v10094
      %12067 = vmatpush1.bf16.msra.mxu0 %v10093
      %12068 = vmatprep.subr.bf16.mxu0 %v10098
      %12069 = vmatpush1.bf16.msra.mxu0 %v10097
      %12070 = vmatprep.subr.bf16.mxu0 %v10102
      %12071 = vmatpush1.bf16.msra.mxu0 %v10101
      %12072 = vmatprep.subr.bf16.mxu0 %v10106
      %12073 = vmatpush1.bf16.msra.mxu0 %v10105
      %12074 = vmatprep.subr.bf16.mxu0 %v10110
      %12075 = vmatpush1.bf16.msra.mxu0 %v10109
      %12076 = vmatprep.subr.bf16.mxu0 %v10114
      %12077 = vmatpush1.bf16.msra.mxu0 %v10113
      %12078 = vmatprep.subr.bf16.mxu0 %v10118
      %12079 = vmatpush1.bf16.msra.mxu0 %v10117
      %12080 = vmatprep.subr.bf16.mxu0 %v10122
      %12081 = vmatpush1.bf16.msra.mxu0 %v10121
      %12082 = vmatprep.subr.bf16.mxu0 %v10126
      %12083 = vmatpush1.bf16.msra.mxu0 %v10125
      %12084 = vmatprep.subr.bf16.mxu0 %v10130
      %12085 = vmatpush1.bf16.msra.mxu0 %v10129
      %12086 = vmatprep.subr.bf16.mxu0 %v10134
      %12087 = vmatpush1.bf16.msra.mxu0 %v10133
      %12088 = vmatprep.subr.bf16.mxu0 %v10138
      %12089 = vmatpush1.bf16.msra.mxu0 %v10137
      %12090 = vmatprep.subr.bf16.mxu0 %v10142
      %12091 = vmatpush1.bf16.msra.mxu0 %v10141
      %12092 = vmatprep.mubr.bf16.mxu0 %v5748
      %12093 = vmatmul.mubr.bf16.gmra.mrb[0].mxu0 %v5747
      %v12094 = vpop.f32.mrb[0].mxu0
      %v12095 = vadd.f32 %v12054, %v12094
      %v12096 = vpop.f32.mrb[0].mxu0
      %v12097 = vadd.f32 %v12056, %v12096
      %v12098 = vpop.f32.mrb[0].mxu0
      %v12099 = vpop.f32.mrb[0].mxu0
      %12100 = vdwg.mxu0
      %12101 = vmatprep.subr.bf16.mxu0 %v10146
      %12102 = vmatpush1.bf16.msra.mxu0 %v10145
      %12103 = vmatprep.subr.bf16.mxu0 %v10150
      %12104 = vmatpush1.bf16.msra.mxu0 %v10149
      %12105 = vmatprep.subr.bf16.mxu0 %v10154
      %12106 = vmatpush1.bf16.msra.mxu0 %v10153
      %12107 = vmatprep.subr.bf16.mxu0 %v10158
      %12108 = vmatpush1.bf16.msra.mxu0 %v10157
      %12109 = vmatprep.subr.bf16.mxu0 %v10162
      %12110 = vmatpush1.bf16.msra.mxu0 %v10161
      %12111 = vmatprep.subr.bf16.mxu0 %v10166
      %12112 = vmatpush1.bf16.msra.mxu0 %v10165
      %12113 = vmatprep.subr.bf16.mxu0 %v10170
      %12114 = vmatpush1.bf16.msra.mxu0 %v10169
      %12115 = vmatprep.subr.bf16.mxu0 %v10174
      %12116 = vmatpush1.bf16.msra.mxu0 %v10173
      %12117 = vmatprep.subr.bf16.mxu0 %v10178
      %12118 = vmatpush1.bf16.msra.mxu0 %v10177
      %12119 = vmatprep.subr.bf16.mxu0 %v10182
      %12120 = vmatpush1.bf16.msra.mxu0 %v10181
      %12121 = vmatprep.subr.bf16.mxu0 %v10186
      %12122 = vmatpush1.bf16.msra.mxu0 %v10185
      %12123 = vmatprep.subr.bf16.mxu0 %v10190
      %12124 = vmatpush1.bf16.msra.mxu0 %v10189
      %12125 = vmatprep.subr.bf16.mxu0 %v10194
      %12126 = vmatpush1.bf16.msra.mxu0 %v10193
      %12127 = vmatprep.subr.bf16.mxu0 %v10198
      %12128 = vmatpush1.bf16.msra.mxu0 %v10197
      %12129 = vmatprep.subr.bf16.mxu0 %v10202
      %12130 = vmatpush1.bf16.msra.mxu0 %v10201
      %12131 = vmatprep.subr.bf16.mxu0 %v10206
      %12132 = vmatpush1.bf16.msra.mxu0 %v10205
      %12133 = vmatprep.mubr.bf16.mxu0 %v5732
      %12134 = vmatmul.mubr.bf16.gmra.mrb[0].mxu0 %v5731
      %v12135 = vpop.f32.mrb[0].mxu0
      %v12136 = vadd.f32 %v12095, %v12135
      %v12137 = vpop.f32.mrb[0].mxu0
      %v12138 = vadd.f32 %v12097, %v12137
      %v12139 = vpop.f32.mrb[0].mxu0
      %v12140 = vpop.f32.mrb[0].mxu0
      %12141 = vdwg.mxu0
      %12142 = vmatprep.subr.bf16.mxu0 %v10210
      %12143 = vmatpush1.bf16.msra.mxu0 %v10209
      %12144 = vmatprep.subr.bf16.mxu0 %v10214
      %12145 = vmatpush1.bf16.msra.mxu0 %v10213
      %12146 = vmatprep.subr.bf16.mxu0 %v10218
      %12147 = vmatpush1.bf16.msra.mxu0 %v10217
      %12148 = vmatprep.subr.bf16.mxu0 %v10222
      %12149 = vmatpush1.bf16.msra.mxu0 %v10221
      %12150 = vmatprep.subr.bf16.mxu0 %v10226
      %12151 = vmatpush1.bf16.msra.mxu0 %v10225
      %12152 = vmatprep.subr.bf16.mxu0 %v10230
      %12153 = vmatpush1.bf16.msra.mxu0 %v10229
      %12154 = vmatprep.subr.bf16.mxu0 %v10234
      %12155 = vmatpush1.bf16.msra.mxu0 %v10233
      %12156 = vmatprep.subr.bf16.mxu0 %v10238
      %12157 = vmatpush1.bf16.msra.mxu0 %v10237
      %12158 = vmatprep.subr.bf16.mxu0 %v10242
      %12159 = vmatpush1.bf16.msra.mxu0 %v10241
      %12160 = vmatprep.subr.bf16.mxu0 %v10246
      %12161 = vmatpush1.bf16.msra.mxu0 %v10245
      %12162 = vmatprep.subr.bf16.mxu0 %v10250
      %12163 = vmatpush1.bf16.msra.mxu0 %v10249
      %12164 = vmatprep.subr.bf16.mxu0 %v10254
      %12165 = vmatpush1.bf16.msra.mxu0 %v10253
      %12166 = vmatprep.subr.bf16.mxu0 %v10258
      %12167 = vmatpush1.bf16.msra.mxu0 %v10257
      %12168 = vmatprep.subr.bf16.mxu0 %v10262
      %12169 = vmatpush1.bf16.msra.mxu0 %v10261
      %12170 = vmatprep.subr.bf16.mxu0 %v10266
      %12171 = vmatpush1.bf16.msra.mxu0 %v10265
      %12172 = vmatprep.subr.bf16.mxu0 %v10270
      %12173 = vmatpush1.bf16.msra.mxu0 %v10269
      %12174 = vmatprep.mubr.bf16.mxu0 %v5754
      %12175 = vmatmul.mubr.bf16.gmra.mrb[0].mxu0 %v5753
      %v12176 = vpop.f32.mrb[0].mxu0
      %v12177 = vadd.f32 %v12136, %v12176
      %v12178 = vpop.f32.mrb[0].mxu0
      %v12179 = vadd.f32 %v12138, %v12178
      %v12180 = vpop.f32.mrb[0].mxu0
      %v12181 = vpop.f32.mrb[0].mxu0
      %12182 = vdwg.mxu0
      %12183 = vmatprep.subr.bf16.mxu0 %v10274
      %12184 = vmatpush1.bf16.msra.mxu0 %v10273
      %12185 = vmatprep.subr.bf16.mxu0 %v10278
      %12186 = vmatpush1.bf16.msra.mxu0 %v10277
      %12187 = vmatprep.subr.bf16.mxu0 %v10282
      %12188 = vmatpush1.bf16.msra.mxu0 %v10281
      %12189 = vmatprep.subr.bf16.mxu0 %v10286
      %12190 = vmatpush1.bf16.msra.mxu0 %v10285
      %12191 = vmatprep.subr.bf16.mxu0 %v10290
      %12192 = vmatpush1.bf16.msra.mxu0 %v10289
      %12193 = vmatprep.subr.bf16.mxu0 %v10294
      %12194 = vmatpush1.bf16.msra.mxu0 %v10293
      %12195 = vmatprep.subr.bf16.mxu0 %v10298
      %12196 = vmatpush1.bf16.msra.mxu0 %v10297
      %12197 = vmatprep.subr.bf16.mxu0 %v10302
      %12198 = vmatpush1.bf16.msra.mxu0 %v10301
      %12199 = vmatprep.subr.bf16.mxu0 %v10306
      %12200 = vmatpush1.bf16.msra.mxu0 %v10305
      %12201 = vmatprep.subr.bf16.mxu0 %v10310
      %12202 = vmatpush1.bf16.msra.mxu0 %v10309
      %12203 = vmatprep.subr.bf16.mxu0 %v10314
      %12204 = vmatpush1.bf16.msra.mxu0 %v10313
      %12205 = vmatprep.subr.bf16.mxu0 %v10318
      %12206 = vmatpush1.bf16.msra.mxu0 %v10317
      %12207 = vmatprep.subr.bf16.mxu0 %v10322
      %12208 = vmatpush1.bf16.msra.mxu0 %v10321
      %12209 = vmatprep.subr.bf16.mxu0 %v10326
      %12210 = vmatpush1.bf16.msra.mxu0 %v10325
      %12211 = vmatprep.subr.bf16.mxu0 %v10330
      %12212 = vmatpush1.bf16.msra.mxu0 %v10329
      %12213 = vmatprep.subr.bf16.mxu0 %v10334
      %12214 = vmatpush1.bf16.msra.mxu0 %v10333
      %12215 = vmatprep.mubr.bf16.mxu0 %v5758
      %12216 = vmatmul.mubr.bf16.gmra.mrb[0].mxu0 %v5757
      %v12217 = vpop.f32.mrb[0].mxu0
      %v12218 = vadd.f32 %v12177, %v12217
      %v12219 = vpop.f32.mrb[0].mxu0
      %v12220 = vadd.f32 %v12179, %v12219
      %v12221 = vpop.f32.mrb[0].mxu0
      %v12222 = vpop.f32.mrb[0].mxu0
      %12223 = vdwg.mxu0
      %12224 = vmatprep.subr.bf16.mxu0 %v10338
      %12225 = vmatpush1.bf16.msra.mxu0 %v10337
      %12226 = vmatprep.subr.bf16.mxu0 %v10342
      %12227 = vmatpush1.bf16.msra.mxu0 %v10341
      %12228 = vmatprep.subr.bf16.mxu0 %v10346
      %12229 = vmatpush1.bf16.msra.mxu0 %v10345
      %12230 = vmatprep.subr.bf16.mxu0 %v10350
      %12231 = vmatpush1.bf16.msra.mxu0 %v10349
      %12232 = vmatprep.subr.bf16.mxu0 %v10354
      %12233 = vmatpush1.bf16.msra.mxu0 %v10353
      %12234 = vmatprep.subr.bf16.mxu0 %v10358
      %12235 = vmatpush1.bf16.msra.mxu0 %v10357
      %12236 = vmatprep.subr.bf16.mxu0 %v10362
      %12237 = vmatpush1.bf16.msra.mxu0 %v10361
      %12238 = vmatprep.subr.bf16.mxu0 %v10366
      %12239 = vmatpush1.bf16.msra.mxu0 %v10365
      %12240 = vmatprep.subr.bf16.mxu0 %v10370
      %12241 = vmatpush1.bf16.msra.mxu0 %v10369
      %12242 = vmatprep.subr.bf16.mxu0 %v10374
      %12243 = vmatpush1.bf16.msra.mxu0 %v10373
      %12244 = vmatprep.subr.bf16.mxu0 %v10378
      %12245 = vmatpush1.bf16.msra.mxu0 %v10377
      %12246 = vmatprep.subr.bf16.mxu0 %v10382
      %12247 = vmatpush1.bf16.msra.mxu0 %v10381
      %12248 = vmatprep.subr.bf16.mxu0 %v10386
      %12249 = vmatpush1.bf16.msra.mxu0 %v10385
      %12250 = vmatprep.subr.bf16.mxu0 %v10390
      %12251 = vmatpush1.bf16.msra.mxu0 %v10389
      %12252 = vmatprep.subr.bf16.mxu0 %v10394
      %12253 = vmatpush1.bf16.msra.mxu0 %v10393
      %12254 = vmatprep.subr.bf16.mxu0 %v10398
      %12255 = vmatpush1.bf16.msra.mxu0 %v10397
      %12256 = vmatprep.mubr.bf16.mxu0 %v5762
      %12257 = vmatmul.mubr.bf16.gmra.mrb[0].mxu0 %v5761
      %v12258 = vpop.f32.mrb[0].mxu0
      %v12259 = vadd.f32 %v12218, %v12258
      %v12260 = vpop.f32.mrb[0].mxu0
      %v12261 = vadd.f32 %v12220, %v12260
      %v12262 = vpop.f32.mrb[0].mxu0
      %v12263 = vpop.f32.mrb[0].mxu0
      %12264 = vdwg.mxu0
      %12265 = vmatprep.subr.bf16.mxu0 %v10402
      %12266 = vmatpush1.bf16.msra.mxu0 %v10401
      %12267 = vmatprep.subr.bf16.mxu0 %v10406
      %12268 = vmatpush1.bf16.msra.mxu0 %v10405
      %12269 = vmatprep.subr.bf16.mxu0 %v10410
      %12270 = vmatpush1.bf16.msra.mxu0 %v10409
      %12271 = vmatprep.subr.bf16.mxu0 %v10414
      %12272 = vmatpush1.bf16.msra.mxu0 %v10413
      %12273 = vmatprep.subr.bf16.mxu0 %v10418
      %12274 = vmatpush1.bf16.msra.mxu0 %v10417
      %12275 = vmatprep.subr.bf16.mxu0 %v10422
      %12276 = vmatpush1.bf16.msra.mxu0 %v10421
      %12277 = vmatprep.subr.bf16.mxu0 %v10426
      %12278 = vmatpush1.bf16.msra.mxu0 %v10425
      %12279 = vmatprep.subr.bf16.mxu0 %v10430
      %12280 = vmatpush1.bf16.msra.mxu0 %v10429
      %12281 = vmatprep.subr.bf16.mxu0 %v10434
      %12282 = vmatpush1.bf16.msra.mxu0 %v10433
      %12283 = vmatprep.subr.bf16.mxu0 %v10438
      %12284 = vmatpush1.bf16.msra.mxu0 %v10437
      %12285 = vmatprep.subr.bf16.mxu0 %v10442
      %12286 = vmatpush1.bf16.msra.mxu0 %v10441
      %12287 = vmatprep.subr.bf16.mxu0 %v10446
      %12288 = vmatpush1.bf16.msra.mxu0 %v10445
      %12289 = vmatprep.subr.bf16.mxu0 %v10450
      %12290 = vmatpush1.bf16.msra.mxu0 %v10449
      %12291 = vmatprep.subr.bf16.mxu0 %v10454
      %12292 = vmatpush1.bf16.msra.mxu0 %v10453
      %12293 = vmatprep.subr.bf16.mxu0 %v10458
      %12294 = vmatpush1.bf16.msra.mxu0 %v10457
      %12295 = vmatprep.subr.bf16.mxu0 %v10462
      %12296 = vmatpush1.bf16.msra.mxu0 %v10461
      %12297 = vmatprep.mubr.bf16.mxu0 %v5734
      %12298 = vmatmul.mubr.bf16.gmra.mrb[0].mxu0 %v5733
      %v12299 = vpop.f32.mrb[0].mxu0
      %v12300 = vadd.f32 %v12259, %v12299
      %v12301 = vpop.f32.mrb[0].mxu0
      %v12302 = vadd.f32 %v12261, %v12301
      %v12303 = vpop.f32.mrb[0].mxu0
      %v12304 = vpop.f32.mrb[0].mxu0
      %12305 = vdwg.mxu0
      %12306 = vmatprep.subr.bf16.mxu0 %v10466
      %12307 = vmatpush1.bf16.msra.mxu0 %v10465
      %12308 = vmatprep.subr.bf16.mxu0 %v10470
      %12309 = vmatpush1.bf16.msra.mxu0 %v10469
      %12310 = vmatprep.subr.bf16.mxu0 %v10474
      %12311 = vmatpush1.bf16.msra.mxu0 %v10473
      %12312 = vmatprep.subr.bf16.mxu0 %v10478
      %12313 = vmatpush1.bf16.msra.mxu0 %v10477
      %12314 = vmatprep.subr.bf16.mxu0 %v10482
      %12315 = vmatpush1.bf16.msra.mxu0 %v10481
      %12316 = vmatprep.subr.bf16.mxu0 %v10486
      %12317 = vmatpush1.bf16.msra.mxu0 %v10485
      %12318 = vmatprep.subr.bf16.mxu0 %v10490
      %12319 = vmatpush1.bf16.msra.mxu0 %v10489
      %12320 = vmatprep.subr.bf16.mxu0 %v10494
      %12321 = vmatpush1.bf16.msra.mxu0 %v10493
      %12322 = vmatprep.subr.bf16.mxu0 %v10498
      %12323 = vmatpush1.bf16.msra.mxu0 %v10497
      %12324 = vmatprep.subr.bf16.mxu0 %v10502
      %12325 = vmatpush1.bf16.msra.mxu0 %v10501
      %12326 = vmatprep.subr.bf16.mxu0 %v10506
      %12327 = vmatpush1.bf16.msra.mxu0 %v10505
      %12328 = vmatprep.subr.bf16.mxu0 %v10510
      %12329 = vmatpush1.bf16.msra.mxu0 %v10509
      %12330 = vmatprep.subr.bf16.mxu0 %v10514
      %12331 = vmatpush1.bf16.msra.mxu0 %v10513
      %12332 = vmatprep.subr.bf16.mxu0 %v10518
      %12333 = vmatpush1.bf16.msra.mxu0 %v10517
      %12334 = vmatprep.subr.bf16.mxu0 %v10522
      %12335 = vmatpush1.bf16.msra.mxu0 %v10521
      %12336 = vmatprep.subr.bf16.mxu0 %v10526
      %12337 = vmatpush1.bf16.msra.mxu0 %v10525
      %12338 = vmatprep.mubr.bf16.mxu0 %v5768
      %12339 = vmatmul.mubr.bf16.gmra.mrb[0].mxu0 %v5767
      %v12340 = vpop.f32.mrb[0].mxu0
      %v12341 = vadd.f32 %v12300, %v12340
      %v12342 = vpop.f32.mrb[0].mxu0
      %v12343 = vadd.f32 %v12302, %v12342
      %v12344 = vpop.f32.mrb[0].mxu0
      %v12345 = vpop.f32.mrb[0].mxu0
      %12346 = vdwg.mxu0
      %12347 = vmatprep.subr.bf16.mxu0 %v10530
      %12348 = vmatpush1.bf16.msra.mxu0 %v10529
      %12349 = vmatprep.subr.bf16.mxu0 %v10534
      %12350 = vmatpush1.bf16.msra.mxu0 %v10533
      %12351 = vmatprep.subr.bf16.mxu0 %v10538
      %12352 = vmatpush1.bf16.msra.mxu0 %v10537
      %12353 = vmatprep.subr.bf16.mxu0 %v10542
      %12354 = vmatpush1.bf16.msra.mxu0 %v10541
      %12355 = vmatprep.subr.bf16.mxu0 %v10546
      %12356 = vmatpush1.bf16.msra.mxu0 %v10545
      %12357 = vmatprep.subr.bf16.mxu0 %v10550
      %12358 = vmatpush1.bf16.msra.mxu0 %v10549
      %12359 = vmatprep.subr.bf16.mxu0 %v10554
      %12360 = vmatpush1.bf16.msra.mxu0 %v10553
      %12361 = vmatprep.subr.bf16.mxu0 %v10558
      %12362 = vmatpush1.bf16.msra.mxu0 %v10557
      %12363 = vmatprep.subr.bf16.mxu0 %v10562
      %12364 = vmatpush1.bf16.msra.mxu0 %v10561
      %12365 = vmatprep.subr.bf16.mxu0 %v10566
      %12366 = vmatpush1.bf16.msra.mxu0 %v10565
      %12367 = vmatprep.subr.bf16.mxu0 %v10570
      %12368 = vmatpush1.bf16.msra.mxu0 %v10569
      %12369 = vmatprep.subr.bf16.mxu0 %v10574
      %12370 = vmatpush1.bf16.msra.mxu0 %v10573
      %12371 = vmatprep.subr.bf16.mxu0 %v10578
      %12372 = vmatpush1.bf16.msra.mxu0 %v10577
      %12373 = vmatprep.subr.bf16.mxu0 %v10582
      %12374 = vmatpush1.bf16.msra.mxu0 %v10581
      %12375 = vmatprep.subr.bf16.mxu0 %v10586
      %12376 = vmatpush1.bf16.msra.mxu0 %v10585
      %12377 = vmatprep.subr.bf16.mxu0 %v10590
      %12378 = vmatpush1.bf16.msra.mxu0 %v10589
      %12379 = vmatprep.mubr.bf16.mxu0 %v5772
      %12380 = vmatmul.mubr.bf16.gmra.mrb[0].mxu0 %v5771
      %v12381 = vpop.f32.mrb[0].mxu0
      %v12382 = vadd.f32 %v12341, %v12381
      %v12383 = vpop.f32.mrb[0].mxu0
      %v12384 = vadd.f32 %v12343, %v12383
      %v12385 = vpop.f32.mrb[0].mxu0
      %v12386 = vpop.f32.mrb[0].mxu0
      %12387 = vdwg.mxu0
      %12388 = vmatprep.subr.bf16.mxu0 %v10594
      %12389 = vmatpush1.bf16.msra.mxu0 %v10593
      %12390 = vmatprep.subr.bf16.mxu0 %v10598
      %12391 = vmatpush1.bf16.msra.mxu0 %v10597
      %12392 = vmatprep.subr.bf16.mxu0 %v10602
      %12393 = vmatpush1.bf16.msra.mxu0 %v10601
      %12394 = vmatprep.subr.bf16.mxu0 %v10606
      %12395 = vmatpush1.bf16.msra.mxu0 %v10605
      %12396 = vmatprep.subr.bf16.mxu0 %v10610
      %12397 = vmatpush1.bf16.msra.mxu0 %v10609
      %12398 = vmatprep.subr.bf16.mxu0 %v10614
      %12399 = vmatpush1.bf16.msra.mxu0 %v10613
      %12400 = vmatprep.subr.bf16.mxu0 %v10618
      %12401 = vmatpush1.bf16.msra.mxu0 %v10617
      %12402 = vmatprep.subr.bf16.mxu0 %v10622
      %12403 = vmatpush1.bf16.msra.mxu0 %v10621
      %12404 = vmatprep.subr.bf16.mxu0 %v10626
      %12405 = vmatpush1.bf16.msra.mxu0 %v10625
      %12406 = vmatprep.subr.bf16.mxu0 %v10630
      %12407 = vmatpush1.bf16.msra.mxu0 %v10629
      %12408 = vmatprep.subr.bf16.mxu0 %v10634
      %12409 = vmatpush1.bf16.msra.mxu0 %v10633
      %12410 = vmatprep.subr.bf16.mxu0 %v10638
      %12411 = vmatpush1.bf16.msra.mxu0 %v10637
      %12412 = vmatprep.subr.bf16.mxu0 %v10642
      %12413 = vmatpush1.bf16.msra.mxu0 %v10641
      %12414 = vmatprep.subr.bf16.mxu0 %v10646
      %12415 = vmatpush1.bf16.msra.mxu0 %v10645
      %12416 = vmatprep.subr.bf16.mxu0 %v10650
      %12417 = vmatpush1.bf16.msra.mxu0 %v10649
      %12418 = vmatprep.subr.bf16.mxu0 %v10654
      %12419 = vmatpush1.bf16.msra.mxu0 %v10653
      %12420 = vmatprep.mubr.bf16.mxu0 %v5776
      %12421 = vmatmul.mubr.bf16.gmra.mrb[0].mxu0 %v5775
      %v12422 = vpop.f32.mrb[0].mxu0
      %v12423 = vadd.f32 %v12382, %v12422
      %v12424 = vpop.f32.mrb[0].mxu0
      %v12425 = vadd.f32 %v12384, %v12424
      %v12426 = vpop.f32.mrb[0].mxu0
      %v12427 = vpop.f32.mrb[0].mxu0
      %12428 = vdwg.mxu0
      %12429 = vmatprep.subr.bf16.mxu0 %v10658
      %12430 = vmatpush1.bf16.msra.mxu0 %v10657
      %12431 = vmatprep.subr.bf16.mxu0 %v10662
      %12432 = vmatpush1.bf16.msra.mxu0 %v10661
      %12433 = vmatprep.subr.bf16.mxu0 %v10666
      %12434 = vmatpush1.bf16.msra.mxu0 %v10665
      %12435 = vmatprep.subr.bf16.mxu0 %v10670
      %12436 = vmatpush1.bf16.msra.mxu0 %v10669
      %12437 = vmatprep.subr.bf16.mxu0 %v10674
      %12438 = vmatpush1.bf16.msra.mxu0 %v10673
      %12439 = vmatprep.subr.bf16.mxu0 %v10678
      %12440 = vmatpush1.bf16.msra.mxu0 %v10677
      %12441 = vmatprep.subr.bf16.mxu0 %v10682
      %12442 = vmatpush1.bf16.msra.mxu0 %v10681
      %12443 = vmatprep.subr.bf16.mxu0 %v10686
      %12444 = vmatpush1.bf16.msra.mxu0 %v10685
      %12445 = vmatprep.subr.bf16.mxu0 %v10690
      %12446 = vmatpush1.bf16.msra.mxu0 %v10689
      %12447 = vmatprep.subr.bf16.mxu0 %v10694
      %12448 = vmatpush1.bf16.msra.mxu0 %v10693
      %12449 = vmatprep.subr.bf16.mxu0 %v10698
      %12450 = vmatpush1.bf16.msra.mxu0 %v10697
      %12451 = vmatprep.subr.bf16.mxu0 %v10702
      %12452 = vmatpush1.bf16.msra.mxu0 %v10701
      %12453 = vmatprep.subr.bf16.mxu0 %v10706
      %12454 = vmatpush1.bf16.msra.mxu0 %v10705
      %12455 = vmatprep.subr.bf16.mxu0 %v10710
      %12456 = vmatpush1.bf16.msra.mxu0 %v10709
      %12457 = vmatprep.subr.bf16.mxu0 %v10714
      %12458 = vmatpush1.bf16.msra.mxu0 %v10713
      %12459 = vmatprep.subr.bf16.mxu0 %v10718
      %12460 = vmatpush1.bf16.msra.mxu0 %v10717
      %12461 = vmatprep.mubr.bf16.mxu0 %v5736
      %12462 = vmatmul.mubr.bf16.gmra.mrb[0].mxu0 %v5735
      %v12463 = vpop.f32.mrb[0].mxu0
      %v12464 = vadd.f32 %v12423, %v12463
      %v12465 = vpop.f32.mrb[0].mxu0
      %v12466 = vadd.f32 %v12425, %v12465
      %v12467 = vpop.f32.mrb[0].mxu0
      %v12468 = vpop.f32.mrb[0].mxu0
      %12469 = vdwg.mxu0
      %12470 = vmatprep.subr.bf16.mxu0 %v10722
      %12471 = vmatpush1.bf16.msra.mxu0 %v10721
      %12472 = vmatprep.subr.bf16.mxu0 %v10726
      %12473 = vmatpush1.bf16.msra.mxu0 %v10725
      %12474 = vmatprep.subr.bf16.mxu0 %v10730
      %12475 = vmatpush1.bf16.msra.mxu0 %v10729
      %12476 = vmatprep.subr.bf16.mxu0 %v10734
      %12477 = vmatpush1.bf16.msra.mxu0 %v10733
      %12478 = vmatprep.subr.bf16.mxu0 %v10738
      %12479 = vmatpush1.bf16.msra.mxu0 %v10737
      %12480 = vmatprep.subr.bf16.mxu0 %v10742
      %12481 = vmatpush1.bf16.msra.mxu0 %v10741
      %12482 = vmatprep.subr.bf16.mxu0 %v10746
      %12483 = vmatpush1.bf16.msra.mxu0 %v10745
      %12484 = vmatprep.subr.bf16.mxu0 %v10750
      %12485 = vmatpush1.bf16.msra.mxu0 %v10749
      %12486 = vmatprep.subr.bf16.mxu0 %v10754
      %12487 = vmatpush1.bf16.msra.mxu0 %v10753
      %12488 = vmatprep.subr.bf16.mxu0 %v10758
      %12489 = vmatpush1.bf16.msra.mxu0 %v10757
      %12490 = vmatprep.subr.bf16.mxu0 %v10762
      %12491 = vmatpush1.bf16.msra.mxu0 %v10761
      %12492 = vmatprep.subr.bf16.mxu0 %v10766
      %12493 = vmatpush1.bf16.msra.mxu0 %v10765
      %12494 = vmatprep.subr.bf16.mxu0 %v10770
      %12495 = vmatpush1.bf16.msra.mxu0 %v10769
      %12496 = vmatprep.subr.bf16.mxu0 %v10774
      %12497 = vmatpush1.bf16.msra.mxu0 %v10773
      %12498 = vmatprep.subr.bf16.mxu0 %v10778
      %12499 = vmatpush1.bf16.msra.mxu0 %v10777
      %12500 = vmatprep.subr.bf16.mxu0 %v10782
      %12501 = vmatpush1.bf16.msra.mxu0 %v10781
      %12502 = vmatprep.mubr.bf16.mxu0 %v5782
      %12503 = vmatmul.mubr.bf16.gmra.mrb[0].mxu0 %v5781
      %v12504 = vpop.f32.mrb[0].mxu0
      %v12505 = vadd.f32 %v12464, %v12504
      %v12506 = vpop.f32.mrb[0].mxu0
      %v12507 = vadd.f32 %v12466, %v12506
      %v12508 = vpop.f32.mrb[0].mxu0
      %v12509 = vpop.f32.mrb[0].mxu0
      %12510 = vdwg.mxu0
      %12511 = vmatprep.subr.bf16.mxu0 %v10786
      %12512 = vmatpush1.bf16.msra.mxu0 %v10785
      %12513 = vmatprep.subr.bf16.mxu0 %v10790
      %12514 = vmatpush1.bf16.msra.mxu0 %v10789
      %12515 = vmatprep.subr.bf16.mxu0 %v10794
      %12516 = vmatpush1.bf16.msra.mxu0 %v10793
      %12517 = vmatprep.subr.bf16.mxu0 %v10798
      %12518 = vmatpush1.bf16.msra.mxu0 %v10797
      %12519 = vmatprep.subr.bf16.mxu0 %v10802
      %12520 = vmatpush1.bf16.msra.mxu0 %v10801
      %12521 = vmatprep.subr.bf16.mxu0 %v10806
      %12522 = vmatpush1.bf16.msra.mxu0 %v10805
      %12523 = vmatprep.subr.bf16.mxu0 %v10810
      %12524 = vmatpush1.bf16.msra.mxu0 %v10809
      %12525 = vmatprep.subr.bf16.mxu0 %v10814
      %12526 = vmatpush1.bf16.msra.mxu0 %v10813
      %12527 = vmatprep.subr.bf16.mxu0 %v10818
      %12528 = vmatpush1.bf16.msra.mxu0 %v10817
      %12529 = vmatprep.subr.bf16.mxu0 %v10822
      %12530 = vmatpush1.bf16.msra.mxu0 %v10821
      %12531 = vmatprep.subr.bf16.mxu0 %v10826
      %12532 = vmatpush1.bf16.msra.mxu0 %v10825
      %12533 = vmatprep.subr.bf16.mxu0 %v10830
      %12534 = vmatpush1.bf16.msra.mxu0 %v10829
      %12535 = vmatprep.subr.bf16.mxu0 %v10834
      %12536 = vmatpush1.bf16.msra.mxu0 %v10833
      %12537 = vmatprep.subr.bf16.mxu0 %v10838
      %12538 = vmatpush1.bf16.msra.mxu0 %v10837
      %12539 = vmatprep.subr.bf16.mxu0 %v10842
      %12540 = vmatpush1.bf16.msra.mxu0 %v10841
      %12541 = vmatprep.subr.bf16.mxu0 %v10846
      %12542 = vmatpush1.bf16.msra.mxu0 %v10845
      %12543 = vmatprep.mubr.bf16.mxu0 %v5786
      %12544 = vmatmul.mubr.bf16.gmra.mrb[0].mxu0 %v5785
      %v12545 = vpop.f32.mrb[0].mxu0
      %v12546 = vadd.f32 %v12505, %v12545
      %v12547 = vpop.f32.mrb[0].mxu0
      %v12548 = vadd.f32 %v12507, %v12547
      %v12549 = vpop.f32.mrb[0].mxu0
      %v12550 = vpop.f32.mrb[0].mxu0
      %12551 = vdwg.mxu0
      %12552 = vmatprep.subr.bf16.mxu0 %v10850
      %12553 = vmatpush1.bf16.msra.mxu0 %v10849
      %12554 = vmatprep.subr.bf16.mxu0 %v10854
      %12555 = vmatpush1.bf16.msra.mxu0 %v10853
      %12556 = vmatprep.subr.bf16.mxu0 %v10858
      %12557 = vmatpush1.bf16.msra.mxu0 %v10857
      %12558 = vmatprep.subr.bf16.mxu0 %v10862
      %12559 = vmatpush1.bf16.msra.mxu0 %v10861
      %12560 = vmatprep.subr.bf16.mxu0 %v10866
      %12561 = vmatpush1.bf16.msra.mxu0 %v10865
      %12562 = vmatprep.subr.bf16.mxu0 %v10870
      %12563 = vmatpush1.bf16.msra.mxu0 %v10869
      %12564 = vmatprep.subr.bf16.mxu0 %v10874
      %12565 = vmatpush1.bf16.msra.mxu0 %v10873
      %12566 = vmatprep.subr.bf16.mxu0 %v10878
      %12567 = vmatpush1.bf16.msra.mxu0 %v10877
      %12568 = vmatprep.subr.bf16.mxu0 %v10882
      %12569 = vmatpush1.bf16.msra.mxu0 %v10881
      %12570 = vmatprep.subr.bf16.mxu0 %v10886
      %12571 = vmatpush1.bf16.msra.mxu0 %v10885
      %12572 = vmatprep.subr.bf16.mxu0 %v10890
      %12573 = vmatpush1.bf16.msra.mxu0 %v10889
      %12574 = vmatprep.subr.bf16.mxu0 %v10894
      %12575 = vmatpush1.bf16.msra.mxu0 %v10893
      %12576 = vmatprep.subr.bf16.mxu0 %v10898
      %12577 = vmatpush1.bf16.msra.mxu0 %v10897
      %12578 = vmatprep.subr.bf16.mxu0 %v10902
      %12579 = vmatpush1.bf16.msra.mxu0 %v10901
      %12580 = vmatprep.subr.bf16.mxu0 %v10906
      %12581 = vmatpush1.bf16.msra.mxu0 %v10905
      %12582 = vmatprep.subr.bf16.mxu0 %v10910
      %12583 = vmatpush1.bf16.msra.mxu0 %v10909
      %12584 = vmatprep.mubr.bf16.mxu0 %v5790
      %12585 = vmatmul.mubr.bf16.gmra.mrb[0].mxu0 %v5789
      %v12586 = vpop.f32.mrb[0].mxu0
      %v12587 = vadd.f32 %v12546, %v12586
      %v12588 = vpop.f32.mrb[0].mxu0
      %v12589 = vadd.f32 %v12548, %v12588
      %v12590 = vpop.f32.mrb[0].mxu0
      %v12591 = vpop.f32.mrb[0].mxu0
      %12592 = vdwg.mxu0
      %12593 = vmatprep.subr.bf16.mxu0 %v9892
      %12594 = vmatpush1.bf16.msra.mxu0 %v9891
      %12595 = vmatprep.subr.bf16.mxu0 %v9896
      %12596 = vmatpush1.bf16.msra.mxu0 %v9895
      %12597 = vmatprep.subr.bf16.mxu0 %v9900
      %12598 = vmatpush1.bf16.msra.mxu0 %v9899
      %12599 = vmatprep.subr.bf16.mxu0 %v9904
      %12600 = vmatpush1.bf16.msra.mxu0 %v9903
      %12601 = vmatprep.subr.bf16.mxu0 %v9908
      %12602 = vmatpush1.bf16.msra.mxu0 %v9907
      %12603 = vmatprep.subr.bf16.mxu0 %v9912
      %12604 = vmatpush1.bf16.msra.mxu0 %v9911
      %12605 = vmatprep.subr.bf16.mxu0 %v9916
      %12606 = vmatpush1.bf16.msra.mxu0 %v9915
      %12607 = vmatprep.subr.bf16.mxu0 %v9920
      %12608 = vmatpush1.bf16.msra.mxu0 %v9919
      %12609 = vmatprep.subr.bf16.mxu0 %v9924
      %12610 = vmatpush1.bf16.msra.mxu0 %v9923
      %12611 = vmatprep.subr.bf16.mxu0 %v9928
      %12612 = vmatpush1.bf16.msra.mxu0 %v9927
      %12613 = vmatprep.subr.bf16.mxu0 %v9932
      %12614 = vmatpush1.bf16.msra.mxu0 %v9931
      %12615 = vmatprep.subr.bf16.mxu0 %v9936
      %12616 = vmatpush1.bf16.msra.mxu0 %v9935
      %12617 = vmatprep.subr.bf16.mxu0 %v9940
      %12618 = vmatpush1.bf16.msra.mxu0 %v9939
      %12619 = vmatprep.subr.bf16.mxu0 %v9944
      %12620 = vmatpush1.bf16.msra.mxu0 %v9943
      %12621 = vmatprep.subr.bf16.mxu0 %v9948
      %12622 = vmatpush1.bf16.msra.mxu0 %v9947
      %12623 = vmatprep.subr.bf16.mxu0 %v9952
      %12624 = vmatpush1.bf16.msra.mxu0 %v9951
      %12625 = vmatprep.mubr.bf16.mxu0 %v5730
      %12626 = vmatmul.mubr.bf16.gmra.mrb[0].mxu0 %v5729
      %v12627 = vpop.f32.mrb[0].mxu0
      %v12628 = vadd.f32 0.0, %v12627
      %v12629 = vpop.f32.mrb[0].mxu0
      %v12630 = vadd.f32 0.0, %v12629
      %v12631 = vpop.f32.mrb[0].mxu0
      %v12632 = vpop.f32.mrb[0].mxu0
      %12633 = vdwg.mxu0
      %12634 = vmatprep.subr.bf16.mxu0 %v9956
      %12635 = vmatpush1.bf16.msra.mxu0 %v9955
      %12636 = vmatprep.subr.bf16.mxu0 %v9960
      %12637 = vmatpush1.bf16.msra.mxu0 %v9959
      %12638 = vmatprep.subr.bf16.mxu0 %v9964
      %12639 = vmatpush1.bf16.msra.mxu0 %v9963
      %12640 = vmatprep.subr.bf16.mxu0 %v9968
      %12641 = vmatpush1.bf16.msra.mxu0 %v9967
      %12642 = vmatprep.subr.bf16.mxu0 %v9972
      %12643 = vmatpush1.bf16.msra.mxu0 %v9971
      %12644 = vmatprep.subr.bf16.mxu0 %v9976
      %12645 = vmatpush1.bf16.msra.mxu0 %v9975
      %12646 = vmatprep.subr.bf16.mxu0 %v9980
      %12647 = vmatpush1.bf16.msra.mxu0 %v9979
      %12648 = vmatprep.subr.bf16.mxu0 %v9984
      %12649 = vmatpush1.bf16.msra.mxu0 %v9983
      %12650 = vmatprep.subr.bf16.mxu0 %v9988
      %12651 = vmatpush1.bf16.msra.mxu0 %v9987
      %12652 = vmatprep.subr.bf16.mxu0 %v9992
      %12653 = vmatpush1.bf16.msra.mxu0 %v9991
      %12654 = vmatprep.subr.bf16.mxu0 %v9996
      %12655 = vmatpush1.bf16.msra.mxu0 %v9995
      %12656 = vmatprep.subr.bf16.mxu0 %v10000
      %12657 = vmatpush1.bf16.msra.mxu0 %v9999
      %12658 = vmatprep.subr.bf16.mxu0 %v10004
      %12659 = vmatpush1.bf16.msra.mxu0 %v10003
      %12660 = vmatprep.subr.bf16.mxu0 %v10008
      %12661 = vmatpush1.bf16.msra.mxu0 %v10007
      %12662 = vmatprep.subr.bf16.mxu0 %v10012
      %12663 = vmatpush1.bf16.msra.mxu0 %v10011
      %12664 = vmatprep.subr.bf16.mxu0 %v10016
      %12665 = vmatpush1.bf16.msra.mxu0 %v10015
      %12666 = vmatprep.mubr.bf16.mxu0 %v5740
      %12667 = vmatmul.mubr.bf16.gmra.mrb[0].mxu0 %v5739
      %v12668 = vpop.f32.mrb[0].mxu0
      %v12669 = vadd.f32 %v12628, %v12668
      %v12670 = vpop.f32.mrb[0].mxu0
      %v12671 = vadd.f32 %v12630, %v12670
      %v12672 = vpop.f32.mrb[0].mxu0
      %v12673 = vpop.f32.mrb[0].mxu0
      %12674 = vdwg.mxu0
      %12675 = vmatprep.subr.bf16.mxu0 %v10020
      %12676 = vmatpush1.bf16.msra.mxu0 %v10019
      %12677 = vmatprep.subr.bf16.mxu0 %v10024
      %12678 = vmatpush1.bf16.msra.mxu0 %v10023
      %12679 = vmatprep.subr.bf16.mxu0 %v10028
      %12680 = vmatpush1.bf16.msra.mxu0 %v10027
      %12681 = vmatprep.subr.bf16.mxu0 %v10032
      %12682 = vmatpush1.bf16.msra.mxu0 %v10031
      %12683 = vmatprep.subr.bf16.mxu0 %v10036
      %12684 = vmatpush1.bf16.msra.mxu0 %v10035
      %12685 = vmatprep.subr.bf16.mxu0 %v10040
      %12686 = vmatpush1.bf16.msra.mxu0 %v10039
      %12687 = vmatprep.subr.bf16.mxu0 %v10044
      %12688 = vmatpush1.bf16.msra.mxu0 %v10043
      %12689 = vmatprep.subr.bf16.mxu0 %v10048
      %12690 = vmatpush1.bf16.msra.mxu0 %v10047
      %12691 = vmatprep.subr.bf16.mxu0 %v10052
      %12692 = vmatpush1.bf16.msra.mxu0 %v10051
      %12693 = vmatprep.subr.bf16.mxu0 %v10056
      %12694 = vmatpush1.bf16.msra.mxu0 %v10055
      %12695 = vmatprep.subr.bf16.mxu0 %v10060
      %12696 = vmatpush1.bf16.msra.mxu0 %v10059
      %12697 = vmatprep.subr.bf16.mxu0 %v10064
      %12698 = vmatpush1.bf16.msra.mxu0 %v10063
      %12699 = vmatprep.subr.bf16.mxu0 %v10068
      %12700 = vmatpush1.bf16.msra.mxu0 %v10067
      %12701 = vmatprep.subr.bf16.mxu0 %v10072
      %12702 = vmatpush1.bf16.msra.mxu0 %v10071
      %12703 = vmatprep.subr.bf16.mxu0 %v10076
      %12704 = vmatpush1.bf16.msra.mxu0 %v10075
      %12705 = vmatprep.subr.bf16.mxu0 %v10080
      %12706 = vmatpush1.bf16.msra.mxu0 %v10079
      %12707 = vmatprep.mubr.bf16.mxu0 %v5744
      %12708 = vmatmul.mubr.bf16.gmra.mrb[0].mxu0 %v5743
      %v12709 = vpop.f32.mrb[0].mxu0
      %v12710 = vadd.f32 %v12669, %v12709
      %v12711 = vpop.f32.mrb[0].mxu0
      %v12712 = vadd.f32 %v12671, %v12711
      %v12713 = vpop.f32.mrb[0].mxu0
      %v12714 = vpop.f32.mrb[0].mxu0
      %12715 = vdwg.mxu0
      %12716 = vmatprep.subr.bf16.mxu0 %v10084
      %12717 = vmatpush1.bf16.msra.mxu0 %v10083
      %12718 = vmatprep.subr.bf16.mxu0 %v10088
      %12719 = vmatpush1.bf16.msra.mxu0 %v10087
      %12720 = vmatprep.subr.bf16.mxu0 %v10092
      %12721 = vmatpush1.bf16.msra.mxu0 %v10091
      %12722 = vmatprep.subr.bf16.mxu0 %v10096
      %12723 = vmatpush1.bf16.msra.mxu0 %v10095
      %12724 = vmatprep.subr.bf16.mxu0 %v10100
      %12725 = vmatpush1.bf16.msra.mxu0 %v10099
      %12726 = vmatprep.subr.bf16.mxu0 %v10104
      %12727 = vmatpush1.bf16.msra.mxu0 %v10103
      %12728 = vmatprep.subr.bf16.mxu0 %v10108
      %12729 = vmatpush1.bf16.msra.mxu0 %v10107
      %12730 = vmatprep.subr.bf16.mxu0 %v10112
      %12731 = vmatpush1.bf16.msra.mxu0 %v10111
      %12732 = vmatprep.subr.bf16.mxu0 %v10116
      %12733 = vmatpush1.bf16.msra.mxu0 %v10115
      %12734 = vmatprep.subr.bf16.mxu0 %v10120
      %12735 = vmatpush1.bf16.msra.mxu0 %v10119
      %12736 = vmatprep.subr.bf16.mxu0 %v10124
      %12737 = vmatpush1.bf16.msra.mxu0 %v10123
      %12738 = vmatprep.subr.bf16.mxu0 %v10128
      %12739 = vmatpush1.bf16.msra.mxu0 %v10127
      %12740 = vmatprep.subr.bf16.mxu0 %v10132
      %12741 = vmatpush1.bf16.msra.mxu0 %v10131
      %12742 = vmatprep.subr.bf16.mxu0 %v10136
      %12743 = vmatpush1.bf16.msra.mxu0 %v10135
      %12744 = vmatprep.subr.bf16.mxu0 %v10140
      %12745 = vmatpush1.bf16.msra.mxu0 %v10139
      %12746 = vmatprep.subr.bf16.mxu0 %v10144
      %12747 = vmatpush1.bf16.msra.mxu0 %v10143
      %12748 = vmatprep.mubr.bf16.mxu0 %v5748
      %12749 = vmatmul.mubr.bf16.gmra.mrb[0].mxu0 %v5747
      %v12750 = vpop.f32.mrb[0].mxu0
      %v12751 = vadd.f32 %v12710, %v12750
      %v12752 = vpop.f32.mrb[0].mxu0
      %v12753 = vadd.f32 %v12712, %v12752
      %v12754 = vpop.f32.mrb[0].mxu0
      %v12755 = vpop.f32.mrb[0].mxu0
      %12756 = vdwg.mxu0
      %12757 = vmatprep.subr.bf16.mxu0 %v10148
      %12758 = vmatpush1.bf16.msra.mxu0 %v10147
      %12759 = vmatprep.subr.bf16.mxu0 %v10152
      %12760 = vmatpush1.bf16.msra.mxu0 %v10151
      %12761 = vmatprep.subr.bf16.mxu0 %v10156
      %12762 = vmatpush1.bf16.msra.mxu0 %v10155
      %12763 = vmatprep.subr.bf16.mxu0 %v10160
      %12764 = vmatpush1.bf16.msra.mxu0 %v10159
      %12765 = vmatprep.subr.bf16.mxu0 %v10164
      %12766 = vmatpush1.bf16.msra.mxu0 %v10163
      %12767 = vmatprep.subr.bf16.mxu0 %v10168
      %12768 = vmatpush1.bf16.msra.mxu0 %v10167
      %12769 = vmatprep.subr.bf16.mxu0 %v10172
      %12770 = vmatpush1.bf16.msra.mxu0 %v10171
      %12771 = vmatprep.subr.bf16.mxu0 %v10176
      %12772 = vmatpush1.bf16.msra.mxu0 %v10175
      %12773 = vmatprep.subr.bf16.mxu0 %v10180
      %12774 = vmatpush1.bf16.msra.mxu0 %v10179
      %12775 = vmatprep.subr.bf16.mxu0 %v10184
      %12776 = vmatpush1.bf16.msra.mxu0 %v10183
      %12777 = vmatprep.subr.bf16.mxu0 %v10188
      %12778 = vmatpush1.bf16.msra.mxu0 %v10187
      %12779 = vmatprep.subr.bf16.mxu0 %v10192
      %12780 = vmatpush1.bf16.msra.mxu0 %v10191
      %12781 = vmatprep.subr.bf16.mxu0 %v10196
      %12782 = vmatpush1.bf16.msra.mxu0 %v10195
      %12783 = vmatprep.subr.bf16.mxu0 %v10200
      %12784 = vmatpush1.bf16.msra.mxu0 %v10199
      %12785 = vmatprep.subr.bf16.mxu0 %v10204
      %12786 = vmatpush1.bf16.msra.mxu0 %v10203
      %12787 = vmatprep.subr.bf16.mxu0 %v10208
      %12788 = vmatpush1.bf16.msra.mxu0 %v10207
      %12789 = vmatprep.mubr.bf16.mxu0 %v5732
      %12790 = vmatmul.mubr.bf16.gmra.mrb[0].mxu0 %v5731
      %v12791 = vpop.f32.mrb[0].mxu0
      %v12792 = vadd.f32 %v12751, %v12791
      %v12793 = vpop.f32.mrb[0].mxu0
      %v12794 = vadd.f32 %v12753, %v12793
      %v12795 = vpop.f32.mrb[0].mxu0
      %v12796 = vpop.f32.mrb[0].mxu0
      %12797 = vdwg.mxu0
      %12798 = vmatprep.subr.bf16.mxu0 %v10212
      %12799 = vmatpush1.bf16.msra.mxu0 %v10211
      %12800 = vmatprep.subr.bf16.mxu0 %v10216
      %12801 = vmatpush1.bf16.msra.mxu0 %v10215
      %12802 = vmatprep.subr.bf16.mxu0 %v10220
      %12803 = vmatpush1.bf16.msra.mxu0 %v10219
      %12804 = vmatprep.subr.bf16.mxu0 %v10224
      %12805 = vmatpush1.bf16.msra.mxu0 %v10223
      %12806 = vmatprep.subr.bf16.mxu0 %v10228
      %12807 = vmatpush1.bf16.msra.mxu0 %v10227
      %12808 = vmatprep.subr.bf16.mxu0 %v10232
      %12809 = vmatpush1.bf16.msra.mxu0 %v10231
      %12810 = vmatprep.subr.bf16.mxu0 %v10236
      %12811 = vmatpush1.bf16.msra.mxu0 %v10235
      %12812 = vmatprep.subr.bf16.mxu0 %v10240
      %12813 = vmatpush1.bf16.msra.mxu0 %v10239
      %12814 = vmatprep.subr.bf16.mxu0 %v10244
      %12815 = vmatpush1.bf16.msra.mxu0 %v10243
      %12816 = vmatprep.subr.bf16.mxu0 %v10248
      %12817 = vmatpush1.bf16.msra.mxu0 %v10247
      %12818 = vmatprep.subr.bf16.mxu0 %v10252
      %12819 = vmatpush1.bf16.msra.mxu0 %v10251
      %12820 = vmatprep.subr.bf16.mxu0 %v10256
      %12821 = vmatpush1.bf16.msra.mxu0 %v10255
      %12822 = vmatprep.subr.bf16.mxu0 %v10260
      %12823 = vmatpush1.bf16.msra.mxu0 %v10259
      %12824 = vmatprep.subr.bf16.mxu0 %v10264
      %12825 = vmatpush1.bf16.msra.mxu0 %v10263
      %12826 = vmatprep.subr.bf16.mxu0 %v10268
      %12827 = vmatpush1.bf16.msra.mxu0 %v10267
      %12828 = vmatprep.subr.bf16.mxu0 %v10272
      %12829 = vmatpush1.bf16.msra.mxu0 %v10271
      %12830 = vmatprep.mubr.bf16.mxu0 %v5754
      %12831 = vmatmul.mubr.bf16.gmra.mrb[0].mxu0 %v5753
      %v12832 = vpop.f32.mrb[0].mxu0
      %v12833 = vadd.f32 %v12792, %v12832
      %v12834 = vpop.f32.mrb[0].mxu0
      %v12835 = vadd.f32 %v12794, %v12834
      %v12836 = vpop.f32.mrb[0].mxu0
      %v12837 = vpop.f32.mrb[0].mxu0
      %12838 = vdwg.mxu0
      %12839 = vmatprep.subr.bf16.mxu0 %v10276
      %12840 = vmatpush1.bf16.msra.mxu0 %v10275
      %12841 = vmatprep.subr.bf16.mxu0 %v10280
      %12842 = vmatpush1.bf16.msra.mxu0 %v10279
      %12843 = vmatprep.subr.bf16.mxu0 %v10284
      %12844 = vmatpush1.bf16.msra.mxu0 %v10283
      %12845 = vmatprep.subr.bf16.mxu0 %v10288
      %12846 = vmatpush1.bf16.msra.mxu0 %v10287
      %12847 = vmatprep.subr.bf16.mxu0 %v10292
      %12848 = vmatpush1.bf16.msra.mxu0 %v10291
      %12849 = vmatprep.subr.bf16.mxu0 %v10296
      %12850 = vmatpush1.bf16.msra.mxu0 %v10295
      %12851 = vmatprep.subr.bf16.mxu0 %v10300
      %12852 = vmatpush1.bf16.msra.mxu0 %v10299
      %12853 = vmatprep.subr.bf16.mxu0 %v10304
      %12854 = vmatpush1.bf16.msra.mxu0 %v10303
      %12855 = vmatprep.subr.bf16.mxu0 %v10308
      %12856 = vmatpush1.bf16.msra.mxu0 %v10307
      %12857 = vmatprep.subr.bf16.mxu0 %v10312
      %12858 = vmatpush1.bf16.msra.mxu0 %v10311
      %12859 = vmatprep.subr.bf16.mxu0 %v10316
      %12860 = vmatpush1.bf16.msra.mxu0 %v10315
      %12861 = vmatprep.subr.bf16.mxu0 %v10320
      %12862 = vmatpush1.bf16.msra.mxu0 %v10319
      %12863 = vmatprep.subr.bf16.mxu0 %v10324
      %12864 = vmatpush1.bf16.msra.mxu0 %v10323
      %12865 = vmatprep.subr.bf16.mxu0 %v10328
      %12866 = vmatpush1.bf16.msra.mxu0 %v10327
      %12867 = vmatprep.subr.bf16.mxu0 %v10332
      %12868 = vmatpush1.bf16.msra.mxu0 %v10331
      %12869 = vmatprep.subr.bf16.mxu0 %v10336
      %12870 = vmatpush1.bf16.msra.mxu0 %v10335
      %12871 = vmatprep.mubr.bf16.mxu0 %v5758
      %12872 = vmatmul.mubr.bf16.gmra.mrb[0].mxu0 %v5757
      %v12873 = vpop.f32.mrb[0].mxu0
      %v12874 = vadd.f32 %v12833, %v12873
      %v12875 = vpop.f32.mrb[0].mxu0
      %v12876 = vadd.f32 %v12835, %v12875
      %v12877 = vpop.f32.mrb[0].mxu0
      %v12878 = vpop.f32.mrb[0].mxu0
      %12879 = vdwg.mxu0
      %12880 = vmatprep.subr.bf16.mxu0 %v10340
      %12881 = vmatpush1.bf16.msra.mxu0 %v10339
      %12882 = vmatprep.subr.bf16.mxu0 %v10344
      %12883 = vmatpush1.bf16.msra.mxu0 %v10343
      %12884 = vmatprep.subr.bf16.mxu0 %v10348
      %12885 = vmatpush1.bf16.msra.mxu0 %v10347
      %12886 = vmatprep.subr.bf16.mxu0 %v10352
      %12887 = vmatpush1.bf16.msra.mxu0 %v10351
      %12888 = vmatprep.subr.bf16.mxu0 %v10356
      %12889 = vmatpush1.bf16.msra.mxu0 %v10355
      %12890 = vmatprep.subr.bf16.mxu0 %v10360
      %12891 = vmatpush1.bf16.msra.mxu0 %v10359
      %12892 = vmatprep.subr.bf16.mxu0 %v10364
      %12893 = vmatpush1.bf16.msra.mxu0 %v10363
      %12894 = vmatprep.subr.bf16.mxu0 %v10368
      %12895 = vmatpush1.bf16.msra.mxu0 %v10367
      %12896 = vmatprep.subr.bf16.mxu0 %v10372
      %12897 = vmatpush1.bf16.msra.mxu0 %v10371
      %12898 = vmatprep.subr.bf16.mxu0 %v10376
      %12899 = vmatpush1.bf16.msra.mxu0 %v10375
      %12900 = vmatprep.subr.bf16.mxu0 %v10380
      %12901 = vmatpush1.bf16.msra.mxu0 %v10379
      %12902 = vmatprep.subr.bf16.mxu0 %v10384
      %12903 = vmatpush1.bf16.msra.mxu0 %v10383
      %12904 = vmatprep.subr.bf16.mxu0 %v10388
      %12905 = vmatpush1.bf16.msra.mxu0 %v10387
      %12906 = vmatprep.subr.bf16.mxu0 %v10392
      %12907 = vmatpush1.bf16.msra.mxu0 %v10391
      %12908 = vmatprep.subr.bf16.mxu0 %v10396
      %12909 = vmatpush1.bf16.msra.mxu0 %v10395
      %12910 = vmatprep.subr.bf16.mxu0 %v10400
      %12911 = vmatpush1.bf16.msra.mxu0 %v10399
      %12912 = vmatprep.mubr.bf16.mxu0 %v5762
      %12913 = vmatmul.mubr.bf16.gmra.mrb[0].mxu0 %v5761
      %v12914 = vpop.f32.mrb[0].mxu0
      %v12915 = vadd.f32 %v12874, %v12914
      %v12916 = vpop.f32.mrb[0].mxu0
      %v12917 = vadd.f32 %v12876, %v12916
      %v12918 = vpop.f32.mrb[0].mxu0
      %v12919 = vpop.f32.mrb[0].mxu0
      %12920 = vdwg.mxu0
      %12921 = vmatprep.subr.bf16.mxu0 %v10404
      %12922 = vmatpush1.bf16.msra.mxu0 %v10403
      %12923 = vmatprep.subr.bf16.mxu0 %v10408
      %12924 = vmatpush1.bf16.msra.mxu0 %v10407
      %12925 = vmatprep.subr.bf16.mxu0 %v10412
      %12926 = vmatpush1.bf16.msra.mxu0 %v10411
      %12927 = vmatprep.subr.bf16.mxu0 %v10416
      %12928 = vmatpush1.bf16.msra.mxu0 %v10415
      %12929 = vmatprep.subr.bf16.mxu0 %v10420
      %12930 = vmatpush1.bf16.msra.mxu0 %v10419
      %12931 = vmatprep.subr.bf16.mxu0 %v10424
      %12932 = vmatpush1.bf16.msra.mxu0 %v10423
      %12933 = vmatprep.subr.bf16.mxu0 %v10428
      %12934 = vmatpush1.bf16.msra.mxu0 %v10427
      %12935 = vmatprep.subr.bf16.mxu0 %v10432
      %12936 = vmatpush1.bf16.msra.mxu0 %v10431
      %12937 = vmatprep.subr.bf16.mxu0 %v10436
      %12938 = vmatpush1.bf16.msra.mxu0 %v10435
      %12939 = vmatprep.subr.bf16.mxu0 %v10440
      %12940 = vmatpush1.bf16.msra.mxu0 %v10439
      %12941 = vmatprep.subr.bf16.mxu0 %v10444
      %12942 = vmatpush1.bf16.msra.mxu0 %v10443
      %12943 = vmatprep.subr.bf16.mxu0 %v10448
      %12944 = vmatpush1.bf16.msra.mxu0 %v10447
      %12945 = vmatprep.subr.bf16.mxu0 %v10452
      %12946 = vmatpush1.bf16.msra.mxu0 %v10451
      %12947 = vmatprep.subr.bf16.mxu0 %v10456
      %12948 = vmatpush1.bf16.msra.mxu0 %v10455
      %12949 = vmatprep.subr.bf16.mxu0 %v10460
      %12950 = vmatpush1.bf16.msra.mxu0 %v10459
      %12951 = vmatprep.subr.bf16.mxu0 %v10464
      %12952 = vmatpush1.bf16.msra.mxu0 %v10463
      %12953 = vmatprep.mubr.bf16.mxu0 %v5734
      %12954 = vmatmul.mubr.bf16.gmra.mrb[0].mxu0 %v5733
      %v12955 = vpop.f32.mrb[0].mxu0
      %v12956 = vadd.f32 %v12915, %v12955
      %v12957 = vpop.f32.mrb[0].mxu0
      %v12958 = vadd.f32 %v12917, %v12957
      %v12959 = vpop.f32.mrb[0].mxu0
      %v12960 = vpop.f32.mrb[0].mxu0
      %12961 = vdwg.mxu0
      %12962 = vmatprep.subr.bf16.mxu0 %v10468
      %12963 = vmatpush1.bf16.msra.mxu0 %v10467
      %12964 = vmatprep.subr.bf16.mxu0 %v10472
      %12965 = vmatpush1.bf16.msra.mxu0 %v10471
      %12966 = vmatprep.subr.bf16.mxu0 %v10476
      %12967 = vmatpush1.bf16.msra.mxu0 %v10475
      %12968 = vmatprep.subr.bf16.mxu0 %v10480
      %12969 = vmatpush1.bf16.msra.mxu0 %v10479
      %12970 = vmatprep.subr.bf16.mxu0 %v10484
      %12971 = vmatpush1.bf16.msra.mxu0 %v10483
      %12972 = vmatprep.subr.bf16.mxu0 %v10488
      %12973 = vmatpush1.bf16.msra.mxu0 %v10487
      %12974 = vmatprep.subr.bf16.mxu0 %v10492
      %12975 = vmatpush1.bf16.msra.mxu0 %v10491
      %12976 = vmatprep.subr.bf16.mxu0 %v10496
      %12977 = vmatpush1.bf16.msra.mxu0 %v10495
      %12978 = vmatprep.subr.bf16.mxu0 %v10500
      %12979 = vmatpush1.bf16.msra.mxu0 %v10499
      %12980 = vmatprep.subr.bf16.mxu0 %v10504
      %12981 = vmatpush1.bf16.msra.mxu0 %v10503
      %12982 = vmatprep.subr.bf16.mxu0 %v10508
      %12983 = vmatpush1.bf16.msra.mxu0 %v10507
      %12984 = vmatprep.subr.bf16.mxu0 %v10512
      %12985 = vmatpush1.bf16.msra.mxu0 %v10511
      %12986 = vmatprep.subr.bf16.mxu0 %v10516
      %12987 = vmatpush1.bf16.msra.mxu0 %v10515
      %12988 = vmatprep.subr.bf16.mxu0 %v10520
      %12989 = vmatpush1.bf16.msra.mxu0 %v10519
      %12990 = vmatprep.subr.bf16.mxu0 %v10524
      %12991 = vmatpush1.bf16.msra.mxu0 %v10523
      %12992 = vmatprep.subr.bf16.mxu0 %v10528
      %12993 = vmatpush1.bf16.msra.mxu0 %v10527
      %12994 = vmatprep.mubr.bf16.mxu0 %v5768
      %12995 = vmatmul.mubr.bf16.gmra.mrb[0].mxu0 %v5767
      %v12996 = vpop.f32.mrb[0].mxu0
      %v12997 = vadd.f32 %v12956, %v12996
      %v12998 = vpop.f32.mrb[0].mxu0
      %v12999 = vadd.f32 %v12958, %v12998
      %v13000 = vpop.f32.mrb[0].mxu0
      %v13001 = vpop.f32.mrb[0].mxu0
      %13002 = vdwg.mxu0
      %13003 = vmatprep.subr.bf16.mxu0 %v10532
      %13004 = vmatpush1.bf16.msra.mxu0 %v10531
      %13005 = vmatprep.subr.bf16.mxu0 %v10536
      %13006 = vmatpush1.bf16.msra.mxu0 %v10535
      %13007 = vmatprep.subr.bf16.mxu0 %v10540
      %13008 = vmatpush1.bf16.msra.mxu0 %v10539
      %13009 = vmatprep.subr.bf16.mxu0 %v10544
      %13010 = vmatpush1.bf16.msra.mxu0 %v10543
      %13011 = vmatprep.subr.bf16.mxu0 %v10548
      %13012 = vmatpush1.bf16.msra.mxu0 %v10547
      %13013 = vmatprep.subr.bf16.mxu0 %v10552
      %13014 = vmatpush1.bf16.msra.mxu0 %v10551
      %13015 = vmatprep.subr.bf16.mxu0 %v10556
      %13016 = vmatpush1.bf16.msra.mxu0 %v10555
      %13017 = vmatprep.subr.bf16.mxu0 %v10560
      %13018 = vmatpush1.bf16.msra.mxu0 %v10559
      %13019 = vmatprep.subr.bf16.mxu0 %v10564
      %13020 = vmatpush1.bf16.msra.mxu0 %v10563
      %13021 = vmatprep.subr.bf16.mxu0 %v10568
      %13022 = vmatpush1.bf16.msra.mxu0 %v10567
      %13023 = vmatprep.subr.bf16.mxu0 %v10572
      %13024 = vmatpush1.bf16.msra.mxu0 %v10571
      %13025 = vmatprep.subr.bf16.mxu0 %v10576
      %13026 = vmatpush1.bf16.msra.mxu0 %v10575
      %13027 = vmatprep.subr.bf16.mxu0 %v10580
      %13028 = vmatpush1.bf16.msra.mxu0 %v10579
      %13029 = vmatprep.subr.bf16.mxu0 %v10584
      %13030 = vmatpush1.bf16.msra.mxu0 %v10583
      %13031 = vmatprep.subr.bf16.mxu0 %v10588
      %13032 = vmatpush1.bf16.msra.mxu0 %v10587
      %13033 = vmatprep.subr.bf16.mxu0 %v10592
      %13034 = vmatpush1.bf16.msra.mxu0 %v10591
      %13035 = vmatprep.mubr.bf16.mxu0 %v5772
      %13036 = vmatmul.mubr.bf16.gmra.mrb[0].mxu0 %v5771
      %v13037 = vpop.f32.mrb[0].mxu0
      %v13038 = vadd.f32 %v12997, %v13037
      %v13039 = vpop.f32.mrb[0].mxu0
      %v13040 = vadd.f32 %v12999, %v13039
      %v13041 = vpop.f32.mrb[0].mxu0
      %v13042 = vpop.f32.mrb[0].mxu0
      %13043 = vdwg.mxu0
      %13044 = vmatprep.subr.bf16.mxu0 %v10596
      %13045 = vmatpush1.bf16.msra.mxu0 %v10595
      %13046 = vmatprep.subr.bf16.mxu0 %v10600
      %13047 = vmatpush1.bf16.msra.mxu0 %v10599
      %13048 = vmatprep.subr.bf16.mxu0 %v10604
      %13049 = vmatpush1.bf16.msra.mxu0 %v10603
      %13050 = vmatprep.subr.bf16.mxu0 %v10608
      %13051 = vmatpush1.bf16.msra.mxu0 %v10607
      %13052 = vmatprep.subr.bf16.mxu0 %v10612
      %13053 = vmatpush1.bf16.msra.mxu0 %v10611
      %13054 = vmatprep.subr.bf16.mxu0 %v10616
      %13055 = vmatpush1.bf16.msra.mxu0 %v10615
      %13056 = vmatprep.subr.bf16.mxu0 %v10620
      %13057 = vmatpush1.bf16.msra.mxu0 %v10619
      %13058 = vmatprep.subr.bf16.mxu0 %v10624
      %13059 = vmatpush1.bf16.msra.mxu0 %v10623
      %13060 = vmatprep.subr.bf16.mxu0 %v10628
      %13061 = vmatpush1.bf16.msra.mxu0 %v10627
      %13062 = vmatprep.subr.bf16.mxu0 %v10632
      %13063 = vmatpush1.bf16.msra.mxu0 %v10631
      %13064 = vmatprep.subr.bf16.mxu0 %v10636
      %13065 = vmatpush1.bf16.msra.mxu0 %v10635
      %13066 = vmatprep.subr.bf16.mxu0 %v10640
      %13067 = vmatpush1.bf16.msra.mxu0 %v10639
      %13068 = vmatprep.subr.bf16.mxu0 %v10644
      %13069 = vmatpush1.bf16.msra.mxu0 %v10643
      %13070 = vmatprep.subr.bf16.mxu0 %v10648
      %13071 = vmatpush1.bf16.msra.mxu0 %v10647
      %13072 = vmatprep.subr.bf16.mxu0 %v10652
      %13073 = vmatpush1.bf16.msra.mxu0 %v10651
      %13074 = vmatprep.subr.bf16.mxu0 %v10656
      %13075 = vmatpush1.bf16.msra.mxu0 %v10655
      %13076 = vmatprep.mubr.bf16.mxu0 %v5776
      %13077 = vmatmul.mubr.bf16.gmra.mrb[0].mxu0 %v5775
      %v13078 = vpop.f32.mrb[0].mxu0
      %v13079 = vadd.f32 %v13038, %v13078
      %v13080 = vpop.f32.mrb[0].mxu0
      %v13081 = vadd.f32 %v13040, %v13080
      %v13082 = vpop.f32.mrb[0].mxu0
      %v13083 = vpop.f32.mrb[0].mxu0
      %13084 = vdwg.mxu0
      %13085 = vmatprep.subr.bf16.mxu0 %v10660
      %13086 = vmatpush1.bf16.msra.mxu0 %v10659
      %13087 = vmatprep.subr.bf16.mxu0 %v10664
      %13088 = vmatpush1.bf16.msra.mxu0 %v10663
      %13089 = vmatprep.subr.bf16.mxu0 %v10668
      %13090 = vmatpush1.bf16.msra.mxu0 %v10667
      %13091 = vmatprep.subr.bf16.mxu0 %v10672
      %13092 = vmatpush1.bf16.msra.mxu0 %v10671
      %13093 = vmatprep.subr.bf16.mxu0 %v10676
      %13094 = vmatpush1.bf16.msra.mxu0 %v10675
      %13095 = vmatprep.subr.bf16.mxu0 %v10680
      %13096 = vmatpush1.bf16.msra.mxu0 %v10679
      %13097 = vmatprep.subr.bf16.mxu0 %v10684
      %13098 = vmatpush1.bf16.msra.mxu0 %v10683
      %13099 = vmatprep.subr.bf16.mxu0 %v10688
      %13100 = vmatpush1.bf16.msra.mxu0 %v10687
      %13101 = vmatprep.subr.bf16.mxu0 %v10692
      %13102 = vmatpush1.bf16.msra.mxu0 %v10691
      %13103 = vmatprep.subr.bf16.mxu0 %v10696
      %13104 = vmatpush1.bf16.msra.mxu0 %v10695
      %13105 = vmatprep.subr.bf16.mxu0 %v10700
      %13106 = vmatpush1.bf16.msra.mxu0 %v10699
      %13107 = vmatprep.subr.bf16.mxu0 %v10704
      %13108 = vmatpush1.bf16.msra.mxu0 %v10703
      %13109 = vmatprep.subr.bf16.mxu0 %v10708
      %13110 = vmatpush1.bf16.msra.mxu0 %v10707
      %13111 = vmatprep.subr.bf16.mxu0 %v10712
      %13112 = vmatpush1.bf16.msra.mxu0 %v10711
      %13113 = vmatprep.subr.bf16.mxu0 %v10716
      %13114 = vmatpush1.bf16.msra.mxu0 %v10715
      %13115 = vmatprep.subr.bf16.mxu0 %v10720
      %13116 = vmatpush1.bf16.msra.mxu0 %v10719
      %13117 = vmatprep.mubr.bf16.mxu0 %v5736
      %13118 = vmatmul.mubr.bf16.gmra.mrb[0].mxu0 %v5735
      %v13119 = vpop.f32.mrb[0].mxu0
      %v13120 = vadd.f32 %v13079, %v13119
      %v13121 = vpop.f32.mrb[0].mxu0
      %v13122 = vadd.f32 %v13081, %v13121
      %v13123 = vpop.f32.mrb[0].mxu0
      %v13124 = vpop.f32.mrb[0].mxu0
      %13125 = vdwg.mxu0
      %13126 = vmatprep.subr.bf16.mxu0 %v10724
      %13127 = vmatpush1.bf16.msra.mxu0 %v10723
      %13128 = vmatprep.subr.bf16.mxu0 %v10728
      %13129 = vmatpush1.bf16.msra.mxu0 %v10727
      %13130 = vmatprep.subr.bf16.mxu0 %v10732
      %13131 = vmatpush1.bf16.msra.mxu0 %v10731
      %13132 = vmatprep.subr.bf16.mxu0 %v10736
      %13133 = vmatpush1.bf16.msra.mxu0 %v10735
      %13134 = vmatprep.subr.bf16.mxu0 %v10740
      %13135 = vmatpush1.bf16.msra.mxu0 %v10739
      %13136 = vmatprep.subr.bf16.mxu0 %v10744
      %13137 = vmatpush1.bf16.msra.mxu0 %v10743
      %13138 = vmatprep.subr.bf16.mxu0 %v10748
      %13139 = vmatpush1.bf16.msra.mxu0 %v10747
      %13140 = vmatprep.subr.bf16.mxu0 %v10752
      %13141 = vmatpush1.bf16.msra.mxu0 %v10751
      %13142 = vmatprep.subr.bf16.mxu0 %v10756
      %13143 = vmatpush1.bf16.msra.mxu0 %v10755
      %13144 = vmatprep.subr.bf16.mxu0 %v10760
      %13145 = vmatpush1.bf16.msra.mxu0 %v10759
      %13146 = vmatprep.subr.bf16.mxu0 %v10764
      %13147 = vmatpush1.bf16.msra.mxu0 %v10763
      %13148 = vmatprep.subr.bf16.mxu0 %v10768
      %13149 = vmatpush1.bf16.msra.mxu0 %v10767
      %13150 = vmatprep.subr.bf16.mxu0 %v10772
      %13151 = vmatpush1.bf16.msra.mxu0 %v10771
      %13152 = vmatprep.subr.bf16.mxu0 %v10776
      %13153 = vmatpush1.bf16.msra.mxu0 %v10775
      %13154 = vmatprep.subr.bf16.mxu0 %v10780
      %13155 = vmatpush1.bf16.msra.mxu0 %v10779
      %13156 = vmatprep.subr.bf16.mxu0 %v10784
      %13157 = vmatpush1.bf16.msra.mxu0 %v10783
      %13158 = vmatprep.mubr.bf16.mxu0 %v5782
      %13159 = vmatmul.mubr.bf16.gmra.mrb[0].mxu0 %v5781
      %v13160 = vpop.f32.mrb[0].mxu0
      %v13161 = vadd.f32 %v13120, %v13160
      %v13162 = vpop.f32.mrb[0].mxu0
      %v13163 = vadd.f32 %v13122, %v13162
      %v13164 = vpop.f32.mrb[0].mxu0
      %v13165 = vpop.f32.mrb[0].mxu0
      %13166 = vdwg.mxu0
      %13167 = vmatprep.subr.bf16.mxu0 %v10788
      %13168 = vmatpush1.bf16.msra.mxu0 %v10787
      %13169 = vmatprep.subr.bf16.mxu0 %v10792
      %13170 = vmatpush1.bf16.msra.mxu0 %v10791
      %13171 = vmatprep.subr.bf16.mxu0 %v10796
      %13172 = vmatpush1.bf16.msra.mxu0 %v10795
      %13173 = vmatprep.subr.bf16.mxu0 %v10800
      %13174 = vmatpush1.bf16.msra.mxu0 %v10799
      %13175 = vmatprep.subr.bf16.mxu0 %v10804
      %13176 = vmatpush1.bf16.msra.mxu0 %v10803
      %13177 = vmatprep.subr.bf16.mxu0 %v10808
      %13178 = vmatpush1.bf16.msra.mxu0 %v10807
      %13179 = vmatprep.subr.bf16.mxu0 %v10812
      %13180 = vmatpush1.bf16.msra.mxu0 %v10811
      %13181 = vmatprep.subr.bf16.mxu0 %v10816
      %13182 = vmatpush1.bf16.msra.mxu0 %v10815
      %13183 = vmatprep.subr.bf16.mxu0 %v10820
      %13184 = vmatpush1.bf16.msra.mxu0 %v10819
      %13185 = vmatprep.subr.bf16.mxu0 %v10824
      %13186 = vmatpush1.bf16.msra.mxu0 %v10823
      %13187 = vmatprep.subr.bf16.mxu0 %v10828
      %13188 = vmatpush1.bf16.msra.mxu0 %v10827
      %13189 = vmatprep.subr.bf16.mxu0 %v10832
      %13190 = vmatpush1.bf16.msra.mxu0 %v10831
      %13191 = vmatprep.subr.bf16.mxu0 %v10836
      %13192 = vmatpush1.bf16.msra.mxu0 %v10835
      %13193 = vmatprep.subr.bf16.mxu0 %v10840
      %13194 = vmatpush1.bf16.msra.mxu0 %v10839
      %13195 = vmatprep.subr.bf16.mxu0 %v10844
      %13196 = vmatpush1.bf16.msra.mxu0 %v10843
      %13197 = vmatprep.subr.bf16.mxu0 %v10848
      %13198 = vmatpush1.bf16.msra.mxu0 %v10847
      %13199 = vmatprep.mubr.bf16.mxu0 %v5786
      %13200 = vmatmul.mubr.bf16.gmra.mrb[0].mxu0 %v5785
      %v13201 = vpop.f32.mrb[0].mxu0
      %v13202 = vadd.f32 %v13161, %v13201
      %v13203 = vpop.f32.mrb[0].mxu0
      %v13204 = vadd.f32 %v13163, %v13203
      %v13205 = vpop.f32.mrb[0].mxu0
      %v13206 = vpop.f32.mrb[0].mxu0
      %13207 = vdwg.mxu0
      %13208 = vmatprep.subr.bf16.mxu0 %v10852
      %13209 = vmatpush1.bf16.msra.mxu0 %v10851
      %13210 = vmatprep.subr.bf16.mxu0 %v10856
      %13211 = vmatpush1.bf16.msra.mxu0 %v10855
      %13212 = vmatprep.subr.bf16.mxu0 %v10860
      %13213 = vmatpush1.bf16.msra.mxu0 %v10859
      %13214 = vmatprep.subr.bf16.mxu0 %v10864
      %13215 = vmatpush1.bf16.msra.mxu0 %v10863
      %13216 = vmatprep.subr.bf16.mxu0 %v10868
      %13217 = vmatpush1.bf16.msra.mxu0 %v10867
      %13218 = vmatprep.subr.bf16.mxu0 %v10872
      %13219 = vmatpush1.bf16.msra.mxu0 %v10871
      %13220 = vmatprep.subr.bf16.mxu0 %v10876
      %13221 = vmatpush1.bf16.msra.mxu0 %v10875
      %13222 = vmatprep.subr.bf16.mxu0 %v10880
      %13223 = vmatpush1.bf16.msra.mxu0 %v10879
      %13224 = vmatprep.subr.bf16.mxu0 %v10884
      %13225 = vmatpush1.bf16.msra.mxu0 %v10883
      %13226 = vmatprep.subr.bf16.mxu0 %v10888
      %13227 = vmatpush1.bf16.msra.mxu0 %v10887
      %13228 = vmatprep.subr.bf16.mxu0 %v10892
      %13229 = vmatpush1.bf16.msra.mxu0 %v10891
      %13230 = vmatprep.subr.bf16.mxu0 %v10896
      %13231 = vmatpush1.bf16.msra.mxu0 %v10895
      %13232 = vmatprep.subr.bf16.mxu0 %v10900
      %13233 = vmatpush1.bf16.msra.mxu0 %v10899
      %13234 = vmatprep.subr.bf16.mxu0 %v10904
      %13235 = vmatpush1.bf16.msra.mxu0 %v10903
      %13236 = vmatprep.subr.bf16.mxu0 %v10908
      %13237 = vmatpush1.bf16.msra.mxu0 %v10907
      %13238 = vmatprep.subr.bf16.mxu0 %v10912
      %13239 = vmatpush1.bf16.msra.mxu0 %v10911
      %13240 = vmatprep.mubr.bf16.mxu0 %v5790
      %13241 = vmatmul.mubr.bf16.gmra.mrb[0].mxu0 %v5789
      %v13242 = vpop.f32.mrb[0].mxu0
      %v13243 = vadd.f32 %v13202, %v13242
      %v13244 = vpop.f32.mrb[0].mxu0
      %v13245 = vadd.f32 %v13204, %v13244
      %v13246 = vpop.f32.mrb[0].mxu0
      %v13247 = vpop.f32.mrb[0].mxu0
      %13248 = vdwg.mxu0
      %vm13249 = vcmask 1043456
      %v13250 = vsel %vm13249, %v12587, 0.0
      %v13251 = vrot.slane %v13250, 4
      %v13252 = vadd.f32 %v13250, %v13251
      %v13253 = vrot.slane %v13252, 2
      %v13254 = vadd.f32 %v13252, %v13253
      %v13255 = vrot.slane %v13254, 1
      %v13256 = vadd.f32 %v13254, %v13255
      %v13257 = vsel %vm13249, %v12589, 0.0
      %v13258 = vrot.slane %v13257, 4
      %v13259 = vadd.f32 %v13257, %v13258
      %v13260 = vrot.slane %v13259, 2
      %v13261 = vadd.f32 %v13259, %v13260
      %v13262 = vrot.slane %v13261, 1
      %v13263 = vadd.f32 %v13261, %v13262
      %v13264 = vsel %vm13249, %v13243, 0.0
      %v13265 = vrot.slane %v13264, 4
      %v13266 = vadd.f32 %v13264, %v13265
      %v13267 = vrot.slane %v13266, 2
      %v13268 = vadd.f32 %v13266, %v13267
      %v13269 = vrot.slane %v13268, 1
      %v13270 = vadd.f32 %v13268, %v13269
      %v13271 = vsel %vm13249, %v13245, 0.0
      %v13272 = vrot.slane %v13271, 4
      %v13273 = vadd.f32 %v13271, %v13272
      %v13274 = vrot.slane %v13273, 2
      %v13275 = vadd.f32 %v13273, %v13274
      %v13276 = vrot.slane %v13275, 1
      %v13277 = vadd.f32 %v13275, %v13276
      %v13278 = vrcp.pop 4.0
      %v13279 = vmul.f32 %v13256, %v13278
      %v13280 = vmul.f32 %v13263, %v13278
      %v13281 = vmul.f32 %v13270, %v13278
      %v13282 = vmul.f32 %v13277, %v13278
      %v13283 = vsub.f32 %v12587, %v13279
      %v13284 = vsub.f32 %v12589, %v13280
      %v13285 = vsub.f32 %v13243, %v13281
      %v13286 = vsub.f32 %v13245, %v13282
      %v13287 = vmul.f32 %v13283, %v13283
      %v13288 = vmul.f32 %v13284, %v13284
      %v13289 = vmul.f32 %v13285, %v13285
      %v13290 = vmul.f32 %v13286, %v13286
      %v13291 = vsel %vm13249, %v13287, 0.0
      %v13292 = vrot.slane %v13291, 4
      %v13293 = vadd.f32 %v13291, %v13292
      %v13294 = vrot.slane %v13293, 2
      %v13295 = vadd.f32 %v13293, %v13294
      %v13296 = vrot.slane %v13295, 1
      %v13297 = vadd.f32 %v13295, %v13296
      %v13298 = vsel %vm13249, %v13288, 0.0
      %v13299 = vrot.slane %v13298, 4
      %v13300 = vadd.f32 %v13298, %v13299
      %v13301 = vrot.slane %v13300, 2
      %v13302 = vadd.f32 %v13300, %v13301
      %v13303 = vrot.slane %v13302, 1
      %v13304 = vadd.f32 %v13302, %v13303
      %v13305 = vsel %vm13249, %v13289, 0.0
      %v13306 = vrot.slane %v13305, 4
      %v13307 = vadd.f32 %v13305, %v13306
      %v13308 = vrot.slane %v13307, 2
      %v13309 = vadd.f32 %v13307, %v13308
      %v13310 = vrot.slane %v13309, 1
      %v13311 = vadd.f32 %v13309, %v13310
      %v13312 = vsel %vm13249, %v13290, 0.0
      %v13313 = vrot.slane %v13312, 4
      %v13314 = vadd.f32 %v13312, %v13313
      %v13315 = vrot.slane %v13314, 2
      %v13316 = vadd.f32 %v13314, %v13315
      %v13317 = vrot.slane %v13316, 1
      %v13318 = vadd.f32 %v13316, %v13317
      %v13319 = vmul.f32 %v13297, %v13278
      %v13320 = vmul.f32 %v13304, %v13278
      %v13321 = vmul.f32 %v13311, %v13278
      %v13322 = vmul.f32 %v13318, %v13278
      %v13323 = vadd.f32 %v13319, 1e-05
      %v13324 = vadd.f32 %v13320, 1e-05
      %v13325 = vadd.f32 %v13321, 1e-05
      %v13326 = vadd.f32 %v13322, 1e-05
      %v13327 = vrsqrt.pop %v13323
      %v13328 = vrsqrt.pop %v13324
      %v13329 = vrsqrt.pop %v13325
      %v13330 = vrsqrt.pop %v13326
      %v13331 = vmul.f32 %v13283, %v13327
      %v13332 = vmul.f32 %v13284, %v13328
      %v13333 = vmul.f32 %v13285, %v13329
      %v13334 = vmul.f32 %v13286, %v13330
      %vm13335 = vcmp.ge.f32.partialorder %v13331, 0.0
      %vm13336 = vcmp.ge.f32.partialorder %v13332, 0.0
      %vm13337 = vcmp.ge.f32.partialorder %v13333, 0.0
      %vm13338 = vcmp.ge.f32.partialorder %v13334, 0.0
      %v13339 = vmul.f32 %v13331, 0.2
      %v13340 = vmul.f32 %v13332, 0.2
      %v13341 = vmul.f32 %v13333, 0.2
      %v13342 = vmul.f32 %v13334, 0.2
      %v13343 = vsel %vm13335, %v13331, %v13339
      %v13344 = vsel %vm13336, %v13332, %v13340
      %v13345 = vsel %vm13337, %v13333, %v13341
      %v13346 = vsel %vm13338, %v13334, %v13342
      %v13347 = vld [vmem:[%s9] sm:$0xf]
      %v13348 = vld [vmem:[%s9 + $0x4] sm:$0xf]
      %v13349 = vpack.c.bf16 %v13343, %v13343
      %v13350 = vpack.c.bf16 %v13344, %v13344
      %v13351 = vpack.c.bf16 %v13345, %v13345
      %v13352 = vpack.c.bf16 %v13346, %v13346
      %v13355 = vunpack.c.l.b16 %v13347
      %v13356 = vunpack.c.l.b16 %v13348
      %v13357 = vpack.c.b16 %v13356, %v13355
      %vm13358 = vcmask 31744
      %v13360 = vsel %vm13358, %v13357, 0
      %vm13362 = vcmask 1041408
      %v13364 = vsel %vm13362, %v13349, 0
      %v13367 = vsel %vm13362, %v13350, 0
      %v13370 = vsel %vm13362, %v13351, 0
      %v13373 = vsel %vm13362, %v13352, 0
      %13375 = vmatprep.subr.bf16.mxu0 %v13367
      %13376 = vmatpush1.bf16.msra.mxu0 %v13364
      %13377 = vmatprep.subr.bf16.mxu0 0
      %13378 = vmatpush1.bf16.msra.mxu0 0
      %13379 = vmatprep.subr.bf16.mxu0 0
      %13380 = vmatpush1.bf16.msra.mxu0 0
      %13381 = vmatprep.subr.bf16.mxu0 0
      %13382 = vmatpush1.bf16.msra.mxu0 0
      %13383 = vmatprep.subr.bf16.mxu0 0
      %13384 = vmatpush1.bf16.msra.mxu0 0
      %13385 = vmatprep.subr.bf16.mxu0 0
      %13386 = vmatpush1.bf16.msra.mxu0 0
      %13387 = vmatprep.subr.bf16.mxu0 0
      %13388 = vmatpush1.bf16.msra.mxu0 0
      %13389 = vmatprep.subr.bf16.mxu0 0
      %13390 = vmatpush1.bf16.msra.mxu0 0
      %13391 = vmatprep.subr.bf16.mxu0 0
      %13392 = vmatpush1.bf16.msra.mxu0 0
      %13393 = vmatprep.subr.bf16.mxu0 0
      %13394 = vmatpush1.bf16.msra.mxu0 0
      %13395 = vmatprep.subr.bf16.mxu0 0
      %13396 = vmatpush1.bf16.msra.mxu0 0
      %13397 = vmatprep.subr.bf16.mxu0 0
      %13398 = vmatpush1.bf16.msra.mxu0 0
      %13399 = vmatprep.subr.bf16.mxu0 0
      %13400 = vmatpush1.bf16.msra.mxu0 0
      %13401 = vmatprep.subr.bf16.mxu0 0
      %13402 = vmatpush1.bf16.msra.mxu0 0
      %13403 = vmatprep.subr.bf16.mxu0 0
      %13404 = vmatpush1.bf16.msra.mxu0 0
      %13405 = vmatprep.subr.bf16.mxu0 0
      %13406 = vmatpush1.bf16.msra.mxu0 0
      %13407 = vmatprep.mubr.bf16.mxu0 0
      %13408 = vmatmul.mubr.bf16.gmra.mrb[0].mxu0 %v13360
      %v13409 = vpop.f32.mrb[0].mxu0
      %v13410 = vadd.f32 0.0, %v13409
      %v13411 = vpop.f32.mrb[0].mxu0
      %v13412 = vadd.f32 0.0, %v13411
      %v13413 = vpop.f32.mrb[0].mxu0
      %v13414 = vadd.f32 0.0, %v13413
      %v13415 = vpop.f32.mrb[0].mxu0
      %v13416 = vadd.f32 0.0, %v13415
      %13417 = vdwg.mxu0
      %13418 = vmatprep.subr.bf16.mxu0 %v13373
      %13419 = vmatpush1.bf16.msra.mxu0 %v13370
      %13420 = vmatprep.subr.bf16.mxu0 0
      %13421 = vmatpush1.bf16.msra.mxu0 0
      %13422 = vmatprep.subr.bf16.mxu0 0
      %13423 = vmatpush1.bf16.msra.mxu0 0
      %13424 = vmatprep.subr.bf16.mxu0 0
      %13425 = vmatpush1.bf16.msra.mxu0 0
      %13426 = vmatprep.subr.bf16.mxu0 0
      %13427 = vmatpush1.bf16.msra.mxu0 0
      %13428 = vmatprep.subr.bf16.mxu0 0
      %13429 = vmatpush1.bf16.msra.mxu0 0
      %13430 = vmatprep.subr.bf16.mxu0 0
      %13431 = vmatpush1.bf16.msra.mxu0 0
      %13432 = vmatprep.subr.bf16.mxu0 0
      %13433 = vmatpush1.bf16.msra.mxu0 0
      %13434 = vmatprep.subr.bf16.mxu0 0
      %13435 = vmatpush1.bf16.msra.mxu0 0
      %13436 = vmatprep.subr.bf16.mxu0 0
      %13437 = vmatpush1.bf16.msra.mxu0 0
      %13438 = vmatprep.subr.bf16.mxu0 0
      %13439 = vmatpush1.bf16.msra.mxu0 0
      %13440 = vmatprep.subr.bf16.mxu0 0
      %13441 = vmatpush1.bf16.msra.mxu0 0
      %13442 = vmatprep.subr.bf16.mxu0 0
      %13443 = vmatpush1.bf16.msra.mxu0 0
      %13444 = vmatprep.subr.bf16.mxu0 0
      %13445 = vmatpush1.bf16.msra.mxu0 0
      %13446 = vmatprep.subr.bf16.mxu0 0
      %13447 = vmatpush1.bf16.msra.mxu0 0
      %13448 = vmatprep.subr.bf16.mxu0 0
      %13449 = vmatpush1.bf16.msra.mxu0 0
      %13450 = vmatprep.mubr.bf16.mxu0 0
      %13451 = vmatmul.mubr.bf16.gmra.mrb[0].mxu0 %v13360
      %v13452 = vpop.f32.mrb[0].mxu0
      %v13453 = vadd.f32 0.0, %v13452
      %v13454 = vpop.f32.mrb[0].mxu0
      %v13455 = vadd.f32 0.0, %v13454
      %v13456 = vpop.f32.mrb[0].mxu0
      %v13457 = vadd.f32 0.0, %v13456
      %v13458 = vpop.f32.mrb[0].mxu0
      %v13459 = vadd.f32 0.0, %v13458
      %13460 = vdwg.mxu0
      %v13461 = vld [vmem:[%s10] sm:$0xff]
      %v13462 = vld [vmem:[%s10 + $0x8] sm:$0xff]
      %v13463 = vld [vmem:[%s10 + $0x10] sm:$0xff]
      %v13464 = vld [vmem:[%s10 + $0x18] sm:$0xff]
      %v13465 = vld [vmem:[%s10 + $0x20] sm:$0xff]
      %v13466 = vld [vmem:[%s10 + $0x28] sm:$0xff]
      %v13467 = vld [vmem:[%s10 + $0x30] sm:$0xff]
      %v13468 = vld [vmem:[%s10 + $0x38] sm:$0xff]
      %v13469 = vmul.f32 %v13410, %v13461
      %v13470 = vmul.f32 %v13412, %v13462
      %v13471 = vmul.f32 %v13453, %v13463
      %v13472 = vmul.f32 %v13455, %v13464
      %v13473 = vmul.f32 %v13414, %v13465
      %v13474 = vmul.f32 %v13416, %v13466
      %v13475 = vmul.f32 %v13457, %v13467
      %v13476 = vmul.f32 %v13459, %v13468
      %v13477 = vadd.f32 %v13469, %v13470
      %v13478 = vadd.f32 %v13477, %v13471
      %v13479 = vadd.f32 %v13478, %v13472
      %13480 = vadd.xlane.f32.xlu0 %v13479
      %v13481 = vpop.xlane.xlu0 %13480
      %v13482 = vadd.f32 %v13473, %v13474
      %v13483 = vadd.f32 %v13482, %v13475
      %v13484 = vadd.f32 %v13483, %v13476
      %13485 = vadd.xlane.f32.xlu0 %v13484
      %v13486 = vpop.xlane.xlu0 %13485
      %v13488 = vrot.slane %v13481, 1
      %v13490 = vadd.f32 %v13481, %v13488
      %v13491 = vrot.slane %v13481, 2
      %v13493 = vadd.f32 %v13490, %v13491
      %v13494 = vrot.slane %v13481, 3
      %v13496 = vadd.f32 %v13493, %v13494
      %v13497 = vrot.slane %v13481, 4
      %v13499 = vadd.f32 %v13496, %v13497
      %v13500 = vrot.slane %v13481, 5
      %v13502 = vadd.f32 %v13499, %v13500
      %v13503 = vrot.slane %v13481, 6
      %v13505 = vadd.f32 %v13502, %v13503
      %v13506 = vrot.slane %v13481, 7
      %v13508 = vadd.f32 %v13505, %v13506
      %v13509 = vadd.f32 %v13508, %v13486
      %v13511 = vrot.slane %v13486, 1
      %v13513 = vadd.f32 %v13509, %v13511
      %v13514 = vrot.slane %v13486, 2
      %v13516 = vadd.f32 %v13513, %v13514
      %v13517 = vrot.slane %v13486, 3
      %v13519 = vadd.f32 %v13516, %v13517
      %v13520 = vrot.slane %v13486, 4
      %v13522 = vadd.f32 %v13519, %v13520
      %v13523 = vrot.slane %v13486, 5
      %v13525 = vadd.f32 %v13522, %v13523
      %v13526 = vrot.slane %v13486, 6
      %v13528 = vadd.f32 %v13525, %v13526
      %v13529 = vrot.slane %v13486, 7
      %v13531 = vadd.f32 %v13528, %v13529
      %v13532 = vld [vmem:[#allocation2] sm:$0x1]
      %v13533 = vadd.f32 %v13531, %v13532
      %vm13534 = vcmask 0
      %13535 = vst.msk [vmem:[%s411] sm:$0x1] %vm13534, %v13533
      %p13536 = scmp.lt.s32.totalorder %s25, 1
      %s13537 = scalar_select %p13536, %s25, 1
      %s13538 = scalar_lea.vmem %s12, %s13537
      // Predicated region
      $region69: #{forward.1} parent=67 // pred_check
        %p13539 = pneg %p300
      $region70: #{forward.1} parent=67 // pred_check_branch
        %13541 = sbr.rel (%p13539) target = $region72
      $region71: #{forward.1} parent=67 // pred_region
        _
      $region72: #{forward.1} parent=67 // pred_fallthru
        _
    $region68: #{forward.1} parent=5 // pred_fallthru
      _
    %p13542 = scmp.le.s32.totalorder 2, %s20
    // Predicated region
    $region73: #{forward.1} parent=5 // pred_check
      %p13543 = pneg %p13542
    $region74: #{forward.1} parent=5 // pred_check_branch
      %13545 = sbr.rel (%p13543) target = $region76
    $region75: #{forward.1} parent=5 // pred_region
      %s13546 = ssub.s32 %s20, 2
      // Predicated region
      $region77: #{forward.1} parent=75 // pred_check
        %p13547 = pneg %p306
      $region78: #{forward.1} parent=75 // pred_check_branch
        %13549 = sbr.rel (%p13547) target = $region80
      $region79: #{forward.1} parent=75 // pred_region
        %p13550 = scmp.lt.s32.totalorder %s26, 1
        %s13551 = scalar_select %p13550, %s26, 1
        %s13552 = scalar_lea.vmem %s12, %s13551
      $region80: #{forward.1} parent=75 // pred_fallthru
        _
    $region76: #{forward.1} parent=5 // pred_fallthru
      _
  $region6: #{forward.1} parent=0 // loop_footer
    %s24 = sadd.s32 1, %s20
  $region7: #{forward.1} parent=0 // loop_footer_branch
    %19 = sbr.rel target = $region3
  $region8: #{forward.1} parent=0 // loop_exit
    _

</llo_original>
